<compile_context>
chip_gen: v7x
topology: tpu7x:2x2x1
jax: 0.10.0
libtpu: 0.0.40
codegen_flags: <defaults>
</compile_context>

<pallas_src>
import functools

import jax
import jax.numpy as jnp
from jax.experimental import pallas as pl
from jax.experimental.pallas import tpu as pltpu

_EPS = 1e-5                        # torch BatchNorm default eps


def _tpu_vmem_capacity_bytes():
    try:
        info = pltpu.get_tpu_info()
        return int(getattr(info, "vmem_capacity_bytes", 128 * 1024 * 1024))
    except Exception:
        return 128 * 1024 * 1024


_VMEM_CAP = _tpu_vmem_capacity_bytes()
_SMALL_VMEM = _VMEM_CAP <= 96 * 1024 * 1024          # v7x: 64 MiB physical VMEM
_VMEM_LIMIT = (40 if _SMALL_VMEM else 64) * 1024 * 1024

# generation-aware tile targets (shrink on v7x, grow on v5e/v6e)
if _SMALL_VMEM:
    _FC_TILE_R, _PD_TM, _PD_TN = 256, 128, 256
    _EC_TILE_N, _EC_TILE_PROJ, _BIL_TILE_N = 128, 256, 256
else:
    _FC_TILE_R, _PD_TM, _PD_TN = 512, 512, 1024
    _EC_TILE_N, _EC_TILE_PROJ, _BIL_TILE_N = 512, 512, 512


def _pick_tile(n, target, align):
    """Largest tile <= target that divides n and is a multiple of `align`;
    falls back to the full extent (always a legal block shape)."""
    if n <= target:
        return n
    t = (target // align) * align
    while t >= align:
        if n % t == 0:
            return t
        t -= align
    return n


def _cparams(sem):
    return pltpu.CompilerParams(dimension_semantics=sem,
                                vmem_limit_bytes=_VMEM_LIMIT)


# ---------------------------------------------------------------------------
# kernel 1: self.fc == Conv1d(n_h,n_h,1)+BatchNorm1d(train)+ReLU on both halves.
# Two-pass tiled BN: pass 1 accumulates per-channel sum/sumsq of raw = x@W over
# row tiles; pass 2 recomputes raw and applies the folded affine + ReLU.
# (Conv1d bias cancels exactly under training-mode BN, so it is folded away.)
# ---------------------------------------------------------------------------
def _fc_stats_kernel(x_ref, w_ref, o_ref):
    @pl.when(pl.program_id(1) == 0)
    def _():
        o_ref[...] = jnp.zeros_like(o_ref)

    x = x_ref[0]                                                   # (TR, C)
    raw = jnp.dot(x, w_ref[...], preferred_element_type=jnp.float32)
    s = jnp.sum(raw, axis=0, keepdims=True)
    ss = jnp.sum(raw * raw, axis=0, keepdims=True)
    o_ref[0] = o_ref[0] + jnp.concatenate([s, ss], axis=0)


def _fc_apply_kernel(x_ref, w_ref, aff_ref, o_ref):
    x = x_ref[0]                                                   # (TR, C)
    raw = jnp.dot(x, w_ref[...], preferred_element_type=jnp.float32)
    aff = aff_ref[0]                                               # (2, O)
    scale = aff[0:1, :]
    shift = aff[1:2, :]
    o_ref[0] = jnp.maximum(raw * scale + shift, 0.0)


def fc_forward_pair(x2_flat, w, gamma, beta):
    S, R, C = x2_flat.shape
    O = w.shape[1]
    TR = _pick_tile(R, _FC_TILE_R, 8)
    nt = R // TR

    stats = pl.pallas_call(
        _fc_stats_kernel,
        out_shape=jax.ShapeDtypeStruct((S, 2, O), jnp.float32),
        grid=(S, nt),
        in_specs=[pl.BlockSpec((1, TR, C), lambda s, t: (s, t, 0)),
                  pl.BlockSpec((C, O), lambda s, t: (0, 0))],
        out_specs=pl.BlockSpec((1, 2, O), lambda s, t: (s, 0, 0)),
        compiler_params=_cparams(("parallel", "arbitrary")),
    )(x2_flat, w)

    cnt = jnp.float32(R)
    mean = stats[:, 0, :] / cnt                                    # (S, O)
    var = jnp.maximum(stats[:, 1, :] / cnt - mean * mean, 0.0)
    scale = gamma * jax.lax.rsqrt(var + _EPS)
    shift = beta - mean * scale
    affine = jnp.stack([scale, shift], axis=1)                     # (S, 2, O)

    return pl.pallas_call(
        _fc_apply_kernel,
        out_shape=jax.ShapeDtypeStruct((S, R, O), jnp.float32),
        grid=(S, nt),
        in_specs=[pl.BlockSpec((1, TR, C), lambda s, t: (s, t, 0)),
                  pl.BlockSpec((C, O), lambda s, t: (0, 0)),
                  pl.BlockSpec((1, 2, O), lambda s, t: (s, 0, 0))],
        out_specs=pl.BlockSpec((1, TR, O), lambda s, t: (s, t, 0)),
        compiler_params=_cparams(("parallel", "parallel")),
    )(x2_flat, w, affine)


# ---------------------------------------------------------------------------
# kernel 2: knn pairwise score  (-||xi - xj||^2), tiled over (m, B, n).
# Row norms are precomputed once and passed in (row and column layouts).
# ---------------------------------------------------------------------------
def _pdist_kernel(xm_ref, xn_ref, xxm_ref, xxn_ref, o_ref):
    xm = xm_ref[0]                                                 # (TM, C)
    xn = xn_ref[0]                                                 # (TN, C)
    gram = jax.lax.dot_general(xm, xn, (((1,), (1,)), ((), ())),
                               preferred_element_type=jnp.float32)
    o_ref[0] = 2.0 * gram - xxm_ref[0] - xxn_ref[0]


def neg_pairwise_sqdist(x_bnc, xx_bn1):
    B, N, C = x_bnc.shape
    TM = _pick_tile(N, _PD_TM, 8)
    TN = _pick_tile(N, _PD_TN, 128)
    xx_col = xx_bn1.reshape(B, 1, N)        # free reshape (trailing dim is 1)
    cost = pl.CostEstimate(flops=int(2 * B * N * N * C),
                           transcendentals=0,
                           bytes_accessed=int(4 * (2 * B * N * C + 2 * B * N
                                                   + B * N * N)))
    # TODO(synk): fuse a running top-K(neighs) over the column-tile axis here
    # (VMEM scratch per row) to avoid materializing (B,N,N) in HBM — biggest
    # win on v5e/v6e; skipped to keep the in-kernel selection simple/robust.
    return pl.pallas_call(
        _pdist_kernel,
        out_shape=jax.ShapeDtypeStruct((B, N, N), jnp.float32),
        grid=(N // TM, B, N // TN),   # N-tile leads: megacore balance at small B
        in_specs=[pl.BlockSpec((1, TM, C), lambda i, b, j: (b, i, 0)),
                  pl.BlockSpec((1, TN, C), lambda i, b, j: (b, j, 0)),
                  pl.BlockSpec((1, TM, 1), lambda i, b, j: (b, i, 0)),
                  pl.BlockSpec((1, 1, TN), lambda i, b, j: (b, 0, j))],
        out_specs=pl.BlockSpec((1, TM, TN), lambda i, b, j: (b, i, j)),
        compiler_params=_cparams(("parallel", "parallel", "parallel")),
        cost_estimate=cost,
    )(x_bnc, x_bnc, xx_bn1, xx_col)


# ---------------------------------------------------------------------------
# kernel 3: EdgeConv (fused gather, BN2d train stats, LeakyReLU, max-k, sigmoid)
# plus the discriminator context contraction XW = sigmoid(...) @ bil_w^T.
#   3a) projection:  [p | q] = h1 @ [W1 | W2-W1]        (tiled over B, N)
#   3b) stats pass:  multi-hot A per tile; sum/sumsq of z[n,k] = p[idx]+q[n]
#   3c) out pass:    gather -> folded affine -> LeakyReLU -> max_k -> sigmoid -> @W^T
# The (B,N,K,C) neighbour tensor never exists in HBM.
# ---------------------------------------------------------------------------
def _ec_project_kernel(h_ref, w_ref, p_ref, q_ref):
    h = h_ref[0]                                                   # (TP, C)
    pq = jnp.dot(h, w_ref[...], preferred_element_type=jnp.float32)  # (TP, 2O)
    o = pq.shape[1] // 2
    p_ref[0] = pq[:, :o]
    q_ref[0] = pq[:, o:]


def _ec_stats_kernel(p_ref, q_ref, idx_ref, o_ref):
    @pl.when(pl.program_id(1) == 0)
    def _():
        o_ref[...] = jnp.zeros_like(o_ref)

    p = p_ref[0]                                                   # (N, O)
    q = q_ref[0]                                                   # (TN, O)
    idx = idx_ref[0]                                               # (TN, K)
    n_pts = p.shape[0]
    tn, k_n = idx.shape
    iota_n = jax.lax.broadcasted_iota(jnp.int32, (tn, n_pts), 1)

    # Multi-hot neighbour-count matrix A[n, j] = #{k : idx[n,k] == j}.
    # K is small & static; each one-hot folds straight into the single (TN,N)
    # accumulator, so the live set stays bounded.  (A fori_loop here would need
    # a dynamic minor-dim slice of idx, avoided for lowering robustness.)
    a = jnp.zeros((tn, n_pts), jnp.float32)
    for k in range(k_n):
        a = a + (iota_n == idx[:, k:k + 1]).astype(jnp.float32)

    g = jnp.dot(a, p, preferred_element_type=jnp.float32)          # (TN, O)
    c = jnp.sum(a, axis=0, keepdims=True)                          # (1, N)
    t1 = jnp.dot(c, p * p, preferred_element_type=jnp.float32)     # (1, O)
    kf = jnp.float32(k_n)
    s = (jnp.sum(g, axis=0, keepdims=True)
         + kf * jnp.sum(q, axis=0, keepdims=True))
    ss = (t1 + 2.0 * jnp.sum(q * g, axis=0, keepdims=True)
          + kf * jnp.sum(q * q, axis=0, keepdims=True))
    o_ref[0] = o_ref[0] + jnp.concatenate([s, ss], axis=0)


def _ec_out_kernel(p_ref, q_ref, idx_ref, aff_ref, wbt_ref, o_ref):
    p = p_ref[0]                                                   # (N, O)
    q = q_ref[0]                                                   # (TN, O)
    idx = idx_ref[0]                                               # (TN, K)
    n_pts, o_ch = p.shape
    tn, k_n = idx.shape
    scale = aff_ref[0:1, :]
    shift = aff_ref[1:2, :]
    p_aff = p * scale                      # BN affine folded out of the K loop
    q_aff = q * scale + shift
    iota_n = jax.lax.broadcasted_iota(jnp.int32, (tn, n_pts), 1)

    mx = jnp.full((tn, o_ch), -jnp.inf, jnp.float32)
    for k in range(k_n):                   # static unroll (see stats kernel note)
        onehot = (iota_n == idx[:, k:k + 1]).astype(jnp.float32)
        z = jnp.dot(onehot, p_aff, preferred_element_type=jnp.float32) + q_aff
        z = jnp.maximum(z, 0.2 * z)        # LeakyReLU(0.2)
        mx = jnp.maximum(mx, z)
    x = jax.nn.sigmoid(mx)                 # X tile (never written to HBM)
    # Fused discriminator context contraction: XW = X @ bil_w^T.
    o_ref[0] = jnp.dot(x, wbt_ref[...], preferred_element_type=jnp.float32)


def edgeconv_context_forward(h1, nbr_idx, w1, w2, gamma, beta, bil_w):
    B, N, C = h1.shape
    O = w1.shape[1]
    K = nbr_idx.shape[-1]
    # algebraic fold + fused projection weight:
    # (nbr-ctr)@W1 + ctr@W2 == nbr@W1 + ctr@(W2-W1)
    w_cat = jnp.concatenate([w1, w2 - w1], axis=1)                 # (C, 2O)

    TP = _pick_tile(N, _EC_TILE_PROJ, 8)
    p, q = pl.pallas_call(
        _ec_project_kernel,
        out_shape=(jax.ShapeDtypeStruct((B, N, O), jnp.float32),
                   jax.ShapeDtypeStruct((B, N, O), jnp.float32)),
        grid=(B, N // TP),
        in_specs=[pl.BlockSpec((1, TP, C), lambda b, t: (b, t, 0)),
                  pl.BlockSpec((C, 2 * O), lambda b, t: (0, 0))],
        out_specs=(pl.BlockSpec((1, TP, O), lambda b, t: (b, t, 0)),
                   pl.BlockSpec((1, TP, O), lambda b, t: (b, t, 0))),
        compiler_params=_cparams(("parallel", "parallel")),
    )(h1, w_cat)

    TN = _pick_tile(N, _EC_TILE_N, 8)
    nt = N // TN

    part = pl.pallas_call(
        _ec_stats_kernel,
        out_shape=jax.ShapeDtypeStruct((B, 2, O), jnp.float32),
        grid=(B, nt),
        in_specs=[pl.BlockSpec((1, N, O), lambda b, t: (b, 0, 0)),
                  pl.BlockSpec((1, TN, O), lambda b, t: (b, t, 0)),
                  pl.BlockSpec((1, TN, K), lambda b, t: (b, t, 0))],
        out_specs=pl.BlockSpec((1, 2, O), lambda b, t: (b, 0, 0)),
        compiler_params=_cparams(("parallel", "arbitrary")),
        cost_estimate=pl.CostEstimate(
            flops=int(2 * B * N * N * O + B * N * K * N),
            transcendentals=0,
            bytes_accessed=int(4 * (2 * B * N * O + B * N * K + 2 * B * O))),
    )(p, q, nbr_idx)

    # exact BatchNorm2d training stats over (B, N, K) per channel
    cnt = jnp.float32(B * N * K)
    s_tot = jnp.sum(part[:, 0, :], axis=0)
    ss_tot = jnp.sum(part[:, 1, :], axis=0)
    mean = s_tot / cnt
    var = jnp.maximum(ss_tot / cnt - mean * mean, 0.0)   # cancellation guard
    scale = gamma * jax.lax.rsqrt(var + _EPS)
    shift = beta - mean * scale
    affine = jnp.stack([scale, shift], axis=0)                     # (2, O)

    # NOTE: B leads the grid so the full-N `p` block is reused across N tiles;
    # a tile-leading grid would re-DMA p every step (worse than the megacore
    # imbalance it would fix).
    return pl.pallas_call(
        _ec_out_kernel,
        out_shape=jax.ShapeDtypeStruct((B, N, O), jnp.float32),
        grid=(B, nt),
        in_specs=[pl.BlockSpec((1, N, O), lambda b, t: (b, 0, 0)),
                  pl.BlockSpec((1, TN, O), lambda b, t: (b, t, 0)),
                  pl.BlockSpec((1, TN, K), lambda b, t: (b, t, 0)),
                  pl.BlockSpec((2, O), lambda b, t: (0, 0)),
                  pl.BlockSpec((O, O), lambda b, t: (0, 0))],
        out_specs=pl.BlockSpec((1, TN, O), lambda b, t: (b, t, 0)),
        compiler_params=_cparams(("parallel", "parallel")),
        cost_estimate=pl.CostEstimate(
            flops=int(2 * B * N * K * N * O + 2 * B * N * O * O),
            transcendentals=int(B * N * O),
            bytes_accessed=int(4 * (3 * B * N * O + B * N * K))),
    )(p, q, nbr_idx, affine, jnp.transpose(bil_w))


# ---------------------------------------------------------------------------
# kernel 4: Discriminator bilinear score for BOTH h_1 and h_2.  The W
# contraction with the shared context was fused into kernel 3, so this is a
# pure multiply-reduce:  sc[s,b,n] = sum_c h[s,b,n,c] * xw[b,n,c] + bias.
# Grid order (nt, S) so the shared xw tile is reused across the two halves.
# ---------------------------------------------------------------------------
def _bilinear_kernel(h_ref, cw_ref, b_ref, o_ref):
    h = h_ref[0]                                                   # (B, TN, C)
    cw = cw_ref[...]                                               # (B, TN, C)
    o_ref[0] = jnp.sum(h * cw, axis=-1) + b_ref[0]


def bilinear_score_pair(h_stack, xw, bias):
    S, B, N, C = h_stack.shape
    TN = _pick_tile(N, _BIL_TILE_N, 128)
    nt = N // TN
    b_arr = jnp.asarray(bias, jnp.float32).reshape((1,))
    return pl.pallas_call(
        _bilinear_kernel,
        out_shape=jax.ShapeDtypeStruct((S, B, N), jnp.float32),
        grid=(nt, S),
        in_specs=[pl.BlockSpec((1, B, TN, C), lambda t, s: (s, 0, t, 0)),
                  pl.BlockSpec((B, TN, C), lambda t, s: (0, t, 0)),
                  pl.BlockSpec(memory_space=pltpu.MemorySpace.SMEM)],
        out_specs=pl.BlockSpec((1, B, TN), lambda t, s: (s, 0, t)),
        compiler_params=_cparams(("parallel", "parallel")),
    )(h_stack, xw, b_arr)


# ---------------------------------------------------------------------------
# IndexSelect forward (glue: permutation, top-k selections, final gathers)
# ---------------------------------------------------------------------------
def index_select_forward(params, xyz, seq1, *, k_pool, neighs, perm_key):
    B, n_h, N = seq1.shape

    # seq2 = seq1[:, :, randperm(N)]
    perm = jax.random.permutation(perm_key, N)
    seq2 = seq1[:, :, perm]

    x2 = jnp.stack([jnp.transpose(seq1, (0, 2, 1)),
                    jnp.transpose(seq2, (0, 2, 1))], axis=0)        # (2,B,N,C)
    x2_flat = x2.reshape(2, B * N, n_h)

    # h_1, h_2 = fc(seq1), fc(seq2): tiled two-pass BN
    h12 = fc_forward_pair(x2_flat, params['fc_w'],
                          params['fc_g'], params['fc_beta'])
    h12 = h12.reshape(2, B, N, n_h)
    h1 = h12[0]

    # kNN graph over h_1 (negated squared distances; row norms precomputed once)
    xx = jnp.sum(h1 * h1, axis=-1, keepdims=True)                   # (B,N,1)
    d = neg_pairwise_sqdist(h1, xx)                                 # (B,N,N)
    # TODO(synk): top-k index selection has no Pallas primitive; done by XLA.
    nbr_idx = jax.lax.top_k(d, neighs)[1].astype(jnp.int32)         # (B,N,K)

    # XW = sigmoid(EdgeConv(h_1)) @ bil_w^T — gather, BN, max-k and the
    # discriminator-context contraction fused; X itself never hits HBM.
    xw = edgeconv_context_forward(h1, nbr_idx, params['ec_w1'], params['ec_w2'],
                                  params['ec_g'], params['ec_beta'],
                                  params['bil_w'])                  # (B,N,C)

    # Discriminator: Bilinear(n_h, n_h, 1) on both halves (multiply-reduce)
    sc = bilinear_score_pair(h12, xw, params['bil_b'])              # (2,B,N)
    ret = jnp.concatenate([sc[0], sc[1]], axis=1)                   # (B, 2N)
    ret_true = sc[0]

    # top-k pooling
    scores = jax.nn.sigmoid(ret_true)
    values, idx = jax.lax.top_k(scores, k_pool)                     # (B,k) each

    # tiny gathers + broadcast scaling stay in XLA (fuses for free)
    idx_seq = jnp.broadcast_to(idx[:, None, :], (B, n_h, k_pool))
    seq_static = jnp.take_along_axis(seq1, idx_seq, axis=2)
    seq = seq_static * values[:, None, :]

    c_xyz = xyz.shape[1]
    idx_xyz = jnp.broadcast_to(idx[:, None, :], (B, c_xyz, k_pool))
    xyz_static = jnp.take_along_axis(xyz, idx_xyz, axis=2)
    xyz_scaled = xyz_static * values[:, None, :]

    return xyz_static, xyz_scaled, seq, ret


# ---------------------------------------------------------------------------
# deterministic parameter construction (synthetic init, no checkpoint load)
# ---------------------------------------------------------------------------
def make_params(key, n_h):
    k0, k1, k2, k3 = jax.random.split(key, 4)
    limit_bil = (6.0 / (n_h + n_h)) ** 0.5          # xavier_uniform-ish
    ec_w = jax.random.normal(k1, (2 * n_h, n_h), jnp.float32) * 0.1
    return {
        'fc_w': jax.random.normal(k0, (n_h, n_h), jnp.float32) * 0.1,
        # fc_b is kept for interface parity but is mathematically a no-op under
        # training-mode BatchNorm1d, so the kernels fold it away exactly.
        'fc_b': jax.random.normal(k2, (n_h,), jnp.float32) * 0.01,
        'fc_g': jnp.ones((n_h,), jnp.float32),
        'fc_beta': jnp.zeros((n_h,), jnp.float32),
        'ec_w1': ec_w[:n_h, :],                     # acts on (neighbour - center)
        'ec_w2': ec_w[n_h:, :],                     # acts on center
        'ec_g': jnp.ones((n_h,), jnp.float32),
        'ec_beta': jnp.zeros((n_h,), jnp.float32),
        'bil_w': jax.random.uniform(k3, (n_h, n_h), jnp.float32,
                                    minval=-limit_bil, maxval=limit_bil),
        'bil_b': 0.0,
    }


if __name__ == "__main__":
    B, n_h, N = 2, 32, 64
    neighs = 8        # EdgeConv neighbours (module default 20, small here)
    k_pool = 16       # IndexSelect.k

    root = jax.random.PRNGKey(0)
    kp, kx, ks, kperm = jax.random.split(root, 4)

    params = make_params(kp, n_h)
    xyz = jax.random.normal(kx, (B, 3, N), jnp.float32)
    seq1 = jax.random.normal(ks, (B, n_h, N), jnp.float32)

    fwd = jax.jit(functools.partial(index_select_forward,
                                    k_pool=k_pool, neighs=neighs))
    out = fwd(params, xyz, seq1, perm_key=kperm)
    out = jax.block_until_ready(out)

    xyz_static, xyz_scaled, seq, ret = out
    assert xyz_static.shape == (B, 3, k_pool)
    assert xyz_scaled.shape == (B, 3, k_pool)
    assert seq.shape == (B, n_h, k_pool)
    assert ret.shape == (B, 2 * N)
    for a in out:
        assert bool(jnp.all(jnp.isfinite(a)))
    print("KERNEL_OK")
</pallas_src>

<mosaic_0001>
module attributes {stable_mosaic.version = 11 : i64} {
  func.func @_fc_apply_kernel(%arg0: i32, %arg1: i32, %arg2: memref<1x128x32xf32, #tpu.memory_space<vmem>>, %arg3: memref<32x32xf32, #tpu.memory_space<vmem>>, %arg4: memref<1x2x32xf32, #tpu.memory_space<vmem>>, %arg5: memref<1x128x32xf32, #tpu.memory_space<vmem>>) attributes {dimension_semantics = [#tpu.dimension_semantics<parallel>, #tpu.dimension_semantics<parallel>], iteration_bounds = array<i64: 2, 1>, scalar_prefetch = 0 : i64, scratch_operands = 0 : i64, tpu.core_type = #tpu.core_type<tc>, window_params = [{transform_indices = @transform_0, window_bounds = array<i64: 1, 128, 32>}, {pipeline_mode = #tpu.pipeline_mode<synchronous>, transform_indices = @transform_1, window_bounds = array<i64: 32, 32>}, {transform_indices = @transform_2, window_bounds = array<i64: 1, 2, 32>}, {transform_indices = @transform_3, window_bounds = array<i64: 1, 128, 32>}]} {
    %c0 = arith.constant 0 : index
    %c0_0 = arith.constant 0 : index
    %c0_1 = arith.constant 0 : index
    %0 = vector.load %arg2[%c0, %c0_0, %c0_1] : memref<1x128x32xf32, #tpu.memory_space<vmem>>, vector<1x128x32xf32>
    %1 = vector.shape_cast %0 : vector<1x128x32xf32> to vector<128x32xf32>
    %c0_2 = arith.constant 0 : index
    %c0_3 = arith.constant 0 : index
    %2 = vector.load %arg3[%c0_2, %c0_3] : memref<32x32xf32, #tpu.memory_space<vmem>>, vector<32x32xf32>
    %cst = arith.constant dense<0.000000e+00> : vector<128x32xf32>
    %3 = tpu.matmul %1, %2, %cst {dimension_numbers = #tpu.dot_dimension_numbers<[1], [0], [0], [1], [0, 0, 1, 1], [], []>} : vector<128x32xf32>, vector<32x32xf32>, vector<128x32xf32> -> vector<128x32xf32>
    %c0_4 = arith.constant 0 : index
    %c0_5 = arith.constant 0 : index
    %c0_6 = arith.constant 0 : index
    %4 = vector.load %arg4[%c0_4, %c0_5, %c0_6] : memref<1x2x32xf32, #tpu.memory_space<vmem>>, vector<1x2x32xf32>
    %5 = vector.shape_cast %4 : vector<1x2x32xf32> to vector<2x32xf32>
    %6 = vector.extract_strided_slice %5 {offsets = [0, 0], sizes = [1, 32], strides = [1, 1]} : vector<2x32xf32> to vector<1x32xf32>
    %7 = vector.extract_strided_slice %5 {offsets = [1, 0], sizes = [1, 32], strides = [1, 1]} : vector<2x32xf32> to vector<1x32xf32>
    %8 = vector.broadcast %6 : vector<1x32xf32> to vector<128x32xf32>
    %9 = arith.mulf %3, %8 : vector<128x32xf32>
    %10 = vector.broadcast %7 : vector<1x32xf32> to vector<128x32xf32>
    %11 = arith.addf %9, %10 : vector<128x32xf32>
    %cst_7 = arith.constant 0.000000e+00 : f32
    %12 = vector.broadcast %cst_7 : f32 to vector<128x32xf32>
    %13 = arith.maximumf %11, %12 : vector<128x32xf32>
    %c0_8 = arith.constant 0 : index
    %c0_9 = arith.constant 0 : index
    %c0_10 = arith.constant 0 : index
    %14 = vector.load %arg5[%c0_8, %c0_9, %c0_10] : memref<1x128x32xf32, #tpu.memory_space<vmem>>, vector<1x128x32xf32>
    %15 = vector.shape_cast %14 : vector<1x128x32xf32> to vector<128x32xf32>
    %16 = vector.shape_cast %13 : vector<128x32xf32> to vector<1x128x32xf32>
    tpu.vector_store %arg5[%c0_8, %c0_9, %c0_10], %16 {strides = array<i32>} : memref<1x128x32xf32, #tpu.memory_space<vmem>>, vector<1x128x32xf32>,
    return
  }
  func.func @transform_0(%arg0: i32, %arg1: i32) -> (i32, i32, i32) {
    %c0_i32 = arith.constant 0 : i32
    %c0_i32_0 = arith.constant 0 : i32
    return %arg0, %arg1, %c0_i32 : i32, i32, i32
  }
  func.func @transform_1(%arg0: i32, %arg1: i32) -> (i32, i32) {
    %c0_i32 = arith.constant 0 : i32
    %c0_i32_0 = arith.constant 0 : i32
    %c0_i32_1 = arith.constant 0 : i32
    return %c0_i32, %c0_i32_0 : i32, i32
  }
  func.func @transform_2(%arg0: i32, %arg1: i32) -> (i32, i32, i32) {
    %c0_i32 = arith.constant 0 : i32
    %c0_i32_0 = arith.constant 0 : i32
    %c0_i32_1 = arith.constant 0 : i32
    return %arg0, %c0_i32, %c0_i32_0 : i32, i32, i32
  }
  func.func @transform_3(%arg0: i32, %arg1: i32) -> (i32, i32, i32) {
    %c0_i32 = arith.constant 0 : i32
    %c0_i32_0 = arith.constant 0 : i32
    return %arg0, %arg1, %c0_i32 : i32, i32, i32
  }
}

module attributes {stable_mosaic.version = 11 : i64} {
  func.func @_fc_stats_kernel(%arg0: i32, %arg1: i32, %arg2: memref<1x128x32xf32, #tpu.memory_space<vmem>>, %arg3: memref<32x32xf32, #tpu.memory_space<vmem>>, %arg4: memref<1x2x32xf32, #tpu.memory_space<vmem>>) attributes {dimension_semantics = [#tpu.dimension_semantics<parallel>, #tpu.dimension_semantics<arbitrary>], iteration_bounds = array<i64: 2, 1>, scalar_prefetch = 0 : i64, scratch_operands = 0 : i64, tpu.core_type = #tpu.core_type<tc>, window_params = [{transform_indices = @transform_0, window_bounds = array<i64: 1, 128, 32>}, {pipeline_mode = #tpu.pipeline_mode<synchronous>, transform_indices = @transform_1, window_bounds = array<i64: 32, 32>}, {transform_indices = @transform_2, window_bounds = array<i64: 1, 2, 32>}]} {
    %c0_i32 = arith.constant 0 : i32
    %0 = arith.cmpi eq, %arg1, %c0_i32 : i32
    %1 = arith.extui %0 : i1 to i32
    %c0_i32_0 = arith.constant 0 : i32
    %2 = arith.cmpi ne, %1, %c0_i32_0 : i32
    scf.if %2 {
      %cst_13 = arith.constant 0.000000e+00 : f32
      %19 = vector.broadcast %cst_13 : f32 to vector<1x2x32xf32>
      %c0_14 = arith.constant 0 : index
      %c0_15 = arith.constant 0 : index
      %c0_16 = arith.constant 0 : index
      %20 = vector.load %arg4[%c0_14, %c0_15, %c0_16] : memref<1x2x32xf32, #tpu.memory_space<vmem>>, vector<1x2x32xf32>
      tpu.vector_store %arg4[%c0_14, %c0_15, %c0_16], %19 {strides = array<i32>} : memref<1x2x32xf32, #tpu.memory_space<vmem>>, vector<1x2x32xf32>,
    } else {
    }
    %c0 = arith.constant 0 : index
    %c0_1 = arith.constant 0 : index
    %c0_2 = arith.constant 0 : index
    %3 = vector.load %arg2[%c0, %c0_1, %c0_2] : memref<1x128x32xf32, #tpu.memory_space<vmem>>, vector<1x128x32xf32>
    %4 = vector.shape_cast %3 : vector<1x128x32xf32> to vector<128x32xf32>
    %c0_3 = arith.constant 0 : index
    %c0_4 = arith.constant 0 : index
    %5 = vector.load %arg3[%c0_3, %c0_4] : memref<32x32xf32, #tpu.memory_space<vmem>>, vector<32x32xf32>
    %cst = arith.constant dense<0.000000e+00> : vector<128x32xf32>
    %6 = tpu.matmul %4, %5, %cst {dimension_numbers = #tpu.dot_dimension_numbers<[1], [0], [0], [1], [0, 0, 1, 1], [], []>} : vector<128x32xf32>, vector<32x32xf32>, vector<128x32xf32> -> vector<128x32xf32>
    %cst_5 = arith.constant dense<0.000000e+00> : vector<32xf32>
    %7 = vector.multi_reduction <add>, %6, %cst_5 [0] : vector<128x32xf32> to vector<32xf32>
    %8 = vector.shape_cast %7 : vector<32xf32> to vector<1x32xf32>
    %9 = arith.mulf %6, %6 : vector<128x32xf32>
    %cst_6 = arith.constant dense<0.000000e+00> : vector<32xf32>
    %10 = vector.multi_reduction <add>, %9, %cst_6 [0] : vector<128x32xf32> to vector<32xf32>
    %11 = vector.shape_cast %10 : vector<32xf32> to vector<1x32xf32>
    %c0_7 = arith.constant 0 : index
    %c0_8 = arith.constant 0 : index
    %c0_9 = arith.constant 0 : index
    %12 = vector.load %arg4[%c0_7, %c0_8, %c0_9] : memref<1x2x32xf32, #tpu.memory_space<vmem>>, vector<1x2x32xf32>
    %13 = vector.shape_cast %12 : vector<1x2x32xf32> to vector<2x32xf32>
    %14 = tpu.concatenate %8, %11 in 0 : vector<1x32xf32>, vector<1x32xf32> -> vector<2x32xf32>
    %15 = arith.addf %13, %14 : vector<2x32xf32>
    %c0_10 = arith.constant 0 : index
    %c0_11 = arith.constant 0 : index
    %c0_12 = arith.constant 0 : index
    %16 = vector.load %arg4[%c0_10, %c0_11, %c0_12] : memref<1x2x32xf32, #tpu.memory_space<vmem>>, vector<1x2x32xf32>
    %17 = vector.shape_cast %16 : vector<1x2x32xf32> to vector<2x32xf32>
    %18 = vector.shape_cast %15 : vector<2x32xf32> to vector<1x2x32xf32>
    tpu.vector_store %arg4[%c0_10, %c0_11, %c0_12], %18 {strides = array<i32>} : memref<1x2x32xf32, #tpu.memory_space<vmem>>, vector<1x2x32xf32>,
    return
  }
  func.func @transform_0(%arg0: i32, %arg1: i32) -> (i32, i32, i32) {
    %c0_i32 = arith.constant 0 : i32
    %c0_i32_0 = arith.constant 0 : i32
    return %arg0, %arg1, %c0_i32 : i32, i32, i32
  }
  func.func @transform_1(%arg0: i32, %arg1: i32) -> (i32, i32) {
    %c0_i32 = arith.constant 0 : i32
    %c0_i32_0 = arith.constant 0 : i32
    %c0_i32_1 = arith.constant 0 : i32
    return %c0_i32, %c0_i32_0 : i32, i32
  }
  func.func @transform_2(%arg0: i32, %arg1: i32) -> (i32, i32, i32) {
    %c0_i32 = arith.constant 0 : i32
    %c0_i32_0 = arith.constant 0 : i32
    %c0_i32_1 = arith.constant 0 : i32
    return %arg0, %c0_i32, %c0_i32_0 : i32, i32, i32
  }
}

module attributes {stable_mosaic.version = 11 : i64} {
  func.func @_pdist_kernel(%arg0: i32, %arg1: i32, %arg2: i32, %arg3: memref<1x64x32xf32, #tpu.memory_space<vmem>>, %arg4: memref<1x64x32xf32, #tpu.memory_space<vmem>>, %arg5: memref<1x64x1xf32, #tpu.memory_space<vmem>>, %arg6: memref<1x1x64xf32, #tpu.memory_space<vmem>>, %arg7: memref<1x64x64xf32, #tpu.memory_space<vmem>>) attributes {dimension_semantics = [#tpu.dimension_semantics<parallel>, #tpu.dimension_semantics<parallel>, #tpu.dimension_semantics<parallel>], iteration_bounds = array<i64: 1, 2, 1>, scalar_prefetch = 0 : i64, scratch_operands = 0 : i64, tpu.core_type = #tpu.core_type<tc>, window_params = [{transform_indices = @transform_0, window_bounds = array<i64: 1, 64, 32>}, {transform_indices = @transform_1, window_bounds = array<i64: 1, 64, 32>}, {transform_indices = @transform_2, window_bounds = array<i64: 1, 64, 1>}, {transform_indices = @transform_3, window_bounds = array<i64: 1, 1, 64>}, {transform_indices = @transform_4, window_bounds = array<i64: 1, 64, 64>}]} {
    %c0 = arith.constant 0 : index
    %c0_0 = arith.constant 0 : index
    %c0_1 = arith.constant 0 : index
    %0 = vector.load %arg3[%c0, %c0_0, %c0_1] : memref<1x64x32xf32, #tpu.memory_space<vmem>>, vector<1x64x32xf32>
    %1 = vector.shape_cast %0 : vector<1x64x32xf32> to vector<64x32xf32>
    %c0_2 = arith.constant 0 : index
    %c0_3 = arith.constant 0 : index
    %c0_4 = arith.constant 0 : index
    %2 = vector.load %arg4[%c0_2, %c0_3, %c0_4] : memref<1x64x32xf32, #tpu.memory_space<vmem>>, vector<1x64x32xf32>
    %3 = vector.shape_cast %2 : vector<1x64x32xf32> to vector<64x32xf32>
    %cst = arith.constant dense<0.000000e+00> : vector<64x64xf32>
    %4 = tpu.matmul %1, %3, %cst {dimension_numbers = #tpu.dot_dimension_numbers<[1], [1], [0], [0], [0, 0, 1, 0], [], []>} : vector<64x32xf32>, vector<64x32xf32>, vector<64x64xf32> -> vector<64x64xf32>
    %cst_5 = arith.constant 2.000000e+00 : f32
    %5 = vector.broadcast %cst_5 : f32 to vector<64x64xf32>
    %6 = arith.mulf %5, %4 : vector<64x64xf32>
    %c0_6 = arith.constant 0 : index
    %c0_7 = arith.constant 0 : index
    %c0_8 = arith.constant 0 : index
    %7 = vector.load %arg5[%c0_6, %c0_7, %c0_8] : memref<1x64x1xf32, #tpu.memory_space<vmem>>, vector<1x64x1xf32>
    %8 = vector.shape_cast %7 : vector<1x64x1xf32> to vector<64x1xf32>
    %9 = vector.broadcast %8 : vector<64x1xf32> to vector<64x64xf32>
    %10 = arith.subf %6, %9 : vector<64x64xf32>
    %c0_9 = arith.constant 0 : index
    %c0_10 = arith.constant 0 : index
    %c0_11 = arith.constant 0 : index
    %11 = vector.load %arg6[%c0_9, %c0_10, %c0_11] : memref<1x1x64xf32, #tpu.memory_space<vmem>>, vector<1x1x64xf32>
    %12 = vector.shape_cast %11 : vector<1x1x64xf32> to vector<1x64xf32>
    %13 = vector.broadcast %12 : vector<1x64xf32> to vector<64x64xf32>
    %14 = arith.subf %10, %13 : vector<64x64xf32>
    %c0_12 = arith.constant 0 : index
    %c0_13 = arith.constant 0 : index
    %c0_14 = arith.constant 0 : index
    %15 = vector.load %arg7[%c0_12, %c0_13, %c0_14] : memref<1x64x64xf32, #tpu.memory_space<vmem>>, vector<1x64x64xf32>
    %16 = vector.shape_cast %15 : vector<1x64x64xf32> to vector<64x64xf32>
    %17 = vector.shape_cast %14 : vector<64x64xf32> to vector<1x64x64xf32>
    tpu.vector_store %arg7[%c0_12, %c0_13, %c0_14], %17 {strides = array<i32>} : memref<1x64x64xf32, #tpu.memory_space<vmem>>, vector<1x64x64xf32>,
    return
  }
  func.func @transform_0(%arg0: i32, %arg1: i32, %arg2: i32) -> (i32, i32, i32) {
    %c0_i32 = arith.constant 0 : i32
    %c0_i32_0 = arith.constant 0 : i32
    return %arg1, %arg0, %c0_i32 : i32, i32, i32
  }
  func.func @transform_1(%arg0: i32, %arg1: i32, %arg2: i32) -> (i32, i32, i32) {
    %c0_i32 = arith.constant 0 : i32
    %c0_i32_0 = arith.constant 0 : i32
    return %arg1, %arg2, %c0_i32 : i32, i32, i32
  }
  func.func @transform_2(%arg0: i32, %arg1: i32, %arg2: i32) -> (i32, i32, i32) {
    %c0_i32 = arith.constant 0 : i32
    %c0_i32_0 = arith.constant 0 : i32
    return %arg1, %arg0, %c0_i32 : i32, i32, i32
  }
  func.func @transform_3(%arg0: i32, %arg1: i32, %arg2: i32) -> (i32, i32, i32) {
    %c0_i32 = arith.constant 0 : i32
    %c0_i32_0 = arith.constant 0 : i32
    return %arg1, %c0_i32, %arg2 : i32, i32, i32
  }
  func.func @transform_4(%arg0: i32, %arg1: i32, %arg2: i32) -> (i32, i32, i32) {
    %c0_i32 = arith.constant 0 : i32
    return %arg1, %arg0, %arg2 : i32, i32, i32
  }
}

module attributes {stable_mosaic.version = 11 : i64} {
  func.func @_ec_project_kernel(%arg0: i32, %arg1: i32, %arg2: memref<1x64x32xf32, #tpu.memory_space<vmem>>, %arg3: memref<32x64xf32, #tpu.memory_space<vmem>>, %arg4: memref<1x64x32xf32, #tpu.memory_space<vmem>>, %arg5: memref<1x64x32xf32, #tpu.memory_space<vmem>>) attributes {dimension_semantics = [#tpu.dimension_semantics<parallel>, #tpu.dimension_semantics<parallel>], iteration_bounds = array<i64: 2, 1>, scalar_prefetch = 0 : i64, scratch_operands = 0 : i64, tpu.core_type = #tpu.core_type<tc>, window_params = [{transform_indices = @transform_0, window_bounds = array<i64: 1, 64, 32>}, {pipeline_mode = #tpu.pipeline_mode<synchronous>, transform_indices = @transform_1, window_bounds = array<i64: 32, 64>}, {transform_indices = @transform_2, window_bounds = array<i64: 1, 64, 32>}, {transform_indices = @transform_3, window_bounds = array<i64: 1, 64, 32>}]} {
    %c0 = arith.constant 0 : index
    %c0_0 = arith.constant 0 : index
    %c0_1 = arith.constant 0 : index
    %0 = vector.load %arg2[%c0, %c0_0, %c0_1] : memref<1x64x32xf32, #tpu.memory_space<vmem>>, vector<1x64x32xf32>
    %1 = vector.shape_cast %0 : vector<1x64x32xf32> to vector<64x32xf32>
    %c0_2 = arith.constant 0 : index
    %c0_3 = arith.constant 0 : index
    %2 = vector.load %arg3[%c0_2, %c0_3] : memref<32x64xf32, #tpu.memory_space<vmem>>, vector<32x64xf32>
    %cst = arith.constant dense<0.000000e+00> : vector<64x64xf32>
    %3 = tpu.matmul %1, %2, %cst {dimension_numbers = #tpu.dot_dimension_numbers<[1], [0], [0], [1], [0, 0, 1, 1], [], []>} : vector<64x32xf32>, vector<32x64xf32>, vector<64x64xf32> -> vector<64x64xf32>
    %4 = vector.extract_strided_slice %3 {offsets = [0, 0], sizes = [64, 32], strides = [1, 1]} : vector<64x64xf32> to vector<64x32xf32>
    %c0_4 = arith.constant 0 : index
    %c0_5 = arith.constant 0 : index
    %c0_6 = arith.constant 0 : index
    %5 = vector.load %arg4[%c0_4, %c0_5, %c0_6] : memref<1x64x32xf32, #tpu.memory_space<vmem>>, vector<1x64x32xf32>
    %6 = vector.shape_cast %5 : vector<1x64x32xf32> to vector<64x32xf32>
    %7 = vector.shape_cast %4 : vector<64x32xf32> to vector<1x64x32xf32>
    tpu.vector_store %arg4[%c0_4, %c0_5, %c0_6], %7 {strides = array<i32>} : memref<1x64x32xf32, #tpu.memory_space<vmem>>, vector<1x64x32xf32>,
    %8 = vector.extract_strided_slice %3 {offsets = [0, 32], sizes = [64, 32], strides = [1, 1]} : vector<64x64xf32> to vector<64x32xf32>
    %c0_7 = arith.constant 0 : index
    %c0_8 = arith.constant 0 : index
    %c0_9 = arith.constant 0 : index
    %9 = vector.load %arg5[%c0_7, %c0_8, %c0_9] : memref<1x64x32xf32, #tpu.memory_space<vmem>>, vector<1x64x32xf32>
    %10 = vector.shape_cast %9 : vector<1x64x32xf32> to vector<64x32xf32>
    %11 = vector.shape_cast %8 : vector<64x32xf32> to vector<1x64x32xf32>
    tpu.vector_store %arg5[%c0_7, %c0_8, %c0_9], %11 {strides = array<i32>} : memref<1x64x32xf32, #tpu.memory_space<vmem>>, vector<1x64x32xf32>,
    return
  }
  func.func @transform_0(%arg0: i32, %arg1: i32) -> (i32, i32, i32) {
    %c0_i32 = arith.constant 0 : i32
    %c0_i32_0 = arith.constant 0 : i32
    return %arg0, %arg1, %c0_i32 : i32, i32, i32
  }
  func.func @transform_1(%arg0: i32, %arg1: i32) -> (i32, i32) {
    %c0_i32 = arith.constant 0 : i32
    %c0_i32_0 = arith.constant 0 : i32
    %c0_i32_1 = arith.constant 0 : i32
    return %c0_i32, %c0_i32_0 : i32, i32
  }
  func.func @transform_2(%arg0: i32, %arg1: i32) -> (i32, i32, i32) {
    %c0_i32 = arith.constant 0 : i32
    %c0_i32_0 = arith.constant 0 : i32
    return %arg0, %arg1, %c0_i32 : i32, i32, i32
  }
  func.func @transform_3(%arg0: i32, %arg1: i32) -> (i32, i32, i32) {
    %c0_i32 = arith.constant 0 : i32
    %c0_i32_0 = arith.constant 0 : i32
    return %arg0, %arg1, %c0_i32 : i32, i32, i32
  }
}

module attributes {stable_mosaic.version = 11 : i64} {
  func.func @_ec_stats_kernel(%arg0: i32, %arg1: i32, %arg2: memref<1x64x32xf32, #tpu.memory_space<vmem>>, %arg3: memref<1x64x32xf32, #tpu.memory_space<vmem>>, %arg4: memref<1x64x8xi32, #tpu.memory_space<vmem>>, %arg5: memref<1x2x32xf32, #tpu.memory_space<vmem>>) attributes {dimension_semantics = [#tpu.dimension_semantics<parallel>, #tpu.dimension_semantics<arbitrary>], iteration_bounds = array<i64: 2, 1>, scalar_prefetch = 0 : i64, scratch_operands = 0 : i64, tpu.core_type = #tpu.core_type<tc>, window_params = [{transform_indices = @transform_0, window_bounds = array<i64: 1, 64, 32>}, {transform_indices = @transform_1, window_bounds = array<i64: 1, 64, 32>}, {transform_indices = @transform_2, window_bounds = array<i64: 1, 64, 8>}, {transform_indices = @transform_3, window_bounds = array<i64: 1, 2, 32>}]} {
    %c0_i32 = arith.constant 0 : i32
    %0 = arith.cmpi eq, %arg1, %c0_i32 : i32
    %1 = arith.extui %0 : i1 to i32
    %c0_i32_0 = arith.constant 0 : i32
    %2 = arith.cmpi ne, %1, %c0_i32_0 : i32
    scf.if %2 {
      %cst_25 = arith.constant 0.000000e+00 : f32
      %90 = vector.broadcast %cst_25 : f32 to vector<1x2x32xf32>
      %c0_26 = arith.constant 0 : index
      %c0_27 = arith.constant 0 : index
      %c0_28 = arith.constant 0 : index
      %91 = vector.load %arg5[%c0_26, %c0_27, %c0_28] : memref<1x2x32xf32, #tpu.memory_space<vmem>>, vector<1x2x32xf32>
      tpu.vector_store %arg5[%c0_26, %c0_27, %c0_28], %90 {strides = array<i32>} : memref<1x2x32xf32, #tpu.memory_space<vmem>>, vector<1x2x32xf32>,
    } else {
    }
    %c0 = arith.constant 0 : index
    %c0_1 = arith.constant 0 : index
    %c0_2 = arith.constant 0 : index
    %3 = vector.load %arg2[%c0, %c0_1, %c0_2] : memref<1x64x32xf32, #tpu.memory_space<vmem>>, vector<1x64x32xf32>
    %4 = vector.shape_cast %3 : vector<1x64x32xf32> to vector<64x32xf32>
    %c0_3 = arith.constant 0 : index
    %c0_4 = arith.constant 0 : index
    %c0_5 = arith.constant 0 : index
    %5 = vector.load %arg3[%c0_3, %c0_4, %c0_5] : memref<1x64x32xf32, #tpu.memory_space<vmem>>, vector<1x64x32xf32>
    %6 = vector.shape_cast %5 : vector<1x64x32xf32> to vector<64x32xf32>
    %c0_6 = arith.constant 0 : index
    %c0_7 = arith.constant 0 : index
    %c0_8 = arith.constant 0 : index
    %7 = vector.load %arg4[%c0_6, %c0_7, %c0_8] : memref<1x64x8xi32, #tpu.memory_space<vmem>>, vector<1x64x8xi32>
    %8 = vector.shape_cast %7 : vector<1x64x8xi32> to vector<64x8xi32>
    %9 = tpu.iota {dimensions = array<i32: 1>} : vector<64x64xi32>
    %cst = arith.constant 0.000000e+00 : f32
    %10 = vector.broadcast %cst : f32 to vector<64x64xf32>
    %11 = vector.extract_strided_slice %8 {offsets = [0, 0], sizes = [64, 1], strides = [1, 1]} : vector<64x8xi32> to vector<64x1xi32>
    %12 = vector.broadcast %11 : vector<64x1xi32> to vector<64x64xi32>
    %13 = arith.cmpi eq, %9, %12 : vector<64x64xi32>
    %14 = arith.extui %13 : vector<64x64xi1> to vector<64x64xi32>
    %15 = arith.sitofp %14 : vector<64x64xi32> to vector<64x64xf32>
    %16 = arith.addf %10, %15 : vector<64x64xf32>
    %17 = vector.extract_strided_slice %8 {offsets = [0, 1], sizes = [64, 1], strides = [1, 1]} : vector<64x8xi32> to vector<64x1xi32>
    %18 = vector.broadcast %17 : vector<64x1xi32> to vector<64x64xi32>
    %19 = arith.cmpi eq, %9, %18 : vector<64x64xi32>
    %20 = arith.extui %19 : vector<64x64xi1> to vector<64x64xi32>
    %21 = arith.sitofp %20 : vector<64x64xi32> to vector<64x64xf32>
    %22 = arith.addf %16, %21 : vector<64x64xf32>
    %23 = vector.extract_strided_slice %8 {offsets = [0, 2], sizes = [64, 1], strides = [1, 1]} : vector<64x8xi32> to vector<64x1xi32>
    %24 = vector.broadcast %23 : vector<64x1xi32> to vector<64x64xi32>
    %25 = arith.cmpi eq, %9, %24 : vector<64x64xi32>
    %26 = arith.extui %25 : vector<64x64xi1> to vector<64x64xi32>
    %27 = arith.sitofp %26 : vector<64x64xi32> to vector<64x64xf32>
    %28 = arith.addf %22, %27 : vector<64x64xf32>
    %29 = vector.extract_strided_slice %8 {offsets = [0, 3], sizes = [64, 1], strides = [1, 1]} : vector<64x8xi32> to vector<64x1xi32>
    %30 = vector.broadcast %29 : vector<64x1xi32> to vector<64x64xi32>
    %31 = arith.cmpi eq, %9, %30 : vector<64x64xi32>
    %32 = arith.extui %31 : vector<64x64xi1> to vector<64x64xi32>
    %33 = arith.sitofp %32 : vector<64x64xi32> to vector<64x64xf32>
    %34 = arith.addf %28, %33 : vector<64x64xf32>
    %35 = vector.extract_strided_slice %8 {offsets = [0, 4], sizes = [64, 1], strides = [1, 1]} : vector<64x8xi32> to vector<64x1xi32>
    %36 = vector.broadcast %35 : vector<64x1xi32> to vector<64x64xi32>
    %37 = arith.cmpi eq, %9, %36 : vector<64x64xi32>
    %38 = arith.extui %37 : vector<64x64xi1> to vector<64x64xi32>
    %39 = arith.sitofp %38 : vector<64x64xi32> to vector<64x64xf32>
    %40 = arith.addf %34, %39 : vector<64x64xf32>
    %41 = vector.extract_strided_slice %8 {offsets = [0, 5], sizes = [64, 1], strides = [1, 1]} : vector<64x8xi32> to vector<64x1xi32>
    %42 = vector.broadcast %41 : vector<64x1xi32> to vector<64x64xi32>
    %43 = arith.cmpi eq, %9, %42 : vector<64x64xi32>
    %44 = arith.extui %43 : vector<64x64xi1> to vector<64x64xi32>
    %45 = arith.sitofp %44 : vector<64x64xi32> to vector<64x64xf32>
    %46 = arith.addf %40, %45 : vector<64x64xf32>
    %47 = vector.extract_strided_slice %8 {offsets = [0, 6], sizes = [64, 1], strides = [1, 1]} : vector<64x8xi32> to vector<64x1xi32>
    %48 = vector.broadcast %47 : vector<64x1xi32> to vector<64x64xi32>
    %49 = arith.cmpi eq, %9, %48 : vector<64x64xi32>
    %50 = arith.extui %49 : vector<64x64xi1> to vector<64x64xi32>
    %51 = arith.sitofp %50 : vector<64x64xi32> to vector<64x64xf32>
    %52 = arith.addf %46, %51 : vector<64x64xf32>
    %53 = vector.extract_strided_slice %8 {offsets = [0, 7], sizes = [64, 1], strides = [1, 1]} : vector<64x8xi32> to vector<64x1xi32>
    %54 = vector.broadcast %53 : vector<64x1xi32> to vector<64x64xi32>
    %55 = arith.cmpi eq, %9, %54 : vector<64x64xi32>
    %56 = arith.extui %55 : vector<64x64xi1> to vector<64x64xi32>
    %57 = arith.sitofp %56 : vector<64x64xi32> to vector<64x64xf32>
    %58 = arith.addf %52, %57 : vector<64x64xf32>
    %cst_9 = arith.constant dense<0.000000e+00> : vector<64x32xf32>
    %59 = tpu.matmul %58, %4, %cst_9 {dimension_numbers = #tpu.dot_dimension_numbers<[1], [0], [0], [1], [0, 0, 1, 1], [], []>} : vector<64x64xf32>, vector<64x32xf32>, vector<64x32xf32> -> vector<64x32xf32>
    %cst_10 = arith.constant dense<0.000000e+00> : vector<64xf32>
    %60 = vector.multi_reduction <add>, %58, %cst_10 [0] : vector<64x64xf32> to vector<64xf32>
    %61 = vector.shape_cast %60 : vector<64xf32> to vector<1x64xf32>
    %62 = arith.mulf %4, %4 : vector<64x32xf32>
    %cst_11 = arith.constant dense<0.000000e+00> : vector<1x32xf32>
    %63 = tpu.matmul %61, %62, %cst_11 {dimension_numbers = #tpu.dot_dimension_numbers<[1], [0], [0], [1], [0, 0, 1, 1], [], []>} : vector<1x64xf32>, vector<64x32xf32>, vector<1x32xf32> -> vector<1x32xf32>
    %cst_12 = arith.constant dense<0.000000e+00> : vector<32xf32>
    %64 = vector.multi_reduction <add>, %59, %cst_12 [0] : vector<64x32xf32> to vector<32xf32>
    %65 = vector.shape_cast %64 : vector<32xf32> to vector<1x32xf32>
    %cst_13 = arith.constant dense<0.000000e+00> : vector<32xf32>
    %66 = vector.multi_reduction <add>, %6, %cst_13 [0] : vector<64x32xf32> to vector<32xf32>
    %67 = vector.shape_cast %66 : vector<32xf32> to vector<1x32xf32>
    %cst_14 = arith.constant 8.000000e+00 : f32
    %68 = vector.broadcast %cst_14 : f32 to vector<1x32xf32>
    %69 = arith.mulf %68, %67 : vector<1x32xf32>
    %70 = arith.addf %65, %69 : vector<1x32xf32>
    %71 = arith.mulf %6, %59 : vector<64x32xf32>
    %cst_15 = arith.constant dense<0.000000e+00> : vector<32xf32>
    %72 = vector.multi_reduction <add>, %71, %cst_15 [0] : vector<64x32xf32> to vector<32xf32>
    %73 = vector.shape_cast %72 : vector<32xf32> to vector<1x32xf32>
    %cst_16 = arith.constant 2.000000e+00 : f32
    %74 = vector.broadcast %cst_16 : f32 to vector<1x32xf32>
    %75 = arith.mulf %74, %73 : vector<1x32xf32>
    %76 = arith.addf %63, %75 : vector<1x32xf32>
    %77 = arith.mulf %6, %6 : vector<64x32xf32>
    %cst_17 = arith.constant dense<0.000000e+00> : vector<32xf32>
    %78 = vector.multi_reduction <add>, %77, %cst_17 [0] : vector<64x32xf32> to vector<32xf32>
    %79 = vector.shape_cast %78 : vector<32xf32> to vector<1x32xf32>
    %cst_18 = arith.constant 8.000000e+00 : f32
    %80 = vector.broadcast %cst_18 : f32 to vector<1x32xf32>
    %81 = arith.mulf %80, %79 : vector<1x32xf32>
    %82 = arith.addf %76, %81 : vector<1x32xf32>
    %c0_19 = arith.constant 0 : index
    %c0_20 = arith.constant 0 : index
    %c0_21 = arith.constant 0 : index
    %83 = vector.load %arg5[%c0_19, %c0_20, %c0_21] : memref<1x2x32xf32, #tpu.memory_space<vmem>>, vector<1x2x32xf32>
    %84 = vector.shape_cast %83 : vector<1x2x32xf32> to vector<2x32xf32>
    %85 = tpu.concatenate %70, %82 in 0 : vector<1x32xf32>, vector<1x32xf32> -> vector<2x32xf32>
    %86 = arith.addf %84, %85 : vector<2x32xf32>
    %c0_22 = arith.constant 0 : index
    %c0_23 = arith.constant 0 : index
    %c0_24 = arith.constant 0 : index
    %87 = vector.load %arg5[%c0_22, %c0_23, %c0_24] : memref<1x2x32xf32, #tpu.memory_space<vmem>>, vector<1x2x32xf32>
    %88 = vector.shape_cast %87 : vector<1x2x32xf32> to vector<2x32xf32>
    %89 = vector.shape_cast %86 : vector<2x32xf32> to vector<1x2x32xf32>
    tpu.vector_store %arg5[%c0_22, %c0_23, %c0_24], %89 {strides = array<i32>} : memref<1x2x32xf32, #tpu.memory_space<vmem>>, vector<1x2x32xf32>,
    return
  }
  func.func @transform_0(%arg0: i32, %arg1: i32) -> (i32, i32, i32) {
    %c0_i32 = arith.constant 0 : i32
    %c0_i32_0 = arith.constant 0 : i32
    %c0_i32_1 = arith.constant 0 : i32
    return %arg0, %c0_i32, %c0_i32_0 : i32, i32, i32
  }
  func.func @transform_1(%arg0: i32, %arg1: i32) -> (i32, i32, i32) {
    %c0_i32 = arith.constant 0 : i32
    %c0_i32_0 = arith.constant 0 : i32
    return %arg0, %arg1, %c0_i32 : i32, i32, i32
  }
  func.func @transform_2(%arg0: i32, %arg1: i32) -> (i32, i32, i32) {
    %c0_i32 = arith.constant 0 : i32
    %c0_i32_0 = arith.constant 0 : i32
    return %arg0, %arg1, %c0_i32 : i32, i32, i32
  }
  func.func @transform_3(%arg0: i32, %arg1: i32) -> (i32, i32, i32) {
    %c0_i32 = arith.constant 0 : i32
    %c0_i32_0 = arith.constant 0 : i32
    %c0_i32_1 = arith.constant 0 : i32
    return %arg0, %c0_i32, %c0_i32_0 : i32, i32, i32
  }
}

module attributes {stable_mosaic.version = 11 : i64} {
  func.func @_ec_out_kernel(%arg0: i32, %arg1: i32, %arg2: memref<1x64x32xf32, #tpu.memory_space<vmem>>, %arg3: memref<1x64x32xf32, #tpu.memory_space<vmem>>, %arg4: memref<1x64x8xi32, #tpu.memory_space<vmem>>, %arg5: memref<2x32xf32, #tpu.memory_space<vmem>>, %arg6: memref<32x32xf32, #tpu.memory_space<vmem>>, %arg7: memref<1x64x32xf32, #tpu.memory_space<vmem>>) attributes {dimension_semantics = [#tpu.dimension_semantics<parallel>, #tpu.dimension_semantics<parallel>], iteration_bounds = array<i64: 2, 1>, scalar_prefetch = 0 : i64, scratch_operands = 0 : i64, tpu.core_type = #tpu.core_type<tc>, window_params = [{transform_indices = @transform_0, window_bounds = array<i64: 1, 64, 32>}, {transform_indices = @transform_1, window_bounds = array<i64: 1, 64, 32>}, {transform_indices = @transform_2, window_bounds = array<i64: 1, 64, 8>}, {pipeline_mode = #tpu.pipeline_mode<synchronous>, transform_indices = @transform_3, window_bounds = array<i64: 2, 32>}, {pipeline_mode = #tpu.pipeline_mode<synchronous>, transform_indices = @transform_4, window_bounds = array<i64: 32, 32>}, {transform_indices = @transform_5, window_bounds = array<i64: 1, 64, 32>}]} {
    %c0 = arith.constant 0 : index
    %c0_0 = arith.constant 0 : index
    %c0_1 = arith.constant 0 : index
    %0 = vector.load %arg2[%c0, %c0_0, %c0_1] : memref<1x64x32xf32, #tpu.memory_space<vmem>>, vector<1x64x32xf32>
    %1 = vector.shape_cast %0 : vector<1x64x32xf32> to vector<64x32xf32>
    %c0_2 = arith.constant 0 : index
    %c0_3 = arith.constant 0 : index
    %c0_4 = arith.constant 0 : index
    %2 = vector.load %arg3[%c0_2, %c0_3, %c0_4] : memref<1x64x32xf32, #tpu.memory_space<vmem>>, vector<1x64x32xf32>
    %3 = vector.shape_cast %2 : vector<1x64x32xf32> to vector<64x32xf32>
    %c0_5 = arith.constant 0 : index
    %c0_6 = arith.constant 0 : index
    %c0_7 = arith.constant 0 : index
    %4 = vector.load %arg4[%c0_5, %c0_6, %c0_7] : memref<1x64x8xi32, #tpu.memory_space<vmem>>, vector<1x64x8xi32>
    %5 = vector.shape_cast %4 : vector<1x64x8xi32> to vector<64x8xi32>
    %c0_8 = arith.constant 0 : index
    %c0_9 = arith.constant 0 : index
    %6 = vector.load %arg5[%c0_8, %c0_9] : memref<2x32xf32, #tpu.memory_space<vmem>>, vector<1x32xf32>
    %c1 = arith.constant 1 : index
    %c0_10 = arith.constant 0 : index
    %7 = vector.load %arg5[%c1, %c0_10] : memref<2x32xf32, #tpu.memory_space<vmem>>, vector<1x32xf32>
    %8 = vector.broadcast %6 : vector<1x32xf32> to vector<64x32xf32>
    %9 = arith.mulf %1, %8 : vector<64x32xf32>
    %10 = vector.broadcast %6 : vector<1x32xf32> to vector<64x32xf32>
    %11 = arith.mulf %3, %10 : vector<64x32xf32>
    %12 = vector.broadcast %7 : vector<1x32xf32> to vector<64x32xf32>
    %13 = arith.addf %11, %12 : vector<64x32xf32>
    %14 = tpu.iota {dimensions = array<i32: 1>} : vector<64x64xi32>
    %cst = arith.constant 0xFF800000 : f32
    %15 = vector.broadcast %cst : f32 to vector<64x32xf32>
    %16 = vector.extract_strided_slice %5 {offsets = [0, 0], sizes = [64, 1], strides = [1, 1]} : vector<64x8xi32> to vector<64x1xi32>
    %17 = vector.broadcast %16 : vector<64x1xi32> to vector<64x64xi32>
    %18 = arith.cmpi eq, %14, %17 : vector<64x64xi32>
    %19 = arith.extui %18 : vector<64x64xi1> to vector<64x64xi32>
    %20 = arith.sitofp %19 : vector<64x64xi32> to vector<64x64xf32>
    %cst_11 = arith.constant dense<0.000000e+00> : vector<64x32xf32>
    %21 = tpu.matmul %20, %9, %cst_11 {dimension_numbers = #tpu.dot_dimension_numbers<[1], [0], [0], [1], [0, 0, 1, 1], [], []>} : vector<64x64xf32>, vector<64x32xf32>, vector<64x32xf32> -> vector<64x32xf32>
    %22 = arith.addf %21, %13 : vector<64x32xf32>
    %cst_12 = arith.constant 2.000000e-01 : f32
    %23 = vector.broadcast %cst_12 : f32 to vector<64x32xf32>
    %24 = arith.mulf %23, %22 : vector<64x32xf32>
    %25 = arith.maximumf %22, %24 : vector<64x32xf32>
    %26 = arith.maximumf %15, %25 : vector<64x32xf32>
    %27 = vector.extract_strided_slice %5 {offsets = [0, 1], sizes = [64, 1], strides = [1, 1]} : vector<64x8xi32> to vector<64x1xi32>
    %28 = vector.broadcast %27 : vector<64x1xi32> to vector<64x64xi32>
    %29 = arith.cmpi eq, %14, %28 : vector<64x64xi32>
    %30 = arith.extui %29 : vector<64x64xi1> to vector<64x64xi32>
    %31 = arith.sitofp %30 : vector<64x64xi32> to vector<64x64xf32>
    %cst_13 = arith.constant dense<0.000000e+00> : vector<64x32xf32>
    %32 = tpu.matmul %31, %9, %cst_13 {dimension_numbers = #tpu.dot_dimension_numbers<[1], [0], [0], [1], [0, 0, 1, 1], [], []>} : vector<64x64xf32>, vector<64x32xf32>, vector<64x32xf32> -> vector<64x32xf32>
    %33 = arith.addf %32, %13 : vector<64x32xf32>
    %cst_14 = arith.constant 2.000000e-01 : f32
    %34 = vector.broadcast %cst_14 : f32 to vector<64x32xf32>
    %35 = arith.mulf %34, %33 : vector<64x32xf32>
    %36 = arith.maximumf %33, %35 : vector<64x32xf32>
    %37 = arith.maximumf %26, %36 : vector<64x32xf32>
    %38 = vector.extract_strided_slice %5 {offsets = [0, 2], sizes = [64, 1], strides = [1, 1]} : vector<64x8xi32> to vector<64x1xi32>
    %39 = vector.broadcast %38 : vector<64x1xi32> to vector<64x64xi32>
    %40 = arith.cmpi eq, %14, %39 : vector<64x64xi32>
    %41 = arith.extui %40 : vector<64x64xi1> to vector<64x64xi32>
    %42 = arith.sitofp %41 : vector<64x64xi32> to vector<64x64xf32>
    %cst_15 = arith.constant dense<0.000000e+00> : vector<64x32xf32>
    %43 = tpu.matmul %42, %9, %cst_15 {dimension_numbers = #tpu.dot_dimension_numbers<[1], [0], [0], [1], [0, 0, 1, 1], [], []>} : vector<64x64xf32>, vector<64x32xf32>, vector<64x32xf32> -> vector<64x32xf32>
    %44 = arith.addf %43, %13 : vector<64x32xf32>
    %cst_16 = arith.constant 2.000000e-01 : f32
    %45 = vector.broadcast %cst_16 : f32 to vector<64x32xf32>
    %46 = arith.mulf %45, %44 : vector<64x32xf32>
    %47 = arith.maximumf %44, %46 : vector<64x32xf32>
    %48 = arith.maximumf %37, %47 : vector<64x32xf32>
    %49 = vector.extract_strided_slice %5 {offsets = [0, 3], sizes = [64, 1], strides = [1, 1]} : vector<64x8xi32> to vector<64x1xi32>
    %50 = vector.broadcast %49 : vector<64x1xi32> to vector<64x64xi32>
    %51 = arith.cmpi eq, %14, %50 : vector<64x64xi32>
    %52 = arith.extui %51 : vector<64x64xi1> to vector<64x64xi32>
    %53 = arith.sitofp %52 : vector<64x64xi32> to vector<64x64xf32>
    %cst_17 = arith.constant dense<0.000000e+00> : vector<64x32xf32>
    %54 = tpu.matmul %53, %9, %cst_17 {dimension_numbers = #tpu.dot_dimension_numbers<[1], [0], [0], [1], [0, 0, 1, 1], [], []>} : vector<64x64xf32>, vector<64x32xf32>, vector<64x32xf32> -> vector<64x32xf32>
    %55 = arith.addf %54, %13 : vector<64x32xf32>
    %cst_18 = arith.constant 2.000000e-01 : f32
    %56 = vector.broadcast %cst_18 : f32 to vector<64x32xf32>
    %57 = arith.mulf %56, %55 : vector<64x32xf32>
    %58 = arith.maximumf %55, %57 : vector<64x32xf32>
    %59 = arith.maximumf %48, %58 : vector<64x32xf32>
    %60 = vector.extract_strided_slice %5 {offsets = [0, 4], sizes = [64, 1], strides = [1, 1]} : vector<64x8xi32> to vector<64x1xi32>
    %61 = vector.broadcast %60 : vector<64x1xi32> to vector<64x64xi32>
    %62 = arith.cmpi eq, %14, %61 : vector<64x64xi32>
    %63 = arith.extui %62 : vector<64x64xi1> to vector<64x64xi32>
    %64 = arith.sitofp %63 : vector<64x64xi32> to vector<64x64xf32>
    %cst_19 = arith.constant dense<0.000000e+00> : vector<64x32xf32>
    %65 = tpu.matmul %64, %9, %cst_19 {dimension_numbers = #tpu.dot_dimension_numbers<[1], [0], [0], [1], [0, 0, 1, 1], [], []>} : vector<64x64xf32>, vector<64x32xf32>, vector<64x32xf32> -> vector<64x32xf32>
    %66 = arith.addf %65, %13 : vector<64x32xf32>
    %cst_20 = arith.constant 2.000000e-01 : f32
    %67 = vector.broadcast %cst_20 : f32 to vector<64x32xf32>
    %68 = arith.mulf %67, %66 : vector<64x32xf32>
    %69 = arith.maximumf %66, %68 : vector<64x32xf32>
    %70 = arith.maximumf %59, %69 : vector<64x32xf32>
    %71 = vector.extract_strided_slice %5 {offsets = [0, 5], sizes = [64, 1], strides = [1, 1]} : vector<64x8xi32> to vector<64x1xi32>
    %72 = vector.broadcast %71 : vector<64x1xi32> to vector<64x64xi32>
    %73 = arith.cmpi eq, %14, %72 : vector<64x64xi32>
    %74 = arith.extui %73 : vector<64x64xi1> to vector<64x64xi32>
    %75 = arith.sitofp %74 : vector<64x64xi32> to vector<64x64xf32>
    %cst_21 = arith.constant dense<0.000000e+00> : vector<64x32xf32>
    %76 = tpu.matmul %75, %9, %cst_21 {dimension_numbers = #tpu.dot_dimension_numbers<[1], [0], [0], [1], [0, 0, 1, 1], [], []>} : vector<64x64xf32>, vector<64x32xf32>, vector<64x32xf32> -> vector<64x32xf32>
    %77 = arith.addf %76, %13 : vector<64x32xf32>
    %cst_22 = arith.constant 2.000000e-01 : f32
    %78 = vector.broadcast %cst_22 : f32 to vector<64x32xf32>
    %79 = arith.mulf %78, %77 : vector<64x32xf32>
    %80 = arith.maximumf %77, %79 : vector<64x32xf32>
    %81 = arith.maximumf %70, %80 : vector<64x32xf32>
    %82 = vector.extract_strided_slice %5 {offsets = [0, 6], sizes = [64, 1], strides = [1, 1]} : vector<64x8xi32> to vector<64x1xi32>
    %83 = vector.broadcast %82 : vector<64x1xi32> to vector<64x64xi32>
    %84 = arith.cmpi eq, %14, %83 : vector<64x64xi32>
    %85 = arith.extui %84 : vector<64x64xi1> to vector<64x64xi32>
    %86 = arith.sitofp %85 : vector<64x64xi32> to vector<64x64xf32>
    %cst_23 = arith.constant dense<0.000000e+00> : vector<64x32xf32>
    %87 = tpu.matmul %86, %9, %cst_23 {dimension_numbers = #tpu.dot_dimension_numbers<[1], [0], [0], [1], [0, 0, 1, 1], [], []>} : vector<64x64xf32>, vector<64x32xf32>, vector<64x32xf32> -> vector<64x32xf32>
    %88 = arith.addf %87, %13 : vector<64x32xf32>
    %cst_24 = arith.constant 2.000000e-01 : f32
    %89 = vector.broadcast %cst_24 : f32 to vector<64x32xf32>
    %90 = arith.mulf %89, %88 : vector<64x32xf32>
    %91 = arith.maximumf %88, %90 : vector<64x32xf32>
    %92 = arith.maximumf %81, %91 : vector<64x32xf32>
    %93 = vector.extract_strided_slice %5 {offsets = [0, 7], sizes = [64, 1], strides = [1, 1]} : vector<64x8xi32> to vector<64x1xi32>
    %94 = vector.broadcast %93 : vector<64x1xi32> to vector<64x64xi32>
    %95 = arith.cmpi eq, %14, %94 : vector<64x64xi32>
    %96 = arith.extui %95 : vector<64x64xi1> to vector<64x64xi32>
    %97 = arith.sitofp %96 : vector<64x64xi32> to vector<64x64xf32>
    %cst_25 = arith.constant dense<0.000000e+00> : vector<64x32xf32>
    %98 = tpu.matmul %97, %9, %cst_25 {dimension_numbers = #tpu.dot_dimension_numbers<[1], [0], [0], [1], [0, 0, 1, 1], [], []>} : vector<64x64xf32>, vector<64x32xf32>, vector<64x32xf32> -> vector<64x32xf32>
    %99 = arith.addf %98, %13 : vector<64x32xf32>
    %cst_26 = arith.constant 2.000000e-01 : f32
    %100 = vector.broadcast %cst_26 : f32 to vector<64x32xf32>
    %101 = arith.mulf %100, %99 : vector<64x32xf32>
    %102 = arith.maximumf %99, %101 : vector<64x32xf32>
    %103 = arith.maximumf %92, %102 : vector<64x32xf32>
    %104 = arith.negf %103 : vector<64x32xf32>
    %105 = math.exp %104 : vector<64x32xf32>
    %cst_27 = arith.constant 1.000000e+00 : f32
    %106 = vector.broadcast %cst_27 : f32 to vector<64x32xf32>
    %107 = arith.addf %106, %105 : vector<64x32xf32>
    %108 = arith.divf %106, %107 : vector<64x32xf32>
    %c0_28 = arith.constant 0 : index
    %c0_29 = arith.constant 0 : index
    %109 = vector.load %arg6[%c0_28, %c0_29] : memref<32x32xf32, #tpu.memory_space<vmem>>, vector<32x32xf32>
    %cst_30 = arith.constant dense<0.000000e+00> : vector<64x32xf32>
    %110 = tpu.matmul %108, %109, %cst_30 {dimension_numbers = #tpu.dot_dimension_numbers<[1], [0], [0], [1], [0, 0, 1, 1], [], []>} : vector<64x32xf32>, vector<32x32xf32>, vector<64x32xf32> -> vector<64x32xf32>
    %c0_31 = arith.constant 0 : index
    %c0_32 = arith.constant 0 : index
    %c0_33 = arith.constant 0 : index
    %111 = vector.load %arg7[%c0_31, %c0_32, %c0_33] : memref<1x64x32xf32, #tpu.memory_space<vmem>>, vector<1x64x32xf32>
    %112 = vector.shape_cast %111 : vector<1x64x32xf32> to vector<64x32xf32>
    %113 = vector.shape_cast %110 : vector<64x32xf32> to vector<1x64x32xf32>
    tpu.vector_store %arg7[%c0_31, %c0_32, %c0_33], %113 {strides = array<i32>} : memref<1x64x32xf32, #tpu.memory_space<vmem>>, vector<1x64x32xf32>,
    return
  }
  func.func @transform_0(%arg0: i32, %arg1: i32) -> (i32, i32, i32) {
    %c0_i32 = arith.constant 0 : i32
    %c0_i32_0 = arith.constant 0 : i32
    %c0_i32_1 = arith.constant 0 : i32
    return %arg0, %c0_i32, %c0_i32_0 : i32, i32, i32
  }
  func.func @transform_1(%arg0: i32, %arg1: i32) -> (i32, i32, i32) {
    %c0_i32 = arith.constant 0 : i32
    %c0_i32_0 = arith.constant 0 : i32
    return %arg0, %arg1, %c0_i32 : i32, i32, i32
  }
  func.func @transform_2(%arg0: i32, %arg1: i32) -> (i32, i32, i32) {
    %c0_i32 = arith.constant 0 : i32
    %c0_i32_0 = arith.constant 0 : i32
    return %arg0, %arg1, %c0_i32 : i32, i32, i32
  }
  func.func @transform_3(%arg0: i32, %arg1: i32) -> (i32, i32) {
    %c0_i32 = arith.constant 0 : i32
    %c0_i32_0 = arith.constant 0 : i32
    %c0_i32_1 = arith.constant 0 : i32
    return %c0_i32, %c0_i32_0 : i32, i32
  }
  func.func @transform_4(%arg0: i32, %arg1: i32) -> (i32, i32) {
    %c0_i32 = arith.constant 0 : i32
    %c0_i32_0 = arith.constant 0 : i32
    %c0_i32_1 = arith.constant 0 : i32
    return %c0_i32, %c0_i32_0 : i32, i32
  }
  func.func @transform_5(%arg0: i32, %arg1: i32) -> (i32, i32, i32) {
    %c0_i32 = arith.constant 0 : i32
    %c0_i32_0 = arith.constant 0 : i32
    return %arg0, %arg1, %c0_i32 : i32, i32, i32
  }
}

module attributes {stable_mosaic.version = 11 : i64} {
  func.func @_bilinear_kernel(%arg0: i32, %arg1: i32, %arg2: memref<1x2x64x32xf32, #tpu.memory_space<vmem>>, %arg3: memref<2x64x32xf32, #tpu.memory_space<vmem>>, %arg4: memref<1xf32, #tpu.memory_space<smem>>, %arg5: memref<1x2x64xf32, #tpu.memory_space<vmem>>) attributes {dimension_semantics = [#tpu.dimension_semantics<parallel>, #tpu.dimension_semantics<parallel>], iteration_bounds = array<i64: 1, 2>, scalar_prefetch = 0 : i64, scratch_operands = 0 : i64, tpu.core_type = #tpu.core_type<tc>, window_params = [{transform_indices = @transform_0, window_bounds = array<i64: 1, 2, 64, 32>}, {transform_indices = @transform_1, window_bounds = array<i64: 2, 64, 32>}, {transform_indices = @transform_2, window_bounds = array<i64: 1>}, {transform_indices = @transform_3, window_bounds = array<i64: 1, 2, 64>}]} {
    %c0 = arith.constant 0 : index
    %c0_0 = arith.constant 0 : index
    %c0_1 = arith.constant 0 : index
    %c0_2 = arith.constant 0 : index
    %0 = vector.load %arg2[%c0, %c0_0, %c0_1, %c0_2] : memref<1x2x64x32xf32, #tpu.memory_space<vmem>>, vector<1x2x64x32xf32>
    %1 = vector.shape_cast %0 : vector<1x2x64x32xf32> to vector<2x64x32xf32>
    %c0_3 = arith.constant 0 : index
    %c0_4 = arith.constant 0 : index
    %c0_5 = arith.constant 0 : index
    %2 = vector.load %arg3[%c0_3, %c0_4, %c0_5] : memref<2x64x32xf32, #tpu.memory_space<vmem>>, vector<2x64x32xf32>
    %3 = arith.mulf %1, %2 : vector<2x64x32xf32>
    %cst = arith.constant dense<0.000000e+00> : vector<2x64xf32>
    %4 = vector.multi_reduction <add>, %3, %cst [2] : vector<2x64x32xf32> to vector<2x64xf32>
    %c0_6 = arith.constant 0 : index
    %5 = memref.load %arg4[%c0_6] : memref<1xf32, #tpu.memory_space<smem>>
    %6 = vector.broadcast %5 : f32 to vector<2x64xf32>
    %7 = arith.addf %4, %6 : vector<2x64xf32>
    %c0_7 = arith.constant 0 : index
    %c0_8 = arith.constant 0 : index
    %c0_9 = arith.constant 0 : index
    %8 = vector.load %arg5[%c0_7, %c0_8, %c0_9] : memref<1x2x64xf32, #tpu.memory_space<vmem>>, vector<1x2x64xf32>
    %9 = vector.shape_cast %8 : vector<1x2x64xf32> to vector<2x64xf32>
    %10 = vector.shape_cast %7 : vector<2x64xf32> to vector<1x2x64xf32>
    tpu.vector_store %arg5[%c0_7, %c0_8, %c0_9], %10 {strides = array<i32>} : memref<1x2x64xf32, #tpu.memory_space<vmem>>, vector<1x2x64xf32>,
    return
  }
  func.func @transform_0(%arg0: i32, %arg1: i32) -> (i32, i32, i32, i32) {
    %c0_i32 = arith.constant 0 : i32
    %c0_i32_0 = arith.constant 0 : i32
    %c0_i32_1 = arith.constant 0 : i32
    return %arg1, %c0_i32, %arg0, %c0_i32_0 : i32, i32, i32, i32
  }
  func.func @transform_1(%arg0: i32, %arg1: i32) -> (i32, i32, i32) {
    %c0_i32 = arith.constant 0 : i32
    %c0_i32_0 = arith.constant 0 : i32
    %c0_i32_1 = arith.constant 0 : i32
    return %c0_i32, %arg0, %c0_i32_0 : i32, i32, i32
  }
  func.func @transform_2(%arg0: i32, %arg1: i32) -> i32 {
    %c0_i32 = arith.constant 0 : i32
    %c0_i32_0 = arith.constant 0 : i32
    return %c0_i32 : i32
  }
  func.func @transform_3(%arg0: i32, %arg1: i32) -> (i32, i32, i32) {
    %c0_i32 = arith.constant 0 : i32
    %c0_i32_0 = arith.constant 0 : i32
    return %arg1, %c0_i32, %arg0 : i32, i32, i32
  }
}

</mosaic_0001>

<llo_original>
// kernel: index_select_forward.8
$region0: #{index_select_forward.8}
  #allocation0 [shape = 'u32[]', space=smem, size = 0x4, offset = 0x4, fixed_abs, tag = 'smem constant byte address 0x4 - core index']
  #allocation1 [shape = 'u32[144,128]{1,0:T(1,128)}', space=vmem, size = 0x12000, scoped, tag = 'internal scratch']
  %s0 = inlined_call_operand.hbm [shape: f32[2,128,32], index: 0, kind: input, shape index: {}]
  %s1 = inlined_call_operand.hbm [shape: f32[32,32], index: 1, kind: input, shape index: {}]
  %s2 = inlined_call_operand.hbm [shape: f32[2,2,32], index: 2, kind: input, shape index: {}]
  %s3 = inlined_call_operand.hbm [shape: f32[2,128,32], index: 3, kind: output, shape index: {}]
  %s4 = sld [smem:[#allocation0]]
  $region57: #{index_select_forward.8} parent=0
    _
  %s6 = ssub.s32 1, %s4
  %s7 = scalar_select 0, %s6, %s4
  $region1: #{index_select_forward.8} parent=0
    #allocation2 [shape = 'u8[131072]{0}', space=vmem, size = 0x20000, scoped, tag = 'input window, operand 0']
    #allocation3 [shape = 's32[2]{0}', space=sflag, size = 0x8, scoped, tag = 'scoped memory for index_select_forward.8']
    #allocation4 [shape = 's32[2]{0}', space=sflag, size = 0x8, scoped, tag = 'scoped memory for index_select_forward.8']
    #allocation5 [shape = 'u8[16384]{0}', space=vmem, size = 0x4000, scoped, tag = 'input window, operand 1, single buffered']
    #allocation6 [shape = 's32[1]{0}', space=sflag, size = 0x4, scoped, tag = 'scoped memory for index_select_forward.8']
    #allocation7 [shape = 'u8[2048]{0}', space=vmem, size = 0x800, scoped, tag = 'input window, operand 2']
    #allocation8 [shape = 'u8[131072]{0}', space=vmem, size = 0x20000, scoped, tag = 'output window, operand 0']
    %8 = vsyncpa [#allocation3], 0
    %s9 = scalar_lea.sflag [#allocation3], 1
    %10 = vsyncpa %s9, 0
    %11 = vsyncpa [#allocation6], 0
    %12 = vsyncpa [#allocation4], 0
    %s13 = scalar_lea.sflag [#allocation4], 1
    %14 = vsyncpa %s13, 0
    loop: start=0, step=1, limit=4
    $region2: #{index_select_forward.8} parent=1 // loop_pre_header
      _
    $region3: #{index_select_forward.8} parent=1 // loop_header
      %s16 = sphi 0, %s20
      %p17 = scmp.ge.s32.totalorder %s16, 4
      %s23 = sphi 0, %s35
      %s24 = sphi 0, %s31
      %s25 = sphi 0, %s23
      %s26 = sphi 0, %s24
      %s27 = sphi 0, %s25
      %s28 = sphi 0, %s26
      %s40 = sphi 0, %s42
      %s43 = sphi 0, %s40
      %s44 = sphi 0, %s43
      %s60 = sphi 0, %s44
      %s64 = sphi 0, %s64
      %s66 = sphi 0, %s64
      %s67 = sphi 0, %s66
      %s81 = sphi 0, %s67
      %s87 = sphi 0, %s89
      %s90 = sphi 0, %s87
      %s91 = sphi 0, %s90
      %s107 = sphi 0, %s91
      %s115 = sphi 0, %s117
      %s118 = sphi 0, %s115
      %s119 = sphi 0, %s118
      %s135 = sphi 0, %s119
    $region4: #{index_select_forward.8} parent=1 // loop_header_branch
      %19 = sbr.rel (%p17) target = $region8
    $region5: #{index_select_forward.8} parent=1 // loop_body
      %s21 = ssub.s32 %s16, 1
      %s22 = ssub.s32 %s16, 2
      %s29 = sadd.s32 1, %s24
      %p30 = scmp.ge.s32.totalorder %s29, 1
      %s31 = scalar_select %p30, 0, %s29
      %s32 = sadd.s32 1, %s23
      %s33 = scalar_select %p30, %s32, %s23
      %p34 = scmp.ge.s32.totalorder %s33, 2
      %s35 = scalar_select %p34, 0, %s33
      %s36 = ssub.s32 %s23, %s35
      %s37 = ssub.s32 %s24, %s31
      %s38 = sor.u32 %s36, %s37
      %p39 = scmp.eq.s32.totalorder %s38, 0
      %s41 = sadd.s32 %s40, 1
      %s42 = scalar_select %p39, %s40, %s41
      %p45 = pneg %p39
      %p46 = scmp.eq.s32.totalorder %s16, 1
      %p47 = por %p45, %p46
      %p48 = scmp.ne.s32.totalorder %s40, %s43
      %p49 = scmp.eq.s32.totalorder %s16, 0
      %p50 = por %p48, %p49
      %p51 = scmp.ne.s32.totalorder %s40, %s43
      %p52 = scmp.eq.s32.totalorder %s21, 1
      %p53 = por %p51, %p52
      %p54 = scmp.ne.s32.totalorder %s43, %s44
      %p55 = scmp.eq.s32.totalorder %s21, 0
      %p56 = por %p54, %p55
      %p57 = scmp.ne.s32.totalorder %s43, %s44
      %p58 = scmp.eq.s32.totalorder %s22, 1
      %p59 = por %p57, %p58
      %p61 = scmp.ne.s32.totalorder %s44, %s60
      %p62 = scmp.eq.s32.totalorder %s22, 0
      %p63 = por %p61, %p62
      %s65 = sadd.s32 %s64, 1
      %p68 = scmp.eq.s32.totalorder %s16, 1
      %p69 = scmp.ne.s32.totalorder %s64, %s66
      %p70 = scmp.eq.s32.totalorder %s16, 0
      %p71 = por %p69, %p70
      %p72 = scmp.ne.s32.totalorder %s64, %s66
      %p73 = scmp.eq.s32.totalorder %s21, 1
      %p74 = por %p72, %p73
      %p75 = scmp.ne.s32.totalorder %s66, %s67
      %p76 = scmp.eq.s32.totalorder %s21, 0
      %p77 = por %p75, %p76
      %p78 = scmp.ne.s32.totalorder %s66, %s67
      %p79 = scmp.eq.s32.totalorder %s22, 1
      %p80 = por %p78, %p79
      %p82 = scmp.ne.s32.totalorder %s67, %s81
      %p83 = scmp.eq.s32.totalorder %s22, 0
      %p84 = por %p82, %p83
      %s85 = ssub.s32 %s23, %s35
      %p86 = scmp.eq.s32.totalorder %s85, 0
      %s88 = sadd.s32 %s87, 1
      %s89 = scalar_select %p86, %s87, %s88
      %p92 = pneg %p86
      %p93 = scmp.eq.s32.totalorder %s16, 1
      %p94 = por %p92, %p93
      %p95 = scmp.ne.s32.totalorder %s87, %s90
      %p96 = scmp.eq.s32.totalorder %s16, 0
      %p97 = por %p95, %p96
      %p98 = scmp.ne.s32.totalorder %s87, %s90
      %p99 = scmp.eq.s32.totalorder %s21, 1
      %p100 = por %p98, %p99
      %p101 = scmp.ne.s32.totalorder %s90, %s91
      %p102 = scmp.eq.s32.totalorder %s21, 0
      %p103 = por %p101, %p102
      %p104 = scmp.ne.s32.totalorder %s90, %s91
      %p105 = scmp.eq.s32.totalorder %s22, 1
      %p106 = por %p104, %p105
      %p108 = scmp.ne.s32.totalorder %s91, %s107
      %p109 = scmp.eq.s32.totalorder %s22, 0
      %p110 = por %p108, %p109
      %s111 = ssub.s32 %s23, %s35
      %s112 = ssub.s32 %s24, %s31
      %s113 = sor.u32 %s111, %s112
      %p114 = scmp.eq.s32.totalorder %s113, 0
      %s116 = sadd.s32 %s115, 1
      %s117 = scalar_select %p114, %s115, %s116
      %p120 = pneg %p114
      %p121 = scmp.eq.s32.totalorder %s16, 1
      %p122 = por %p120, %p121
      %p123 = scmp.ne.s32.totalorder %s115, %s118
      %p124 = scmp.eq.s32.totalorder %s16, 0
      %p125 = por %p123, %p124
      %p126 = scmp.ne.s32.totalorder %s115, %s118
      %p127 = scmp.eq.s32.totalorder %s21, 1
      %p128 = por %p126, %p127
      %p129 = scmp.ne.s32.totalorder %s118, %s119
      %p130 = scmp.eq.s32.totalorder %s21, 0
      %p131 = por %p129, %p130
      %p132 = scmp.ne.s32.totalorder %s118, %s119
      %p133 = scmp.eq.s32.totalorder %s22, 1
      %p134 = por %p132, %p133
      %p136 = scmp.ne.s32.totalorder %s119, %s135
      %p137 = scmp.eq.s32.totalorder %s22, 0
      %p138 = por %p136, %p137
      %p139 = scmp.le.s32.totalorder 1, %s16
      %p140 = scmp.lt.s32.totalorder %s16, 3
      %p141 = pnand %p139, %p140
      %p142 = pneg %p141
      // Predicated region
      $region9: #{index_select_forward.8} parent=5 // pred_check
        _
      $region10: #{index_select_forward.8} parent=5 // pred_check_branch
        %144 = sbr.rel (%p141) target = $region12
      $region11: #{index_select_forward.8} parent=5 // pred_region
        %s145 = ssub.s32 %s16, 1
        // Predicated region
        $region13: #{index_select_forward.8} parent=11 // pred_check
          %p146 = pneg %p77
        $region14: #{index_select_forward.8} parent=11 // pred_check_branch
          %148 = sbr.rel (%p146) target = $region16
        $region15: #{index_select_forward.8} parent=11 // pred_region
          %s150 = ssub.s32 512, 512
          %151 = vsyncadd [#allocation6], %s150
          %s152 = sshll.u32 [#allocation5], 4
          %s153 = int_to_ptr.vmem [resolvable:$true] %s152
          %158 = dma.hbm_to_vmem [thread:$0]  %s1, 512, %s153, [#allocation6], 128, 128, 8
        $region16: #{index_select_forward.8} parent=11 // pred_fallthru
          _
      $region12: #{index_select_forward.8} parent=5 // pred_fallthru
        _
      %p159 = scmp.lt.s32.totalorder %s16, 2
      // Predicated region
      $region17: #{index_select_forward.8} parent=5 // pred_check
        %p160 = pneg %p159
      $region18: #{index_select_forward.8} parent=5 // pred_check_branch
        %162 = sbr.rel (%p160) target = $region20
      $region19: #{index_select_forward.8} parent=5 // pred_region
        // Predicated region
        $region21: #{index_select_forward.8} parent=19 // pred_check
          %p163 = pneg %p50
        $region22: #{index_select_forward.8} parent=19 // pred_check_branch
          %165 = sbr.rel (%p163) target = $region24
        $region23: #{index_select_forward.8} parent=19 // pred_region
          %s166 = sand.u32 %s16, 1
          %s167 = scalar_lea.sflag [#allocation3], %s166
          %s168 = sand.u32 %s40, 1
          %s169 = smul.addr %s168, 128
          %s170 = scalar_lea.vmem [#allocation2], %s169
          %s171 = smul.u32 16, %s24
          %s173 = ssub.s32 2048, 2048
          %174 = vsyncadd %s167, %s173
          %s175 = smul.addr %s23, 16
          %s176 = sadd.s32 %s171, %s175
          %s177 = smul.addr %s176, 128
          %s178 = scalar_lea.hbm %s0, %s177
          %s179 = sshll.u32 %s170, 4
          %s180 = int_to_ptr.vmem [resolvable:$true] %s179
          %185 = dma.hbm_to_vmem [thread:$0]  %s178, 2048, %s180, %s167, 128, 128, 8
        $region24: #{index_select_forward.8} parent=19 // pred_fallthru
          _
        // Predicated region
        $region25: #{index_select_forward.8} parent=19 // pred_check
          %p186 = pneg %p97
        $region26: #{index_select_forward.8} parent=19 // pred_check_branch
          %188 = sbr.rel (%p186) target = $region28
        $region27: #{index_select_forward.8} parent=19 // pred_region
          %s189 = sand.u32 %s16, 1
          %s190 = scalar_lea.sflag [#allocation3], %s189
          %s191 = sand.u32 %s87, 1
          %s192 = smul.addr %s191, 2
          %s193 = scalar_lea.vmem [#allocation7], %s192
          %s195 = ssub.s32 32, 32
          %196 = vsyncadd %s190, %s195
          %s197 = smul.addr %s23, 32
          %s198 = scalar_lea.hbm %s2, %s197
          %s200 = sshll.u32 %s193, 4
          %s201 = int_to_ptr.vmem [resolvable:$true] %s200
          %203 = dma.hbm_to_vmem [thread:$0]  %s198, 32, %s201, %s190
        $region28: #{index_select_forward.8} parent=19 // pred_fallthru
          _
      $region20: #{index_select_forward.8} parent=5 // pred_fallthru
        _
      %p204 = scmp.le.s32.totalorder 1, %s16
      %p205 = scmp.lt.s32.totalorder %s16, 3
      %p206 = pnand %p204, %p205
      %p207 = pneg %p206
      // Predicated region
      $region29: #{index_select_forward.8} parent=5 // pred_check
        _
      $region30: #{index_select_forward.8} parent=5 // pred_check_branch
        %209 = sbr.rel (%p206) target = $region32
      $region31: #{index_select_forward.8} parent=5 // pred_region
        %s210 = ssub.s32 %s16, 1
        %s211 = sand.u32 %s21, 1
        %s212 = scalar_lea.sflag [#allocation3], %s211
        %s213 = sand.u32 %s43, 1
        %s214 = smul.addr %s213, 128
        %s215 = scalar_lea.vmem [#allocation2], %s214
        // Predicated region
        $region33: #{index_select_forward.8} parent=31 // pred_check
          %p216 = pneg %p56
        $region34: #{index_select_forward.8} parent=31 // pred_check_branch
          %218 = sbr.rel (%p216) target = $region36
        $region35: #{index_select_forward.8} parent=31 // pred_region
          %219 = dma.done %s212, 2048
        $region36: #{index_select_forward.8} parent=31 // pred_fallthru
          _
        // Predicated region
        $region37: #{index_select_forward.8} parent=31 // pred_check
          %p220 = pneg %p77
        $region38: #{index_select_forward.8} parent=31 // pred_check_branch
          %222 = sbr.rel (%p220) target = $region40
        $region39: #{index_select_forward.8} parent=31 // pred_region
          %223 = dma.done [#allocation6], 512
        $region40: #{index_select_forward.8} parent=31 // pred_fallthru
          _
        %s224 = sand.u32 %s21, 1
        %s225 = scalar_lea.sflag [#allocation3], %s224
        %s226 = sand.u32 %s90, 1
        %s227 = smul.addr %s226, 2
        %s228 = scalar_lea.vmem [#allocation7], %s227
        // Predicated region
        $region41: #{index_select_forward.8} parent=31 // pred_check
          %p229 = pneg %p103
        $region42: #{index_select_forward.8} parent=31 // pred_check_branch
          %231 = sbr.rel (%p229) target = $region44
        $region43: #{index_select_forward.8} parent=31 // pred_region
          %232 = dma.done %s225, 32
        $region44: #{index_select_forward.8} parent=31 // pred_fallthru
          _
        %s233 = sand.u32 %s21, 1
        %s234 = scalar_lea.sflag [#allocation3], %s233
        %s235 = sand.u32 %s43, 1
        %s236 = smul.addr %s235, 128
        %s237 = scalar_lea.vmem [#allocation2], %s236
        %p238 = pneg %p56
        %p239 = pneg %p53
        %p240 = pneg %p77
        %p241 = pneg %p74
        %s242 = sand.u32 %s21, 1
        %s243 = scalar_lea.sflag [#allocation3], %s242
        %s244 = sand.u32 %s90, 1
        %s245 = smul.addr %s244, 2
        %s246 = scalar_lea.vmem [#allocation7], %s245
        %p247 = pneg %p103
        %p248 = pneg %p100
        %p249 = pneg %p131
        %p250 = pneg %p128
        %s251 = sand.u32 %s118, 1
        %s252 = scalar_lea.sflag [#allocation4], %s251
        %s253 = sand.u32 %s118, 1
        %s254 = smul.addr %s253, 128
        %s255 = scalar_lea.vmem [#allocation8], %s254
        %s256 = smul.u32 16, %s26
        %s257 = smul.u32 16, %s26
        %v258 = vld [vmem:[%s215] sm:$0xff]
        %v259 = vld [vmem:[%s215 + $0x8] sm:$0xff]
        %v260 = vld [vmem:[%s215 + $0x10] sm:$0xff]
        %v261 = vld [vmem:[%s215 + $0x18] sm:$0xff]
        %v262 = vld [vmem:[%s215 + $0x20] sm:$0xff]
        %v263 = vld [vmem:[%s215 + $0x28] sm:$0xff]
        %v264 = vld [vmem:[%s215 + $0x30] sm:$0xff]
        %v265 = vld [vmem:[%s215 + $0x38] sm:$0xff]
        %v266 = vld [vmem:[%s215 + $0x40] sm:$0xff]
        %v267 = vld [vmem:[%s215 + $0x48] sm:$0xff]
        %v268 = vld [vmem:[%s215 + $0x50] sm:$0xff]
        %v269 = vld [vmem:[%s215 + $0x58] sm:$0xff]
        %v270 = vld [vmem:[%s215 + $0x60] sm:$0xff]
        %v271 = vld [vmem:[%s215 + $0x68] sm:$0xff]
        %v272 = vld [vmem:[%s215 + $0x70] sm:$0xff]
        %v273 = vld [vmem:[%s215 + $0x78] sm:$0xff]
        %v274 = vld [vmem:[#allocation5] sm:$0xff]
        %v275 = vld [vmem:[#allocation5 + $0x8] sm:$0xff]
        %v276 = vld [vmem:[#allocation5 + $0x10] sm:$0xff]
        %v277 = vld [vmem:[#allocation5 + $0x18] sm:$0xff]
        %vm278 = vcmask 261120
        %v280 = vsel %vm278, %v258, 0
        %v283 = vsel %vm278, %v259, 0
        %v286 = vsel %vm278, %v260, 0
        %v289 = vsel %vm278, %v261, 0
        %v292 = vsel %vm278, %v262, 0
        %v295 = vsel %vm278, %v263, 0
        %v298 = vsel %vm278, %v264, 0
        %v301 = vsel %vm278, %v265, 0
        %v304 = vsel %vm278, %v266, 0
        %v307 = vsel %vm278, %v267, 0
        %v310 = vsel %vm278, %v268, 0
        %v313 = vsel %vm278, %v269, 0
        %v316 = vsel %vm278, %v270, 0
        %v319 = vsel %vm278, %v271, 0
        %v322 = vsel %vm278, %v272, 0
        %v325 = vsel %vm278, %v273, 0
        %327 = vmatprep.subr.mxu0 0.0
        %328 = vmatpush1.msra.mxu0 %v274
        %329 = vmatprep.subr.mxu0 0.0
        %330 = vmatpush1.msra.mxu0 %v275
        %331 = vmatprep.subr.mxu0 0.0
        %332 = vmatpush1.msra.mxu0 %v276
        %333 = vmatprep.subr.mxu0 0.0
        %334 = vmatpush1.msra.mxu0 %v277
        %335 = vmatprep.subr.mxu0 0.0
        %336 = vmatpush1.msra.mxu0 0.0
        %337 = vmatprep.subr.mxu0 0.0
        %338 = vmatpush1.msra.mxu0 0.0
        %339 = vmatprep.subr.mxu0 0.0
        %340 = vmatpush1.msra.mxu0 0.0
        %341 = vmatprep.subr.mxu0 0.0
        %342 = vmatpush1.msra.mxu0 0.0
        %343 = vmatprep.subr.mxu0 0.0
        %344 = vmatpush1.msra.mxu0 0.0
        %345 = vmatprep.subr.mxu0 0.0
        %346 = vmatpush1.msra.mxu0 0.0
        %347 = vmatprep.subr.mxu0 0.0
        %348 = vmatpush1.msra.mxu0 0.0
        %349 = vmatprep.subr.mxu0 0.0
        %350 = vmatpush1.msra.mxu0 0.0
        %351 = vmatprep.subr.mxu0 0.0
        %352 = vmatpush1.msra.mxu0 0.0
        %353 = vmatprep.subr.mxu0 0.0
        %354 = vmatpush1.msra.mxu0 0.0
        %355 = vmatprep.subr.mxu0 0.0
        %356 = vmatpush1.msra.mxu0 0.0
        %357 = vmatprep.subr.mxu0 0.0
        %358 = vmatpush1.msra.mxu0 0.0
        %359 = vmatprep.subr.mxu0 0.0
        %360 = vmatpush1.msra.mxu0 0.0
        %361 = vmatprep.subr.mxu0 0.0
        %362 = vmatpush1.msra.mxu0 0.0
        %363 = vmatprep.subr.mxu0 0.0
        %364 = vmatpush1.msra.mxu0 0.0
        %365 = vmatprep.subr.mxu0 0.0
        %366 = vmatpush1.msra.mxu0 0.0
        %367 = vmatprep.subr.mxu0 0.0
        %368 = vmatpush1.msra.mxu0 0.0
        %369 = vmatprep.subr.mxu0 0.0
        %370 = vmatpush1.msra.mxu0 0.0
        %371 = vmatprep.subr.mxu0 0.0
        %372 = vmatpush1.msra.mxu0 0.0
        %373 = vmatprep.subr.mxu0 0.0
        %374 = vmatpush1.msra.mxu0 0.0
        %375 = vmatprep.subr.mxu0 0.0
        %376 = vmatpush1.msra.mxu0 0.0
        %377 = vmatprep.subr.mxu0 0.0
        %378 = vmatpush1.msra.mxu0 0.0
        %379 = vmatprep.subr.mxu0 0.0
        %380 = vmatpush1.msra.mxu0 0.0
        %381 = vmatprep.subr.mxu0 0.0
        %382 = vmatpush1.msra.mxu0 0.0
        %383 = vmatprep.subr.mxu0 0.0
        %384 = vmatpush1.msra.mxu0 0.0
        %385 = vmatprep.subr.mxu0 0.0
        %386 = vmatpush1.msra.mxu0 0.0
        %387 = vmatprep.subr.mxu0 0.0
        %388 = vmatpush1.msra.mxu0 0.0
        %389 = vmatprep.subr.mxu0 0.0
        %390 = vmatpush1.msra.mxu0 0.0
        %391 = vmatprep.mubr.f32.mxu0 0.0
        %392 = vmatmul.mubr.f32.gmra.mrb[0].mxu0 %v280
        %v393 = vpop.f32.mrb[0].mxu0
        %v394 = vadd.f32 0.0, %v393
        %v395 = vpop.f32.mrb[0].mxu0
        %396 = vmatprep.mubr.f32.mxu0 0.0
        %397 = vmatmul.mubr.f32.gmra.mrb[0].mxu0 %v283
        %v398 = vpop.f32.mrb[0].mxu0
        %v399 = vadd.f32 0.0, %v398
        %v400 = vpop.f32.mrb[0].mxu0
        %401 = vmatprep.mubr.f32.mxu0 0.0
        %402 = vmatmul.mubr.f32.gmra.mrb[0].mxu0 %v286
        %v403 = vpop.f32.mrb[0].mxu0
        %v404 = vadd.f32 0.0, %v403
        %v405 = vpop.f32.mrb[0].mxu0
        %406 = vmatprep.mubr.f32.mxu0 0.0
        %407 = vmatmul.mubr.f32.gmra.mrb[0].mxu0 %v289
        %v408 = vpop.f32.mrb[0].mxu0
        %v409 = vadd.f32 0.0, %v408
        %v410 = vpop.f32.mrb[0].mxu0
        %411 = vmatprep.mubr.f32.mxu0 0.0
        %412 = vmatmul.mubr.f32.gmra.mrb[0].mxu0 %v292
        %v413 = vpop.f32.mrb[0].mxu0
        %v414 = vadd.f32 0.0, %v413
        %v415 = vpop.f32.mrb[0].mxu0
        %416 = vmatprep.mubr.f32.mxu0 0.0
        %417 = vmatmul.mubr.f32.gmra.mrb[0].mxu0 %v295
        %v418 = vpop.f32.mrb[0].mxu0
        %v419 = vadd.f32 0.0, %v418
        %v420 = vpop.f32.mrb[0].mxu0
        %421 = vmatprep.mubr.f32.mxu0 0.0
        %422 = vmatmul.mubr.f32.gmra.mrb[0].mxu0 %v298
        %v423 = vpop.f32.mrb[0].mxu0
        %v424 = vadd.f32 0.0, %v423
        %v425 = vpop.f32.mrb[0].mxu0
        %426 = vmatprep.mubr.f32.mxu0 0.0
        %427 = vmatmul.mubr.f32.gmra.mrb[0].mxu0 %v301
        %v428 = vpop.f32.mrb[0].mxu0
        %v429 = vadd.f32 0.0, %v428
        %v430 = vpop.f32.mrb[0].mxu0
        %431 = vmatprep.mubr.f32.mxu0 0.0
        %432 = vmatmul.mubr.f32.gmra.mrb[0].mxu0 %v304
        %v433 = vpop.f32.mrb[0].mxu0
        %v434 = vadd.f32 0.0, %v433
        %v435 = vpop.f32.mrb[0].mxu0
        %436 = vmatprep.mubr.f32.mxu0 0.0
        %437 = vmatmul.mubr.f32.gmra.mrb[0].mxu0 %v307
        %v438 = vpop.f32.mrb[0].mxu0
        %v439 = vadd.f32 0.0, %v438
        %v440 = vpop.f32.mrb[0].mxu0
        %441 = vmatprep.mubr.f32.mxu0 0.0
        %442 = vmatmul.mubr.f32.gmra.mrb[0].mxu0 %v310
        %v443 = vpop.f32.mrb[0].mxu0
        %v444 = vadd.f32 0.0, %v443
        %v445 = vpop.f32.mrb[0].mxu0
        %446 = vmatprep.mubr.f32.mxu0 0.0
        %447 = vmatmul.mubr.f32.gmra.mrb[0].mxu0 %v313
        %v448 = vpop.f32.mrb[0].mxu0
        %v449 = vadd.f32 0.0, %v448
        %v450 = vpop.f32.mrb[0].mxu0
        %451 = vmatprep.mubr.f32.mxu0 0.0
        %452 = vmatmul.mubr.f32.gmra.mrb[0].mxu0 %v316
        %v453 = vpop.f32.mrb[0].mxu0
        %v454 = vadd.f32 0.0, %v453
        %v455 = vpop.f32.mrb[0].mxu0
        %456 = vmatprep.mubr.f32.mxu0 0.0
        %457 = vmatmul.mubr.f32.gmra.mrb[0].mxu0 %v319
        %v458 = vpop.f32.mrb[0].mxu0
        %v459 = vadd.f32 0.0, %v458
        %v460 = vpop.f32.mrb[0].mxu0
        %461 = vmatprep.mubr.f32.mxu0 0.0
        %462 = vmatmul.mubr.f32.gmra.mrb[0].mxu0 %v322
        %v463 = vpop.f32.mrb[0].mxu0
        %v464 = vadd.f32 0.0, %v463
        %v465 = vpop.f32.mrb[0].mxu0
        %466 = vmatprep.mubr.f32.mxu0 0.0
        %467 = vmatmul.mubr.f32.gmra.mrb[0].mxu0 %v325
        %v468 = vpop.f32.mrb[0].mxu0
        %v469 = vadd.f32 0.0, %v468
        %v470 = vpop.f32.mrb[0].mxu0
        %471 = vdwg.mxu0
        %v472 = vld [vmem:[%s228] sm:$0x3]
        %v473 = vlaneseq
        %v474 = vshrl.u32 %v473, 7
        %v475 = vsub.s32 0, %v474
        %v476 = vrot.slane %v472, %v475
        %v477 = vmul.f32 %v394, %v476
        %v478 = vmul.f32 %v399, %v476
        %v479 = vmul.f32 %v404, %v476
        %v480 = vmul.f32 %v409, %v476
        %v481 = vmul.f32 %v414, %v476
        %v482 = vmul.f32 %v419, %v476
        %v483 = vmul.f32 %v424, %v476
        %v484 = vmul.f32 %v429, %v476
        %v485 = vmul.f32 %v434, %v476
        %v486 = vmul.f32 %v439, %v476
        %v487 = vmul.f32 %v444, %v476
        %v488 = vmul.f32 %v449, %v476
        %v489 = vmul.f32 %v454, %v476
        %v490 = vmul.f32 %v459, %v476
        %v491 = vmul.f32 %v464, %v476
        %v492 = vmul.f32 %v469, %v476
        %v493 = vlaneseq
        %v494 = vshrl.u32 %v493, 7
        %v495 = vsub.s32 1, %v494
        %v496 = vrot.slane %v472, %v495
        %v497 = vadd.f32 %v477, %v496
        %v498 = vadd.f32 %v478, %v496
        %v499 = vadd.f32 %v479, %v496
        %v500 = vadd.f32 %v480, %v496
        %v501 = vadd.f32 %v481, %v496
        %v502 = vadd.f32 %v482, %v496
        %v503 = vadd.f32 %v483, %v496
        %v504 = vadd.f32 %v484, %v496
        %v505 = vadd.f32 %v485, %v496
        %v506 = vadd.f32 %v486, %v496
        %v507 = vadd.f32 %v487, %v496
        %v508 = vadd.f32 %v488, %v496
        %v509 = vadd.f32 %v489, %v496
        %v510 = vadd.f32 %v490, %v496
        %v511 = vadd.f32 %v491, %v496
        %v512 = vadd.f32 %v492, %v496
        %v513 = vmax.f32 %v497, 0.0
        %v514 = vmax.f32 %v498, 0.0
        %v515 = vmax.f32 %v499, 0.0
        %v516 = vmax.f32 %v500, 0.0
        %v517 = vmax.f32 %v501, 0.0
        %v518 = vmax.f32 %v502, 0.0
        %v519 = vmax.f32 %v503, 0.0
        %v520 = vmax.f32 %v504, 0.0
        %v521 = vmax.f32 %v505, 0.0
        %v522 = vmax.f32 %v506, 0.0
        %v523 = vmax.f32 %v507, 0.0
        %v524 = vmax.f32 %v508, 0.0
        %v525 = vmax.f32 %v509, 0.0
        %v526 = vmax.f32 %v510, 0.0
        %v527 = vmax.f32 %v511, 0.0
        %v528 = vmax.f32 %v512, 0.0
        %529 = vst.msk [vmem:[%s255] sm:$0xff] %vm278, %v513
        %530 = vst.msk [vmem:[%s255 + $0x8] sm:$0xff] %vm278, %v514
        %531 = vst.msk [vmem:[%s255 + $0x10] sm:$0xff] %vm278, %v515
        %532 = vst.msk [vmem:[%s255 + $0x18] sm:$0xff] %vm278, %v516
        %533 = vst.msk [vmem:[%s255 + $0x20] sm:$0xff] %vm278, %v517
        %534 = vst.msk [vmem:[%s255 + $0x28] sm:$0xff] %vm278, %v518
        %535 = vst.msk [vmem:[%s255 + $0x30] sm:$0xff] %vm278, %v519
        %536 = vst.msk [vmem:[%s255 + $0x38] sm:$0xff] %vm278, %v520
        %537 = vst.msk [vmem:[%s255 + $0x40] sm:$0xff] %vm278, %v521
        %538 = vst.msk [vmem:[%s255 + $0x48] sm:$0xff] %vm278, %v522
        %539 = vst.msk [vmem:[%s255 + $0x50] sm:$0xff] %vm278, %v523
        %540 = vst.msk [vmem:[%s255 + $0x58] sm:$0xff] %vm278, %v524
        %541 = vst.msk [vmem:[%s255 + $0x60] sm:$0xff] %vm278, %v525
        %542 = vst.msk [vmem:[%s255 + $0x68] sm:$0xff] %vm278, %v526
        %543 = vst.msk [vmem:[%s255 + $0x70] sm:$0xff] %vm278, %v527
        %544 = vst.msk [vmem:[%s255 + $0x78] sm:$0xff] %vm278, %v528
        %s545 = sand.u32 %s118, 1
        %s546 = scalar_lea.sflag [#allocation4], %s545
        %s547 = sand.u32 %s118, 1
        %s548 = smul.addr %s547, 128
        %s549 = scalar_lea.vmem [#allocation8], %s548
        // Predicated region
        $region45: #{index_select_forward.8} parent=31 // pred_check
          %p550 = pneg %p128
        $region46: #{index_select_forward.8} parent=31 // pred_check_branch
          %552 = sbr.rel (%p550) target = $region48
        $region47: #{index_select_forward.8} parent=31 // pred_region
          %s553 = smul.u32 16, %s26
          %s555 = ssub.s32 2048, 2048
          %556 = vsyncadd %s546, %s555
          %s557 = smul.addr %s25, 16
          %s558 = sadd.s32 %s553, %s557
          %s559 = smul.addr %s558, 128
          %s560 = scalar_lea.hbm %s3, %s559
          %s561 = sshll.u32 %s549, 4
          %s562 = int_to_ptr.vmem [resolvable:$true] %s561
          %567 = dma.vmem_to_hbm [thread:$0]  %s562, 2048, %s560, %s546, 128, 128, 8
        $region48: #{index_select_forward.8} parent=31 // pred_fallthru
          _
      $region32: #{index_select_forward.8} parent=5 // pred_fallthru
        _
      %p568 = scmp.le.s32.totalorder 2, %s16
      // Predicated region
      $region49: #{index_select_forward.8} parent=5 // pred_check
        %p569 = pneg %p568
      $region50: #{index_select_forward.8} parent=5 // pred_check_branch
        %571 = sbr.rel (%p569) target = $region52
      $region51: #{index_select_forward.8} parent=5 // pred_region
        %s572 = ssub.s32 %s16, 2
        // Predicated region
        $region53: #{index_select_forward.8} parent=51 // pred_check
          %p573 = pneg %p134
        $region54: #{index_select_forward.8} parent=51 // pred_check_branch
          %575 = sbr.rel (%p573) target = $region56
        $region55: #{index_select_forward.8} parent=51 // pred_region
          %s576 = sand.u32 %s119, 1
          %s577 = scalar_lea.sflag [#allocation4], %s576
          %s578 = sand.u32 %s119, 1
          %s579 = smul.addr %s578, 128
          %s580 = scalar_lea.vmem [#allocation8], %s579
          %581 = dma.done %s577, 2048
        $region56: #{index_select_forward.8} parent=51 // pred_fallthru
          _
      $region52: #{index_select_forward.8} parent=5 // pred_fallthru
        _
    $region6: #{index_select_forward.8} parent=1 // loop_footer
      %s20 = sadd.s32 1, %s16
    $region7: #{index_select_forward.8} parent=1 // loop_footer_branch
      %15 = sbr.rel target = $region3
    $region8: #{index_select_forward.8} parent=1 // loop_exit
      _
    %582 = vsyncpa [#allocation3], 1
    %s583 = scalar_lea.sflag [#allocation3], 1
    %584 = vsyncpa %s583, 1
    %585 = vsyncpa [#allocation6], 1
    %586 = vsyncpa [#allocation4], 1
    %s587 = scalar_lea.sflag [#allocation4], 1
    %588 = vsyncpa %s587, 1

// kernel: index_select_forward.7
$region0: #{index_select_forward.7}
  #allocation0 [shape = 'u32[]', space=smem, size = 0x4, offset = 0x4, fixed_abs, tag = 'smem constant byte address 0x4 - core index']
  #allocation1 [shape = 'u32[144,128]{1,0:T(1,128)}', space=vmem, size = 0x12000, scoped, tag = 'internal scratch']
  %s0 = inlined_call_operand.hbm [shape: f32[2,128,32], index: 0, kind: input, shape index: {}]
  %s1 = inlined_call_operand.hbm [shape: f32[32,32], index: 1, kind: input, shape index: {}]
  %s2 = inlined_call_operand.hbm [shape: f32[2,2,32], index: 2, kind: output, shape index: {}]
  %s3 = sld [smem:[#allocation0]]
  $region53: #{index_select_forward.7} parent=0
    _
  %s5 = ssub.s32 1, %s3
  %s6 = scalar_select 0, %s5, %s3
  $region1: #{index_select_forward.7} parent=0
    #allocation2 [shape = 'u8[131072]{0}', space=vmem, size = 0x20000, scoped, tag = 'input window, operand 0']
    #allocation3 [shape = 's32[2]{0}', space=sflag, size = 0x8, scoped, tag = 'scoped memory for index_select_forward.7']
    #allocation4 [shape = 's32[2]{0}', space=sflag, size = 0x8, scoped, tag = 'scoped memory for index_select_forward.7']
    #allocation5 [shape = 'u8[16384]{0}', space=vmem, size = 0x4000, scoped, tag = 'input window, operand 1, single buffered']
    #allocation6 [shape = 's32[1]{0}', space=sflag, size = 0x4, scoped, tag = 'scoped memory for index_select_forward.7']
    #allocation7 [shape = 'u8[2048]{0}', space=vmem, size = 0x800, scoped, tag = 'output window, operand 0']
    %7 = vsyncpa [#allocation3], 0
    %s8 = scalar_lea.sflag [#allocation3], 1
    %9 = vsyncpa %s8, 0
    %10 = vsyncpa [#allocation6], 0
    %11 = vsyncpa [#allocation4], 0
    %s12 = scalar_lea.sflag [#allocation4], 1
    %13 = vsyncpa %s12, 0
    loop: start=0, step=1, limit=4
    $region2: #{index_select_forward.7} parent=1 // loop_pre_header
      _
    $region3: #{index_select_forward.7} parent=1 // loop_header
      %s15 = sphi 0, %s19
      %p16 = scmp.ge.s32.totalorder %s15, 4
      %s22 = sphi 0, %s34
      %s23 = sphi 0, %s30
      %s24 = sphi 0, %s22
      %s25 = sphi 0, %s23
      %s26 = sphi 0, %s24
      %s27 = sphi 0, %s25
      %s39 = sphi 0, %s41
      %s42 = sphi 0, %s39
      %s43 = sphi 0, %s42
      %s59 = sphi 0, %s43
      %s63 = sphi 0, %s63
      %s65 = sphi 0, %s63
      %s66 = sphi 0, %s65
      %s80 = sphi 0, %s66
      %s86 = sphi 0, %s88
      %s89 = sphi 0, %s86
      %s90 = sphi 0, %s89
      %s106 = sphi 0, %s90
    $region4: #{index_select_forward.7} parent=1 // loop_header_branch
      %18 = sbr.rel (%p16) target = $region8
    $region5: #{index_select_forward.7} parent=1 // loop_body
      %s20 = ssub.s32 %s15, 1
      %s21 = ssub.s32 %s15, 2
      %s28 = sadd.s32 1, %s23
      %p29 = scmp.ge.s32.totalorder %s28, 1
      %s30 = scalar_select %p29, 0, %s28
      %s31 = sadd.s32 1, %s22
      %s32 = scalar_select %p29, %s31, %s22
      %p33 = scmp.ge.s32.totalorder %s32, 2
      %s34 = scalar_select %p33, 0, %s32
      %s35 = ssub.s32 %s22, %s34
      %s36 = ssub.s32 %s23, %s30
      %s37 = sor.u32 %s35, %s36
      %p38 = scmp.eq.s32.totalorder %s37, 0
      %s40 = sadd.s32 %s39, 1
      %s41 = scalar_select %p38, %s39, %s40
      %p44 = pneg %p38
      %p45 = scmp.eq.s32.totalorder %s15, 1
      %p46 = por %p44, %p45
      %p47 = scmp.ne.s32.totalorder %s39, %s42
      %p48 = scmp.eq.s32.totalorder %s15, 0
      %p49 = por %p47, %p48
      %p50 = scmp.ne.s32.totalorder %s39, %s42
      %p51 = scmp.eq.s32.totalorder %s20, 1
      %p52 = por %p50, %p51
      %p53 = scmp.ne.s32.totalorder %s42, %s43
      %p54 = scmp.eq.s32.totalorder %s20, 0
      %p55 = por %p53, %p54
      %p56 = scmp.ne.s32.totalorder %s42, %s43
      %p57 = scmp.eq.s32.totalorder %s21, 1
      %p58 = por %p56, %p57
      %p60 = scmp.ne.s32.totalorder %s43, %s59
      %p61 = scmp.eq.s32.totalorder %s21, 0
      %p62 = por %p60, %p61
      %s64 = sadd.s32 %s63, 1
      %p67 = scmp.eq.s32.totalorder %s15, 1
      %p68 = scmp.ne.s32.totalorder %s63, %s65
      %p69 = scmp.eq.s32.totalorder %s15, 0
      %p70 = por %p68, %p69
      %p71 = scmp.ne.s32.totalorder %s63, %s65
      %p72 = scmp.eq.s32.totalorder %s20, 1
      %p73 = por %p71, %p72
      %p74 = scmp.ne.s32.totalorder %s65, %s66
      %p75 = scmp.eq.s32.totalorder %s20, 0
      %p76 = por %p74, %p75
      %p77 = scmp.ne.s32.totalorder %s65, %s66
      %p78 = scmp.eq.s32.totalorder %s21, 1
      %p79 = por %p77, %p78
      %p81 = scmp.ne.s32.totalorder %s66, %s80
      %p82 = scmp.eq.s32.totalorder %s21, 0
      %p83 = por %p81, %p82
      %s84 = ssub.s32 %s22, %s34
      %p85 = scmp.eq.s32.totalorder %s84, 0
      %s87 = sadd.s32 %s86, 1
      %s88 = scalar_select %p85, %s86, %s87
      %p91 = pneg %p85
      %p92 = scmp.eq.s32.totalorder %s15, 1
      %p93 = por %p91, %p92
      %p94 = scmp.ne.s32.totalorder %s86, %s89
      %p95 = scmp.eq.s32.totalorder %s15, 0
      %p96 = por %p94, %p95
      %p97 = scmp.ne.s32.totalorder %s86, %s89
      %p98 = scmp.eq.s32.totalorder %s20, 1
      %p99 = por %p97, %p98
      %p100 = scmp.ne.s32.totalorder %s89, %s90
      %p101 = scmp.eq.s32.totalorder %s20, 0
      %p102 = por %p100, %p101
      %p103 = scmp.ne.s32.totalorder %s89, %s90
      %p104 = scmp.eq.s32.totalorder %s21, 1
      %p105 = por %p103, %p104
      %p107 = scmp.ne.s32.totalorder %s90, %s106
      %p108 = scmp.eq.s32.totalorder %s21, 0
      %p109 = por %p107, %p108
      %p110 = scmp.le.s32.totalorder 1, %s15
      %p111 = scmp.lt.s32.totalorder %s15, 3
      %p112 = pnand %p110, %p111
      %p113 = pneg %p112
      // Predicated region
      $region9: #{index_select_forward.7} parent=5 // pred_check
        _
      $region10: #{index_select_forward.7} parent=5 // pred_check_branch
        %115 = sbr.rel (%p112) target = $region12
      $region11: #{index_select_forward.7} parent=5 // pred_region
        %s116 = ssub.s32 %s15, 1
        // Predicated region
        $region13: #{index_select_forward.7} parent=11 // pred_check
          %p117 = pneg %p76
        $region14: #{index_select_forward.7} parent=11 // pred_check_branch
          %119 = sbr.rel (%p117) target = $region16
        $region15: #{index_select_forward.7} parent=11 // pred_region
          %s121 = ssub.s32 512, 512
          %122 = vsyncadd [#allocation6], %s121
          %s123 = sshll.u32 [#allocation5], 4
          %s124 = int_to_ptr.vmem [resolvable:$true] %s123
          %129 = dma.hbm_to_vmem [thread:$0]  %s1, 512, %s124, [#allocation6], 128, 128, 8
        $region16: #{index_select_forward.7} parent=11 // pred_fallthru
          _
      $region12: #{index_select_forward.7} parent=5 // pred_fallthru
        _
      %p130 = scmp.lt.s32.totalorder %s15, 2
      // Predicated region
      $region17: #{index_select_forward.7} parent=5 // pred_check
        %p131 = pneg %p130
      $region18: #{index_select_forward.7} parent=5 // pred_check_branch
        %133 = sbr.rel (%p131) target = $region20
      $region19: #{index_select_forward.7} parent=5 // pred_region
        // Predicated region
        $region21: #{index_select_forward.7} parent=19 // pred_check
          %p134 = pneg %p49
        $region22: #{index_select_forward.7} parent=19 // pred_check_branch
          %136 = sbr.rel (%p134) target = $region24
        $region23: #{index_select_forward.7} parent=19 // pred_region
          %s137 = sand.u32 %s39, 1
          %s138 = scalar_lea.sflag [#allocation3], %s137
          %s139 = sand.u32 %s39, 1
          %s140 = smul.addr %s139, 128
          %s141 = scalar_lea.vmem [#allocation2], %s140
          %s142 = smul.u32 16, %s23
          %s144 = ssub.s32 2048, 2048
          %145 = vsyncadd %s138, %s144
          %s146 = smul.addr %s22, 16
          %s147 = sadd.s32 %s142, %s146
          %s148 = smul.addr %s147, 128
          %s149 = scalar_lea.hbm %s0, %s148
          %s150 = sshll.u32 %s141, 4
          %s151 = int_to_ptr.vmem [resolvable:$true] %s150
          %156 = dma.hbm_to_vmem [thread:$0]  %s149, 2048, %s151, %s138, 128, 128, 8
        $region24: #{index_select_forward.7} parent=19 // pred_fallthru
          _
      $region20: #{index_select_forward.7} parent=5 // pred_fallthru
        _
      %p157 = scmp.le.s32.totalorder 1, %s15
      %p158 = scmp.lt.s32.totalorder %s15, 3
      %p159 = pnand %p157, %p158
      %p160 = pneg %p159
      // Predicated region
      $region25: #{index_select_forward.7} parent=5 // pred_check
        _
      $region26: #{index_select_forward.7} parent=5 // pred_check_branch
        %162 = sbr.rel (%p159) target = $region28
      $region27: #{index_select_forward.7} parent=5 // pred_region
        %s163 = ssub.s32 %s15, 1
        %s164 = sand.u32 %s42, 1
        %s165 = scalar_lea.sflag [#allocation3], %s164
        %s166 = sand.u32 %s42, 1
        %s167 = smul.addr %s166, 128
        %s168 = scalar_lea.vmem [#allocation2], %s167
        // Predicated region
        $region29: #{index_select_forward.7} parent=27 // pred_check
          %p169 = pneg %p55
        $region30: #{index_select_forward.7} parent=27 // pred_check_branch
          %171 = sbr.rel (%p169) target = $region32
        $region31: #{index_select_forward.7} parent=27 // pred_region
          %172 = dma.done %s165, 2048
        $region32: #{index_select_forward.7} parent=27 // pred_fallthru
          _
        // Predicated region
        $region33: #{index_select_forward.7} parent=27 // pred_check
          %p173 = pneg %p76
        $region34: #{index_select_forward.7} parent=27 // pred_check_branch
          %175 = sbr.rel (%p173) target = $region36
        $region35: #{index_select_forward.7} parent=27 // pred_region
          %176 = dma.done [#allocation6], 512
        $region36: #{index_select_forward.7} parent=27 // pred_fallthru
          _
        %s177 = sand.u32 %s42, 1
        %s178 = scalar_lea.sflag [#allocation3], %s177
        %s179 = sand.u32 %s42, 1
        %s180 = smul.addr %s179, 128
        %s181 = scalar_lea.vmem [#allocation2], %s180
        %p182 = pneg %p55
        %p183 = pneg %p52
        %p184 = pneg %p76
        %p185 = pneg %p73
        %p186 = pneg %p102
        %p187 = pneg %p99
        %s188 = sand.u32 %s89, 1
        %s189 = scalar_lea.sflag [#allocation4], %s188
        %s190 = sand.u32 %s89, 1
        %s191 = smul.addr %s190, 2
        %s192 = scalar_lea.vmem [#allocation7], %s191
        %s193 = smul.u32 16, %s25
        %p194 = scmp.eq.s32.totalorder %s25, 0
        // Predicated region
        $region37: #{index_select_forward.7} parent=27 // pred_check
          %p195 = pneg %p194
        $region38: #{index_select_forward.7} parent=27 // pred_check_branch
          %197 = sbr.rel (%p195) target = $region40
        $region39: #{index_select_forward.7} parent=27 // pred_region
          %vm198 = vcmask 254976
          %199 = vst.msk [vmem:[%s192] sm:$0x3] %vm198, 0.0
        $region40: #{index_select_forward.7} parent=27 // pred_fallthru
          _
        %v200 = vld [vmem:[%s168] sm:$0xff]
        %v201 = vld [vmem:[%s168 + $0x8] sm:$0xff]
        %v202 = vld [vmem:[%s168 + $0x10] sm:$0xff]
        %v203 = vld [vmem:[%s168 + $0x18] sm:$0xff]
        %v204 = vld [vmem:[%s168 + $0x20] sm:$0xff]
        %v205 = vld [vmem:[%s168 + $0x28] sm:$0xff]
        %v206 = vld [vmem:[%s168 + $0x30] sm:$0xff]
        %v207 = vld [vmem:[%s168 + $0x38] sm:$0xff]
        %v208 = vld [vmem:[%s168 + $0x40] sm:$0xff]
        %v209 = vld [vmem:[%s168 + $0x48] sm:$0xff]
        %v210 = vld [vmem:[%s168 + $0x50] sm:$0xff]
        %v211 = vld [vmem:[%s168 + $0x58] sm:$0xff]
        %v212 = vld [vmem:[%s168 + $0x60] sm:$0xff]
        %v213 = vld [vmem:[%s168 + $0x68] sm:$0xff]
        %v214 = vld [vmem:[%s168 + $0x70] sm:$0xff]
        %v215 = vld [vmem:[%s168 + $0x78] sm:$0xff]
        %v216 = vld [vmem:[#allocation5] sm:$0xff]
        %v217 = vld [vmem:[#allocation5 + $0x8] sm:$0xff]
        %v218 = vld [vmem:[#allocation5 + $0x10] sm:$0xff]
        %v219 = vld [vmem:[#allocation5 + $0x18] sm:$0xff]
        %vm220 = vcmask 261120
        %v222 = vsel %vm220, %v200, 0
        %v225 = vsel %vm220, %v201, 0
        %v228 = vsel %vm220, %v202, 0
        %v231 = vsel %vm220, %v203, 0
        %v234 = vsel %vm220, %v204, 0
        %v237 = vsel %vm220, %v205, 0
        %v240 = vsel %vm220, %v206, 0
        %v243 = vsel %vm220, %v207, 0
        %v246 = vsel %vm220, %v208, 0
        %v249 = vsel %vm220, %v209, 0
        %v252 = vsel %vm220, %v210, 0
        %v255 = vsel %vm220, %v211, 0
        %v258 = vsel %vm220, %v212, 0
        %v261 = vsel %vm220, %v213, 0
        %v264 = vsel %vm220, %v214, 0
        %v267 = vsel %vm220, %v215, 0
        %269 = vmatprep.subr.mxu0 0.0
        %270 = vmatpush1.msra.mxu0 %v216
        %271 = vmatprep.subr.mxu0 0.0
        %272 = vmatpush1.msra.mxu0 %v217
        %273 = vmatprep.subr.mxu0 0.0
        %274 = vmatpush1.msra.mxu0 %v218
        %275 = vmatprep.subr.mxu0 0.0
        %276 = vmatpush1.msra.mxu0 %v219
        %277 = vmatprep.subr.mxu0 0.0
        %278 = vmatpush1.msra.mxu0 0.0
        %279 = vmatprep.subr.mxu0 0.0
        %280 = vmatpush1.msra.mxu0 0.0
        %281 = vmatprep.subr.mxu0 0.0
        %282 = vmatpush1.msra.mxu0 0.0
        %283 = vmatprep.subr.mxu0 0.0
        %284 = vmatpush1.msra.mxu0 0.0
        %285 = vmatprep.subr.mxu0 0.0
        %286 = vmatpush1.msra.mxu0 0.0
        %287 = vmatprep.subr.mxu0 0.0
        %288 = vmatpush1.msra.mxu0 0.0
        %289 = vmatprep.subr.mxu0 0.0
        %290 = vmatpush1.msra.mxu0 0.0
        %291 = vmatprep.subr.mxu0 0.0
        %292 = vmatpush1.msra.mxu0 0.0
        %293 = vmatprep.subr.mxu0 0.0
        %294 = vmatpush1.msra.mxu0 0.0
        %295 = vmatprep.subr.mxu0 0.0
        %296 = vmatpush1.msra.mxu0 0.0
        %297 = vmatprep.subr.mxu0 0.0
        %298 = vmatpush1.msra.mxu0 0.0
        %299 = vmatprep.subr.mxu0 0.0
        %300 = vmatpush1.msra.mxu0 0.0
        %301 = vmatprep.subr.mxu0 0.0
        %302 = vmatpush1.msra.mxu0 0.0
        %303 = vmatprep.subr.mxu0 0.0
        %304 = vmatpush1.msra.mxu0 0.0
        %305 = vmatprep.subr.mxu0 0.0
        %306 = vmatpush1.msra.mxu0 0.0
        %307 = vmatprep.subr.mxu0 0.0
        %308 = vmatpush1.msra.mxu0 0.0
        %309 = vmatprep.subr.mxu0 0.0
        %310 = vmatpush1.msra.mxu0 0.0
        %311 = vmatprep.subr.mxu0 0.0
        %312 = vmatpush1.msra.mxu0 0.0
        %313 = vmatprep.subr.mxu0 0.0
        %314 = vmatpush1.msra.mxu0 0.0
        %315 = vmatprep.subr.mxu0 0.0
        %316 = vmatpush1.msra.mxu0 0.0
        %317 = vmatprep.subr.mxu0 0.0
        %318 = vmatpush1.msra.mxu0 0.0
        %319 = vmatprep.subr.mxu0 0.0
        %320 = vmatpush1.msra.mxu0 0.0
        %321 = vmatprep.subr.mxu0 0.0
        %322 = vmatpush1.msra.mxu0 0.0
        %323 = vmatprep.subr.mxu0 0.0
        %324 = vmatpush1.msra.mxu0 0.0
        %325 = vmatprep.subr.mxu0 0.0
        %326 = vmatpush1.msra.mxu0 0.0
        %327 = vmatprep.subr.mxu0 0.0
        %328 = vmatpush1.msra.mxu0 0.0
        %329 = vmatprep.subr.mxu0 0.0
        %330 = vmatpush1.msra.mxu0 0.0
        %331 = vmatprep.subr.mxu0 0.0
        %332 = vmatpush1.msra.mxu0 0.0
        %333 = vmatprep.mubr.f32.mxu0 0.0
        %334 = vmatmul.mubr.f32.gmra.mrb[0].mxu0 %v222
        %v335 = vpop.f32.mrb[0].mxu0
        %v336 = vadd.f32 0.0, %v335
        %v337 = vpop.f32.mrb[0].mxu0
        %338 = vmatprep.mubr.f32.mxu0 0.0
        %339 = vmatmul.mubr.f32.gmra.mrb[0].mxu0 %v225
        %v340 = vpop.f32.mrb[0].mxu0
        %v341 = vadd.f32 0.0, %v340
        %v342 = vpop.f32.mrb[0].mxu0
        %343 = vmatprep.mubr.f32.mxu0 0.0
        %344 = vmatmul.mubr.f32.gmra.mrb[0].mxu0 %v228
        %v345 = vpop.f32.mrb[0].mxu0
        %v346 = vadd.f32 0.0, %v345
        %v347 = vpop.f32.mrb[0].mxu0
        %348 = vmatprep.mubr.f32.mxu0 0.0
        %349 = vmatmul.mubr.f32.gmra.mrb[0].mxu0 %v231
        %v350 = vpop.f32.mrb[0].mxu0
        %v351 = vadd.f32 0.0, %v350
        %v352 = vpop.f32.mrb[0].mxu0
        %353 = vmatprep.mubr.f32.mxu0 0.0
        %354 = vmatmul.mubr.f32.gmra.mrb[0].mxu0 %v234
        %v355 = vpop.f32.mrb[0].mxu0
        %v356 = vadd.f32 0.0, %v355
        %v357 = vpop.f32.mrb[0].mxu0
        %358 = vmatprep.mubr.f32.mxu0 0.0
        %359 = vmatmul.mubr.f32.gmra.mrb[0].mxu0 %v237
        %v360 = vpop.f32.mrb[0].mxu0
        %v361 = vadd.f32 0.0, %v360
        %v362 = vpop.f32.mrb[0].mxu0
        %363 = vmatprep.mubr.f32.mxu0 0.0
        %364 = vmatmul.mubr.f32.gmra.mrb[0].mxu0 %v240
        %v365 = vpop.f32.mrb[0].mxu0
        %v366 = vadd.f32 0.0, %v365
        %v367 = vpop.f32.mrb[0].mxu0
        %368 = vmatprep.mubr.f32.mxu0 0.0
        %369 = vmatmul.mubr.f32.gmra.mrb[0].mxu0 %v243
        %v370 = vpop.f32.mrb[0].mxu0
        %v371 = vadd.f32 0.0, %v370
        %v372 = vpop.f32.mrb[0].mxu0
        %373 = vmatprep.mubr.f32.mxu0 0.0
        %374 = vmatmul.mubr.f32.gmra.mrb[0].mxu0 %v246
        %v375 = vpop.f32.mrb[0].mxu0
        %v376 = vadd.f32 0.0, %v375
        %v377 = vpop.f32.mrb[0].mxu0
        %378 = vmatprep.mubr.f32.mxu0 0.0
        %379 = vmatmul.mubr.f32.gmra.mrb[0].mxu0 %v249
        %v380 = vpop.f32.mrb[0].mxu0
        %v381 = vadd.f32 0.0, %v380
        %v382 = vpop.f32.mrb[0].mxu0
        %383 = vmatprep.mubr.f32.mxu0 0.0
        %384 = vmatmul.mubr.f32.gmra.mrb[0].mxu0 %v252
        %v385 = vpop.f32.mrb[0].mxu0
        %v386 = vadd.f32 0.0, %v385
        %v387 = vpop.f32.mrb[0].mxu0
        %388 = vmatprep.mubr.f32.mxu0 0.0
        %389 = vmatmul.mubr.f32.gmra.mrb[0].mxu0 %v255
        %v390 = vpop.f32.mrb[0].mxu0
        %v391 = vadd.f32 0.0, %v390
        %v392 = vpop.f32.mrb[0].mxu0
        %393 = vmatprep.mubr.f32.mxu0 0.0
        %394 = vmatmul.mubr.f32.gmra.mrb[0].mxu0 %v258
        %v395 = vpop.f32.mrb[0].mxu0
        %v396 = vadd.f32 0.0, %v395
        %v397 = vpop.f32.mrb[0].mxu0
        %398 = vmatprep.mubr.f32.mxu0 0.0
        %399 = vmatmul.mubr.f32.gmra.mrb[0].mxu0 %v261
        %v400 = vpop.f32.mrb[0].mxu0
        %v401 = vadd.f32 0.0, %v400
        %v402 = vpop.f32.mrb[0].mxu0
        %403 = vmatprep.mubr.f32.mxu0 0.0
        %404 = vmatmul.mubr.f32.gmra.mrb[0].mxu0 %v264
        %v405 = vpop.f32.mrb[0].mxu0
        %v406 = vadd.f32 0.0, %v405
        %v407 = vpop.f32.mrb[0].mxu0
        %408 = vmatprep.mubr.f32.mxu0 0.0
        %409 = vmatmul.mubr.f32.gmra.mrb[0].mxu0 %v267
        %v410 = vpop.f32.mrb[0].mxu0
        %v411 = vadd.f32 0.0, %v410
        %v412 = vpop.f32.mrb[0].mxu0
        %413 = vdwg.mxu0
        %v414 = vsel %vm220, %v336, 0.0
        %v415 = vsel %vm220, %v341, 0.0
        %v416 = vadd.f32 %v414, %v415
        %v417 = vsel %vm220, %v346, 0.0
        %v418 = vadd.f32 %v416, %v417
        %v419 = vsel %vm220, %v351, 0.0
        %v420 = vadd.f32 %v418, %v419
        %v421 = vsel %vm220, %v356, 0.0
        %v422 = vadd.f32 %v420, %v421
        %v423 = vsel %vm220, %v361, 0.0
        %v424 = vadd.f32 %v422, %v423
        %v425 = vsel %vm220, %v366, 0.0
        %v426 = vadd.f32 %v424, %v425
        %v427 = vsel %vm220, %v371, 0.0
        %v428 = vadd.f32 %v426, %v427
        %v429 = vsel %vm220, %v376, 0.0
        %v430 = vadd.f32 %v428, %v429
        %v431 = vsel %vm220, %v381, 0.0
        %v432 = vadd.f32 %v430, %v431
        %v433 = vsel %vm220, %v386, 0.0
        %v434 = vadd.f32 %v432, %v433
        %v435 = vsel %vm220, %v391, 0.0
        %v436 = vadd.f32 %v434, %v435
        %v437 = vsel %vm220, %v396, 0.0
        %v438 = vadd.f32 %v436, %v437
        %v439 = vsel %vm220, %v401, 0.0
        %v440 = vadd.f32 %v438, %v439
        %v441 = vsel %vm220, %v406, 0.0
        %v442 = vadd.f32 %v440, %v441
        %v443 = vsel %vm220, %v411, 0.0
        %v444 = vadd.f32 %v442, %v443
        %v445 = vrot.slane %v444, 4
        %v446 = vadd.f32 %v444, %v445
        %v447 = vrot.slane %v446, 2
        %v448 = vadd.f32 %v446, %v447
        %v449 = vrot.slane %v448, 1
        %v450 = vadd.f32 %v448, %v449
        %v451 = vmul.f32 %v336, %v336
        %v452 = vmul.f32 %v341, %v341
        %v453 = vmul.f32 %v346, %v346
        %v454 = vmul.f32 %v351, %v351
        %v455 = vmul.f32 %v356, %v356
        %v456 = vmul.f32 %v361, %v361
        %v457 = vmul.f32 %v366, %v366
        %v458 = vmul.f32 %v371, %v371
        %v459 = vmul.f32 %v376, %v376
        %v460 = vmul.f32 %v381, %v381
        %v461 = vmul.f32 %v386, %v386
        %v462 = vmul.f32 %v391, %v391
        %v463 = vmul.f32 %v396, %v396
        %v464 = vmul.f32 %v401, %v401
        %v465 = vmul.f32 %v406, %v406
        %v466 = vmul.f32 %v411, %v411
        %v467 = vsel %vm220, %v451, 0.0
        %v468 = vsel %vm220, %v452, 0.0
        %v469 = vadd.f32 %v467, %v468
        %v470 = vsel %vm220, %v453, 0.0
        %v471 = vadd.f32 %v469, %v470
        %v472 = vsel %vm220, %v454, 0.0
        %v473 = vadd.f32 %v471, %v472
        %v474 = vsel %vm220, %v455, 0.0
        %v475 = vadd.f32 %v473, %v474
        %v476 = vsel %vm220, %v456, 0.0
        %v477 = vadd.f32 %v475, %v476
        %v478 = vsel %vm220, %v457, 0.0
        %v479 = vadd.f32 %v477, %v478
        %v480 = vsel %vm220, %v458, 0.0
        %v481 = vadd.f32 %v479, %v480
        %v482 = vsel %vm220, %v459, 0.0
        %v483 = vadd.f32 %v481, %v482
        %v484 = vsel %vm220, %v460, 0.0
        %v485 = vadd.f32 %v483, %v484
        %v486 = vsel %vm220, %v461, 0.0
        %v487 = vadd.f32 %v485, %v486
        %v488 = vsel %vm220, %v462, 0.0
        %v489 = vadd.f32 %v487, %v488
        %v490 = vsel %vm220, %v463, 0.0
        %v491 = vadd.f32 %v489, %v490
        %v492 = vsel %vm220, %v464, 0.0
        %v493 = vadd.f32 %v491, %v492
        %v494 = vsel %vm220, %v465, 0.0
        %v495 = vadd.f32 %v493, %v494
        %v496 = vsel %vm220, %v466, 0.0
        %v497 = vadd.f32 %v495, %v496
        %v498 = vrot.slane %v497, 4
        %v499 = vadd.f32 %v497, %v498
        %v500 = vrot.slane %v499, 2
        %v501 = vadd.f32 %v499, %v500
        %v502 = vrot.slane %v501, 1
        %v503 = vadd.f32 %v501, %v502
        %v504 = vld [vmem:[%s192] sm:$0x3]
        %vm505 = vcmask 1040384
        %v506 = vsel %vm505, %v450, %v503
        %v507 = vadd.f32 %v504, %v506
        %vm508 = vcmask 254976
        %509 = vst.msk [vmem:[%s192] sm:$0x3] %vm508, %v507
        %s510 = sand.u32 %s89, 1
        %s511 = scalar_lea.sflag [#allocation4], %s510
        %s512 = sand.u32 %s89, 1
        %s513 = smul.addr %s512, 2
        %s514 = scalar_lea.vmem [#allocation7], %s513
        // Predicated region
        $region41: #{index_select_forward.7} parent=27 // pred_check
          %p515 = pneg %p99
        $region42: #{index_select_forward.7} parent=27 // pred_check_branch
          %517 = sbr.rel (%p515) target = $region44
        $region43: #{index_select_forward.7} parent=27 // pred_region
          %s519 = ssub.s32 32, 32
          %520 = vsyncadd %s511, %s519
          %s521 = smul.addr %s24, 32
          %s522 = scalar_lea.hbm %s2, %s521
          %s524 = sshll.u32 %s514, 4
          %s525 = int_to_ptr.vmem [resolvable:$true] %s524
          %527 = dma.vmem_to_hbm [thread:$0]  %s525, 32, %s522, %s511
        $region44: #{index_select_forward.7} parent=27 // pred_fallthru
          _
      $region28: #{index_select_forward.7} parent=5 // pred_fallthru
        _
      %p528 = scmp.le.s32.totalorder 2, %s15
      // Predicated region
      $region45: #{index_select_forward.7} parent=5 // pred_check
        %p529 = pneg %p528
      $region46: #{index_select_forward.7} parent=5 // pred_check_branch
        %531 = sbr.rel (%p529) target = $region48
      $region47: #{index_select_forward.7} parent=5 // pred_region
        %s532 = ssub.s32 %s15, 2
        // Predicated region
        $region49: #{index_select_forward.7} parent=47 // pred_check
          %p533 = pneg %p105
        $region50: #{index_select_forward.7} parent=47 // pred_check_branch
          %535 = sbr.rel (%p533) target = $region52
        $region51: #{index_select_forward.7} parent=47 // pred_region
          %s536 = sand.u32 %s90, 1
          %s537 = scalar_lea.sflag [#allocation4], %s536
          %s538 = sand.u32 %s90, 1
          %s539 = smul.addr %s538, 2
          %s540 = scalar_lea.vmem [#allocation7], %s539
          %541 = dma.done %s537, 32
        $region52: #{index_select_forward.7} parent=47 // pred_fallthru
          _
      $region48: #{index_select_forward.7} parent=5 // pred_fallthru
        _
    $region6: #{index_select_forward.7} parent=1 // loop_footer
      %s19 = sadd.s32 1, %s15
    $region7: #{index_select_forward.7} parent=1 // loop_footer_branch
      %14 = sbr.rel target = $region3
    $region8: #{index_select_forward.7} parent=1 // loop_exit
      _
    %542 = vsyncpa [#allocation3], 1
    %s543 = scalar_lea.sflag [#allocation3], 1
    %544 = vsyncpa %s543, 1
    %545 = vsyncpa [#allocation6], 1
    %546 = vsyncpa [#allocation4], 1
    %s547 = scalar_lea.sflag [#allocation4], 1
    %548 = vsyncpa %s547, 1

// kernel: index_select_forward.10
$region0: #{index_select_forward.10}
  #allocation0 [shape = 'u32[]', space=smem, size = 0x4, offset = 0x4, fixed_abs, tag = 'smem constant byte address 0x4 - core index']
  #allocation1 [shape = 'u32[144,128]{1,0:T(1,128)}', space=vmem, size = 0x12000, scoped, tag = 'internal scratch']
  %s0 = inlined_call_operand.hbm [shape: f32[2,64,32], index: 0, kind: input, shape index: {}, may-alias: {0,1}]
  %s1 = inlined_call_operand.hbm [shape: f32[2,64,32], index: 1, kind: input, shape index: {}, may-alias: {0,1}]
  %s2 = inlined_call_operand.hbm [shape: f32[2,64,1], index: 2, kind: input, shape index: {}]
  %s3 = inlined_call_operand.hbm [shape: f32[2,1,64], index: 3, kind: input, shape index: {}]
  %s4 = inlined_call_operand.hbm [shape: f32[2,64,64], index: 4, kind: output, shape index: {}]
  %s5 = sld [smem:[#allocation0]]
  $region65: #{index_select_forward.10} parent=0
    _
  %s7 = ssub.s32 1, %s5
  %s8 = scalar_select 0, %s7, %s5
  $region1: #{index_select_forward.10} parent=0
    #allocation2 [shape = 'u8[65536]{0}', space=vmem, size = 0x10000, scoped, tag = 'input window, operand 0']
    #allocation3 [shape = 's32[2]{0}', space=sflag, size = 0x8, scoped, tag = 'scoped memory for index_select_forward.10']
    #allocation4 [shape = 's32[2]{0}', space=sflag, size = 0x8, scoped, tag = 'scoped memory for index_select_forward.10']
    #allocation5 [shape = 'u8[65536]{0}', space=vmem, size = 0x10000, scoped, tag = 'input window, operand 1']
    #allocation6 [shape = 's32[2]{0}', space=sflag, size = 0x8, scoped, tag = 'scoped memory for index_select_forward.10']
    #allocation7 [shape = 'u8[65536]{0}', space=vmem, size = 0x10000, scoped, tag = 'input window, operand 2']
    #allocation8 [shape = 'u8[1024]{0}', space=vmem, size = 0x400, scoped, tag = 'input window, operand 3']
    #allocation9 [shape = 's32[2]{0}', space=sflag, size = 0x8, scoped, tag = 'scoped memory for index_select_forward.10']
    #allocation10 [shape = 'u8[65536]{0}', space=vmem, size = 0x10000, scoped, tag = 'output window, operand 0']
    %9 = vsyncpa [#allocation3], 0
    %s10 = scalar_lea.sflag [#allocation3], 1
    %11 = vsyncpa %s10, 0
    %12 = vsyncpa [#allocation6], 0
    %s13 = scalar_lea.sflag [#allocation6], 1
    %14 = vsyncpa %s13, 0
    %15 = vsyncpa [#allocation9], 0
    %s16 = scalar_lea.sflag [#allocation9], 1
    %17 = vsyncpa %s16, 0
    %18 = vsyncpa [#allocation4], 0
    %s19 = scalar_lea.sflag [#allocation4], 1
    %20 = vsyncpa %s19, 0
    loop: start=0, step=1, limit=4
    $region2: #{index_select_forward.10} parent=1 // loop_pre_header
      _
    $region3: #{index_select_forward.10} parent=1 // loop_header
      %s22 = sphi 0, %s26
      %p23 = scmp.ge.s32.totalorder %s22, 4
      %s29 = sphi 0, %s48
      %s30 = sphi 0, %s44
      %s31 = sphi 0, %s40
      %s32 = sphi 0, %s29
      %s33 = sphi 0, %s30
      %s34 = sphi 0, %s31
      %s35 = sphi 0, %s32
      %s36 = sphi 0, %s33
      %s37 = sphi 0, %s34
      %s53 = sphi 0, %s55
      %s56 = sphi 0, %s53
      %s57 = sphi 0, %s56
      %s73 = sphi 0, %s57
      %s81 = sphi 0, %s83
      %s84 = sphi 0, %s81
      %s85 = sphi 0, %s84
      %s101 = sphi 0, %s85
      %s109 = sphi 0, %s111
      %s112 = sphi 0, %s109
      %s113 = sphi 0, %s112
      %s129 = sphi 0, %s113
      %s137 = sphi 0, %s139
      %s140 = sphi 0, %s137
      %s141 = sphi 0, %s140
      %s157 = sphi 0, %s141
      %s167 = sphi 0, %s169
      %s170 = sphi 0, %s167
      %s171 = sphi 0, %s170
      %s187 = sphi 0, %s171
    $region4: #{index_select_forward.10} parent=1 // loop_header_branch
      %25 = sbr.rel (%p23) target = $region8
    $region5: #{index_select_forward.10} parent=1 // loop_body
      %s27 = ssub.s32 %s22, 1
      %s28 = ssub.s32 %s22, 2
      %s38 = sadd.s32 1, %s31
      %p39 = scmp.ge.s32.totalorder %s38, 1
      %s40 = scalar_select %p39, 0, %s38
      %s41 = sadd.s32 1, %s30
      %s42 = scalar_select %p39, %s41, %s30
      %p43 = scmp.ge.s32.totalorder %s42, 2
      %s44 = scalar_select %p43, 0, %s42
      %s45 = sadd.s32 1, %s29
      %s46 = scalar_select %p43, %s45, %s29
      %p47 = scmp.ge.s32.totalorder %s46, 1
      %s48 = scalar_select %p47, 0, %s46
      %s49 = ssub.s32 %s30, %s44
      %s50 = ssub.s32 %s29, %s48
      %s51 = sor.u32 %s49, %s50
      %p52 = scmp.eq.s32.totalorder %s51, 0
      %s54 = sadd.s32 %s53, 1
      %s55 = scalar_select %p52, %s53, %s54
      %p58 = pneg %p52
      %p59 = scmp.eq.s32.totalorder %s22, 1
      %p60 = por %p58, %p59
      %p61 = scmp.ne.s32.totalorder %s53, %s56
      %p62 = scmp.eq.s32.totalorder %s22, 0
      %p63 = por %p61, %p62
      %p64 = scmp.ne.s32.totalorder %s53, %s56
      %p65 = scmp.eq.s32.totalorder %s27, 1
      %p66 = por %p64, %p65
      %p67 = scmp.ne.s32.totalorder %s56, %s57
      %p68 = scmp.eq.s32.totalorder %s27, 0
      %p69 = por %p67, %p68
      %p70 = scmp.ne.s32.totalorder %s56, %s57
      %p71 = scmp.eq.s32.totalorder %s28, 1
      %p72 = por %p70, %p71
      %p74 = scmp.ne.s32.totalorder %s57, %s73
      %p75 = scmp.eq.s32.totalorder %s28, 0
      %p76 = por %p74, %p75
      %s77 = ssub.s32 %s30, %s44
      %s78 = ssub.s32 %s31, %s40
      %s79 = sor.u32 %s77, %s78
      %p80 = scmp.eq.s32.totalorder %s79, 0
      %s82 = sadd.s32 %s81, 1
      %s83 = scalar_select %p80, %s81, %s82
      %p86 = pneg %p80
      %p87 = scmp.eq.s32.totalorder %s22, 1
      %p88 = por %p86, %p87
      %p89 = scmp.ne.s32.totalorder %s81, %s84
      %p90 = scmp.eq.s32.totalorder %s22, 0
      %p91 = por %p89, %p90
      %p92 = scmp.ne.s32.totalorder %s81, %s84
      %p93 = scmp.eq.s32.totalorder %s27, 1
      %p94 = por %p92, %p93
      %p95 = scmp.ne.s32.totalorder %s84, %s85
      %p96 = scmp.eq.s32.totalorder %s27, 0
      %p97 = por %p95, %p96
      %p98 = scmp.ne.s32.totalorder %s84, %s85
      %p99 = scmp.eq.s32.totalorder %s28, 1
      %p100 = por %p98, %p99
      %p102 = scmp.ne.s32.totalorder %s85, %s101
      %p103 = scmp.eq.s32.totalorder %s28, 0
      %p104 = por %p102, %p103
      %s105 = ssub.s32 %s30, %s44
      %s106 = ssub.s32 %s29, %s48
      %s107 = sor.u32 %s105, %s106
      %p108 = scmp.eq.s32.totalorder %s107, 0
      %s110 = sadd.s32 %s109, 1
      %s111 = scalar_select %p108, %s109, %s110
      %p114 = pneg %p108
      %p115 = scmp.eq.s32.totalorder %s22, 1
      %p116 = por %p114, %p115
      %p117 = scmp.ne.s32.totalorder %s109, %s112
      %p118 = scmp.eq.s32.totalorder %s22, 0
      %p119 = por %p117, %p118
      %p120 = scmp.ne.s32.totalorder %s109, %s112
      %p121 = scmp.eq.s32.totalorder %s27, 1
      %p122 = por %p120, %p121
      %p123 = scmp.ne.s32.totalorder %s112, %s113
      %p124 = scmp.eq.s32.totalorder %s27, 0
      %p125 = por %p123, %p124
      %p126 = scmp.ne.s32.totalorder %s112, %s113
      %p127 = scmp.eq.s32.totalorder %s28, 1
      %p128 = por %p126, %p127
      %p130 = scmp.ne.s32.totalorder %s113, %s129
      %p131 = scmp.eq.s32.totalorder %s28, 0
      %p132 = por %p130, %p131
      %s133 = ssub.s32 %s30, %s44
      %s134 = ssub.s32 %s31, %s40
      %s135 = sor.u32 %s133, %s134
      %p136 = scmp.eq.s32.totalorder %s135, 0
      %s138 = sadd.s32 %s137, 1
      %s139 = scalar_select %p136, %s137, %s138
      %p142 = pneg %p136
      %p143 = scmp.eq.s32.totalorder %s22, 1
      %p144 = por %p142, %p143
      %p145 = scmp.ne.s32.totalorder %s137, %s140
      %p146 = scmp.eq.s32.totalorder %s22, 0
      %p147 = por %p145, %p146
      %p148 = scmp.ne.s32.totalorder %s137, %s140
      %p149 = scmp.eq.s32.totalorder %s27, 1
      %p150 = por %p148, %p149
      %p151 = scmp.ne.s32.totalorder %s140, %s141
      %p152 = scmp.eq.s32.totalorder %s27, 0
      %p153 = por %p151, %p152
      %p154 = scmp.ne.s32.totalorder %s140, %s141
      %p155 = scmp.eq.s32.totalorder %s28, 1
      %p156 = por %p154, %p155
      %p158 = scmp.ne.s32.totalorder %s141, %s157
      %p159 = scmp.eq.s32.totalorder %s28, 0
      %p160 = por %p158, %p159
      %s161 = ssub.s32 %s30, %s44
      %s162 = ssub.s32 %s29, %s48
      %s163 = sor.u32 %s161, %s162
      %s164 = ssub.s32 %s31, %s40
      %s165 = sor.u32 %s163, %s164
      %p166 = scmp.eq.s32.totalorder %s165, 0
      %s168 = sadd.s32 %s167, 1
      %s169 = scalar_select %p166, %s167, %s168
      %p172 = pneg %p166
      %p173 = scmp.eq.s32.totalorder %s22, 1
      %p174 = por %p172, %p173
      %p175 = scmp.ne.s32.totalorder %s167, %s170
      %p176 = scmp.eq.s32.totalorder %s22, 0
      %p177 = por %p175, %p176
      %p178 = scmp.ne.s32.totalorder %s167, %s170
      %p179 = scmp.eq.s32.totalorder %s27, 1
      %p180 = por %p178, %p179
      %p181 = scmp.ne.s32.totalorder %s170, %s171
      %p182 = scmp.eq.s32.totalorder %s27, 0
      %p183 = por %p181, %p182
      %p184 = scmp.ne.s32.totalorder %s170, %s171
      %p185 = scmp.eq.s32.totalorder %s28, 1
      %p186 = por %p184, %p185
      %p188 = scmp.ne.s32.totalorder %s171, %s187
      %p189 = scmp.eq.s32.totalorder %s28, 0
      %p190 = por %p188, %p189
      %p191 = scmp.le.s32.totalorder 1, %s22
      %p192 = scmp.lt.s32.totalorder %s22, 3
      %p193 = pnand %p191, %p192
      %p194 = pneg %p193
      // Predicated region
      $region9: #{index_select_forward.10} parent=5 // pred_check
        _
      $region10: #{index_select_forward.10} parent=5 // pred_check_branch
        %196 = sbr.rel (%p193) target = $region12
      $region11: #{index_select_forward.10} parent=5 // pred_region
        %s197 = ssub.s32 %s22, 1
      $region12: #{index_select_forward.10} parent=5 // pred_fallthru
        _
      %p198 = scmp.lt.s32.totalorder %s22, 2
      // Predicated region
      $region13: #{index_select_forward.10} parent=5 // pred_check
        %p199 = pneg %p198
      $region14: #{index_select_forward.10} parent=5 // pred_check_branch
        %201 = sbr.rel (%p199) target = $region16
      $region15: #{index_select_forward.10} parent=5 // pred_region
        // Predicated region
        $region17: #{index_select_forward.10} parent=15 // pred_check
          %p202 = pneg %p63
        $region18: #{index_select_forward.10} parent=15 // pred_check_branch
          %204 = sbr.rel (%p202) target = $region20
        $region19: #{index_select_forward.10} parent=15 // pred_region
          %s205 = sand.u32 %s53, 1
          %s206 = scalar_lea.sflag [#allocation3], %s205
          %s207 = sand.u32 %s53, 1
          %s208 = smul.addr %s207, 64
          %s209 = scalar_lea.vmem [#allocation2], %s208
          %s210 = smul.u32 8, %s29
          %s212 = ssub.s32 1024, 1024
          %213 = vsyncadd %s206, %s212
          %s214 = smul.addr %s30, 8
          %s215 = sadd.s32 %s210, %s214
          %s216 = smul.addr %s215, 128
          %s217 = scalar_lea.hbm %s0, %s216
          %s218 = sshll.u32 %s209, 4
          %s219 = int_to_ptr.vmem [resolvable:$true] %s218
          %224 = dma.hbm_to_vmem [thread:$0]  %s217, 1024, %s219, %s206, 128, 128, 8
        $region20: #{index_select_forward.10} parent=15 // pred_fallthru
          _
        // Predicated region
        $region21: #{index_select_forward.10} parent=15 // pred_check
          %p225 = pneg %p91
        $region22: #{index_select_forward.10} parent=15 // pred_check_branch
          %227 = sbr.rel (%p225) target = $region24
        $region23: #{index_select_forward.10} parent=15 // pred_region
          %s228 = sand.u32 %s22, 1
          %s229 = scalar_lea.sflag [#allocation6], %s228
          %s230 = sand.u32 %s81, 1
          %s231 = smul.addr %s230, 64
          %s232 = scalar_lea.vmem [#allocation5], %s231
          %s233 = smul.u32 8, %s31
          %s235 = ssub.s32 1024, 1024
          %236 = vsyncadd %s229, %s235
          %s237 = smul.addr %s30, 8
          %s238 = sadd.s32 %s233, %s237
          %s239 = smul.addr %s238, 128
          %s240 = scalar_lea.hbm %s1, %s239
          %s241 = sshll.u32 %s232, 4
          %s242 = int_to_ptr.vmem [resolvable:$true] %s241
          %247 = dma.hbm_to_vmem [thread:$0]  %s240, 1024, %s242, %s229, 128, 128, 8
        $region24: #{index_select_forward.10} parent=15 // pred_fallthru
          _
        // Predicated region
        $region25: #{index_select_forward.10} parent=15 // pred_check
          %p248 = pneg %p119
        $region26: #{index_select_forward.10} parent=15 // pred_check_branch
          %250 = sbr.rel (%p248) target = $region28
        $region27: #{index_select_forward.10} parent=15 // pred_region
          %s251 = sand.u32 %s22, 1
          %s252 = scalar_lea.sflag [#allocation6], %s251
          %s253 = sand.u32 %s109, 1
          %s254 = smul.addr %s253, 64
          %s255 = scalar_lea.vmem [#allocation7], %s254
          %s256 = smul.u32 8, %s29
          %s258 = ssub.s32 1024, 1024
          %259 = vsyncadd %s252, %s258
          %s260 = smul.addr %s30, 8
          %s261 = sadd.s32 %s256, %s260
          %s262 = smul.addr %s261, 128
          %s263 = scalar_lea.hbm %s2, %s262
          %s264 = sshll.u32 %s255, 4
          %s265 = int_to_ptr.vmem [resolvable:$true] %s264
          %270 = dma.hbm_to_vmem [thread:$0]  %s263, 1024, %s265, %s252, 128, 128, 8
        $region28: #{index_select_forward.10} parent=15 // pred_fallthru
          _
        // Predicated region
        $region29: #{index_select_forward.10} parent=15 // pred_check
          %p271 = pneg %p147
        $region30: #{index_select_forward.10} parent=15 // pred_check_branch
          %273 = sbr.rel (%p271) target = $region32
        $region31: #{index_select_forward.10} parent=15 // pred_region
          %s274 = sand.u32 %s137, 1
          %s275 = scalar_lea.sflag [#allocation9], %s274
          %s276 = sand.u32 %s137, 1
          %s277 = scalar_lea.vmem [#allocation8], %s276
          %s279 = ssub.s32 16, 16
          %280 = vsyncadd %s275, %s279
          %s281 = sadd.s32 %s31, %s30
          %s282 = smul.addr %s281, 16
          %s283 = scalar_lea.hbm %s3, %s282
          %s285 = sshll.u32 %s277, 4
          %s286 = int_to_ptr.vmem [resolvable:$true] %s285
          %288 = dma.hbm_to_vmem [thread:$0]  %s283, 16, %s286, %s275
        $region32: #{index_select_forward.10} parent=15 // pred_fallthru
          _
      $region16: #{index_select_forward.10} parent=5 // pred_fallthru
        _
      %p289 = scmp.le.s32.totalorder 1, %s22
      %p290 = scmp.lt.s32.totalorder %s22, 3
      %p291 = pnand %p289, %p290
      %p292 = pneg %p291
      // Predicated region
      $region33: #{index_select_forward.10} parent=5 // pred_check
        _
      $region34: #{index_select_forward.10} parent=5 // pred_check_branch
        %294 = sbr.rel (%p291) target = $region36
      $region35: #{index_select_forward.10} parent=5 // pred_region
        %s295 = ssub.s32 %s22, 1
        %s296 = sand.u32 %s56, 1
        %s297 = scalar_lea.sflag [#allocation3], %s296
        %s298 = sand.u32 %s56, 1
        %s299 = smul.addr %s298, 64
        %s300 = scalar_lea.vmem [#allocation2], %s299
        // Predicated region
        $region37: #{index_select_forward.10} parent=35 // pred_check
          %p301 = pneg %p69
        $region38: #{index_select_forward.10} parent=35 // pred_check_branch
          %303 = sbr.rel (%p301) target = $region40
        $region39: #{index_select_forward.10} parent=35 // pred_region
          %304 = dma.done %s297, 1024
        $region40: #{index_select_forward.10} parent=35 // pred_fallthru
          _
        %s305 = sand.u32 %s27, 1
        %s306 = scalar_lea.sflag [#allocation6], %s305
        %s307 = sand.u32 %s84, 1
        %s308 = smul.addr %s307, 64
        %s309 = scalar_lea.vmem [#allocation5], %s308
        // Predicated region
        $region41: #{index_select_forward.10} parent=35 // pred_check
          %p310 = pneg %p97
        $region42: #{index_select_forward.10} parent=35 // pred_check_branch
          %312 = sbr.rel (%p310) target = $region44
        $region43: #{index_select_forward.10} parent=35 // pred_region
          %313 = dma.done %s306, 1024
        $region44: #{index_select_forward.10} parent=35 // pred_fallthru
          _
        %s314 = sand.u32 %s27, 1
        %s315 = scalar_lea.sflag [#allocation6], %s314
        %s316 = sand.u32 %s112, 1
        %s317 = smul.addr %s316, 64
        %s318 = scalar_lea.vmem [#allocation7], %s317
        // Predicated region
        $region45: #{index_select_forward.10} parent=35 // pred_check
          %p319 = pneg %p125
        $region46: #{index_select_forward.10} parent=35 // pred_check_branch
          %321 = sbr.rel (%p319) target = $region48
        $region47: #{index_select_forward.10} parent=35 // pred_region
          %322 = dma.done %s315, 1024
        $region48: #{index_select_forward.10} parent=35 // pred_fallthru
          _
        %s323 = sand.u32 %s140, 1
        %s324 = scalar_lea.sflag [#allocation9], %s323
        %s325 = sand.u32 %s140, 1
        %s326 = scalar_lea.vmem [#allocation8], %s325
        // Predicated region
        $region49: #{index_select_forward.10} parent=35 // pred_check
          %p327 = pneg %p153
        $region50: #{index_select_forward.10} parent=35 // pred_check_branch
          %329 = sbr.rel (%p327) target = $region52
        $region51: #{index_select_forward.10} parent=35 // pred_region
          %330 = dma.done %s324, 16
        $region52: #{index_select_forward.10} parent=35 // pred_fallthru
          _
        %s331 = sand.u32 %s56, 1
        %s332 = scalar_lea.sflag [#allocation3], %s331
        %s333 = sand.u32 %s56, 1
        %s334 = smul.addr %s333, 64
        %s335 = scalar_lea.vmem [#allocation2], %s334
        %p336 = pneg %p69
        %p337 = pneg %p66
        %s338 = sand.u32 %s27, 1
        %s339 = scalar_lea.sflag [#allocation6], %s338
        %s340 = sand.u32 %s84, 1
        %s341 = smul.addr %s340, 64
        %s342 = scalar_lea.vmem [#allocation5], %s341
        %p343 = pneg %p97
        %p344 = pneg %p94
        %s345 = sand.u32 %s27, 1
        %s346 = scalar_lea.sflag [#allocation6], %s345
        %s347 = sand.u32 %s112, 1
        %s348 = smul.addr %s347, 64
        %s349 = scalar_lea.vmem [#allocation7], %s348
        %p350 = pneg %p125
        %p351 = pneg %p122
        %s352 = sand.u32 %s140, 1
        %s353 = scalar_lea.sflag [#allocation9], %s352
        %s354 = sand.u32 %s140, 1
        %s355 = scalar_lea.vmem [#allocation8], %s354
        %p356 = pneg %p153
        %p357 = pneg %p150
        %p358 = pneg %p183
        %p359 = pneg %p180
        %s360 = sand.u32 %s170, 1
        %s361 = scalar_lea.sflag [#allocation4], %s360
        %s362 = sand.u32 %s170, 1
        %s363 = smul.addr %s362, 64
        %s364 = scalar_lea.vmem [#allocation10], %s363
        %s365 = smul.u32 8, %s32
        %s366 = smul.u32 8, %s34
        %s367 = smul.u32 8, %s32
        %s368 = smul.u32 8, %s32
        %v369 = vld [vmem:[%s300] sm:$0xff]
        %v370 = vld [vmem:[%s300 + $0x8] sm:$0xff]
        %v371 = vld [vmem:[%s300 + $0x10] sm:$0xff]
        %v372 = vld [vmem:[%s300 + $0x18] sm:$0xff]
        %v373 = vld [vmem:[%s300 + $0x20] sm:$0xff]
        %v374 = vld [vmem:[%s300 + $0x28] sm:$0xff]
        %v375 = vld [vmem:[%s300 + $0x30] sm:$0xff]
        %v376 = vld [vmem:[%s300 + $0x38] sm:$0xff]
        %v377 = vld [vmem:[%s309] sm:$0xff]
        %v378 = vld [vmem:[%s309 + $0x8] sm:$0xff]
        %v379 = vld [vmem:[%s309 + $0x10] sm:$0xff]
        %v380 = vld [vmem:[%s309 + $0x18] sm:$0xff]
        %v381 = vld [vmem:[%s309 + $0x20] sm:$0xff]
        %v382 = vld [vmem:[%s309 + $0x28] sm:$0xff]
        %v383 = vld [vmem:[%s309 + $0x30] sm:$0xff]
        %v384 = vld [vmem:[%s309 + $0x38] sm:$0xff]
        %vm385 = vcmask 261120
        %v387 = vsel %vm385, %v369, 0
        %v390 = vsel %vm385, %v370, 0
        %v393 = vsel %vm385, %v371, 0
        %v396 = vsel %vm385, %v372, 0
        %v399 = vsel %vm385, %v373, 0
        %v402 = vsel %vm385, %v374, 0
        %v405 = vsel %vm385, %v375, 0
        %v408 = vsel %vm385, %v376, 0
        %v411 = vsel %vm385, %v377, 0
        %v414 = vsel %vm385, %v378, 0
        %v417 = vsel %vm385, %v379, 0
        %v420 = vsel %vm385, %v380, 0
        %v423 = vsel %vm385, %v381, 0
        %v426 = vsel %vm385, %v382, 0
        %v429 = vsel %vm385, %v383, 0
        %v432 = vsel %vm385, %v384, 0
        %434 = vmatprep.subr.mxu0 0.0
        %435 = vmatpush1.xpose.msra.mxu0 %v411
        %436 = vmatprep.subr.mxu0 0.0
        %437 = vmatpush1.xpose.msra.mxu0 %v414
        %438 = vmatprep.subr.mxu0 0.0
        %439 = vmatpush1.xpose.msra.mxu0 %v417
        %440 = vmatprep.subr.mxu0 0.0
        %441 = vmatpush1.xpose.msra.mxu0 %v420
        %442 = vmatprep.subr.mxu0 0.0
        %443 = vmatpush1.xpose.msra.mxu0 %v423
        %444 = vmatprep.subr.mxu0 0.0
        %445 = vmatpush1.xpose.msra.mxu0 %v426
        %446 = vmatprep.subr.mxu0 0.0
        %447 = vmatpush1.xpose.msra.mxu0 %v429
        %448 = vmatprep.subr.mxu0 0.0
        %449 = vmatpush1.xpose.msra.mxu0 %v432
        %450 = vmatprep.subr.mxu0 0.0
        %451 = vmatpush1.xpose.msra.mxu0 0.0
        %452 = vmatprep.subr.mxu0 0.0
        %453 = vmatpush1.xpose.msra.mxu0 0.0
        %454 = vmatprep.subr.mxu0 0.0
        %455 = vmatpush1.xpose.msra.mxu0 0.0
        %456 = vmatprep.subr.mxu0 0.0
        %457 = vmatpush1.xpose.msra.mxu0 0.0
        %458 = vmatprep.subr.mxu0 0.0
        %459 = vmatpush1.xpose.msra.mxu0 0.0
        %460 = vmatprep.subr.mxu0 0.0
        %461 = vmatpush1.xpose.msra.mxu0 0.0
        %462 = vmatprep.subr.mxu0 0.0
        %463 = vmatpush1.xpose.msra.mxu0 0.0
        %464 = vmatprep.subr.mxu0 0.0
        %465 = vmatpush1.xpose.msra.mxu0 0.0
        %466 = vmatprep.subr.mxu0 0.0
        %467 = vmatpush1.xpose.msra.mxu0 0.0
        %468 = vmatprep.subr.mxu0 0.0
        %469 = vmatpush1.xpose.msra.mxu0 0.0
        %470 = vmatprep.subr.mxu0 0.0
        %471 = vmatpush1.xpose.msra.mxu0 0.0
        %472 = vmatprep.subr.mxu0 0.0
        %473 = vmatpush1.xpose.msra.mxu0 0.0
        %474 = vmatprep.subr.mxu0 0.0
        %475 = vmatpush1.xpose.msra.mxu0 0.0
        %476 = vmatprep.subr.mxu0 0.0
        %477 = vmatpush1.xpose.msra.mxu0 0.0
        %478 = vmatprep.subr.mxu0 0.0
        %479 = vmatpush1.xpose.msra.mxu0 0.0
        %480 = vmatprep.subr.mxu0 0.0
        %481 = vmatpush1.xpose.msra.mxu0 0.0
        %482 = vmatprep.subr.mxu0 0.0
        %483 = vmatpush1.xpose.msra.mxu0 0.0
        %484 = vmatprep.subr.mxu0 0.0
        %485 = vmatpush1.xpose.msra.mxu0 0.0
        %486 = vmatprep.subr.mxu0 0.0
        %487 = vmatpush1.xpose.msra.mxu0 0.0
        %488 = vmatprep.subr.mxu0 0.0
        %489 = vmatpush1.xpose.msra.mxu0 0.0
        %490 = vmatprep.subr.mxu0 0.0
        %491 = vmatpush1.xpose.msra.mxu0 0.0
        %492 = vmatprep.subr.mxu0 0.0
        %493 = vmatpush1.xpose.msra.mxu0 0.0
        %494 = vmatprep.subr.mxu0 0.0
        %495 = vmatpush1.xpose.msra.mxu0 0.0
        %496 = vmatprep.subr.mxu0 0.0
        %497 = vmatpush1.xpose.msra.mxu0 0.0
        %498 = vmatprep.mubr.f32.mxu0 0.0
        %499 = vmatmul.mubr.f32.gmra.mrb[0].mxu0 %v387
        %v500 = vpop.f32.mrb[0].mxu0
        %v501 = vadd.f32 0.0, %v500
        %v502 = vpop.f32.mrb[0].mxu0
        %503 = vmatprep.mubr.f32.mxu0 0.0
        %504 = vmatmul.mubr.f32.gmra.mrb[0].mxu0 %v390
        %v505 = vpop.f32.mrb[0].mxu0
        %v506 = vadd.f32 0.0, %v505
        %v507 = vpop.f32.mrb[0].mxu0
        %508 = vmatprep.mubr.f32.mxu0 0.0
        %509 = vmatmul.mubr.f32.gmra.mrb[0].mxu0 %v393
        %v510 = vpop.f32.mrb[0].mxu0
        %v511 = vadd.f32 0.0, %v510
        %v512 = vpop.f32.mrb[0].mxu0
        %513 = vmatprep.mubr.f32.mxu0 0.0
        %514 = vmatmul.mubr.f32.gmra.mrb[0].mxu0 %v396
        %v515 = vpop.f32.mrb[0].mxu0
        %v516 = vadd.f32 0.0, %v515
        %v517 = vpop.f32.mrb[0].mxu0
        %518 = vmatprep.mubr.f32.mxu0 0.0
        %519 = vmatmul.mubr.f32.gmra.mrb[0].mxu0 %v399
        %v520 = vpop.f32.mrb[0].mxu0
        %v521 = vadd.f32 0.0, %v520
        %v522 = vpop.f32.mrb[0].mxu0
        %523 = vmatprep.mubr.f32.mxu0 0.0
        %524 = vmatmul.mubr.f32.gmra.mrb[0].mxu0 %v402
        %v525 = vpop.f32.mrb[0].mxu0
        %v526 = vadd.f32 0.0, %v525
        %v527 = vpop.f32.mrb[0].mxu0
        %528 = vmatprep.mubr.f32.mxu0 0.0
        %529 = vmatmul.mubr.f32.gmra.mrb[0].mxu0 %v405
        %v530 = vpop.f32.mrb[0].mxu0
        %v531 = vadd.f32 0.0, %v530
        %v532 = vpop.f32.mrb[0].mxu0
        %533 = vmatprep.mubr.f32.mxu0 0.0
        %534 = vmatmul.mubr.f32.gmra.mrb[0].mxu0 %v408
        %v535 = vpop.f32.mrb[0].mxu0
        %v536 = vadd.f32 0.0, %v535
        %v537 = vpop.f32.mrb[0].mxu0
        %538 = vdwg.mxu0
        %v539 = vmul.f32 %v501, 2.0
        %v540 = vmul.f32 %v506, 2.0
        %v541 = vmul.f32 %v511, 2.0
        %v542 = vmul.f32 %v516, 2.0
        %v543 = vmul.f32 %v521, 2.0
        %v544 = vmul.f32 %v526, 2.0
        %v545 = vmul.f32 %v531, 2.0
        %v546 = vmul.f32 %v536, 2.0
        %v547 = vld [vmem:[%s318] sm:$0xff]
        %v548 = vld [vmem:[%s318 + $0x8] sm:$0xff]
        %v549 = vld [vmem:[%s318 + $0x10] sm:$0xff]
        %v550 = vld [vmem:[%s318 + $0x18] sm:$0xff]
        %v551 = vld [vmem:[%s318 + $0x20] sm:$0xff]
        %v552 = vld [vmem:[%s318 + $0x28] sm:$0xff]
        %v553 = vld [vmem:[%s318 + $0x30] sm:$0xff]
        %v554 = vld [vmem:[%s318 + $0x38] sm:$0xff]
        %556 = vset.pattern.permute.xlu0 0
        %557 = vperm.xlu0 %556, %v547
        %v558 = vpop.permute.xlu0 %557
        %561 = vset.pattern.permute.xlu0 0
        %562 = vperm.xlu0 %561, %v548
        %v563 = vpop.permute.xlu0 %562
        %566 = vset.pattern.permute.xlu0 0
        %567 = vperm.xlu0 %566, %v549
        %v568 = vpop.permute.xlu0 %567
        %571 = vset.pattern.permute.xlu0 0
        %572 = vperm.xlu0 %571, %v550
        %v573 = vpop.permute.xlu0 %572
        %576 = vset.pattern.permute.xlu0 0
        %577 = vperm.xlu0 %576, %v551
        %v578 = vpop.permute.xlu0 %577
        %581 = vset.pattern.permute.xlu0 0
        %582 = vperm.xlu0 %581, %v552
        %v583 = vpop.permute.xlu0 %582
        %586 = vset.pattern.permute.xlu0 0
        %587 = vperm.xlu0 %586, %v553
        %v588 = vpop.permute.xlu0 %587
        %591 = vset.pattern.permute.xlu0 0
        %592 = vperm.xlu0 %591, %v554
        %v593 = vpop.permute.xlu0 %592
        %v595 = vsub.f32 %v539, %v558
        %v596 = vsub.f32 %v540, %v563
        %v597 = vsub.f32 %v541, %v568
        %v598 = vsub.f32 %v542, %v573
        %v599 = vsub.f32 %v543, %v578
        %v600 = vsub.f32 %v544, %v583
        %v601 = vsub.f32 %v545, %v588
        %v602 = vsub.f32 %v546, %v593
        %v603 = vld [vmem:[%s326] sm:$0x1]
        %v605 = vlaneseq
        %v606 = vshrl.u32 %v605, 7
        %v607 = vsub.s32 0, %v606
        %v608 = vrot.slane %v603, %v607
        %v610 = vsub.f32 %v595, %v608
        %v611 = vsub.f32 %v596, %v608
        %v612 = vsub.f32 %v597, %v608
        %v613 = vsub.f32 %v598, %v608
        %v614 = vsub.f32 %v599, %v608
        %v615 = vsub.f32 %v600, %v608
        %v616 = vsub.f32 %v601, %v608
        %v617 = vsub.f32 %v602, %v608
        %vm618 = vcmask 523264
        %619 = vst.msk [vmem:[%s364] sm:$0xff] %vm618, %v610
        %620 = vst.msk [vmem:[%s364 + $0x8] sm:$0xff] %vm618, %v611
        %621 = vst.msk [vmem:[%s364 + $0x10] sm:$0xff] %vm618, %v612
        %622 = vst.msk [vmem:[%s364 + $0x18] sm:$0xff] %vm618, %v613
        %623 = vst.msk [vmem:[%s364 + $0x20] sm:$0xff] %vm618, %v614
        %624 = vst.msk [vmem:[%s364 + $0x28] sm:$0xff] %vm618, %v615
        %625 = vst.msk [vmem:[%s364 + $0x30] sm:$0xff] %vm618, %v616
        %626 = vst.msk [vmem:[%s364 + $0x38] sm:$0xff] %vm618, %v617
        %s627 = sand.u32 %s170, 1
        %s628 = scalar_lea.sflag [#allocation4], %s627
        %s629 = sand.u32 %s170, 1
        %s630 = smul.addr %s629, 64
        %s631 = scalar_lea.vmem [#allocation10], %s630
        // Predicated region
        $region53: #{index_select_forward.10} parent=35 // pred_check
          %p632 = pneg %p180
        $region54: #{index_select_forward.10} parent=35 // pred_check_branch
          %634 = sbr.rel (%p632) target = $region56
        $region55: #{index_select_forward.10} parent=35 // pred_region
          %s635 = smul.u32 8, %s32
          %s637 = ssub.s32 1024, 1024
          %638 = vsyncadd %s628, %s637
          %s639 = sadd.s32 %s34, %s635
          %s640 = smul.addr %s33, 8
          %s641 = sadd.s32 %s639, %s640
          %s642 = smul.addr %s641, 128
          %s643 = scalar_lea.hbm %s4, %s642
          %s644 = sshll.u32 %s631, 4
          %s645 = int_to_ptr.vmem [resolvable:$true] %s644
          %650 = dma.vmem_to_hbm [thread:$0]  %s645, 1024, %s643, %s628, 128, 128, 8
        $region56: #{index_select_forward.10} parent=35 // pred_fallthru
          _
      $region36: #{index_select_forward.10} parent=5 // pred_fallthru
        _
      %p651 = scmp.le.s32.totalorder 2, %s22
      // Predicated region
      $region57: #{index_select_forward.10} parent=5 // pred_check
        %p652 = pneg %p651
      $region58: #{index_select_forward.10} parent=5 // pred_check_branch
        %654 = sbr.rel (%p652) target = $region60
      $region59: #{index_select_forward.10} parent=5 // pred_region
        %s655 = ssub.s32 %s22, 2
        // Predicated region
        $region61: #{index_select_forward.10} parent=59 // pred_check
          %p656 = pneg %p186
        $region62: #{index_select_forward.10} parent=59 // pred_check_branch
          %658 = sbr.rel (%p656) target = $region64
        $region63: #{index_select_forward.10} parent=59 // pred_region
          %s659 = sand.u32 %s171, 1
          %s660 = scalar_lea.sflag [#allocation4], %s659
          %s661 = sand.u32 %s171, 1
          %s662 = smul.addr %s661, 64
          %s663 = scalar_lea.vmem [#allocation10], %s662
          %664 = dma.done %s660, 1024
        $region64: #{index_select_forward.10} parent=59 // pred_fallthru
          _
      $region60: #{index_select_forward.10} parent=5 // pred_fallthru
        _
    $region6: #{index_select_forward.10} parent=1 // loop_footer
      %s26 = sadd.s32 1, %s22
    $region7: #{index_select_forward.10} parent=1 // loop_footer_branch
      %21 = sbr.rel target = $region3
    $region8: #{index_select_forward.10} parent=1 // loop_exit
      _
    %665 = vsyncpa [#allocation3], 1
    %s666 = scalar_lea.sflag [#allocation3], 1
    %667 = vsyncpa %s666, 1
    %668 = vsyncpa [#allocation6], 1
    %s669 = scalar_lea.sflag [#allocation6], 1
    %670 = vsyncpa %s669, 1
    %671 = vsyncpa [#allocation9], 1
    %s672 = scalar_lea.sflag [#allocation9], 1
    %673 = vsyncpa %s672, 1
    %674 = vsyncpa [#allocation4], 1
    %s675 = scalar_lea.sflag [#allocation4], 1
    %676 = vsyncpa %s675, 1

// kernel: sub.13
$region0: #{sub.13}
  #allocation0 [shape = 's32[1]{0}', space=sflag, size = 0x4, scoped, tag = 'scoped memory for sub.13']
  %s0 = inlined_call_operand.vmem [shape: f32[32,32], index: 0, kind: input, shape index: {}]
  %s1 = inlined_call_operand.vmem [shape: f32[32,32], index: 1, kind: input, shape index: {}]
  %s2 = inlined_call_operand.vmem [shape: f32[32,32], index: 2, kind: output, shape index: {}]
  %v3 = vld [vmem:[%s0] sm:$0xff]
  %v4 = vld [vmem:[%s1] sm:$0xff]
  %5 = xla_tuple %v3, %v4
  %6 = xla_tuple %5
  %v7 = vsub.f32 %v3, %v4
  %8 = xla_tuple %v7
  %9 = vst [vmem:[%s2] sm:$0xff] %v7
  %s10 = scalar_lea.vmem %s0, 8
  %v11 = vld [vmem:[%s10] sm:$0xff]
  %s12 = scalar_lea.vmem %s1, 8
  %v13 = vld [vmem:[%s12] sm:$0xff]
  %14 = xla_tuple %v11, %v13
  %15 = xla_tuple %14
  %v16 = vsub.f32 %v11, %v13
  %17 = xla_tuple %v16
  %s18 = scalar_lea.vmem %s2, 8
  %19 = vst [vmem:[%s18] sm:$0xff] %v16
  %s20 = scalar_lea.vmem %s0, 16
  %v21 = vld [vmem:[%s20] sm:$0xff]
  %s22 = scalar_lea.vmem %s1, 16
  %v23 = vld [vmem:[%s22] sm:$0xff]
  %24 = xla_tuple %v21, %v23
  %25 = xla_tuple %24
  %v26 = vsub.f32 %v21, %v23
  %27 = xla_tuple %v26
  %s28 = scalar_lea.vmem %s2, 16
  %29 = vst [vmem:[%s28] sm:$0xff] %v26
  %s30 = scalar_lea.vmem %s0, 24
  %v31 = vld [vmem:[%s30] sm:$0xff]
  %s32 = scalar_lea.vmem %s1, 24
  %v33 = vld [vmem:[%s32] sm:$0xff]
  %34 = xla_tuple %v31, %v33
  %35 = xla_tuple %34
  %v36 = vsub.f32 %v31, %v33
  %37 = xla_tuple %v36
  %s38 = scalar_lea.vmem %s2, 24
  %39 = vst [vmem:[%s38] sm:$0xff] %v36

// kernel: index_select_forward.9
$region0: #{index_select_forward.9}
  #allocation0 [shape = 'u32[]', space=smem, size = 0x4, offset = 0x4, fixed_abs, tag = 'smem constant byte address 0x4 - core index']
  #allocation1 [shape = 'u32[144,128]{1,0:T(1,128)}', space=vmem, size = 0x12000, scoped, tag = 'internal scratch']
  %s0 = inlined_call_operand.hbm [shape: f32[2,64,32], index: 0, kind: input, shape index: {}]
  %s1 = inlined_call_operand.hbm [shape: f32[32,64], index: 1, kind: input, shape index: {}]
  %s2 = inlined_call_operand.hbm [shape: f32[2,64,32], index: 2, kind: output, shape index: {0}]
  %s3 = inlined_call_operand.hbm [shape: f32[2,64,32], index: 3, kind: output, shape index: {1}]
  %4 = xla_tuple %s2, %s3
  %s5 = sld [smem:[#allocation0]]
  $region57: #{index_select_forward.9} parent=0
    _
  %s7 = ssub.s32 1, %s5
  %s8 = scalar_select 0, %s7, %s5
  $region1: #{index_select_forward.9} parent=0
    #allocation2 [shape = 'u8[65536]{0}', space=vmem, size = 0x10000, scoped, tag = 'input window, operand 0']
    #allocation3 [shape = 's32[2]{0}', space=sflag, size = 0x8, scoped, tag = 'scoped memory for index_select_forward.9']
    #allocation4 [shape = 's32[2]{0}', space=sflag, size = 0x8, scoped, tag = 'scoped memory for index_select_forward.9']
    #allocation5 [shape = 'u8[16384]{0}', space=vmem, size = 0x4000, scoped, tag = 'input window, operand 1, single buffered']
    #allocation6 [shape = 's32[1]{0}', space=sflag, size = 0x4, scoped, tag = 'scoped memory for index_select_forward.9']
    #allocation7 [shape = 'u8[65536]{0}', space=vmem, size = 0x10000, scoped, tag = 'output window, operand 0']
    #allocation8 [shape = 'u8[65536]{0}', space=vmem, size = 0x10000, scoped, tag = 'output window, operand 1']
    #allocation9 [shape = 's32[2]{0}', space=sflag, size = 0x8, scoped, tag = 'scoped memory for index_select_forward.9']
    %9 = vsyncpa [#allocation3], 0
    %s10 = scalar_lea.sflag [#allocation3], 1
    %11 = vsyncpa %s10, 0
    %12 = vsyncpa [#allocation6], 0
    %13 = vsyncpa [#allocation4], 0
    %s14 = scalar_lea.sflag [#allocation4], 1
    %15 = vsyncpa %s14, 0
    %16 = vsyncpa [#allocation9], 0
    %s17 = scalar_lea.sflag [#allocation9], 1
    %18 = vsyncpa %s17, 0
    loop: start=0, step=1, limit=4
    $region2: #{index_select_forward.9} parent=1 // loop_pre_header
      _
    $region3: #{index_select_forward.9} parent=1 // loop_header
      %s20 = sphi 0, %s24
      %p21 = scmp.ge.s32.totalorder %s20, 4
      %s27 = sphi 0, %s39
      %s28 = sphi 0, %s35
      %s29 = sphi 0, %s27
      %s30 = sphi 0, %s28
      %s31 = sphi 0, %s29
      %s32 = sphi 0, %s30
      %s44 = sphi 0, %s46
      %s47 = sphi 0, %s44
      %s48 = sphi 0, %s47
      %s64 = sphi 0, %s48
      %s68 = sphi 0, %s68
      %s70 = sphi 0, %s68
      %s71 = sphi 0, %s70
      %s85 = sphi 0, %s71
      %s93 = sphi 0, %s95
      %s96 = sphi 0, %s93
      %s97 = sphi 0, %s96
      %s113 = sphi 0, %s97
      %s121 = sphi 0, %s123
      %s124 = sphi 0, %s121
      %s125 = sphi 0, %s124
      %s141 = sphi 0, %s125
    $region4: #{index_select_forward.9} parent=1 // loop_header_branch
      %23 = sbr.rel (%p21) target = $region8
    $region5: #{index_select_forward.9} parent=1 // loop_body
      %s25 = ssub.s32 %s20, 1
      %s26 = ssub.s32 %s20, 2
      %s33 = sadd.s32 1, %s28
      %p34 = scmp.ge.s32.totalorder %s33, 1
      %s35 = scalar_select %p34, 0, %s33
      %s36 = sadd.s32 1, %s27
      %s37 = scalar_select %p34, %s36, %s27
      %p38 = scmp.ge.s32.totalorder %s37, 2
      %s39 = scalar_select %p38, 0, %s37
      %s40 = ssub.s32 %s27, %s39
      %s41 = ssub.s32 %s28, %s35
      %s42 = sor.u32 %s40, %s41
      %p43 = scmp.eq.s32.totalorder %s42, 0
      %s45 = sadd.s32 %s44, 1
      %s46 = scalar_select %p43, %s44, %s45
      %p49 = pneg %p43
      %p50 = scmp.eq.s32.totalorder %s20, 1
      %p51 = por %p49, %p50
      %p52 = scmp.ne.s32.totalorder %s44, %s47
      %p53 = scmp.eq.s32.totalorder %s20, 0
      %p54 = por %p52, %p53
      %p55 = scmp.ne.s32.totalorder %s44, %s47
      %p56 = scmp.eq.s32.totalorder %s25, 1
      %p57 = por %p55, %p56
      %p58 = scmp.ne.s32.totalorder %s47, %s48
      %p59 = scmp.eq.s32.totalorder %s25, 0
      %p60 = por %p58, %p59
      %p61 = scmp.ne.s32.totalorder %s47, %s48
      %p62 = scmp.eq.s32.totalorder %s26, 1
      %p63 = por %p61, %p62
      %p65 = scmp.ne.s32.totalorder %s48, %s64
      %p66 = scmp.eq.s32.totalorder %s26, 0
      %p67 = por %p65, %p66
      %s69 = sadd.s32 %s68, 1
      %p72 = scmp.eq.s32.totalorder %s20, 1
      %p73 = scmp.ne.s32.totalorder %s68, %s70
      %p74 = scmp.eq.s32.totalorder %s20, 0
      %p75 = por %p73, %p74
      %p76 = scmp.ne.s32.totalorder %s68, %s70
      %p77 = scmp.eq.s32.totalorder %s25, 1
      %p78 = por %p76, %p77
      %p79 = scmp.ne.s32.totalorder %s70, %s71
      %p80 = scmp.eq.s32.totalorder %s25, 0
      %p81 = por %p79, %p80
      %p82 = scmp.ne.s32.totalorder %s70, %s71
      %p83 = scmp.eq.s32.totalorder %s26, 1
      %p84 = por %p82, %p83
      %p86 = scmp.ne.s32.totalorder %s71, %s85
      %p87 = scmp.eq.s32.totalorder %s26, 0
      %p88 = por %p86, %p87
      %s89 = ssub.s32 %s27, %s39
      %s90 = ssub.s32 %s28, %s35
      %s91 = sor.u32 %s89, %s90
      %p92 = scmp.eq.s32.totalorder %s91, 0
      %s94 = sadd.s32 %s93, 1
      %s95 = scalar_select %p92, %s93, %s94
      %p98 = pneg %p92
      %p99 = scmp.eq.s32.totalorder %s20, 1
      %p100 = por %p98, %p99
      %p101 = scmp.ne.s32.totalorder %s93, %s96
      %p102 = scmp.eq.s32.totalorder %s20, 0
      %p103 = por %p101, %p102
      %p104 = scmp.ne.s32.totalorder %s93, %s96
      %p105 = scmp.eq.s32.totalorder %s25, 1
      %p106 = por %p104, %p105
      %p107 = scmp.ne.s32.totalorder %s96, %s97
      %p108 = scmp.eq.s32.totalorder %s25, 0
      %p109 = por %p107, %p108
      %p110 = scmp.ne.s32.totalorder %s96, %s97
      %p111 = scmp.eq.s32.totalorder %s26, 1
      %p112 = por %p110, %p111
      %p114 = scmp.ne.s32.totalorder %s97, %s113
      %p115 = scmp.eq.s32.totalorder %s26, 0
      %p116 = por %p114, %p115
      %s117 = ssub.s32 %s27, %s39
      %s118 = ssub.s32 %s28, %s35
      %s119 = sor.u32 %s117, %s118
      %p120 = scmp.eq.s32.totalorder %s119, 0
      %s122 = sadd.s32 %s121, 1
      %s123 = scalar_select %p120, %s121, %s122
      %p126 = pneg %p120
      %p127 = scmp.eq.s32.totalorder %s20, 1
      %p128 = por %p126, %p127
      %p129 = scmp.ne.s32.totalorder %s121, %s124
      %p130 = scmp.eq.s32.totalorder %s20, 0
      %p131 = por %p129, %p130
      %p132 = scmp.ne.s32.totalorder %s121, %s124
      %p133 = scmp.eq.s32.totalorder %s25, 1
      %p134 = por %p132, %p133
      %p135 = scmp.ne.s32.totalorder %s124, %s125
      %p136 = scmp.eq.s32.totalorder %s25, 0
      %p137 = por %p135, %p136
      %p138 = scmp.ne.s32.totalorder %s124, %s125
      %p139 = scmp.eq.s32.totalorder %s26, 1
      %p140 = por %p138, %p139
      %p142 = scmp.ne.s32.totalorder %s125, %s141
      %p143 = scmp.eq.s32.totalorder %s26, 0
      %p144 = por %p142, %p143
      %p145 = scmp.le.s32.totalorder 1, %s20
      %p146 = scmp.lt.s32.totalorder %s20, 3
      %p147 = pnand %p145, %p146
      %p148 = pneg %p147
      // Predicated region
      $region9: #{index_select_forward.9} parent=5 // pred_check
        _
      $region10: #{index_select_forward.9} parent=5 // pred_check_branch
        %150 = sbr.rel (%p147) target = $region12
      $region11: #{index_select_forward.9} parent=5 // pred_region
        %s151 = ssub.s32 %s20, 1
        // Predicated region
        $region13: #{index_select_forward.9} parent=11 // pred_check
          %p152 = pneg %p81
        $region14: #{index_select_forward.9} parent=11 // pred_check_branch
          %154 = sbr.rel (%p152) target = $region16
        $region15: #{index_select_forward.9} parent=11 // pred_region
          %s156 = ssub.s32 512, 512
          %157 = vsyncadd [#allocation6], %s156
          %s158 = sshll.u32 [#allocation5], 4
          %s159 = int_to_ptr.vmem [resolvable:$true] %s158
          %164 = dma.hbm_to_vmem [thread:$0]  %s1, 512, %s159, [#allocation6], 128, 128, 8
        $region16: #{index_select_forward.9} parent=11 // pred_fallthru
          _
      $region12: #{index_select_forward.9} parent=5 // pred_fallthru
        _
      %p165 = scmp.lt.s32.totalorder %s20, 2
      // Predicated region
      $region17: #{index_select_forward.9} parent=5 // pred_check
        %p166 = pneg %p165
      $region18: #{index_select_forward.9} parent=5 // pred_check_branch
        %168 = sbr.rel (%p166) target = $region20
      $region19: #{index_select_forward.9} parent=5 // pred_region
        // Predicated region
        $region21: #{index_select_forward.9} parent=19 // pred_check
          %p169 = pneg %p54
        $region22: #{index_select_forward.9} parent=19 // pred_check_branch
          %171 = sbr.rel (%p169) target = $region24
        $region23: #{index_select_forward.9} parent=19 // pred_region
          %s172 = sand.u32 %s44, 1
          %s173 = scalar_lea.sflag [#allocation3], %s172
          %s174 = sand.u32 %s44, 1
          %s175 = smul.addr %s174, 64
          %s176 = scalar_lea.vmem [#allocation2], %s175
          %s177 = smul.u32 8, %s28
          %s179 = ssub.s32 1024, 1024
          %180 = vsyncadd %s173, %s179
          %s181 = smul.addr %s27, 8
          %s182 = sadd.s32 %s177, %s181
          %s183 = smul.addr %s182, 128
          %s184 = scalar_lea.hbm %s0, %s183
          %s185 = sshll.u32 %s176, 4
          %s186 = int_to_ptr.vmem [resolvable:$true] %s185
          %191 = dma.hbm_to_vmem [thread:$0]  %s184, 1024, %s186, %s173, 128, 128, 8
        $region24: #{index_select_forward.9} parent=19 // pred_fallthru
          _
      $region20: #{index_select_forward.9} parent=5 // pred_fallthru
        _
      %p192 = scmp.le.s32.totalorder 1, %s20
      %p193 = scmp.lt.s32.totalorder %s20, 3
      %p194 = pnand %p192, %p193
      %p195 = pneg %p194
      // Predicated region
      $region25: #{index_select_forward.9} parent=5 // pred_check
        _
      $region26: #{index_select_forward.9} parent=5 // pred_check_branch
        %197 = sbr.rel (%p194) target = $region28
      $region27: #{index_select_forward.9} parent=5 // pred_region
        %s198 = ssub.s32 %s20, 1
        %s199 = sand.u32 %s47, 1
        %s200 = scalar_lea.sflag [#allocation3], %s199
        %s201 = sand.u32 %s47, 1
        %s202 = smul.addr %s201, 64
        %s203 = scalar_lea.vmem [#allocation2], %s202
        // Predicated region
        $region29: #{index_select_forward.9} parent=27 // pred_check
          %p204 = pneg %p60
        $region30: #{index_select_forward.9} parent=27 // pred_check_branch
          %206 = sbr.rel (%p204) target = $region32
        $region31: #{index_select_forward.9} parent=27 // pred_region
          %207 = dma.done %s200, 1024
        $region32: #{index_select_forward.9} parent=27 // pred_fallthru
          _
        // Predicated region
        $region33: #{index_select_forward.9} parent=27 // pred_check
          %p208 = pneg %p81
        $region34: #{index_select_forward.9} parent=27 // pred_check_branch
          %210 = sbr.rel (%p208) target = $region36
        $region35: #{index_select_forward.9} parent=27 // pred_region
          %211 = dma.done [#allocation6], 512
        $region36: #{index_select_forward.9} parent=27 // pred_fallthru
          _
        %s212 = sand.u32 %s47, 1
        %s213 = scalar_lea.sflag [#allocation3], %s212
        %s214 = sand.u32 %s47, 1
        %s215 = smul.addr %s214, 64
        %s216 = scalar_lea.vmem [#allocation2], %s215
        %p217 = pneg %p60
        %p218 = pneg %p57
        %p219 = pneg %p81
        %p220 = pneg %p78
        %p221 = pneg %p109
        %p222 = pneg %p106
        %s223 = sand.u32 %s96, 1
        %s224 = scalar_lea.sflag [#allocation4], %s223
        %s225 = sand.u32 %s96, 1
        %s226 = smul.addr %s225, 64
        %s227 = scalar_lea.vmem [#allocation7], %s226
        %p228 = pneg %p137
        %p229 = pneg %p134
        %s230 = sand.u32 %s124, 1
        %s231 = scalar_lea.sflag [#allocation9], %s230
        %s232 = sand.u32 %s124, 1
        %s233 = smul.addr %s232, 64
        %s234 = scalar_lea.vmem [#allocation8], %s233
        %s235 = smul.u32 8, %s30
        %s236 = smul.u32 8, %s30
        %s237 = smul.u32 8, %s30
        %v238 = vld [vmem:[%s203] sm:$0xff]
        %v239 = vld [vmem:[%s203 + $0x8] sm:$0xff]
        %v240 = vld [vmem:[%s203 + $0x10] sm:$0xff]
        %v241 = vld [vmem:[%s203 + $0x18] sm:$0xff]
        %v242 = vld [vmem:[%s203 + $0x20] sm:$0xff]
        %v243 = vld [vmem:[%s203 + $0x28] sm:$0xff]
        %v244 = vld [vmem:[%s203 + $0x30] sm:$0xff]
        %v245 = vld [vmem:[%s203 + $0x38] sm:$0xff]
        %v246 = vld [vmem:[#allocation5] sm:$0xff]
        %v247 = vld [vmem:[#allocation5 + $0x8] sm:$0xff]
        %v248 = vld [vmem:[#allocation5 + $0x10] sm:$0xff]
        %v249 = vld [vmem:[#allocation5 + $0x18] sm:$0xff]
        %vm250 = vcmask 261120
        %v252 = vsel %vm250, %v238, 0
        %v255 = vsel %vm250, %v239, 0
        %v258 = vsel %vm250, %v240, 0
        %v261 = vsel %vm250, %v241, 0
        %v264 = vsel %vm250, %v242, 0
        %v267 = vsel %vm250, %v243, 0
        %v270 = vsel %vm250, %v244, 0
        %v273 = vsel %vm250, %v245, 0
        %275 = vmatprep.subr.mxu0 0.0
        %276 = vmatpush1.msra.mxu0 %v246
        %277 = vmatprep.subr.mxu0 0.0
        %278 = vmatpush1.msra.mxu0 %v247
        %279 = vmatprep.subr.mxu0 0.0
        %280 = vmatpush1.msra.mxu0 %v248
        %281 = vmatprep.subr.mxu0 0.0
        %282 = vmatpush1.msra.mxu0 %v249
        %283 = vmatprep.subr.mxu0 0.0
        %284 = vmatpush1.msra.mxu0 0.0
        %285 = vmatprep.subr.mxu0 0.0
        %286 = vmatpush1.msra.mxu0 0.0
        %287 = vmatprep.subr.mxu0 0.0
        %288 = vmatpush1.msra.mxu0 0.0
        %289 = vmatprep.subr.mxu0 0.0
        %290 = vmatpush1.msra.mxu0 0.0
        %291 = vmatprep.subr.mxu0 0.0
        %292 = vmatpush1.msra.mxu0 0.0
        %293 = vmatprep.subr.mxu0 0.0
        %294 = vmatpush1.msra.mxu0 0.0
        %295 = vmatprep.subr.mxu0 0.0
        %296 = vmatpush1.msra.mxu0 0.0
        %297 = vmatprep.subr.mxu0 0.0
        %298 = vmatpush1.msra.mxu0 0.0
        %299 = vmatprep.subr.mxu0 0.0
        %300 = vmatpush1.msra.mxu0 0.0
        %301 = vmatprep.subr.mxu0 0.0
        %302 = vmatpush1.msra.mxu0 0.0
        %303 = vmatprep.subr.mxu0 0.0
        %304 = vmatpush1.msra.mxu0 0.0
        %305 = vmatprep.subr.mxu0 0.0
        %306 = vmatpush1.msra.mxu0 0.0
        %307 = vmatprep.subr.mxu0 0.0
        %308 = vmatpush1.msra.mxu0 0.0
        %309 = vmatprep.subr.mxu0 0.0
        %310 = vmatpush1.msra.mxu0 0.0
        %311 = vmatprep.subr.mxu0 0.0
        %312 = vmatpush1.msra.mxu0 0.0
        %313 = vmatprep.subr.mxu0 0.0
        %314 = vmatpush1.msra.mxu0 0.0
        %315 = vmatprep.subr.mxu0 0.0
        %316 = vmatpush1.msra.mxu0 0.0
        %317 = vmatprep.subr.mxu0 0.0
        %318 = vmatpush1.msra.mxu0 0.0
        %319 = vmatprep.subr.mxu0 0.0
        %320 = vmatpush1.msra.mxu0 0.0
        %321 = vmatprep.subr.mxu0 0.0
        %322 = vmatpush1.msra.mxu0 0.0
        %323 = vmatprep.subr.mxu0 0.0
        %324 = vmatpush1.msra.mxu0 0.0
        %325 = vmatprep.subr.mxu0 0.0
        %326 = vmatpush1.msra.mxu0 0.0
        %327 = vmatprep.subr.mxu0 0.0
        %328 = vmatpush1.msra.mxu0 0.0
        %329 = vmatprep.subr.mxu0 0.0
        %330 = vmatpush1.msra.mxu0 0.0
        %331 = vmatprep.subr.mxu0 0.0
        %332 = vmatpush1.msra.mxu0 0.0
        %333 = vmatprep.subr.mxu0 0.0
        %334 = vmatpush1.msra.mxu0 0.0
        %335 = vmatprep.subr.mxu0 0.0
        %336 = vmatpush1.msra.mxu0 0.0
        %337 = vmatprep.subr.mxu0 0.0
        %338 = vmatpush1.msra.mxu0 0.0
        %339 = vmatprep.mubr.f32.mxu0 0.0
        %340 = vmatmul.mubr.f32.gmra.mrb[0].mxu0 %v252
        %v341 = vpop.f32.mrb[0].mxu0
        %v342 = vadd.f32 0.0, %v341
        %v343 = vpop.f32.mrb[0].mxu0
        %344 = vmatprep.mubr.f32.mxu0 0.0
        %345 = vmatmul.mubr.f32.gmra.mrb[0].mxu0 %v255
        %v346 = vpop.f32.mrb[0].mxu0
        %v347 = vadd.f32 0.0, %v346
        %v348 = vpop.f32.mrb[0].mxu0
        %349 = vmatprep.mubr.f32.mxu0 0.0
        %350 = vmatmul.mubr.f32.gmra.mrb[0].mxu0 %v258
        %v351 = vpop.f32.mrb[0].mxu0
        %v352 = vadd.f32 0.0, %v351
        %v353 = vpop.f32.mrb[0].mxu0
        %354 = vmatprep.mubr.f32.mxu0 0.0
        %355 = vmatmul.mubr.f32.gmra.mrb[0].mxu0 %v261
        %v356 = vpop.f32.mrb[0].mxu0
        %v357 = vadd.f32 0.0, %v356
        %v358 = vpop.f32.mrb[0].mxu0
        %359 = vmatprep.mubr.f32.mxu0 0.0
        %360 = vmatmul.mubr.f32.gmra.mrb[0].mxu0 %v264
        %v361 = vpop.f32.mrb[0].mxu0
        %v362 = vadd.f32 0.0, %v361
        %v363 = vpop.f32.mrb[0].mxu0
        %364 = vmatprep.mubr.f32.mxu0 0.0
        %365 = vmatmul.mubr.f32.gmra.mrb[0].mxu0 %v267
        %v366 = vpop.f32.mrb[0].mxu0
        %v367 = vadd.f32 0.0, %v366
        %v368 = vpop.f32.mrb[0].mxu0
        %369 = vmatprep.mubr.f32.mxu0 0.0
        %370 = vmatmul.mubr.f32.gmra.mrb[0].mxu0 %v270
        %v371 = vpop.f32.mrb[0].mxu0
        %v372 = vadd.f32 0.0, %v371
        %v373 = vpop.f32.mrb[0].mxu0
        %374 = vmatprep.mubr.f32.mxu0 0.0
        %375 = vmatmul.mubr.f32.gmra.mrb[0].mxu0 %v273
        %v376 = vpop.f32.mrb[0].mxu0
        %v377 = vadd.f32 0.0, %v376
        %v378 = vpop.f32.mrb[0].mxu0
        %379 = vdwg.mxu0
        %380 = vst.msk [vmem:[%s227] sm:$0xff] %vm250, %v342
        %381 = vst.msk [vmem:[%s227 + $0x8] sm:$0xff] %vm250, %v347
        %382 = vst.msk [vmem:[%s227 + $0x10] sm:$0xff] %vm250, %v352
        %383 = vst.msk [vmem:[%s227 + $0x18] sm:$0xff] %vm250, %v357
        %384 = vst.msk [vmem:[%s227 + $0x20] sm:$0xff] %vm250, %v362
        %385 = vst.msk [vmem:[%s227 + $0x28] sm:$0xff] %vm250, %v367
        %386 = vst.msk [vmem:[%s227 + $0x30] sm:$0xff] %vm250, %v372
        %387 = vst.msk [vmem:[%s227 + $0x38] sm:$0xff] %vm250, %v377
        %396 = vrot.lane.b32.xlu0 %v342, 96
        %v397 = vpop.permute.xlu0 %396
        %398 = vrot.lane.b32.xlu0 %v347, 96
        %v399 = vpop.permute.xlu0 %398
        %400 = vrot.lane.b32.xlu0 %v352, 96
        %v401 = vpop.permute.xlu0 %400
        %402 = vrot.lane.b32.xlu0 %v357, 96
        %v403 = vpop.permute.xlu0 %402
        %404 = vrot.lane.b32.xlu0 %v362, 96
        %v405 = vpop.permute.xlu0 %404
        %406 = vrot.lane.b32.xlu0 %v367, 96
        %v407 = vpop.permute.xlu0 %406
        %408 = vrot.lane.b32.xlu0 %v372, 96
        %v409 = vpop.permute.xlu0 %408
        %410 = vrot.lane.b32.xlu0 %v377, 96
        %v411 = vpop.permute.xlu0 %410
        %420 = vst.msk [vmem:[%s234] sm:$0xff] %vm250, %v397
        %421 = vst.msk [vmem:[%s234 + $0x8] sm:$0xff] %vm250, %v399
        %422 = vst.msk [vmem:[%s234 + $0x10] sm:$0xff] %vm250, %v401
        %423 = vst.msk [vmem:[%s234 + $0x18] sm:$0xff] %vm250, %v403
        %424 = vst.msk [vmem:[%s234 + $0x20] sm:$0xff] %vm250, %v405
        %425 = vst.msk [vmem:[%s234 + $0x28] sm:$0xff] %vm250, %v407
        %426 = vst.msk [vmem:[%s234 + $0x30] sm:$0xff] %vm250, %v409
        %427 = vst.msk [vmem:[%s234 + $0x38] sm:$0xff] %vm250, %v411
        %s428 = sand.u32 %s96, 1
        %s429 = scalar_lea.sflag [#allocation4], %s428
        %s430 = sand.u32 %s96, 1
        %s431 = smul.addr %s430, 64
        %s432 = scalar_lea.vmem [#allocation7], %s431
        %s433 = sand.u32 %s124, 1
        %s434 = scalar_lea.sflag [#allocation9], %s433
        %s435 = sand.u32 %s124, 1
        %s436 = smul.addr %s435, 64
        %s437 = scalar_lea.vmem [#allocation8], %s436
        // Predicated region
        $region37: #{index_select_forward.9} parent=27 // pred_check
          %p438 = pneg %p106
        $region38: #{index_select_forward.9} parent=27 // pred_check_branch
          %440 = sbr.rel (%p438) target = $region40
        $region39: #{index_select_forward.9} parent=27 // pred_region
          %s441 = smul.u32 8, %s30
          %s443 = ssub.s32 1024, 1024
          %444 = vsyncadd %s429, %s443
          %s445 = smul.addr %s29, 8
          %s446 = sadd.s32 %s441, %s445
          %s447 = smul.addr %s446, 128
          %s448 = scalar_lea.hbm %s2, %s447
          %s449 = sshll.u32 %s432, 4
          %s450 = int_to_ptr.vmem [resolvable:$true] %s449
          %455 = dma.vmem_to_hbm [thread:$0]  %s450, 1024, %s448, %s429, 128, 128, 8
        $region40: #{index_select_forward.9} parent=27 // pred_fallthru
          _
        // Predicated region
        $region41: #{index_select_forward.9} parent=27 // pred_check
          %p456 = pneg %p134
        $region42: #{index_select_forward.9} parent=27 // pred_check_branch
          %458 = sbr.rel (%p456) target = $region44
        $region43: #{index_select_forward.9} parent=27 // pred_region
          %s459 = smul.u32 8, %s30
          %s461 = ssub.s32 1024, 1024
          %462 = vsyncadd %s434, %s461
          %s463 = smul.addr %s29, 8
          %s464 = sadd.s32 %s459, %s463
          %s465 = smul.addr %s464, 128
          %s466 = scalar_lea.hbm %s3, %s465
          %s467 = sshll.u32 %s437, 4
          %s468 = int_to_ptr.vmem [resolvable:$true] %s467
          %473 = dma.vmem_to_hbm [thread:$0]  %s468, 1024, %s466, %s434, 128, 128, 8
        $region44: #{index_select_forward.9} parent=27 // pred_fallthru
          _
      $region28: #{index_select_forward.9} parent=5 // pred_fallthru
        _
      %p474 = scmp.le.s32.totalorder 2, %s20
      // Predicated region
      $region45: #{index_select_forward.9} parent=5 // pred_check
        %p475 = pneg %p474
      $region46: #{index_select_forward.9} parent=5 // pred_check_branch
        %477 = sbr.rel (%p475) target = $region48
      $region47: #{index_select_forward.9} parent=5 // pred_region
        %s478 = ssub.s32 %s20, 2
        // Predicated region
        $region49: #{index_select_forward.9} parent=47 // pred_check
          %p479 = pneg %p112
        $region50: #{index_select_forward.9} parent=47 // pred_check_branch
          %481 = sbr.rel (%p479) target = $region52
        $region51: #{index_select_forward.9} parent=47 // pred_region
          %s482 = sand.u32 %s97, 1
          %s483 = scalar_lea.sflag [#allocation4], %s482
          %s484 = sand.u32 %s97, 1
          %s485 = smul.addr %s484, 64
          %s486 = scalar_lea.vmem [#allocation7], %s485
          %487 = dma.done %s483, 1024
        $region52: #{index_select_forward.9} parent=47 // pred_fallthru
          _
        // Predicated region
        $region53: #{index_select_forward.9} parent=47 // pred_check
          %p488 = pneg %p140
        $region54: #{index_select_forward.9} parent=47 // pred_check_branch
          %490 = sbr.rel (%p488) target = $region56
        $region55: #{index_select_forward.9} parent=47 // pred_region
          %s491 = sand.u32 %s125, 1
          %s492 = scalar_lea.sflag [#allocation9], %s491
          %s493 = sand.u32 %s125, 1
          %s494 = smul.addr %s493, 64
          %s495 = scalar_lea.vmem [#allocation8], %s494
          %496 = dma.done %s492, 1024
        $region56: #{index_select_forward.9} parent=47 // pred_fallthru
          _
      $region48: #{index_select_forward.9} parent=5 // pred_fallthru
        _
    $region6: #{index_select_forward.9} parent=1 // loop_footer
      %s24 = sadd.s32 1, %s20
    $region7: #{index_select_forward.9} parent=1 // loop_footer_branch
      %19 = sbr.rel target = $region3
    $region8: #{index_select_forward.9} parent=1 // loop_exit
      _
    %497 = vsyncpa [#allocation3], 1
    %s498 = scalar_lea.sflag [#allocation3], 1
    %499 = vsyncpa %s498, 1
    %500 = vsyncpa [#allocation6], 1
    %501 = vsyncpa [#allocation4], 1
    %s502 = scalar_lea.sflag [#allocation4], 1
    %503 = vsyncpa %s502, 1
    %504 = vsyncpa [#allocation9], 1
    %s505 = scalar_lea.sflag [#allocation9], 1
    %506 = vsyncpa %s505, 1

// kernel: index_select_forward.11
$region0: #{index_select_forward.11}
  #allocation0 [shape = 'u32[]', space=smem, size = 0x4, offset = 0x4, fixed_abs, tag = 'smem constant byte address 0x4 - core index']
  #allocation1 [shape = 'u32[144,128]{1,0:T(1,128)}', space=vmem, size = 0x12000, scoped, tag = 'internal scratch']
  %s0 = inlined_call_operand.hbm [shape: f32[2,64,32], index: 0, kind: input, shape index: {}]
  %s1 = inlined_call_operand.hbm [shape: f32[2,64,32], index: 1, kind: input, shape index: {}]
  %s2 = inlined_call_operand.hbm [shape: s32[2,64,8], index: 2, kind: input, shape index: {}]
  %s3 = inlined_call_operand.hbm [shape: f32[2,2,32], index: 3, kind: output, shape index: {}]
  %s4 = sld [smem:[#allocation0]]
  $region61: #{index_select_forward.11} parent=0
    _
  %s6 = ssub.s32 1, %s4
  %s7 = scalar_select 0, %s6, %s4
  $region1: #{index_select_forward.11} parent=0
    #allocation2 [shape = 'u8[65536]{0}', space=vmem, size = 0x10000, scoped, tag = 'input window, operand 0']
    #allocation3 [shape = 's32[2]{0}', space=sflag, size = 0x8, scoped, tag = 'scoped memory for index_select_forward.11']
    #allocation4 [shape = 's32[2]{0}', space=sflag, size = 0x8, scoped, tag = 'scoped memory for index_select_forward.11']
    #allocation5 [shape = 'u8[65536]{0}', space=vmem, size = 0x10000, scoped, tag = 'input window, operand 1']
    #allocation6 [shape = 's32[2]{0}', space=sflag, size = 0x8, scoped, tag = 'scoped memory for index_select_forward.11']
    #allocation7 [shape = 'u8[65536]{0}', space=vmem, size = 0x10000, scoped, tag = 'input window, operand 2']
    #allocation8 [shape = 'u8[2048]{0}', space=vmem, size = 0x800, scoped, tag = 'output window, operand 0']
    %8 = vsyncpa [#allocation3], 0
    %s9 = scalar_lea.sflag [#allocation3], 1
    %10 = vsyncpa %s9, 0
    %11 = vsyncpa [#allocation6], 0
    %s12 = scalar_lea.sflag [#allocation6], 1
    %13 = vsyncpa %s12, 0
    %14 = vsyncpa [#allocation4], 0
    %s15 = scalar_lea.sflag [#allocation4], 1
    %16 = vsyncpa %s15, 0
    loop: start=0, step=1, limit=4
    $region2: #{index_select_forward.11} parent=1 // loop_pre_header
      _
    $region3: #{index_select_forward.11} parent=1 // loop_header
      %s18 = sphi 0, %s22
      %p19 = scmp.ge.s32.totalorder %s18, 4
      %s25 = sphi 0, %s37
      %s26 = sphi 0, %s33
      %s27 = sphi 0, %s25
      %s28 = sphi 0, %s26
      %s29 = sphi 0, %s27
      %s30 = sphi 0, %s28
      %s40 = sphi 0, %s42
      %s43 = sphi 0, %s40
      %s44 = sphi 0, %s43
      %s60 = sphi 0, %s44
      %s68 = sphi 0, %s70
      %s71 = sphi 0, %s68
      %s72 = sphi 0, %s71
      %s88 = sphi 0, %s72
      %s96 = sphi 0, %s98
      %s99 = sphi 0, %s96
      %s100 = sphi 0, %s99
      %s116 = sphi 0, %s100
      %s122 = sphi 0, %s124
      %s125 = sphi 0, %s122
      %s126 = sphi 0, %s125
      %s142 = sphi 0, %s126
    $region4: #{index_select_forward.11} parent=1 // loop_header_branch
      %21 = sbr.rel (%p19) target = $region8
    $region5: #{index_select_forward.11} parent=1 // loop_body
      %s23 = ssub.s32 %s18, 1
      %s24 = ssub.s32 %s18, 2
      %s31 = sadd.s32 1, %s26
      %p32 = scmp.ge.s32.totalorder %s31, 1
      %s33 = scalar_select %p32, 0, %s31
      %s34 = sadd.s32 1, %s25
      %s35 = scalar_select %p32, %s34, %s25
      %p36 = scmp.ge.s32.totalorder %s35, 2
      %s37 = scalar_select %p36, 0, %s35
      %s38 = ssub.s32 %s25, %s37
      %p39 = scmp.eq.s32.totalorder %s38, 0
      %s41 = sadd.s32 %s40, 1
      %s42 = scalar_select %p39, %s40, %s41
      %p45 = pneg %p39
      %p46 = scmp.eq.s32.totalorder %s18, 1
      %p47 = por %p45, %p46
      %p48 = scmp.ne.s32.totalorder %s40, %s43
      %p49 = scmp.eq.s32.totalorder %s18, 0
      %p50 = por %p48, %p49
      %p51 = scmp.ne.s32.totalorder %s40, %s43
      %p52 = scmp.eq.s32.totalorder %s23, 1
      %p53 = por %p51, %p52
      %p54 = scmp.ne.s32.totalorder %s43, %s44
      %p55 = scmp.eq.s32.totalorder %s23, 0
      %p56 = por %p54, %p55
      %p57 = scmp.ne.s32.totalorder %s43, %s44
      %p58 = scmp.eq.s32.totalorder %s24, 1
      %p59 = por %p57, %p58
      %p61 = scmp.ne.s32.totalorder %s44, %s60
      %p62 = scmp.eq.s32.totalorder %s24, 0
      %p63 = por %p61, %p62
      %s64 = ssub.s32 %s25, %s37
      %s65 = ssub.s32 %s26, %s33
      %s66 = sor.u32 %s64, %s65
      %p67 = scmp.eq.s32.totalorder %s66, 0
      %s69 = sadd.s32 %s68, 1
      %s70 = scalar_select %p67, %s68, %s69
      %p73 = pneg %p67
      %p74 = scmp.eq.s32.totalorder %s18, 1
      %p75 = por %p73, %p74
      %p76 = scmp.ne.s32.totalorder %s68, %s71
      %p77 = scmp.eq.s32.totalorder %s18, 0
      %p78 = por %p76, %p77
      %p79 = scmp.ne.s32.totalorder %s68, %s71
      %p80 = scmp.eq.s32.totalorder %s23, 1
      %p81 = por %p79, %p80
      %p82 = scmp.ne.s32.totalorder %s71, %s72
      %p83 = scmp.eq.s32.totalorder %s23, 0
      %p84 = por %p82, %p83
      %p85 = scmp.ne.s32.totalorder %s71, %s72
      %p86 = scmp.eq.s32.totalorder %s24, 1
      %p87 = por %p85, %p86
      %p89 = scmp.ne.s32.totalorder %s72, %s88
      %p90 = scmp.eq.s32.totalorder %s24, 0
      %p91 = por %p89, %p90
      %s92 = ssub.s32 %s25, %s37
      %s93 = ssub.s32 %s26, %s33
      %s94 = sor.u32 %s92, %s93
      %p95 = scmp.eq.s32.totalorder %s94, 0
      %s97 = sadd.s32 %s96, 1
      %s98 = scalar_select %p95, %s96, %s97
      %p101 = pneg %p95
      %p102 = scmp.eq.s32.totalorder %s18, 1
      %p103 = por %p101, %p102
      %p104 = scmp.ne.s32.totalorder %s96, %s99
      %p105 = scmp.eq.s32.totalorder %s18, 0
      %p106 = por %p104, %p105
      %p107 = scmp.ne.s32.totalorder %s96, %s99
      %p108 = scmp.eq.s32.totalorder %s23, 1
      %p109 = por %p107, %p108
      %p110 = scmp.ne.s32.totalorder %s99, %s100
      %p111 = scmp.eq.s32.totalorder %s23, 0
      %p112 = por %p110, %p111
      %p113 = scmp.ne.s32.totalorder %s99, %s100
      %p114 = scmp.eq.s32.totalorder %s24, 1
      %p115 = por %p113, %p114
      %p117 = scmp.ne.s32.totalorder %s100, %s116
      %p118 = scmp.eq.s32.totalorder %s24, 0
      %p119 = por %p117, %p118
      %s120 = ssub.s32 %s25, %s37
      %p121 = scmp.eq.s32.totalorder %s120, 0
      %s123 = sadd.s32 %s122, 1
      %s124 = scalar_select %p121, %s122, %s123
      %p127 = pneg %p121
      %p128 = scmp.eq.s32.totalorder %s18, 1
      %p129 = por %p127, %p128
      %p130 = scmp.ne.s32.totalorder %s122, %s125
      %p131 = scmp.eq.s32.totalorder %s18, 0
      %p132 = por %p130, %p131
      %p133 = scmp.ne.s32.totalorder %s122, %s125
      %p134 = scmp.eq.s32.totalorder %s23, 1
      %p135 = por %p133, %p134
      %p136 = scmp.ne.s32.totalorder %s125, %s126
      %p137 = scmp.eq.s32.totalorder %s23, 0
      %p138 = por %p136, %p137
      %p139 = scmp.ne.s32.totalorder %s125, %s126
      %p140 = scmp.eq.s32.totalorder %s24, 1
      %p141 = por %p139, %p140
      %p143 = scmp.ne.s32.totalorder %s126, %s142
      %p144 = scmp.eq.s32.totalorder %s24, 0
      %p145 = por %p143, %p144
      %p146 = scmp.le.s32.totalorder 1, %s18
      %p147 = scmp.lt.s32.totalorder %s18, 3
      %p148 = pnand %p146, %p147
      %p149 = pneg %p148
      // Predicated region
      $region9: #{index_select_forward.11} parent=5 // pred_check
        _
      $region10: #{index_select_forward.11} parent=5 // pred_check_branch
        %151 = sbr.rel (%p148) target = $region12
      $region11: #{index_select_forward.11} parent=5 // pred_region
        %s152 = ssub.s32 %s18, 1
      $region12: #{index_select_forward.11} parent=5 // pred_fallthru
        _
      %p153 = scmp.lt.s32.totalorder %s18, 2
      // Predicated region
      $region13: #{index_select_forward.11} parent=5 // pred_check
        %p154 = pneg %p153
      $region14: #{index_select_forward.11} parent=5 // pred_check_branch
        %156 = sbr.rel (%p154) target = $region16
      $region15: #{index_select_forward.11} parent=5 // pred_region
        // Predicated region
        $region17: #{index_select_forward.11} parent=15 // pred_check
          %p157 = pneg %p50
        $region18: #{index_select_forward.11} parent=15 // pred_check_branch
          %159 = sbr.rel (%p157) target = $region20
        $region19: #{index_select_forward.11} parent=15 // pred_region
          %s160 = sand.u32 %s40, 1
          %s161 = scalar_lea.sflag [#allocation3], %s160
          %s162 = sand.u32 %s40, 1
          %s163 = smul.addr %s162, 64
          %s164 = scalar_lea.vmem [#allocation2], %s163
          %s166 = ssub.s32 1024, 1024
          %167 = vsyncadd %s161, %s166
          %s168 = smul.addr %s25, 8
          %s169 = smul.addr %s168, 128
          %s170 = scalar_lea.hbm %s0, %s169
          %s171 = sshll.u32 %s164, 4
          %s172 = int_to_ptr.vmem [resolvable:$true] %s171
          %177 = dma.hbm_to_vmem [thread:$0]  %s170, 1024, %s172, %s161, 128, 128, 8
        $region20: #{index_select_forward.11} parent=15 // pred_fallthru
          _
        // Predicated region
        $region21: #{index_select_forward.11} parent=15 // pred_check
          %p178 = pneg %p78
        $region22: #{index_select_forward.11} parent=15 // pred_check_branch
          %180 = sbr.rel (%p178) target = $region24
        $region23: #{index_select_forward.11} parent=15 // pred_region
          %s181 = sand.u32 %s18, 1
          %s182 = scalar_lea.sflag [#allocation6], %s181
          %s183 = sand.u32 %s68, 1
          %s184 = smul.addr %s183, 64
          %s185 = scalar_lea.vmem [#allocation5], %s184
          %s186 = smul.u32 8, %s26
          %s188 = ssub.s32 1024, 1024
          %189 = vsyncadd %s182, %s188
          %s190 = smul.addr %s25, 8
          %s191 = sadd.s32 %s186, %s190
          %s192 = smul.addr %s191, 128
          %s193 = scalar_lea.hbm %s1, %s192
          %s194 = sshll.u32 %s185, 4
          %s195 = int_to_ptr.vmem [resolvable:$true] %s194
          %200 = dma.hbm_to_vmem [thread:$0]  %s193, 1024, %s195, %s182, 128, 128, 8
        $region24: #{index_select_forward.11} parent=15 // pred_fallthru
          _
        // Predicated region
        $region25: #{index_select_forward.11} parent=15 // pred_check
          %p201 = pneg %p106
        $region26: #{index_select_forward.11} parent=15 // pred_check_branch
          %203 = sbr.rel (%p201) target = $region28
        $region27: #{index_select_forward.11} parent=15 // pred_region
          %s204 = sand.u32 %s18, 1
          %s205 = scalar_lea.sflag [#allocation6], %s204
          %s206 = sand.u32 %s96, 1
          %s207 = smul.addr %s206, 64
          %s208 = scalar_lea.vmem [#allocation7], %s207
          %s209 = smul.u32 8, %s26
          %s211 = ssub.s32 1024, 1024
          %212 = vsyncadd %s205, %s211
          %s213 = smul.addr %s25, 8
          %s214 = sadd.s32 %s209, %s213
          %s215 = smul.addr %s214, 128
          %s216 = scalar_lea.hbm %s2, %s215
          %s217 = sshll.u32 %s208, 4
          %s218 = int_to_ptr.vmem [resolvable:$true] %s217
          %223 = dma.hbm_to_vmem [thread:$0]  %s216, 1024, %s218, %s205, 128, 128, 8
        $region28: #{index_select_forward.11} parent=15 // pred_fallthru
          _
      $region16: #{index_select_forward.11} parent=5 // pred_fallthru
        _
      %p224 = scmp.le.s32.totalorder 1, %s18
      %p225 = scmp.lt.s32.totalorder %s18, 3
      %p226 = pnand %p224, %p225
      %p227 = pneg %p226
      // Predicated region
      $region29: #{index_select_forward.11} parent=5 // pred_check
        _
      $region30: #{index_select_forward.11} parent=5 // pred_check_branch
        %229 = sbr.rel (%p226) target = $region32
      $region31: #{index_select_forward.11} parent=5 // pred_region
        %s230 = ssub.s32 %s18, 1
        %s231 = sand.u32 %s43, 1
        %s232 = scalar_lea.sflag [#allocation3], %s231
        %s233 = sand.u32 %s43, 1
        %s234 = smul.addr %s233, 64
        %s235 = scalar_lea.vmem [#allocation2], %s234
        // Predicated region
        $region33: #{index_select_forward.11} parent=31 // pred_check
          %p236 = pneg %p56
        $region34: #{index_select_forward.11} parent=31 // pred_check_branch
          %238 = sbr.rel (%p236) target = $region36
        $region35: #{index_select_forward.11} parent=31 // pred_region
          %239 = dma.done %s232, 1024
        $region36: #{index_select_forward.11} parent=31 // pred_fallthru
          _
        %s240 = sand.u32 %s23, 1
        %s241 = scalar_lea.sflag [#allocation6], %s240
        %s242 = sand.u32 %s71, 1
        %s243 = smul.addr %s242, 64
        %s244 = scalar_lea.vmem [#allocation5], %s243
        // Predicated region
        $region37: #{index_select_forward.11} parent=31 // pred_check
          %p245 = pneg %p84
        $region38: #{index_select_forward.11} parent=31 // pred_check_branch
          %247 = sbr.rel (%p245) target = $region40
        $region39: #{index_select_forward.11} parent=31 // pred_region
          %248 = dma.done %s241, 1024
        $region40: #{index_select_forward.11} parent=31 // pred_fallthru
          _
        %s249 = sand.u32 %s23, 1
        %s250 = scalar_lea.sflag [#allocation6], %s249
        %s251 = sand.u32 %s99, 1
        %s252 = smul.addr %s251, 64
        %s253 = scalar_lea.vmem [#allocation7], %s252
        // Predicated region
        $region41: #{index_select_forward.11} parent=31 // pred_check
          %p254 = pneg %p112
        $region42: #{index_select_forward.11} parent=31 // pred_check_branch
          %256 = sbr.rel (%p254) target = $region44
        $region43: #{index_select_forward.11} parent=31 // pred_region
          %257 = dma.done %s250, 1024
        $region44: #{index_select_forward.11} parent=31 // pred_fallthru
          _
        %s258 = sand.u32 %s43, 1
        %s259 = scalar_lea.sflag [#allocation3], %s258
        %s260 = sand.u32 %s43, 1
        %s261 = smul.addr %s260, 64
        %s262 = scalar_lea.vmem [#allocation2], %s261
        %p263 = pneg %p56
        %p264 = pneg %p53
        %s265 = sand.u32 %s23, 1
        %s266 = scalar_lea.sflag [#allocation6], %s265
        %s267 = sand.u32 %s71, 1
        %s268 = smul.addr %s267, 64
        %s269 = scalar_lea.vmem [#allocation5], %s268
        %p270 = pneg %p84
        %p271 = pneg %p81
        %s272 = sand.u32 %s23, 1
        %s273 = scalar_lea.sflag [#allocation6], %s272
        %s274 = sand.u32 %s99, 1
        %s275 = smul.addr %s274, 64
        %s276 = scalar_lea.vmem [#allocation7], %s275
        %p277 = pneg %p112
        %p278 = pneg %p109
        %p279 = pneg %p138
        %p280 = pneg %p135
        %s281 = sand.u32 %s125, 1
        %s282 = scalar_lea.sflag [#allocation4], %s281
        %s283 = sand.u32 %s125, 1
        %s284 = smul.addr %s283, 2
        %s285 = scalar_lea.vmem [#allocation8], %s284
        %s286 = smul.u32 8, %s28
        %s287 = smul.u32 8, %s28
        %p288 = scmp.eq.s32.totalorder %s28, 0
        // Predicated region
        $region45: #{index_select_forward.11} parent=31 // pred_check
          %p289 = pneg %p288
        $region46: #{index_select_forward.11} parent=31 // pred_check_branch
          %291 = sbr.rel (%p289) target = $region48
        $region47: #{index_select_forward.11} parent=31 // pred_region
          %vm292 = vcmask 254976
          %293 = vst.msk [vmem:[%s285] sm:$0x3] %vm292, 0.0
        $region48: #{index_select_forward.11} parent=31 // pred_fallthru
          _
        %v294 = vld [vmem:[%s235] sm:$0xff]
        %v295 = vld [vmem:[%s235 + $0x8] sm:$0xff]
        %v296 = vld [vmem:[%s235 + $0x10] sm:$0xff]
        %v297 = vld [vmem:[%s235 + $0x18] sm:$0xff]
        %v298 = vld [vmem:[%s235 + $0x20] sm:$0xff]
        %v299 = vld [vmem:[%s235 + $0x28] sm:$0xff]
        %v300 = vld [vmem:[%s235 + $0x30] sm:$0xff]
        %v301 = vld [vmem:[%s235 + $0x38] sm:$0xff]
        %v302 = vld [vmem:[%s244] sm:$0xff]
        %v303 = vld [vmem:[%s244 + $0x8] sm:$0xff]
        %v304 = vld [vmem:[%s244 + $0x10] sm:$0xff]
        %v305 = vld [vmem:[%s244 + $0x18] sm:$0xff]
        %v306 = vld [vmem:[%s244 + $0x20] sm:$0xff]
        %v307 = vld [vmem:[%s244 + $0x28] sm:$0xff]
        %v308 = vld [vmem:[%s244 + $0x30] sm:$0xff]
        %v309 = vld [vmem:[%s244 + $0x38] sm:$0xff]
        %v310 = vld [vmem:[%s253] sm:$0xff]
        %v311 = vld [vmem:[%s253 + $0x8] sm:$0xff]
        %v312 = vld [vmem:[%s253 + $0x10] sm:$0xff]
        %v313 = vld [vmem:[%s253 + $0x18] sm:$0xff]
        %v314 = vld [vmem:[%s253 + $0x20] sm:$0xff]
        %v315 = vld [vmem:[%s253 + $0x28] sm:$0xff]
        %v316 = vld [vmem:[%s253 + $0x30] sm:$0xff]
        %v317 = vld [vmem:[%s253 + $0x38] sm:$0xff]
        %v318 = vlaneseq
        %v319 = vand.u32 %v318, 127
        %320 = vset.pattern.permute.xlu0 0
        %321 = vperm.xlu0 %320, %v310
        %v322 = vpop.permute.xlu0 %321
        %323 = vset.pattern.permute.xlu0 0
        %324 = vperm.xlu0 %323, %v311
        %v325 = vpop.permute.xlu0 %324
        %326 = vset.pattern.permute.xlu0 0
        %327 = vperm.xlu0 %326, %v312
        %v328 = vpop.permute.xlu0 %327
        %329 = vset.pattern.permute.xlu0 0
        %330 = vperm.xlu0 %329, %v313
        %v331 = vpop.permute.xlu0 %330
        %332 = vset.pattern.permute.xlu0 0
        %333 = vperm.xlu0 %332, %v314
        %v334 = vpop.permute.xlu0 %333
        %335 = vset.pattern.permute.xlu0 0
        %336 = vperm.xlu0 %335, %v315
        %v337 = vpop.permute.xlu0 %336
        %338 = vset.pattern.permute.xlu0 0
        %339 = vperm.xlu0 %338, %v316
        %v340 = vpop.permute.xlu0 %339
        %341 = vset.pattern.permute.xlu0 0
        %342 = vperm.xlu0 %341, %v317
        %v343 = vpop.permute.xlu0 %342
        %vm344 = vcmp.eq.s32.totalorder %v319, %v322
        %vm345 = vcmp.eq.s32.totalorder %v319, %v325
        %vm346 = vcmp.eq.s32.totalorder %v319, %v328
        %vm347 = vcmp.eq.s32.totalorder %v319, %v331
        %vm348 = vcmp.eq.s32.totalorder %v319, %v334
        %vm349 = vcmp.eq.s32.totalorder %v319, %v337
        %vm350 = vcmp.eq.s32.totalorder %v319, %v340
        %vm351 = vcmp.eq.s32.totalorder %v319, %v343
        %v352 = vsel %vm344, 1, 0
        %v353 = vsel %vm345, 1, 0
        %v354 = vsel %vm346, 1, 0
        %v355 = vsel %vm347, 1, 0
        %v356 = vsel %vm348, 1, 0
        %v357 = vsel %vm349, 1, 0
        %v358 = vsel %vm350, 1, 0
        %v359 = vsel %vm351, 1, 0
        %v360 = vcvt.s32.f32 %v352
        %v361 = vcvt.s32.f32 %v353
        %v362 = vcvt.s32.f32 %v354
        %v363 = vcvt.s32.f32 %v355
        %v364 = vcvt.s32.f32 %v356
        %v365 = vcvt.s32.f32 %v357
        %v366 = vcvt.s32.f32 %v358
        %v367 = vcvt.s32.f32 %v359
        %v368 = vadd.f32 %v360, 0.0
        %v369 = vadd.f32 %v361, 0.0
        %v370 = vadd.f32 %v362, 0.0
        %v371 = vadd.f32 %v363, 0.0
        %v372 = vadd.f32 %v364, 0.0
        %v373 = vadd.f32 %v365, 0.0
        %v374 = vadd.f32 %v366, 0.0
        %v375 = vadd.f32 %v367, 0.0
        %376 = vset.pattern.permute.xlu0 1
        %377 = vperm.xlu0 %376, %v310
        %v378 = vpop.permute.xlu0 %377
        %379 = vset.pattern.permute.xlu0 1
        %380 = vperm.xlu0 %379, %v311
        %v381 = vpop.permute.xlu0 %380
        %382 = vset.pattern.permute.xlu0 1
        %383 = vperm.xlu0 %382, %v312
        %v384 = vpop.permute.xlu0 %383
        %385 = vset.pattern.permute.xlu0 1
        %386 = vperm.xlu0 %385, %v313
        %v387 = vpop.permute.xlu0 %386
        %388 = vset.pattern.permute.xlu0 1
        %389 = vperm.xlu0 %388, %v314
        %v390 = vpop.permute.xlu0 %389
        %391 = vset.pattern.permute.xlu0 1
        %392 = vperm.xlu0 %391, %v315
        %v393 = vpop.permute.xlu0 %392
        %394 = vset.pattern.permute.xlu0 1
        %395 = vperm.xlu0 %394, %v316
        %v396 = vpop.permute.xlu0 %395
        %397 = vset.pattern.permute.xlu0 1
        %398 = vperm.xlu0 %397, %v317
        %v399 = vpop.permute.xlu0 %398
        %vm400 = vcmp.eq.s32.totalorder %v319, %v378
        %vm401 = vcmp.eq.s32.totalorder %v319, %v381
        %vm402 = vcmp.eq.s32.totalorder %v319, %v384
        %vm403 = vcmp.eq.s32.totalorder %v319, %v387
        %vm404 = vcmp.eq.s32.totalorder %v319, %v390
        %vm405 = vcmp.eq.s32.totalorder %v319, %v393
        %vm406 = vcmp.eq.s32.totalorder %v319, %v396
        %vm407 = vcmp.eq.s32.totalorder %v319, %v399
        %v408 = vsel %vm400, 1, 0
        %v409 = vsel %vm401, 1, 0
        %v410 = vsel %vm402, 1, 0
        %v411 = vsel %vm403, 1, 0
        %v412 = vsel %vm404, 1, 0
        %v413 = vsel %vm405, 1, 0
        %v414 = vsel %vm406, 1, 0
        %v415 = vsel %vm407, 1, 0
        %v416 = vcvt.s32.f32 %v408
        %v417 = vcvt.s32.f32 %v409
        %v418 = vcvt.s32.f32 %v410
        %v419 = vcvt.s32.f32 %v411
        %v420 = vcvt.s32.f32 %v412
        %v421 = vcvt.s32.f32 %v413
        %v422 = vcvt.s32.f32 %v414
        %v423 = vcvt.s32.f32 %v415
        %v424 = vadd.f32 %v368, %v416
        %v425 = vadd.f32 %v369, %v417
        %v426 = vadd.f32 %v370, %v418
        %v427 = vadd.f32 %v371, %v419
        %v428 = vadd.f32 %v372, %v420
        %v429 = vadd.f32 %v373, %v421
        %v430 = vadd.f32 %v374, %v422
        %v431 = vadd.f32 %v375, %v423
        %432 = vset.pattern.permute.xlu0 2
        %433 = vperm.xlu0 %432, %v310
        %v434 = vpop.permute.xlu0 %433
        %435 = vset.pattern.permute.xlu0 2
        %436 = vperm.xlu0 %435, %v311
        %v437 = vpop.permute.xlu0 %436
        %438 = vset.pattern.permute.xlu0 2
        %439 = vperm.xlu0 %438, %v312
        %v440 = vpop.permute.xlu0 %439
        %441 = vset.pattern.permute.xlu0 2
        %442 = vperm.xlu0 %441, %v313
        %v443 = vpop.permute.xlu0 %442
        %444 = vset.pattern.permute.xlu0 2
        %445 = vperm.xlu0 %444, %v314
        %v446 = vpop.permute.xlu0 %445
        %447 = vset.pattern.permute.xlu0 2
        %448 = vperm.xlu0 %447, %v315
        %v449 = vpop.permute.xlu0 %448
        %450 = vset.pattern.permute.xlu0 2
        %451 = vperm.xlu0 %450, %v316
        %v452 = vpop.permute.xlu0 %451
        %453 = vset.pattern.permute.xlu0 2
        %454 = vperm.xlu0 %453, %v317
        %v455 = vpop.permute.xlu0 %454
        %vm456 = vcmp.eq.s32.totalorder %v319, %v434
        %vm457 = vcmp.eq.s32.totalorder %v319, %v437
        %vm458 = vcmp.eq.s32.totalorder %v319, %v440
        %vm459 = vcmp.eq.s32.totalorder %v319, %v443
        %vm460 = vcmp.eq.s32.totalorder %v319, %v446
        %vm461 = vcmp.eq.s32.totalorder %v319, %v449
        %vm462 = vcmp.eq.s32.totalorder %v319, %v452
        %vm463 = vcmp.eq.s32.totalorder %v319, %v455
        %v464 = vsel %vm456, 1, 0
        %v465 = vsel %vm457, 1, 0
        %v466 = vsel %vm458, 1, 0
        %v467 = vsel %vm459, 1, 0
        %v468 = vsel %vm460, 1, 0
        %v469 = vsel %vm461, 1, 0
        %v470 = vsel %vm462, 1, 0
        %v471 = vsel %vm463, 1, 0
        %v472 = vcvt.s32.f32 %v464
        %v473 = vcvt.s32.f32 %v465
        %v474 = vcvt.s32.f32 %v466
        %v475 = vcvt.s32.f32 %v467
        %v476 = vcvt.s32.f32 %v468
        %v477 = vcvt.s32.f32 %v469
        %v478 = vcvt.s32.f32 %v470
        %v479 = vcvt.s32.f32 %v471
        %v480 = vadd.f32 %v424, %v472
        %v481 = vadd.f32 %v425, %v473
        %v482 = vadd.f32 %v426, %v474
        %v483 = vadd.f32 %v427, %v475
        %v484 = vadd.f32 %v428, %v476
        %v485 = vadd.f32 %v429, %v477
        %v486 = vadd.f32 %v430, %v478
        %v487 = vadd.f32 %v431, %v479
        %488 = vset.pattern.permute.xlu0 3
        %489 = vperm.xlu0 %488, %v310
        %v490 = vpop.permute.xlu0 %489
        %491 = vset.pattern.permute.xlu0 3
        %492 = vperm.xlu0 %491, %v311
        %v493 = vpop.permute.xlu0 %492
        %494 = vset.pattern.permute.xlu0 3
        %495 = vperm.xlu0 %494, %v312
        %v496 = vpop.permute.xlu0 %495
        %497 = vset.pattern.permute.xlu0 3
        %498 = vperm.xlu0 %497, %v313
        %v499 = vpop.permute.xlu0 %498
        %500 = vset.pattern.permute.xlu0 3
        %501 = vperm.xlu0 %500, %v314
        %v502 = vpop.permute.xlu0 %501
        %503 = vset.pattern.permute.xlu0 3
        %504 = vperm.xlu0 %503, %v315
        %v505 = vpop.permute.xlu0 %504
        %506 = vset.pattern.permute.xlu0 3
        %507 = vperm.xlu0 %506, %v316
        %v508 = vpop.permute.xlu0 %507
        %509 = vset.pattern.permute.xlu0 3
        %510 = vperm.xlu0 %509, %v317
        %v511 = vpop.permute.xlu0 %510
        %vm512 = vcmp.eq.s32.totalorder %v319, %v490
        %vm513 = vcmp.eq.s32.totalorder %v319, %v493
        %vm514 = vcmp.eq.s32.totalorder %v319, %v496
        %vm515 = vcmp.eq.s32.totalorder %v319, %v499
        %vm516 = vcmp.eq.s32.totalorder %v319, %v502
        %vm517 = vcmp.eq.s32.totalorder %v319, %v505
        %vm518 = vcmp.eq.s32.totalorder %v319, %v508
        %vm519 = vcmp.eq.s32.totalorder %v319, %v511
        %v520 = vsel %vm512, 1, 0
        %v521 = vsel %vm513, 1, 0
        %v522 = vsel %vm514, 1, 0
        %v523 = vsel %vm515, 1, 0
        %v524 = vsel %vm516, 1, 0
        %v525 = vsel %vm517, 1, 0
        %v526 = vsel %vm518, 1, 0
        %v527 = vsel %vm519, 1, 0
        %v528 = vcvt.s32.f32 %v520
        %v529 = vcvt.s32.f32 %v521
        %v530 = vcvt.s32.f32 %v522
        %v531 = vcvt.s32.f32 %v523
        %v532 = vcvt.s32.f32 %v524
        %v533 = vcvt.s32.f32 %v525
        %v534 = vcvt.s32.f32 %v526
        %v535 = vcvt.s32.f32 %v527
        %v536 = vadd.f32 %v480, %v528
        %v537 = vadd.f32 %v481, %v529
        %v538 = vadd.f32 %v482, %v530
        %v539 = vadd.f32 %v483, %v531
        %v540 = vadd.f32 %v484, %v532
        %v541 = vadd.f32 %v485, %v533
        %v542 = vadd.f32 %v486, %v534
        %v543 = vadd.f32 %v487, %v535
        %544 = vset.pattern.permute.xlu0 4
        %545 = vperm.xlu0 %544, %v310
        %v546 = vpop.permute.xlu0 %545
        %547 = vset.pattern.permute.xlu0 4
        %548 = vperm.xlu0 %547, %v311
        %v549 = vpop.permute.xlu0 %548
        %550 = vset.pattern.permute.xlu0 4
        %551 = vperm.xlu0 %550, %v312
        %v552 = vpop.permute.xlu0 %551
        %553 = vset.pattern.permute.xlu0 4
        %554 = vperm.xlu0 %553, %v313
        %v555 = vpop.permute.xlu0 %554
        %556 = vset.pattern.permute.xlu0 4
        %557 = vperm.xlu0 %556, %v314
        %v558 = vpop.permute.xlu0 %557
        %559 = vset.pattern.permute.xlu0 4
        %560 = vperm.xlu0 %559, %v315
        %v561 = vpop.permute.xlu0 %560
        %562 = vset.pattern.permute.xlu0 4
        %563 = vperm.xlu0 %562, %v316
        %v564 = vpop.permute.xlu0 %563
        %565 = vset.pattern.permute.xlu0 4
        %566 = vperm.xlu0 %565, %v317
        %v567 = vpop.permute.xlu0 %566
        %vm568 = vcmp.eq.s32.totalorder %v319, %v546
        %vm569 = vcmp.eq.s32.totalorder %v319, %v549
        %vm570 = vcmp.eq.s32.totalorder %v319, %v552
        %vm571 = vcmp.eq.s32.totalorder %v319, %v555
        %vm572 = vcmp.eq.s32.totalorder %v319, %v558
        %vm573 = vcmp.eq.s32.totalorder %v319, %v561
        %vm574 = vcmp.eq.s32.totalorder %v319, %v564
        %vm575 = vcmp.eq.s32.totalorder %v319, %v567
        %v576 = vsel %vm568, 1, 0
        %v577 = vsel %vm569, 1, 0
        %v578 = vsel %vm570, 1, 0
        %v579 = vsel %vm571, 1, 0
        %v580 = vsel %vm572, 1, 0
        %v581 = vsel %vm573, 1, 0
        %v582 = vsel %vm574, 1, 0
        %v583 = vsel %vm575, 1, 0
        %v584 = vcvt.s32.f32 %v576
        %v585 = vcvt.s32.f32 %v577
        %v586 = vcvt.s32.f32 %v578
        %v587 = vcvt.s32.f32 %v579
        %v588 = vcvt.s32.f32 %v580
        %v589 = vcvt.s32.f32 %v581
        %v590 = vcvt.s32.f32 %v582
        %v591 = vcvt.s32.f32 %v583
        %v592 = vadd.f32 %v536, %v584
        %v593 = vadd.f32 %v537, %v585
        %v594 = vadd.f32 %v538, %v586
        %v595 = vadd.f32 %v539, %v587
        %v596 = vadd.f32 %v540, %v588
        %v597 = vadd.f32 %v541, %v589
        %v598 = vadd.f32 %v542, %v590
        %v599 = vadd.f32 %v543, %v591
        %600 = vset.pattern.permute.xlu0 5
        %601 = vperm.xlu0 %600, %v310
        %v602 = vpop.permute.xlu0 %601
        %603 = vset.pattern.permute.xlu0 5
        %604 = vperm.xlu0 %603, %v311
        %v605 = vpop.permute.xlu0 %604
        %606 = vset.pattern.permute.xlu0 5
        %607 = vperm.xlu0 %606, %v312
        %v608 = vpop.permute.xlu0 %607
        %609 = vset.pattern.permute.xlu0 5
        %610 = vperm.xlu0 %609, %v313
        %v611 = vpop.permute.xlu0 %610
        %612 = vset.pattern.permute.xlu0 5
        %613 = vperm.xlu0 %612, %v314
        %v614 = vpop.permute.xlu0 %613
        %615 = vset.pattern.permute.xlu0 5
        %616 = vperm.xlu0 %615, %v315
        %v617 = vpop.permute.xlu0 %616
        %618 = vset.pattern.permute.xlu0 5
        %619 = vperm.xlu0 %618, %v316
        %v620 = vpop.permute.xlu0 %619
        %621 = vset.pattern.permute.xlu0 5
        %622 = vperm.xlu0 %621, %v317
        %v623 = vpop.permute.xlu0 %622
        %vm624 = vcmp.eq.s32.totalorder %v319, %v602
        %vm625 = vcmp.eq.s32.totalorder %v319, %v605
        %vm626 = vcmp.eq.s32.totalorder %v319, %v608
        %vm627 = vcmp.eq.s32.totalorder %v319, %v611
        %vm628 = vcmp.eq.s32.totalorder %v319, %v614
        %vm629 = vcmp.eq.s32.totalorder %v319, %v617
        %vm630 = vcmp.eq.s32.totalorder %v319, %v620
        %vm631 = vcmp.eq.s32.totalorder %v319, %v623
        %v632 = vsel %vm624, 1, 0
        %v633 = vsel %vm625, 1, 0
        %v634 = vsel %vm626, 1, 0
        %v635 = vsel %vm627, 1, 0
        %v636 = vsel %vm628, 1, 0
        %v637 = vsel %vm629, 1, 0
        %v638 = vsel %vm630, 1, 0
        %v639 = vsel %vm631, 1, 0
        %v640 = vcvt.s32.f32 %v632
        %v641 = vcvt.s32.f32 %v633
        %v642 = vcvt.s32.f32 %v634
        %v643 = vcvt.s32.f32 %v635
        %v644 = vcvt.s32.f32 %v636
        %v645 = vcvt.s32.f32 %v637
        %v646 = vcvt.s32.f32 %v638
        %v647 = vcvt.s32.f32 %v639
        %v648 = vadd.f32 %v592, %v640
        %v649 = vadd.f32 %v593, %v641
        %v650 = vadd.f32 %v594, %v642
        %v651 = vadd.f32 %v595, %v643
        %v652 = vadd.f32 %v596, %v644
        %v653 = vadd.f32 %v597, %v645
        %v654 = vadd.f32 %v598, %v646
        %v655 = vadd.f32 %v599, %v647
        %656 = vset.pattern.permute.xlu0 6
        %657 = vperm.xlu0 %656, %v310
        %v658 = vpop.permute.xlu0 %657
        %659 = vset.pattern.permute.xlu0 6
        %660 = vperm.xlu0 %659, %v311
        %v661 = vpop.permute.xlu0 %660
        %662 = vset.pattern.permute.xlu0 6
        %663 = vperm.xlu0 %662, %v312
        %v664 = vpop.permute.xlu0 %663
        %665 = vset.pattern.permute.xlu0 6
        %666 = vperm.xlu0 %665, %v313
        %v667 = vpop.permute.xlu0 %666
        %668 = vset.pattern.permute.xlu0 6
        %669 = vperm.xlu0 %668, %v314
        %v670 = vpop.permute.xlu0 %669
        %671 = vset.pattern.permute.xlu0 6
        %672 = vperm.xlu0 %671, %v315
        %v673 = vpop.permute.xlu0 %672
        %674 = vset.pattern.permute.xlu0 6
        %675 = vperm.xlu0 %674, %v316
        %v676 = vpop.permute.xlu0 %675
        %677 = vset.pattern.permute.xlu0 6
        %678 = vperm.xlu0 %677, %v317
        %v679 = vpop.permute.xlu0 %678
        %vm680 = vcmp.eq.s32.totalorder %v319, %v658
        %vm681 = vcmp.eq.s32.totalorder %v319, %v661
        %vm682 = vcmp.eq.s32.totalorder %v319, %v664
        %vm683 = vcmp.eq.s32.totalorder %v319, %v667
        %vm684 = vcmp.eq.s32.totalorder %v319, %v670
        %vm685 = vcmp.eq.s32.totalorder %v319, %v673
        %vm686 = vcmp.eq.s32.totalorder %v319, %v676
        %vm687 = vcmp.eq.s32.totalorder %v319, %v679
        %v688 = vsel %vm680, 1, 0
        %v689 = vsel %vm681, 1, 0
        %v690 = vsel %vm682, 1, 0
        %v691 = vsel %vm683, 1, 0
        %v692 = vsel %vm684, 1, 0
        %v693 = vsel %vm685, 1, 0
        %v694 = vsel %vm686, 1, 0
        %v695 = vsel %vm687, 1, 0
        %v696 = vcvt.s32.f32 %v688
        %v697 = vcvt.s32.f32 %v689
        %v698 = vcvt.s32.f32 %v690
        %v699 = vcvt.s32.f32 %v691
        %v700 = vcvt.s32.f32 %v692
        %v701 = vcvt.s32.f32 %v693
        %v702 = vcvt.s32.f32 %v694
        %v703 = vcvt.s32.f32 %v695
        %v704 = vadd.f32 %v648, %v696
        %v705 = vadd.f32 %v649, %v697
        %v706 = vadd.f32 %v650, %v698
        %v707 = vadd.f32 %v651, %v699
        %v708 = vadd.f32 %v652, %v700
        %v709 = vadd.f32 %v653, %v701
        %v710 = vadd.f32 %v654, %v702
        %v711 = vadd.f32 %v655, %v703
        %712 = vset.pattern.permute.xlu0 7
        %713 = vperm.xlu0 %712, %v310
        %v714 = vpop.permute.xlu0 %713
        %715 = vset.pattern.permute.xlu0 7
        %716 = vperm.xlu0 %715, %v311
        %v717 = vpop.permute.xlu0 %716
        %718 = vset.pattern.permute.xlu0 7
        %719 = vperm.xlu0 %718, %v312
        %v720 = vpop.permute.xlu0 %719
        %721 = vset.pattern.permute.xlu0 7
        %722 = vperm.xlu0 %721, %v313
        %v723 = vpop.permute.xlu0 %722
        %724 = vset.pattern.permute.xlu0 7
        %725 = vperm.xlu0 %724, %v314
        %v726 = vpop.permute.xlu0 %725
        %727 = vset.pattern.permute.xlu0 7
        %728 = vperm.xlu0 %727, %v315
        %v729 = vpop.permute.xlu0 %728
        %730 = vset.pattern.permute.xlu0 7
        %731 = vperm.xlu0 %730, %v316
        %v732 = vpop.permute.xlu0 %731
        %733 = vset.pattern.permute.xlu0 7
        %734 = vperm.xlu0 %733, %v317
        %v735 = vpop.permute.xlu0 %734
        %vm736 = vcmp.eq.s32.totalorder %v319, %v714
        %vm737 = vcmp.eq.s32.totalorder %v319, %v717
        %vm738 = vcmp.eq.s32.totalorder %v319, %v720
        %vm739 = vcmp.eq.s32.totalorder %v319, %v723
        %vm740 = vcmp.eq.s32.totalorder %v319, %v726
        %vm741 = vcmp.eq.s32.totalorder %v319, %v729
        %vm742 = vcmp.eq.s32.totalorder %v319, %v732
        %vm743 = vcmp.eq.s32.totalorder %v319, %v735
        %v744 = vsel %vm736, 1, 0
        %v745 = vsel %vm737, 1, 0
        %v746 = vsel %vm738, 1, 0
        %v747 = vsel %vm739, 1, 0
        %v748 = vsel %vm740, 1, 0
        %v749 = vsel %vm741, 1, 0
        %v750 = vsel %vm742, 1, 0
        %v751 = vsel %vm743, 1, 0
        %v752 = vcvt.s32.f32 %v744
        %v753 = vcvt.s32.f32 %v745
        %v754 = vcvt.s32.f32 %v746
        %v755 = vcvt.s32.f32 %v747
        %v756 = vcvt.s32.f32 %v748
        %v757 = vcvt.s32.f32 %v749
        %v758 = vcvt.s32.f32 %v750
        %v759 = vcvt.s32.f32 %v751
        %v760 = vadd.f32 %v704, %v752
        %v761 = vadd.f32 %v705, %v753
        %v762 = vadd.f32 %v706, %v754
        %v763 = vadd.f32 %v707, %v755
        %v764 = vadd.f32 %v708, %v756
        %v765 = vadd.f32 %v709, %v757
        %v766 = vadd.f32 %v710, %v758
        %v767 = vadd.f32 %v711, %v759
        %vm768 = vcmask 523264
        %v770 = vsel %vm768, %v760, 0
        %v773 = vsel %vm768, %v761, 0
        %v776 = vsel %vm768, %v762, 0
        %v779 = vsel %vm768, %v763, 0
        %v782 = vsel %vm768, %v764, 0
        %v785 = vsel %vm768, %v765, 0
        %v788 = vsel %vm768, %v766, 0
        %v791 = vsel %vm768, %v767, 0
        %793 = vmatprep.subr.mxu0 0.0
        %794 = vmatpush1.msra.mxu0 %v294
        %795 = vmatprep.subr.mxu0 0.0
        %796 = vmatpush1.msra.mxu0 %v295
        %797 = vmatprep.subr.mxu0 0.0
        %798 = vmatpush1.msra.mxu0 %v296
        %799 = vmatprep.subr.mxu0 0.0
        %800 = vmatpush1.msra.mxu0 %v297
        %801 = vmatprep.subr.mxu0 0.0
        %802 = vmatpush1.msra.mxu0 %v298
        %803 = vmatprep.subr.mxu0 0.0
        %804 = vmatpush1.msra.mxu0 %v299
        %805 = vmatprep.subr.mxu0 0.0
        %806 = vmatpush1.msra.mxu0 %v300
        %807 = vmatprep.subr.mxu0 0.0
        %808 = vmatpush1.msra.mxu0 %v301
        %809 = vmatprep.subr.mxu0 0.0
        %810 = vmatpush1.msra.mxu0 0.0
        %811 = vmatprep.subr.mxu0 0.0
        %812 = vmatpush1.msra.mxu0 0.0
        %813 = vmatprep.subr.mxu0 0.0
        %814 = vmatpush1.msra.mxu0 0.0
        %815 = vmatprep.subr.mxu0 0.0
        %816 = vmatpush1.msra.mxu0 0.0
        %817 = vmatprep.subr.mxu0 0.0
        %818 = vmatpush1.msra.mxu0 0.0
        %819 = vmatprep.subr.mxu0 0.0
        %820 = vmatpush1.msra.mxu0 0.0
        %821 = vmatprep.subr.mxu0 0.0
        %822 = vmatpush1.msra.mxu0 0.0
        %823 = vmatprep.subr.mxu0 0.0
        %824 = vmatpush1.msra.mxu0 0.0
        %825 = vmatprep.subr.mxu0 0.0
        %826 = vmatpush1.msra.mxu0 0.0
        %827 = vmatprep.subr.mxu0 0.0
        %828 = vmatpush1.msra.mxu0 0.0
        %829 = vmatprep.subr.mxu0 0.0
        %830 = vmatpush1.msra.mxu0 0.0
        %831 = vmatprep.subr.mxu0 0.0
        %832 = vmatpush1.msra.mxu0 0.0
        %833 = vmatprep.subr.mxu0 0.0
        %834 = vmatpush1.msra.mxu0 0.0
        %835 = vmatprep.subr.mxu0 0.0
        %836 = vmatpush1.msra.mxu0 0.0
        %837 = vmatprep.subr.mxu0 0.0
        %838 = vmatpush1.msra.mxu0 0.0
        %839 = vmatprep.subr.mxu0 0.0
        %840 = vmatpush1.msra.mxu0 0.0
        %841 = vmatprep.subr.mxu0 0.0
        %842 = vmatpush1.msra.mxu0 0.0
        %843 = vmatprep.subr.mxu0 0.0
        %844 = vmatpush1.msra.mxu0 0.0
        %845 = vmatprep.subr.mxu0 0.0
        %846 = vmatpush1.msra.mxu0 0.0
        %847 = vmatprep.subr.mxu0 0.0
        %848 = vmatpush1.msra.mxu0 0.0
        %849 = vmatprep.subr.mxu0 0.0
        %850 = vmatpush1.msra.mxu0 0.0
        %851 = vmatprep.subr.mxu0 0.0
        %852 = vmatpush1.msra.mxu0 0.0
        %853 = vmatprep.subr.mxu0 0.0
        %854 = vmatpush1.msra.mxu0 0.0
        %855 = vmatprep.subr.mxu0 0.0
        %856 = vmatpush1.msra.mxu0 0.0
        %857 = vmatprep.mubr.f32.mxu0 0.0
        %858 = vmatmul.mubr.f32.gmra.mrb[0].mxu0 %v770
        %v859 = vpop.f32.mrb[0].mxu0
        %v860 = vadd.f32 0.0, %v859
        %v861 = vpop.f32.mrb[0].mxu0
        %862 = vmatprep.mubr.f32.mxu0 0.0
        %863 = vmatmul.mubr.f32.gmra.mrb[0].mxu0 %v773
        %v864 = vpop.f32.mrb[0].mxu0
        %v865 = vadd.f32 0.0, %v864
        %v866 = vpop.f32.mrb[0].mxu0
        %867 = vmatprep.mubr.f32.mxu0 0.0
        %868 = vmatmul.mubr.f32.gmra.mrb[0].mxu0 %v776
        %v869 = vpop.f32.mrb[0].mxu0
        %v870 = vadd.f32 0.0, %v869
        %v871 = vpop.f32.mrb[0].mxu0
        %872 = vmatprep.mubr.f32.mxu0 0.0
        %873 = vmatmul.mubr.f32.gmra.mrb[0].mxu0 %v779
        %v874 = vpop.f32.mrb[0].mxu0
        %v875 = vadd.f32 0.0, %v874
        %v876 = vpop.f32.mrb[0].mxu0
        %877 = vmatprep.mubr.f32.mxu0 0.0
        %878 = vmatmul.mubr.f32.gmra.mrb[0].mxu0 %v782
        %v879 = vpop.f32.mrb[0].mxu0
        %v880 = vadd.f32 0.0, %v879
        %v881 = vpop.f32.mrb[0].mxu0
        %882 = vmatprep.mubr.f32.mxu0 0.0
        %883 = vmatmul.mubr.f32.gmra.mrb[0].mxu0 %v785
        %v884 = vpop.f32.mrb[0].mxu0
        %v885 = vadd.f32 0.0, %v884
        %v886 = vpop.f32.mrb[0].mxu0
        %887 = vmatprep.mubr.f32.mxu0 0.0
        %888 = vmatmul.mubr.f32.gmra.mrb[0].mxu0 %v788
        %v889 = vpop.f32.mrb[0].mxu0
        %v890 = vadd.f32 0.0, %v889
        %v891 = vpop.f32.mrb[0].mxu0
        %892 = vmatprep.mubr.f32.mxu0 0.0
        %893 = vmatmul.mubr.f32.gmra.mrb[0].mxu0 %v791
        %v894 = vpop.f32.mrb[0].mxu0
        %v895 = vadd.f32 0.0, %v894
        %v896 = vpop.f32.mrb[0].mxu0
        %897 = vdwg.mxu0
        %v898 = vsel %vm768, %v760, 0.0
        %v899 = vsel %vm768, %v761, 0.0
        %v900 = vadd.f32 %v898, %v899
        %v901 = vsel %vm768, %v762, 0.0
        %v902 = vadd.f32 %v900, %v901
        %v903 = vsel %vm768, %v763, 0.0
        %v904 = vadd.f32 %v902, %v903
        %v905 = vsel %vm768, %v764, 0.0
        %v906 = vadd.f32 %v904, %v905
        %v907 = vsel %vm768, %v765, 0.0
        %v908 = vadd.f32 %v906, %v907
        %v909 = vsel %vm768, %v766, 0.0
        %v910 = vadd.f32 %v908, %v909
        %v911 = vsel %vm768, %v767, 0.0
        %v912 = vadd.f32 %v910, %v911
        %v913 = vrot.slane %v912, 4
        %v914 = vadd.f32 %v912, %v913
        %v915 = vrot.slane %v914, 2
        %v916 = vadd.f32 %v914, %v915
        %v917 = vrot.slane %v916, 1
        %v918 = vadd.f32 %v916, %v917
        %v919 = vmul.f32 %v294, %v294
        %v920 = vmul.f32 %v295, %v295
        %v921 = vmul.f32 %v296, %v296
        %v922 = vmul.f32 %v297, %v297
        %v923 = vmul.f32 %v298, %v298
        %v924 = vmul.f32 %v299, %v299
        %v925 = vmul.f32 %v300, %v300
        %v926 = vmul.f32 %v301, %v301
        %vm927 = vcmask 261120
        %v928 = vsel %vm927, %v860, 0.0
        %v929 = vsel %vm927, %v865, 0.0
        %v930 = vadd.f32 %v928, %v929
        %v931 = vsel %vm927, %v870, 0.0
        %v932 = vadd.f32 %v930, %v931
        %v933 = vsel %vm927, %v875, 0.0
        %v934 = vadd.f32 %v932, %v933
        %v935 = vsel %vm927, %v880, 0.0
        %v936 = vadd.f32 %v934, %v935
        %v937 = vsel %vm927, %v885, 0.0
        %v938 = vadd.f32 %v936, %v937
        %v939 = vsel %vm927, %v890, 0.0
        %v940 = vadd.f32 %v938, %v939
        %v941 = vsel %vm927, %v895, 0.0
        %v942 = vadd.f32 %v940, %v941
        %v943 = vrot.slane %v942, 4
        %v944 = vadd.f32 %v942, %v943
        %v945 = vrot.slane %v944, 2
        %v946 = vadd.f32 %v944, %v945
        %v947 = vrot.slane %v946, 1
        %v948 = vadd.f32 %v946, %v947
        %v949 = vsel %vm927, %v302, 0.0
        %v950 = vsel %vm927, %v303, 0.0
        %v951 = vadd.f32 %v949, %v950
        %v952 = vsel %vm927, %v304, 0.0
        %v953 = vadd.f32 %v951, %v952
        %v954 = vsel %vm927, %v305, 0.0
        %v955 = vadd.f32 %v953, %v954
        %v956 = vsel %vm927, %v306, 0.0
        %v957 = vadd.f32 %v955, %v956
        %v958 = vsel %vm927, %v307, 0.0
        %v959 = vadd.f32 %v957, %v958
        %v960 = vsel %vm927, %v308, 0.0
        %v961 = vadd.f32 %v959, %v960
        %v962 = vsel %vm927, %v309, 0.0
        %v963 = vadd.f32 %v961, %v962
        %v964 = vrot.slane %v963, 4
        %v965 = vadd.f32 %v963, %v964
        %v966 = vrot.slane %v965, 2
        %v967 = vadd.f32 %v965, %v966
        %v968 = vrot.slane %v967, 1
        %v969 = vadd.f32 %v967, %v968
        %v970 = vmul.f32 %v969, 8.0
        %v971 = vadd.f32 %v948, %v970
        %v972 = vmul.f32 %v302, %v860
        %v973 = vmul.f32 %v303, %v865
        %v974 = vmul.f32 %v304, %v870
        %v975 = vmul.f32 %v305, %v875
        %v976 = vmul.f32 %v306, %v880
        %v977 = vmul.f32 %v307, %v885
        %v978 = vmul.f32 %v308, %v890
        %v979 = vmul.f32 %v309, %v895
        %v980 = vsel %vm927, %v972, 0.0
        %v981 = vsel %vm927, %v973, 0.0
        %v982 = vadd.f32 %v980, %v981
        %v983 = vsel %vm927, %v974, 0.0
        %v984 = vadd.f32 %v982, %v983
        %v985 = vsel %vm927, %v975, 0.0
        %v986 = vadd.f32 %v984, %v985
        %v987 = vsel %vm927, %v976, 0.0
        %v988 = vadd.f32 %v986, %v987
        %v989 = vsel %vm927, %v977, 0.0
        %v990 = vadd.f32 %v988, %v989
        %v991 = vsel %vm927, %v978, 0.0
        %v992 = vadd.f32 %v990, %v991
        %v993 = vsel %vm927, %v979, 0.0
        %v994 = vadd.f32 %v992, %v993
        %v995 = vrot.slane %v994, 4
        %v996 = vadd.f32 %v994, %v995
        %v997 = vrot.slane %v996, 2
        %v998 = vadd.f32 %v996, %v997
        %v999 = vrot.slane %v998, 1
        %v1000 = vadd.f32 %v998, %v999
        %v1001 = vmul.f32 %v1000, 2.0
        %v1003 = vsel %vm768, %v918, 0
        %1005 = vmatprep.subr.mxu0 0.0
        %1006 = vmatpush1.msra.mxu0 %v919
        %1007 = vmatprep.subr.mxu0 0.0
        %1008 = vmatpush1.msra.mxu0 %v920
        %1009 = vmatprep.subr.mxu0 0.0
        %1010 = vmatpush1.msra.mxu0 %v921
        %1011 = vmatprep.subr.mxu0 0.0
        %1012 = vmatpush1.msra.mxu0 %v922
        %1013 = vmatprep.subr.mxu0 0.0
        %1014 = vmatpush1.msra.mxu0 %v923
        %1015 = vmatprep.subr.mxu0 0.0
        %1016 = vmatpush1.msra.mxu0 %v924
        %1017 = vmatprep.subr.mxu0 0.0
        %1018 = vmatpush1.msra.mxu0 %v925
        %1019 = vmatprep.subr.mxu0 0.0
        %1020 = vmatpush1.msra.mxu0 %v926
        %1021 = vmatprep.subr.mxu0 0.0
        %1022 = vmatpush1.msra.mxu0 0.0
        %1023 = vmatprep.subr.mxu0 0.0
        %1024 = vmatpush1.msra.mxu0 0.0
        %1025 = vmatprep.subr.mxu0 0.0
        %1026 = vmatpush1.msra.mxu0 0.0
        %1027 = vmatprep.subr.mxu0 0.0
        %1028 = vmatpush1.msra.mxu0 0.0
        %1029 = vmatprep.subr.mxu0 0.0
        %1030 = vmatpush1.msra.mxu0 0.0
        %1031 = vmatprep.subr.mxu0 0.0
        %1032 = vmatpush1.msra.mxu0 0.0
        %1033 = vmatprep.subr.mxu0 0.0
        %1034 = vmatpush1.msra.mxu0 0.0
        %1035 = vmatprep.subr.mxu0 0.0
        %1036 = vmatpush1.msra.mxu0 0.0
        %1037 = vmatprep.subr.mxu0 0.0
        %1038 = vmatpush1.msra.mxu0 0.0
        %1039 = vmatprep.subr.mxu0 0.0
        %1040 = vmatpush1.msra.mxu0 0.0
        %1041 = vmatprep.subr.mxu0 0.0
        %1042 = vmatpush1.msra.mxu0 0.0
        %1043 = vmatprep.subr.mxu0 0.0
        %1044 = vmatpush1.msra.mxu0 0.0
        %1045 = vmatprep.subr.mxu0 0.0
        %1046 = vmatpush1.msra.mxu0 0.0
        %1047 = vmatprep.subr.mxu0 0.0
        %1048 = vmatpush1.msra.mxu0 0.0
        %1049 = vmatprep.subr.mxu0 0.0
        %1050 = vmatpush1.msra.mxu0 0.0
        %1051 = vmatprep.subr.mxu0 0.0
        %1052 = vmatpush1.msra.mxu0 0.0
        %1053 = vmatprep.subr.mxu0 0.0
        %1054 = vmatpush1.msra.mxu0 0.0
        %1055 = vmatprep.subr.mxu0 0.0
        %1056 = vmatpush1.msra.mxu0 0.0
        %1057 = vmatprep.subr.mxu0 0.0
        %1058 = vmatpush1.msra.mxu0 0.0
        %1059 = vmatprep.subr.mxu0 0.0
        %1060 = vmatpush1.msra.mxu0 0.0
        %1061 = vmatprep.subr.mxu0 0.0
        %1062 = vmatpush1.msra.mxu0 0.0
        %1063 = vmatprep.subr.mxu0 0.0
        %1064 = vmatpush1.msra.mxu0 0.0
        %1065 = vmatprep.subr.mxu0 0.0
        %1066 = vmatpush1.msra.mxu0 0.0
        %1067 = vmatprep.subr.mxu0 0.0
        %1068 = vmatpush1.msra.mxu0 0.0
        %1069 = vmatprep.mubr.f32.mxu0 0.0
        %1070 = vmatmul.mubr.f32.gmra.mrb[0].mxu0 %v1003
        %v1071 = vpop.f32.mrb[0].mxu0
        %v1072 = vadd.f32 %v1001, %v1071
        %v1073 = vpop.f32.mrb[0].mxu0
        %1074 = vdwg.mxu0
        %v1075 = vmul.f32 %v302, %v302
        %v1076 = vmul.f32 %v303, %v303
        %v1077 = vmul.f32 %v304, %v304
        %v1078 = vmul.f32 %v305, %v305
        %v1079 = vmul.f32 %v306, %v306
        %v1080 = vmul.f32 %v307, %v307
        %v1081 = vmul.f32 %v308, %v308
        %v1082 = vmul.f32 %v309, %v309
        %v1083 = vsel %vm927, %v1075, 0.0
        %v1084 = vsel %vm927, %v1076, 0.0
        %v1085 = vadd.f32 %v1083, %v1084
        %v1086 = vsel %vm927, %v1077, 0.0
        %v1087 = vadd.f32 %v1085, %v1086
        %v1088 = vsel %vm927, %v1078, 0.0
        %v1089 = vadd.f32 %v1087, %v1088
        %v1090 = vsel %vm927, %v1079, 0.0
        %v1091 = vadd.f32 %v1089, %v1090
        %v1092 = vsel %vm927, %v1080, 0.0
        %v1093 = vadd.f32 %v1091, %v1092
        %v1094 = vsel %vm927, %v1081, 0.0
        %v1095 = vadd.f32 %v1093, %v1094
        %v1096 = vsel %vm927, %v1082, 0.0
        %v1097 = vadd.f32 %v1095, %v1096
        %v1098 = vrot.slane %v1097, 4
        %v1099 = vadd.f32 %v1097, %v1098
        %v1100 = vrot.slane %v1099, 2
        %v1101 = vadd.f32 %v1099, %v1100
        %v1102 = vrot.slane %v1101, 1
        %v1103 = vadd.f32 %v1101, %v1102
        %v1104 = vmul.f32 %v1103, 8.0
        %v1105 = vadd.f32 %v1072, %v1104
        %v1106 = vld [vmem:[%s285] sm:$0x3]
        %v1108 = vrot.slane %v1105, 7
        %vm1110 = vcmask 1040384
        %v1111 = vsel %vm1110, %v971, %v1108
        %v1112 = vadd.f32 %v1106, %v1111
        %vm1113 = vcmask 254976
        %1114 = vst.msk [vmem:[%s285] sm:$0x3] %vm1113, %v1112
        %s1115 = sand.u32 %s125, 1
        %s1116 = scalar_lea.sflag [#allocation4], %s1115
        %s1117 = sand.u32 %s125, 1
        %s1118 = smul.addr %s1117, 2
        %s1119 = scalar_lea.vmem [#allocation8], %s1118
        // Predicated region
        $region49: #{index_select_forward.11} parent=31 // pred_check
          %p1120 = pneg %p135
        $region50: #{index_select_forward.11} parent=31 // pred_check_branch
          %1122 = sbr.rel (%p1120) target = $region52
        $region51: #{index_select_forward.11} parent=31 // pred_region
          %s1124 = ssub.s32 32, 32
          %1125 = vsyncadd %s1116, %s1124
          %s1126 = smul.addr %s27, 32
          %s1127 = scalar_lea.hbm %s3, %s1126
          %s1129 = sshll.u32 %s1119, 4
          %s1130 = int_to_ptr.vmem [resolvable:$true] %s1129
          %1132 = dma.vmem_to_hbm [thread:$0]  %s1130, 32, %s1127, %s1116
        $region52: #{index_select_forward.11} parent=31 // pred_fallthru
          _
      $region32: #{index_select_forward.11} parent=5 // pred_fallthru
        _
      %p1133 = scmp.le.s32.totalorder 2, %s18
      // Predicated region
      $region53: #{index_select_forward.11} parent=5 // pred_check
        %p1134 = pneg %p1133
      $region54: #{index_select_forward.11} parent=5 // pred_check_branch
        %1136 = sbr.rel (%p1134) target = $region56
      $region55: #{index_select_forward.11} parent=5 // pred_region
        %s1137 = ssub.s32 %s18, 2
        // Predicated region
        $region57: #{index_select_forward.11} parent=55 // pred_check
          %p1138 = pneg %p141
        $region58: #{index_select_forward.11} parent=55 // pred_check_branch
          %1140 = sbr.rel (%p1138) target = $region60
        $region59: #{index_select_forward.11} parent=55 // pred_region
          %s1141 = sand.u32 %s126, 1
          %s1142 = scalar_lea.sflag [#allocation4], %s1141
          %s1143 = sand.u32 %s126, 1
          %s1144 = smul.addr %s1143, 2
          %s1145 = scalar_lea.vmem [#allocation8], %s1144
          %1146 = dma.done %s1142, 32
        $region60: #{index_select_forward.11} parent=55 // pred_fallthru
          _
      $region56: #{index_select_forward.11} parent=5 // pred_fallthru
        _
    $region6: #{index_select_forward.11} parent=1 // loop_footer
      %s22 = sadd.s32 1, %s18
    $region7: #{index_select_forward.11} parent=1 // loop_footer_branch
      %17 = sbr.rel target = $region3
    $region8: #{index_select_forward.11} parent=1 // loop_exit
      _
    %1147 = vsyncpa [#allocation3], 1
    %s1148 = scalar_lea.sflag [#allocation3], 1
    %1149 = vsyncpa %s1148, 1
    %1150 = vsyncpa [#allocation6], 1
    %s1151 = scalar_lea.sflag [#allocation6], 1
    %1152 = vsyncpa %s1151, 1
    %1153 = vsyncpa [#allocation4], 1
    %s1154 = scalar_lea.sflag [#allocation4], 1
    %1155 = vsyncpa %s1154, 1

// kernel: index_select_forward.12
$region0: #{index_select_forward.12}
  #allocation0 [shape = 'u32[]', space=smem, size = 0x4, offset = 0x4, fixed_abs, tag = 'smem constant byte address 0x4 - core index']
  #allocation1 [shape = 'u32[144,128]{1,0:T(1,128)}', space=vmem, size = 0x12000, scoped, tag = 'internal scratch']
  %s0 = inlined_call_operand.hbm [shape: f32[2,64,32], index: 0, kind: input, shape index: {}]
  %s1 = inlined_call_operand.hbm [shape: f32[2,64,32], index: 1, kind: input, shape index: {}]
  %s2 = inlined_call_operand.hbm [shape: s32[2,64,8], index: 2, kind: input, shape index: {}]
  %s3 = inlined_call_operand.hbm [shape: f32[2,32], index: 3, kind: input, shape index: {}]
  %s4 = inlined_call_operand.hbm [shape: f32[32,32], index: 4, kind: input, shape index: {}]
  %s5 = inlined_call_operand.hbm [shape: f32[2,64,32], index: 5, kind: output, shape index: {}]
  %s6 = sld [smem:[#allocation0]]
  $region73: #{index_select_forward.12} parent=0
    _
  %s8 = ssub.s32 1, %s6
  %s9 = scalar_select 0, %s8, %s6
  $region1: #{index_select_forward.12} parent=0
    #allocation2 [shape = 'u8[65536]{0}', space=vmem, size = 0x10000, scoped, tag = 'input window, operand 0']
    #allocation3 [shape = 's32[2]{0}', space=sflag, size = 0x8, scoped, tag = 'scoped memory for index_select_forward.12']
    #allocation4 [shape = 's32[2]{0}', space=sflag, size = 0x8, scoped, tag = 'scoped memory for index_select_forward.12']
    #allocation5 [shape = 'u8[65536]{0}', space=vmem, size = 0x10000, scoped, tag = 'input window, operand 1']
    #allocation6 [shape = 's32[2]{0}', space=sflag, size = 0x8, scoped, tag = 'scoped memory for index_select_forward.12']
    #allocation7 [shape = 'u8[65536]{0}', space=vmem, size = 0x10000, scoped, tag = 'input window, operand 2']
    #allocation8 [shape = 'u8[1024]{0}', space=vmem, size = 0x400, scoped, tag = 'input window, operand 3, single buffered']
    #allocation9 [shape = 's32[1]{0}', space=sflag, size = 0x4, scoped, tag = 'scoped memory for index_select_forward.12']
    #allocation10 [shape = 'u8[16384]{0}', space=vmem, size = 0x4000, scoped, tag = 'input window, operand 4, single buffered']
    #allocation11 [shape = 'u8[65536]{0}', space=vmem, size = 0x10000, scoped, tag = 'output window, operand 0']
    %10 = vsyncpa [#allocation3], 0
    %s11 = scalar_lea.sflag [#allocation3], 1
    %12 = vsyncpa %s11, 0
    %13 = vsyncpa [#allocation6], 0
    %s14 = scalar_lea.sflag [#allocation6], 1
    %15 = vsyncpa %s14, 0
    %16 = vsyncpa [#allocation9], 0
    %17 = vsyncpa [#allocation4], 0
    %s18 = scalar_lea.sflag [#allocation4], 1
    %19 = vsyncpa %s18, 0
    loop: start=0, step=1, limit=4
    $region2: #{index_select_forward.12} parent=1 // loop_pre_header
      _
    $region3: #{index_select_forward.12} parent=1 // loop_header
      %s21 = sphi 0, %s25
      %p22 = scmp.ge.s32.totalorder %s21, 4
      %s28 = sphi 0, %s40
      %s29 = sphi 0, %s36
      %s30 = sphi 0, %s28
      %s31 = sphi 0, %s29
      %s32 = sphi 0, %s30
      %s33 = sphi 0, %s31
      %s43 = sphi 0, %s45
      %s46 = sphi 0, %s43
      %s47 = sphi 0, %s46
      %s63 = sphi 0, %s47
      %s71 = sphi 0, %s73
      %s74 = sphi 0, %s71
      %s75 = sphi 0, %s74
      %s91 = sphi 0, %s75
      %s99 = sphi 0, %s101
      %s102 = sphi 0, %s99
      %s103 = sphi 0, %s102
      %s119 = sphi 0, %s103
      %s123 = sphi 0, %s123
      %s125 = sphi 0, %s123
      %s126 = sphi 0, %s125
      %s140 = sphi 0, %s126
      %s144 = sphi 0, %s144
      %s146 = sphi 0, %s144
      %s147 = sphi 0, %s146
      %s161 = sphi 0, %s147
      %s169 = sphi 0, %s171
      %s172 = sphi 0, %s169
      %s173 = sphi 0, %s172
      %s189 = sphi 0, %s173
    $region4: #{index_select_forward.12} parent=1 // loop_header_branch
      %24 = sbr.rel (%p22) target = $region8
    $region5: #{index_select_forward.12} parent=1 // loop_body
      %s26 = ssub.s32 %s21, 1
      %s27 = ssub.s32 %s21, 2
      %s34 = sadd.s32 1, %s29
      %p35 = scmp.ge.s32.totalorder %s34, 1
      %s36 = scalar_select %p35, 0, %s34
      %s37 = sadd.s32 1, %s28
      %s38 = scalar_select %p35, %s37, %s28
      %p39 = scmp.ge.s32.totalorder %s38, 2
      %s40 = scalar_select %p39, 0, %s38
      %s41 = ssub.s32 %s28, %s40
      %p42 = scmp.eq.s32.totalorder %s41, 0
      %s44 = sadd.s32 %s43, 1
      %s45 = scalar_select %p42, %s43, %s44
      %p48 = pneg %p42
      %p49 = scmp.eq.s32.totalorder %s21, 1
      %p50 = por %p48, %p49
      %p51 = scmp.ne.s32.totalorder %s43, %s46
      %p52 = scmp.eq.s32.totalorder %s21, 0
      %p53 = por %p51, %p52
      %p54 = scmp.ne.s32.totalorder %s43, %s46
      %p55 = scmp.eq.s32.totalorder %s26, 1
      %p56 = por %p54, %p55
      %p57 = scmp.ne.s32.totalorder %s46, %s47
      %p58 = scmp.eq.s32.totalorder %s26, 0
      %p59 = por %p57, %p58
      %p60 = scmp.ne.s32.totalorder %s46, %s47
      %p61 = scmp.eq.s32.totalorder %s27, 1
      %p62 = por %p60, %p61
      %p64 = scmp.ne.s32.totalorder %s47, %s63
      %p65 = scmp.eq.s32.totalorder %s27, 0
      %p66 = por %p64, %p65
      %s67 = ssub.s32 %s28, %s40
      %s68 = ssub.s32 %s29, %s36
      %s69 = sor.u32 %s67, %s68
      %p70 = scmp.eq.s32.totalorder %s69, 0
      %s72 = sadd.s32 %s71, 1
      %s73 = scalar_select %p70, %s71, %s72
      %p76 = pneg %p70
      %p77 = scmp.eq.s32.totalorder %s21, 1
      %p78 = por %p76, %p77
      %p79 = scmp.ne.s32.totalorder %s71, %s74
      %p80 = scmp.eq.s32.totalorder %s21, 0
      %p81 = por %p79, %p80
      %p82 = scmp.ne.s32.totalorder %s71, %s74
      %p83 = scmp.eq.s32.totalorder %s26, 1
      %p84 = por %p82, %p83
      %p85 = scmp.ne.s32.totalorder %s74, %s75
      %p86 = scmp.eq.s32.totalorder %s26, 0
      %p87 = por %p85, %p86
      %p88 = scmp.ne.s32.totalorder %s74, %s75
      %p89 = scmp.eq.s32.totalorder %s27, 1
      %p90 = por %p88, %p89
      %p92 = scmp.ne.s32.totalorder %s75, %s91
      %p93 = scmp.eq.s32.totalorder %s27, 0
      %p94 = por %p92, %p93
      %s95 = ssub.s32 %s28, %s40
      %s96 = ssub.s32 %s29, %s36
      %s97 = sor.u32 %s95, %s96
      %p98 = scmp.eq.s32.totalorder %s97, 0
      %s100 = sadd.s32 %s99, 1
      %s101 = scalar_select %p98, %s99, %s100
      %p104 = pneg %p98
      %p105 = scmp.eq.s32.totalorder %s21, 1
      %p106 = por %p104, %p105
      %p107 = scmp.ne.s32.totalorder %s99, %s102
      %p108 = scmp.eq.s32.totalorder %s21, 0
      %p109 = por %p107, %p108
      %p110 = scmp.ne.s32.totalorder %s99, %s102
      %p111 = scmp.eq.s32.totalorder %s26, 1
      %p112 = por %p110, %p111
      %p113 = scmp.ne.s32.totalorder %s102, %s103
      %p114 = scmp.eq.s32.totalorder %s26, 0
      %p115 = por %p113, %p114
      %p116 = scmp.ne.s32.totalorder %s102, %s103
      %p117 = scmp.eq.s32.totalorder %s27, 1
      %p118 = por %p116, %p117
      %p120 = scmp.ne.s32.totalorder %s103, %s119
      %p121 = scmp.eq.s32.totalorder %s27, 0
      %p122 = por %p120, %p121
      %s124 = sadd.s32 %s123, 1
      %p127 = scmp.eq.s32.totalorder %s21, 1
      %p128 = scmp.ne.s32.totalorder %s123, %s125
      %p129 = scmp.eq.s32.totalorder %s21, 0
      %p130 = por %p128, %p129
      %p131 = scmp.ne.s32.totalorder %s123, %s125
      %p132 = scmp.eq.s32.totalorder %s26, 1
      %p133 = por %p131, %p132
      %p134 = scmp.ne.s32.totalorder %s125, %s126
      %p135 = scmp.eq.s32.totalorder %s26, 0
      %p136 = por %p134, %p135
      %p137 = scmp.ne.s32.totalorder %s125, %s126
      %p138 = scmp.eq.s32.totalorder %s27, 1
      %p139 = por %p137, %p138
      %p141 = scmp.ne.s32.totalorder %s126, %s140
      %p142 = scmp.eq.s32.totalorder %s27, 0
      %p143 = por %p141, %p142
      %s145 = sadd.s32 %s144, 1
      %p148 = scmp.eq.s32.totalorder %s21, 1
      %p149 = scmp.ne.s32.totalorder %s144, %s146
      %p150 = scmp.eq.s32.totalorder %s21, 0
      %p151 = por %p149, %p150
      %p152 = scmp.ne.s32.totalorder %s144, %s146
      %p153 = scmp.eq.s32.totalorder %s26, 1
      %p154 = por %p152, %p153
      %p155 = scmp.ne.s32.totalorder %s146, %s147
      %p156 = scmp.eq.s32.totalorder %s26, 0
      %p157 = por %p155, %p156
      %p158 = scmp.ne.s32.totalorder %s146, %s147
      %p159 = scmp.eq.s32.totalorder %s27, 1
      %p160 = por %p158, %p159
      %p162 = scmp.ne.s32.totalorder %s147, %s161
      %p163 = scmp.eq.s32.totalorder %s27, 0
      %p164 = por %p162, %p163
      %s165 = ssub.s32 %s28, %s40
      %s166 = ssub.s32 %s29, %s36
      %s167 = sor.u32 %s165, %s166
      %p168 = scmp.eq.s32.totalorder %s167, 0
      %s170 = sadd.s32 %s169, 1
      %s171 = scalar_select %p168, %s169, %s170
      %p174 = pneg %p168
      %p175 = scmp.eq.s32.totalorder %s21, 1
      %p176 = por %p174, %p175
      %p177 = scmp.ne.s32.totalorder %s169, %s172
      %p178 = scmp.eq.s32.totalorder %s21, 0
      %p179 = por %p177, %p178
      %p180 = scmp.ne.s32.totalorder %s169, %s172
      %p181 = scmp.eq.s32.totalorder %s26, 1
      %p182 = por %p180, %p181
      %p183 = scmp.ne.s32.totalorder %s172, %s173
      %p184 = scmp.eq.s32.totalorder %s26, 0
      %p185 = por %p183, %p184
      %p186 = scmp.ne.s32.totalorder %s172, %s173
      %p187 = scmp.eq.s32.totalorder %s27, 1
      %p188 = por %p186, %p187
      %p190 = scmp.ne.s32.totalorder %s173, %s189
      %p191 = scmp.eq.s32.totalorder %s27, 0
      %p192 = por %p190, %p191
      %p193 = scmp.le.s32.totalorder 1, %s21
      %p194 = scmp.lt.s32.totalorder %s21, 3
      %p195 = pnand %p193, %p194
      %p196 = pneg %p195
      // Predicated region
      $region9: #{index_select_forward.12} parent=5 // pred_check
        _
      $region10: #{index_select_forward.12} parent=5 // pred_check_branch
        %198 = sbr.rel (%p195) target = $region12
      $region11: #{index_select_forward.12} parent=5 // pred_region
        %s199 = ssub.s32 %s21, 1
        // Predicated region
        $region13: #{index_select_forward.12} parent=11 // pred_check
          %p200 = pneg %p136
        $region14: #{index_select_forward.12} parent=11 // pred_check_branch
          %202 = sbr.rel (%p200) target = $region16
        $region15: #{index_select_forward.12} parent=11 // pred_region
          %s204 = ssub.s32 32, 32
          %205 = vsyncadd [#allocation9], %s204
          %s207 = sshll.u32 [#allocation8], 4
          %s208 = int_to_ptr.vmem [resolvable:$true] %s207
          %210 = dma.hbm_to_vmem [thread:$0]  %s3, 32, %s208, [#allocation9]
        $region16: #{index_select_forward.12} parent=11 // pred_fallthru
          _
        // Predicated region
        $region17: #{index_select_forward.12} parent=11 // pred_check
          %p211 = pneg %p157
        $region18: #{index_select_forward.12} parent=11 // pred_check_branch
          %213 = sbr.rel (%p211) target = $region20
        $region19: #{index_select_forward.12} parent=11 // pred_region
          %s215 = ssub.s32 512, 512
          %216 = vsyncadd [#allocation9], %s215
          %s217 = sshll.u32 [#allocation10], 4
          %s218 = int_to_ptr.vmem [resolvable:$true] %s217
          %223 = dma.hbm_to_vmem [thread:$0]  %s4, 512, %s218, [#allocation9], 128, 128, 8
        $region20: #{index_select_forward.12} parent=11 // pred_fallthru
          _
      $region12: #{index_select_forward.12} parent=5 // pred_fallthru
        _
      %p224 = scmp.lt.s32.totalorder %s21, 2
      // Predicated region
      $region21: #{index_select_forward.12} parent=5 // pred_check
        %p225 = pneg %p224
      $region22: #{index_select_forward.12} parent=5 // pred_check_branch
        %227 = sbr.rel (%p225) target = $region24
      $region23: #{index_select_forward.12} parent=5 // pred_region
        // Predicated region
        $region25: #{index_select_forward.12} parent=23 // pred_check
          %p228 = pneg %p53
        $region26: #{index_select_forward.12} parent=23 // pred_check_branch
          %230 = sbr.rel (%p228) target = $region28
        $region27: #{index_select_forward.12} parent=23 // pred_region
          %s231 = sand.u32 %s43, 1
          %s232 = scalar_lea.sflag [#allocation3], %s231
          %s233 = sand.u32 %s43, 1
          %s234 = smul.addr %s233, 64
          %s235 = scalar_lea.vmem [#allocation2], %s234
          %s237 = ssub.s32 1024, 1024
          %238 = vsyncadd %s232, %s237
          %s239 = smul.addr %s28, 8
          %s240 = smul.addr %s239, 128
          %s241 = scalar_lea.hbm %s0, %s240
          %s242 = sshll.u32 %s235, 4
          %s243 = int_to_ptr.vmem [resolvable:$true] %s242
          %248 = dma.hbm_to_vmem [thread:$0]  %s241, 1024, %s243, %s232, 128, 128, 8
        $region28: #{index_select_forward.12} parent=23 // pred_fallthru
          _
        // Predicated region
        $region29: #{index_select_forward.12} parent=23 // pred_check
          %p249 = pneg %p81
        $region30: #{index_select_forward.12} parent=23 // pred_check_branch
          %251 = sbr.rel (%p249) target = $region32
        $region31: #{index_select_forward.12} parent=23 // pred_region
          %s252 = sand.u32 %s21, 1
          %s253 = scalar_lea.sflag [#allocation6], %s252
          %s254 = sand.u32 %s71, 1
          %s255 = smul.addr %s254, 64
          %s256 = scalar_lea.vmem [#allocation5], %s255
          %s257 = smul.u32 8, %s29
          %s259 = ssub.s32 1024, 1024
          %260 = vsyncadd %s253, %s259
          %s261 = smul.addr %s28, 8
          %s262 = sadd.s32 %s257, %s261
          %s263 = smul.addr %s262, 128
          %s264 = scalar_lea.hbm %s1, %s263
          %s265 = sshll.u32 %s256, 4
          %s266 = int_to_ptr.vmem [resolvable:$true] %s265
          %271 = dma.hbm_to_vmem [thread:$0]  %s264, 1024, %s266, %s253, 128, 128, 8
        $region32: #{index_select_forward.12} parent=23 // pred_fallthru
          _
        // Predicated region
        $region33: #{index_select_forward.12} parent=23 // pred_check
          %p272 = pneg %p109
        $region34: #{index_select_forward.12} parent=23 // pred_check_branch
          %274 = sbr.rel (%p272) target = $region36
        $region35: #{index_select_forward.12} parent=23 // pred_region
          %s275 = sand.u32 %s21, 1
          %s276 = scalar_lea.sflag [#allocation6], %s275
          %s277 = sand.u32 %s99, 1
          %s278 = smul.addr %s277, 64
          %s279 = scalar_lea.vmem [#allocation7], %s278
          %s280 = smul.u32 8, %s29
          %s282 = ssub.s32 1024, 1024
          %283 = vsyncadd %s276, %s282
          %s284 = smul.addr %s28, 8
          %s285 = sadd.s32 %s280, %s284
          %s286 = smul.addr %s285, 128
          %s287 = scalar_lea.hbm %s2, %s286
          %s288 = sshll.u32 %s279, 4
          %s289 = int_to_ptr.vmem [resolvable:$true] %s288
          %294 = dma.hbm_to_vmem [thread:$0]  %s287, 1024, %s289, %s276, 128, 128, 8
        $region36: #{index_select_forward.12} parent=23 // pred_fallthru
          _
      $region24: #{index_select_forward.12} parent=5 // pred_fallthru
        _
      %p295 = scmp.le.s32.totalorder 1, %s21
      %p296 = scmp.lt.s32.totalorder %s21, 3
      %p297 = pnand %p295, %p296
      %p298 = pneg %p297
      // Predicated region
      $region37: #{index_select_forward.12} parent=5 // pred_check
        _
      $region38: #{index_select_forward.12} parent=5 // pred_check_branch
        %300 = sbr.rel (%p297) target = $region40
      $region39: #{index_select_forward.12} parent=5 // pred_region
        %s301 = ssub.s32 %s21, 1
        %s302 = sand.u32 %s46, 1
        %s303 = scalar_lea.sflag [#allocation3], %s302
        %s304 = sand.u32 %s46, 1
        %s305 = smul.addr %s304, 64
        %s306 = scalar_lea.vmem [#allocation2], %s305
        // Predicated region
        $region41: #{index_select_forward.12} parent=39 // pred_check
          %p307 = pneg %p59
        $region42: #{index_select_forward.12} parent=39 // pred_check_branch
          %309 = sbr.rel (%p307) target = $region44
        $region43: #{index_select_forward.12} parent=39 // pred_region
          %310 = dma.done %s303, 1024
        $region44: #{index_select_forward.12} parent=39 // pred_fallthru
          _
        %s311 = sand.u32 %s26, 1
        %s312 = scalar_lea.sflag [#allocation6], %s311
        %s313 = sand.u32 %s74, 1
        %s314 = smul.addr %s313, 64
        %s315 = scalar_lea.vmem [#allocation5], %s314
        // Predicated region
        $region45: #{index_select_forward.12} parent=39 // pred_check
          %p316 = pneg %p87
        $region46: #{index_select_forward.12} parent=39 // pred_check_branch
          %318 = sbr.rel (%p316) target = $region48
        $region47: #{index_select_forward.12} parent=39 // pred_region
          %319 = dma.done %s312, 1024
        $region48: #{index_select_forward.12} parent=39 // pred_fallthru
          _
        %s320 = sand.u32 %s26, 1
        %s321 = scalar_lea.sflag [#allocation6], %s320
        %s322 = sand.u32 %s102, 1
        %s323 = smul.addr %s322, 64
        %s324 = scalar_lea.vmem [#allocation7], %s323
        // Predicated region
        $region49: #{index_select_forward.12} parent=39 // pred_check
          %p325 = pneg %p115
        $region50: #{index_select_forward.12} parent=39 // pred_check_branch
          %327 = sbr.rel (%p325) target = $region52
        $region51: #{index_select_forward.12} parent=39 // pred_region
          %328 = dma.done %s321, 1024
        $region52: #{index_select_forward.12} parent=39 // pred_fallthru
          _
        // Predicated region
        $region53: #{index_select_forward.12} parent=39 // pred_check
          %p329 = pneg %p136
        $region54: #{index_select_forward.12} parent=39 // pred_check_branch
          %331 = sbr.rel (%p329) target = $region56
        $region55: #{index_select_forward.12} parent=39 // pred_region
          %332 = dma.done [#allocation9], 32
        $region56: #{index_select_forward.12} parent=39 // pred_fallthru
          _
        // Predicated region
        $region57: #{index_select_forward.12} parent=39 // pred_check
          %p333 = pneg %p157
        $region58: #{index_select_forward.12} parent=39 // pred_check_branch
          %335 = sbr.rel (%p333) target = $region60
        $region59: #{index_select_forward.12} parent=39 // pred_region
          %336 = dma.done [#allocation9], 512
        $region60: #{index_select_forward.12} parent=39 // pred_fallthru
          _
        %s337 = sand.u32 %s46, 1
        %s338 = scalar_lea.sflag [#allocation3], %s337
        %s339 = sand.u32 %s46, 1
        %s340 = smul.addr %s339, 64
        %s341 = scalar_lea.vmem [#allocation2], %s340
        %p342 = pneg %p59
        %p343 = pneg %p56
        %s344 = sand.u32 %s26, 1
        %s345 = scalar_lea.sflag [#allocation6], %s344
        %s346 = sand.u32 %s74, 1
        %s347 = smul.addr %s346, 64
        %s348 = scalar_lea.vmem [#allocation5], %s347
        %p349 = pneg %p87
        %p350 = pneg %p84
        %s351 = sand.u32 %s26, 1
        %s352 = scalar_lea.sflag [#allocation6], %s351
        %s353 = sand.u32 %s102, 1
        %s354 = smul.addr %s353, 64
        %s355 = scalar_lea.vmem [#allocation7], %s354
        %p356 = pneg %p115
        %p357 = pneg %p112
        %p358 = pneg %p136
        %p359 = pneg %p133
        %p360 = pneg %p157
        %p361 = pneg %p154
        %p362 = pneg %p185
        %p363 = pneg %p182
        %s364 = sand.u32 %s172, 1
        %s365 = scalar_lea.sflag [#allocation4], %s364
        %s366 = sand.u32 %s172, 1
        %s367 = smul.addr %s366, 64
        %s368 = scalar_lea.vmem [#allocation11], %s367
        %s369 = smul.u32 8, %s31
        %s370 = smul.u32 8, %s31
        %s371 = smul.u32 8, %s31
        %v372 = vld [vmem:[%s306] sm:$0xff]
        %v373 = vld [vmem:[%s306 + $0x8] sm:$0xff]
        %v374 = vld [vmem:[%s306 + $0x10] sm:$0xff]
        %v375 = vld [vmem:[%s306 + $0x18] sm:$0xff]
        %v376 = vld [vmem:[%s306 + $0x20] sm:$0xff]
        %v377 = vld [vmem:[%s306 + $0x28] sm:$0xff]
        %v378 = vld [vmem:[%s306 + $0x30] sm:$0xff]
        %v379 = vld [vmem:[%s306 + $0x38] sm:$0xff]
        %v380 = vld [vmem:[%s315] sm:$0xff]
        %v381 = vld [vmem:[%s315 + $0x8] sm:$0xff]
        %v382 = vld [vmem:[%s315 + $0x10] sm:$0xff]
        %v383 = vld [vmem:[%s315 + $0x18] sm:$0xff]
        %v384 = vld [vmem:[%s315 + $0x20] sm:$0xff]
        %v385 = vld [vmem:[%s315 + $0x28] sm:$0xff]
        %v386 = vld [vmem:[%s315 + $0x30] sm:$0xff]
        %v387 = vld [vmem:[%s315 + $0x38] sm:$0xff]
        %v388 = vld [vmem:[%s324] sm:$0xff]
        %v389 = vld [vmem:[%s324 + $0x8] sm:$0xff]
        %v390 = vld [vmem:[%s324 + $0x10] sm:$0xff]
        %v391 = vld [vmem:[%s324 + $0x18] sm:$0xff]
        %v392 = vld [vmem:[%s324 + $0x20] sm:$0xff]
        %v393 = vld [vmem:[%s324 + $0x28] sm:$0xff]
        %v394 = vld [vmem:[%s324 + $0x30] sm:$0xff]
        %v395 = vld [vmem:[%s324 + $0x38] sm:$0xff]
        %v396 = vld [vmem:[#allocation8] sm:$0x1]
        %v397 = vld [vmem:[#allocation8 + $0x1] sm:$0x1]
        %v398 = vlaneseq
        %v399 = vshrl.u32 %v398, 7
        %v400 = vsub.s32 0, %v399
        %v401 = vrot.slane %v396, %v400
        %v402 = vmul.f32 %v372, %v401
        %v403 = vmul.f32 %v373, %v401
        %v404 = vmul.f32 %v374, %v401
        %v405 = vmul.f32 %v375, %v401
        %v406 = vmul.f32 %v376, %v401
        %v407 = vmul.f32 %v377, %v401
        %v408 = vmul.f32 %v378, %v401
        %v409 = vmul.f32 %v379, %v401
        %v410 = vmul.f32 %v380, %v401
        %v411 = vmul.f32 %v381, %v401
        %v412 = vmul.f32 %v382, %v401
        %v413 = vmul.f32 %v383, %v401
        %v414 = vmul.f32 %v384, %v401
        %v415 = vmul.f32 %v385, %v401
        %v416 = vmul.f32 %v386, %v401
        %v417 = vmul.f32 %v387, %v401
        %v418 = vlaneseq
        %v419 = vshrl.u32 %v418, 7
        %v420 = vsub.s32 0, %v419
        %v421 = vrot.slane %v397, %v420
        %v422 = vadd.f32 %v410, %v421
        %v423 = vadd.f32 %v411, %v421
        %v424 = vadd.f32 %v412, %v421
        %v425 = vadd.f32 %v413, %v421
        %v426 = vadd.f32 %v414, %v421
        %v427 = vadd.f32 %v415, %v421
        %v428 = vadd.f32 %v416, %v421
        %v429 = vadd.f32 %v417, %v421
        %v430 = vlaneseq
        %v431 = vand.u32 %v430, 127
        %432 = vset.pattern.permute.xlu0 0
        %433 = vperm.xlu0 %432, %v388
        %v434 = vpop.permute.xlu0 %433
        %435 = vset.pattern.permute.xlu0 0
        %436 = vperm.xlu0 %435, %v389
        %v437 = vpop.permute.xlu0 %436
        %438 = vset.pattern.permute.xlu0 0
        %439 = vperm.xlu0 %438, %v390
        %v440 = vpop.permute.xlu0 %439
        %441 = vset.pattern.permute.xlu0 0
        %442 = vperm.xlu0 %441, %v391
        %v443 = vpop.permute.xlu0 %442
        %444 = vset.pattern.permute.xlu0 0
        %445 = vperm.xlu0 %444, %v392
        %v446 = vpop.permute.xlu0 %445
        %447 = vset.pattern.permute.xlu0 0
        %448 = vperm.xlu0 %447, %v393
        %v449 = vpop.permute.xlu0 %448
        %450 = vset.pattern.permute.xlu0 0
        %451 = vperm.xlu0 %450, %v394
        %v452 = vpop.permute.xlu0 %451
        %453 = vset.pattern.permute.xlu0 0
        %454 = vperm.xlu0 %453, %v395
        %v455 = vpop.permute.xlu0 %454
        %vm456 = vcmp.eq.s32.totalorder %v431, %v434
        %vm457 = vcmp.eq.s32.totalorder %v431, %v437
        %vm458 = vcmp.eq.s32.totalorder %v431, %v440
        %vm459 = vcmp.eq.s32.totalorder %v431, %v443
        %vm460 = vcmp.eq.s32.totalorder %v431, %v446
        %vm461 = vcmp.eq.s32.totalorder %v431, %v449
        %vm462 = vcmp.eq.s32.totalorder %v431, %v452
        %vm463 = vcmp.eq.s32.totalorder %v431, %v455
        %v464 = vsel %vm456, 1, 0
        %v465 = vsel %vm457, 1, 0
        %v466 = vsel %vm458, 1, 0
        %v467 = vsel %vm459, 1, 0
        %v468 = vsel %vm460, 1, 0
        %v469 = vsel %vm461, 1, 0
        %v470 = vsel %vm462, 1, 0
        %v471 = vsel %vm463, 1, 0
        %v472 = vcvt.s32.f32 %v464
        %v473 = vcvt.s32.f32 %v465
        %v474 = vcvt.s32.f32 %v466
        %v475 = vcvt.s32.f32 %v467
        %v476 = vcvt.s32.f32 %v468
        %v477 = vcvt.s32.f32 %v469
        %v478 = vcvt.s32.f32 %v470
        %v479 = vcvt.s32.f32 %v471
        %vm480 = vcmask 523264
        %v482 = vsel %vm480, %v472, 0
        %v485 = vsel %vm480, %v473, 0
        %v488 = vsel %vm480, %v474, 0
        %v491 = vsel %vm480, %v475, 0
        %v494 = vsel %vm480, %v476, 0
        %v497 = vsel %vm480, %v477, 0
        %v500 = vsel %vm480, %v478, 0
        %v503 = vsel %vm480, %v479, 0
        %505 = vmatprep.subr.mxu0 0.0
        %506 = vmatpush1.msra.mxu0 %v402
        %507 = vmatprep.subr.mxu0 0.0
        %508 = vmatpush1.msra.mxu0 %v403
        %509 = vmatprep.subr.mxu0 0.0
        %510 = vmatpush1.msra.mxu0 %v404
        %511 = vmatprep.subr.mxu0 0.0
        %512 = vmatpush1.msra.mxu0 %v405
        %513 = vmatprep.subr.mxu0 0.0
        %514 = vmatpush1.msra.mxu0 %v406
        %515 = vmatprep.subr.mxu0 0.0
        %516 = vmatpush1.msra.mxu0 %v407
        %517 = vmatprep.subr.mxu0 0.0
        %518 = vmatpush1.msra.mxu0 %v408
        %519 = vmatprep.subr.mxu0 0.0
        %520 = vmatpush1.msra.mxu0 %v409
        %521 = vmatprep.subr.mxu0 0.0
        %522 = vmatpush1.msra.mxu0 0.0
        %523 = vmatprep.subr.mxu0 0.0
        %524 = vmatpush1.msra.mxu0 0.0
        %525 = vmatprep.subr.mxu0 0.0
        %526 = vmatpush1.msra.mxu0 0.0
        %527 = vmatprep.subr.mxu0 0.0
        %528 = vmatpush1.msra.mxu0 0.0
        %529 = vmatprep.subr.mxu0 0.0
        %530 = vmatpush1.msra.mxu0 0.0
        %531 = vmatprep.subr.mxu0 0.0
        %532 = vmatpush1.msra.mxu0 0.0
        %533 = vmatprep.subr.mxu0 0.0
        %534 = vmatpush1.msra.mxu0 0.0
        %535 = vmatprep.subr.mxu0 0.0
        %536 = vmatpush1.msra.mxu0 0.0
        %537 = vmatprep.subr.mxu0 0.0
        %538 = vmatpush1.msra.mxu0 0.0
        %539 = vmatprep.subr.mxu0 0.0
        %540 = vmatpush1.msra.mxu0 0.0
        %541 = vmatprep.subr.mxu0 0.0
        %542 = vmatpush1.msra.mxu0 0.0
        %543 = vmatprep.subr.mxu0 0.0
        %544 = vmatpush1.msra.mxu0 0.0
        %545 = vmatprep.subr.mxu0 0.0
        %546 = vmatpush1.msra.mxu0 0.0
        %547 = vmatprep.subr.mxu0 0.0
        %548 = vmatpush1.msra.mxu0 0.0
        %549 = vmatprep.subr.mxu0 0.0
        %550 = vmatpush1.msra.mxu0 0.0
        %551 = vmatprep.subr.mxu0 0.0
        %552 = vmatpush1.msra.mxu0 0.0
        %553 = vmatprep.subr.mxu0 0.0
        %554 = vmatpush1.msra.mxu0 0.0
        %555 = vmatprep.subr.mxu0 0.0
        %556 = vmatpush1.msra.mxu0 0.0
        %557 = vmatprep.subr.mxu0 0.0
        %558 = vmatpush1.msra.mxu0 0.0
        %559 = vmatprep.subr.mxu0 0.0
        %560 = vmatpush1.msra.mxu0 0.0
        %561 = vmatprep.subr.mxu0 0.0
        %562 = vmatpush1.msra.mxu0 0.0
        %563 = vmatprep.subr.mxu0 0.0
        %564 = vmatpush1.msra.mxu0 0.0
        %565 = vmatprep.subr.mxu0 0.0
        %566 = vmatpush1.msra.mxu0 0.0
        %567 = vmatprep.subr.mxu0 0.0
        %568 = vmatpush1.msra.mxu0 0.0
        %569 = vmatprep.mubr.f32.mxu0 0.0
        %570 = vmatmul.mubr.f32.gmra.mrb[0].mxu0 %v482
        %v571 = vpop.f32.mrb[0].mxu0
        %v572 = vadd.f32 %v422, %v571
        %v573 = vpop.f32.mrb[0].mxu0
        %574 = vmatprep.mubr.f32.mxu0 0.0
        %575 = vmatmul.mubr.f32.gmra.mrb[0].mxu0 %v485
        %v576 = vpop.f32.mrb[0].mxu0
        %v577 = vadd.f32 %v423, %v576
        %v578 = vpop.f32.mrb[0].mxu0
        %579 = vmatprep.mubr.f32.mxu0 0.0
        %580 = vmatmul.mubr.f32.gmra.mrb[0].mxu0 %v488
        %v581 = vpop.f32.mrb[0].mxu0
        %v582 = vadd.f32 %v424, %v581
        %v583 = vpop.f32.mrb[0].mxu0
        %584 = vmatprep.mubr.f32.mxu0 0.0
        %585 = vmatmul.mubr.f32.gmra.mrb[0].mxu0 %v491
        %v586 = vpop.f32.mrb[0].mxu0
        %v587 = vadd.f32 %v425, %v586
        %v588 = vpop.f32.mrb[0].mxu0
        %589 = vmatprep.mubr.f32.mxu0 0.0
        %590 = vmatmul.mubr.f32.gmra.mrb[0].mxu0 %v494
        %v591 = vpop.f32.mrb[0].mxu0
        %v592 = vadd.f32 %v426, %v591
        %v593 = vpop.f32.mrb[0].mxu0
        %594 = vmatprep.mubr.f32.mxu0 0.0
        %595 = vmatmul.mubr.f32.gmra.mrb[0].mxu0 %v497
        %v596 = vpop.f32.mrb[0].mxu0
        %v597 = vadd.f32 %v427, %v596
        %v598 = vpop.f32.mrb[0].mxu0
        %599 = vmatprep.mubr.f32.mxu0 0.0
        %600 = vmatmul.mubr.f32.gmra.mrb[0].mxu0 %v500
        %v601 = vpop.f32.mrb[0].mxu0
        %v602 = vadd.f32 %v428, %v601
        %v603 = vpop.f32.mrb[0].mxu0
        %604 = vmatprep.mubr.f32.mxu0 0.0
        %605 = vmatmul.mubr.f32.gmra.mrb[0].mxu0 %v503
        %v606 = vpop.f32.mrb[0].mxu0
        %v607 = vadd.f32 %v429, %v606
        %v608 = vpop.f32.mrb[0].mxu0
        %609 = vdwg.mxu0
        %v610 = vmul.f32 %v572, 0.2
        %v611 = vmul.f32 %v577, 0.2
        %v612 = vmul.f32 %v582, 0.2
        %v613 = vmul.f32 %v587, 0.2
        %v614 = vmul.f32 %v592, 0.2
        %v615 = vmul.f32 %v597, 0.2
        %v616 = vmul.f32 %v602, 0.2
        %v617 = vmul.f32 %v607, 0.2
        %v618 = vmax.f32 %v572, %v610
        %v619 = vmax.f32 %v577, %v611
        %v620 = vmax.f32 %v582, %v612
        %v621 = vmax.f32 %v587, %v613
        %v622 = vmax.f32 %v592, %v614
        %v623 = vmax.f32 %v597, %v615
        %v624 = vmax.f32 %v602, %v616
        %v625 = vmax.f32 %v607, %v617
        %626 = vset.pattern.permute.xlu0 1
        %627 = vperm.xlu0 %626, %v388
        %v628 = vpop.permute.xlu0 %627
        %629 = vset.pattern.permute.xlu0 1
        %630 = vperm.xlu0 %629, %v389
        %v631 = vpop.permute.xlu0 %630
        %632 = vset.pattern.permute.xlu0 1
        %633 = vperm.xlu0 %632, %v390
        %v634 = vpop.permute.xlu0 %633
        %635 = vset.pattern.permute.xlu0 1
        %636 = vperm.xlu0 %635, %v391
        %v637 = vpop.permute.xlu0 %636
        %638 = vset.pattern.permute.xlu0 1
        %639 = vperm.xlu0 %638, %v392
        %v640 = vpop.permute.xlu0 %639
        %641 = vset.pattern.permute.xlu0 1
        %642 = vperm.xlu0 %641, %v393
        %v643 = vpop.permute.xlu0 %642
        %644 = vset.pattern.permute.xlu0 1
        %645 = vperm.xlu0 %644, %v394
        %v646 = vpop.permute.xlu0 %645
        %647 = vset.pattern.permute.xlu0 1
        %648 = vperm.xlu0 %647, %v395
        %v649 = vpop.permute.xlu0 %648
        %vm650 = vcmp.eq.s32.totalorder %v431, %v628
        %vm651 = vcmp.eq.s32.totalorder %v431, %v631
        %vm652 = vcmp.eq.s32.totalorder %v431, %v634
        %vm653 = vcmp.eq.s32.totalorder %v431, %v637
        %vm654 = vcmp.eq.s32.totalorder %v431, %v640
        %vm655 = vcmp.eq.s32.totalorder %v431, %v643
        %vm656 = vcmp.eq.s32.totalorder %v431, %v646
        %vm657 = vcmp.eq.s32.totalorder %v431, %v649
        %v658 = vsel %vm650, 1, 0
        %v659 = vsel %vm651, 1, 0
        %v660 = vsel %vm652, 1, 0
        %v661 = vsel %vm653, 1, 0
        %v662 = vsel %vm654, 1, 0
        %v663 = vsel %vm655, 1, 0
        %v664 = vsel %vm656, 1, 0
        %v665 = vsel %vm657, 1, 0
        %v666 = vcvt.s32.f32 %v658
        %v667 = vcvt.s32.f32 %v659
        %v668 = vcvt.s32.f32 %v660
        %v669 = vcvt.s32.f32 %v661
        %v670 = vcvt.s32.f32 %v662
        %v671 = vcvt.s32.f32 %v663
        %v672 = vcvt.s32.f32 %v664
        %v673 = vcvt.s32.f32 %v665
        %v675 = vsel %vm480, %v666, 0
        %v678 = vsel %vm480, %v667, 0
        %v681 = vsel %vm480, %v668, 0
        %v684 = vsel %vm480, %v669, 0
        %v687 = vsel %vm480, %v670, 0
        %v690 = vsel %vm480, %v671, 0
        %v693 = vsel %vm480, %v672, 0
        %v696 = vsel %vm480, %v673, 0
        %698 = vmatprep.subr.mxu0 0.0
        %699 = vmatpush1.msra.mxu0 %v402
        %700 = vmatprep.subr.mxu0 0.0
        %701 = vmatpush1.msra.mxu0 %v403
        %702 = vmatprep.subr.mxu0 0.0
        %703 = vmatpush1.msra.mxu0 %v404
        %704 = vmatprep.subr.mxu0 0.0
        %705 = vmatpush1.msra.mxu0 %v405
        %706 = vmatprep.subr.mxu0 0.0
        %707 = vmatpush1.msra.mxu0 %v406
        %708 = vmatprep.subr.mxu0 0.0
        %709 = vmatpush1.msra.mxu0 %v407
        %710 = vmatprep.subr.mxu0 0.0
        %711 = vmatpush1.msra.mxu0 %v408
        %712 = vmatprep.subr.mxu0 0.0
        %713 = vmatpush1.msra.mxu0 %v409
        %714 = vmatprep.subr.mxu0 0.0
        %715 = vmatpush1.msra.mxu0 0.0
        %716 = vmatprep.subr.mxu0 0.0
        %717 = vmatpush1.msra.mxu0 0.0
        %718 = vmatprep.subr.mxu0 0.0
        %719 = vmatpush1.msra.mxu0 0.0
        %720 = vmatprep.subr.mxu0 0.0
        %721 = vmatpush1.msra.mxu0 0.0
        %722 = vmatprep.subr.mxu0 0.0
        %723 = vmatpush1.msra.mxu0 0.0
        %724 = vmatprep.subr.mxu0 0.0
        %725 = vmatpush1.msra.mxu0 0.0
        %726 = vmatprep.subr.mxu0 0.0
        %727 = vmatpush1.msra.mxu0 0.0
        %728 = vmatprep.subr.mxu0 0.0
        %729 = vmatpush1.msra.mxu0 0.0
        %730 = vmatprep.subr.mxu0 0.0
        %731 = vmatpush1.msra.mxu0 0.0
        %732 = vmatprep.subr.mxu0 0.0
        %733 = vmatpush1.msra.mxu0 0.0
        %734 = vmatprep.subr.mxu0 0.0
        %735 = vmatpush1.msra.mxu0 0.0
        %736 = vmatprep.subr.mxu0 0.0
        %737 = vmatpush1.msra.mxu0 0.0
        %738 = vmatprep.subr.mxu0 0.0
        %739 = vmatpush1.msra.mxu0 0.0
        %740 = vmatprep.subr.mxu0 0.0
        %741 = vmatpush1.msra.mxu0 0.0
        %742 = vmatprep.subr.mxu0 0.0
        %743 = vmatpush1.msra.mxu0 0.0
        %744 = vmatprep.subr.mxu0 0.0
        %745 = vmatpush1.msra.mxu0 0.0
        %746 = vmatprep.subr.mxu0 0.0
        %747 = vmatpush1.msra.mxu0 0.0
        %748 = vmatprep.subr.mxu0 0.0
        %749 = vmatpush1.msra.mxu0 0.0
        %750 = vmatprep.subr.mxu0 0.0
        %751 = vmatpush1.msra.mxu0 0.0
        %752 = vmatprep.subr.mxu0 0.0
        %753 = vmatpush1.msra.mxu0 0.0
        %754 = vmatprep.subr.mxu0 0.0
        %755 = vmatpush1.msra.mxu0 0.0
        %756 = vmatprep.subr.mxu0 0.0
        %757 = vmatpush1.msra.mxu0 0.0
        %758 = vmatprep.subr.mxu0 0.0
        %759 = vmatpush1.msra.mxu0 0.0
        %760 = vmatprep.subr.mxu0 0.0
        %761 = vmatpush1.msra.mxu0 0.0
        %762 = vmatprep.mubr.f32.mxu0 0.0
        %763 = vmatmul.mubr.f32.gmra.mrb[0].mxu0 %v675
        %v764 = vpop.f32.mrb[0].mxu0
        %v765 = vadd.f32 %v422, %v764
        %v766 = vpop.f32.mrb[0].mxu0
        %767 = vmatprep.mubr.f32.mxu0 0.0
        %768 = vmatmul.mubr.f32.gmra.mrb[0].mxu0 %v678
        %v769 = vpop.f32.mrb[0].mxu0
        %v770 = vadd.f32 %v423, %v769
        %v771 = vpop.f32.mrb[0].mxu0
        %772 = vmatprep.mubr.f32.mxu0 0.0
        %773 = vmatmul.mubr.f32.gmra.mrb[0].mxu0 %v681
        %v774 = vpop.f32.mrb[0].mxu0
        %v775 = vadd.f32 %v424, %v774
        %v776 = vpop.f32.mrb[0].mxu0
        %777 = vmatprep.mubr.f32.mxu0 0.0
        %778 = vmatmul.mubr.f32.gmra.mrb[0].mxu0 %v684
        %v779 = vpop.f32.mrb[0].mxu0
        %v780 = vadd.f32 %v425, %v779
        %v781 = vpop.f32.mrb[0].mxu0
        %782 = vmatprep.mubr.f32.mxu0 0.0
        %783 = vmatmul.mubr.f32.gmra.mrb[0].mxu0 %v687
        %v784 = vpop.f32.mrb[0].mxu0
        %v785 = vadd.f32 %v426, %v784
        %v786 = vpop.f32.mrb[0].mxu0
        %787 = vmatprep.mubr.f32.mxu0 0.0
        %788 = vmatmul.mubr.f32.gmra.mrb[0].mxu0 %v690
        %v789 = vpop.f32.mrb[0].mxu0
        %v790 = vadd.f32 %v427, %v789
        %v791 = vpop.f32.mrb[0].mxu0
        %792 = vmatprep.mubr.f32.mxu0 0.0
        %793 = vmatmul.mubr.f32.gmra.mrb[0].mxu0 %v693
        %v794 = vpop.f32.mrb[0].mxu0
        %v795 = vadd.f32 %v428, %v794
        %v796 = vpop.f32.mrb[0].mxu0
        %797 = vmatprep.mubr.f32.mxu0 0.0
        %798 = vmatmul.mubr.f32.gmra.mrb[0].mxu0 %v696
        %v799 = vpop.f32.mrb[0].mxu0
        %v800 = vadd.f32 %v429, %v799
        %v801 = vpop.f32.mrb[0].mxu0
        %802 = vdwg.mxu0
        %v803 = vmul.f32 %v765, 0.2
        %v804 = vmul.f32 %v770, 0.2
        %v805 = vmul.f32 %v775, 0.2
        %v806 = vmul.f32 %v780, 0.2
        %v807 = vmul.f32 %v785, 0.2
        %v808 = vmul.f32 %v790, 0.2
        %v809 = vmul.f32 %v795, 0.2
        %v810 = vmul.f32 %v800, 0.2
        %v811 = vmax.f32 %v765, %v803
        %v812 = vmax.f32 %v770, %v804
        %v813 = vmax.f32 %v775, %v805
        %v814 = vmax.f32 %v780, %v806
        %v815 = vmax.f32 %v785, %v807
        %v816 = vmax.f32 %v790, %v808
        %v817 = vmax.f32 %v795, %v809
        %v818 = vmax.f32 %v800, %v810
        %v819 = vmax.f32 %v618, %v811
        %v820 = vmax.f32 %v619, %v812
        %v821 = vmax.f32 %v620, %v813
        %v822 = vmax.f32 %v621, %v814
        %v823 = vmax.f32 %v622, %v815
        %v824 = vmax.f32 %v623, %v816
        %v825 = vmax.f32 %v624, %v817
        %v826 = vmax.f32 %v625, %v818
        %827 = vset.pattern.permute.xlu0 2
        %828 = vperm.xlu0 %827, %v388
        %v829 = vpop.permute.xlu0 %828
        %830 = vset.pattern.permute.xlu0 2
        %831 = vperm.xlu0 %830, %v389
        %v832 = vpop.permute.xlu0 %831
        %833 = vset.pattern.permute.xlu0 2
        %834 = vperm.xlu0 %833, %v390
        %v835 = vpop.permute.xlu0 %834
        %836 = vset.pattern.permute.xlu0 2
        %837 = vperm.xlu0 %836, %v391
        %v838 = vpop.permute.xlu0 %837
        %839 = vset.pattern.permute.xlu0 2
        %840 = vperm.xlu0 %839, %v392
        %v841 = vpop.permute.xlu0 %840
        %842 = vset.pattern.permute.xlu0 2
        %843 = vperm.xlu0 %842, %v393
        %v844 = vpop.permute.xlu0 %843
        %845 = vset.pattern.permute.xlu0 2
        %846 = vperm.xlu0 %845, %v394
        %v847 = vpop.permute.xlu0 %846
        %848 = vset.pattern.permute.xlu0 2
        %849 = vperm.xlu0 %848, %v395
        %v850 = vpop.permute.xlu0 %849
        %vm851 = vcmp.eq.s32.totalorder %v431, %v829
        %vm852 = vcmp.eq.s32.totalorder %v431, %v832
        %vm853 = vcmp.eq.s32.totalorder %v431, %v835
        %vm854 = vcmp.eq.s32.totalorder %v431, %v838
        %vm855 = vcmp.eq.s32.totalorder %v431, %v841
        %vm856 = vcmp.eq.s32.totalorder %v431, %v844
        %vm857 = vcmp.eq.s32.totalorder %v431, %v847
        %vm858 = vcmp.eq.s32.totalorder %v431, %v850
        %v859 = vsel %vm851, 1, 0
        %v860 = vsel %vm852, 1, 0
        %v861 = vsel %vm853, 1, 0
        %v862 = vsel %vm854, 1, 0
        %v863 = vsel %vm855, 1, 0
        %v864 = vsel %vm856, 1, 0
        %v865 = vsel %vm857, 1, 0
        %v866 = vsel %vm858, 1, 0
        %v867 = vcvt.s32.f32 %v859
        %v868 = vcvt.s32.f32 %v860
        %v869 = vcvt.s32.f32 %v861
        %v870 = vcvt.s32.f32 %v862
        %v871 = vcvt.s32.f32 %v863
        %v872 = vcvt.s32.f32 %v864
        %v873 = vcvt.s32.f32 %v865
        %v874 = vcvt.s32.f32 %v866
        %v876 = vsel %vm480, %v867, 0
        %v879 = vsel %vm480, %v868, 0
        %v882 = vsel %vm480, %v869, 0
        %v885 = vsel %vm480, %v870, 0
        %v888 = vsel %vm480, %v871, 0
        %v891 = vsel %vm480, %v872, 0
        %v894 = vsel %vm480, %v873, 0
        %v897 = vsel %vm480, %v874, 0
        %899 = vmatprep.subr.mxu0 0.0
        %900 = vmatpush1.msra.mxu0 %v402
        %901 = vmatprep.subr.mxu0 0.0
        %902 = vmatpush1.msra.mxu0 %v403
        %903 = vmatprep.subr.mxu0 0.0
        %904 = vmatpush1.msra.mxu0 %v404
        %905 = vmatprep.subr.mxu0 0.0
        %906 = vmatpush1.msra.mxu0 %v405
        %907 = vmatprep.subr.mxu0 0.0
        %908 = vmatpush1.msra.mxu0 %v406
        %909 = vmatprep.subr.mxu0 0.0
        %910 = vmatpush1.msra.mxu0 %v407
        %911 = vmatprep.subr.mxu0 0.0
        %912 = vmatpush1.msra.mxu0 %v408
        %913 = vmatprep.subr.mxu0 0.0
        %914 = vmatpush1.msra.mxu0 %v409
        %915 = vmatprep.subr.mxu0 0.0
        %916 = vmatpush1.msra.mxu0 0.0
        %917 = vmatprep.subr.mxu0 0.0
        %918 = vmatpush1.msra.mxu0 0.0
        %919 = vmatprep.subr.mxu0 0.0
        %920 = vmatpush1.msra.mxu0 0.0
        %921 = vmatprep.subr.mxu0 0.0
        %922 = vmatpush1.msra.mxu0 0.0
        %923 = vmatprep.subr.mxu0 0.0
        %924 = vmatpush1.msra.mxu0 0.0
        %925 = vmatprep.subr.mxu0 0.0
        %926 = vmatpush1.msra.mxu0 0.0
        %927 = vmatprep.subr.mxu0 0.0
        %928 = vmatpush1.msra.mxu0 0.0
        %929 = vmatprep.subr.mxu0 0.0
        %930 = vmatpush1.msra.mxu0 0.0
        %931 = vmatprep.subr.mxu0 0.0
        %932 = vmatpush1.msra.mxu0 0.0
        %933 = vmatprep.subr.mxu0 0.0
        %934 = vmatpush1.msra.mxu0 0.0
        %935 = vmatprep.subr.mxu0 0.0
        %936 = vmatpush1.msra.mxu0 0.0
        %937 = vmatprep.subr.mxu0 0.0
        %938 = vmatpush1.msra.mxu0 0.0
        %939 = vmatprep.subr.mxu0 0.0
        %940 = vmatpush1.msra.mxu0 0.0
        %941 = vmatprep.subr.mxu0 0.0
        %942 = vmatpush1.msra.mxu0 0.0
        %943 = vmatprep.subr.mxu0 0.0
        %944 = vmatpush1.msra.mxu0 0.0
        %945 = vmatprep.subr.mxu0 0.0
        %946 = vmatpush1.msra.mxu0 0.0
        %947 = vmatprep.subr.mxu0 0.0
        %948 = vmatpush1.msra.mxu0 0.0
        %949 = vmatprep.subr.mxu0 0.0
        %950 = vmatpush1.msra.mxu0 0.0
        %951 = vmatprep.subr.mxu0 0.0
        %952 = vmatpush1.msra.mxu0 0.0
        %953 = vmatprep.subr.mxu0 0.0
        %954 = vmatpush1.msra.mxu0 0.0
        %955 = vmatprep.subr.mxu0 0.0
        %956 = vmatpush1.msra.mxu0 0.0
        %957 = vmatprep.subr.mxu0 0.0
        %958 = vmatpush1.msra.mxu0 0.0
        %959 = vmatprep.subr.mxu0 0.0
        %960 = vmatpush1.msra.mxu0 0.0
        %961 = vmatprep.subr.mxu0 0.0
        %962 = vmatpush1.msra.mxu0 0.0
        %963 = vmatprep.mubr.f32.mxu0 0.0
        %964 = vmatmul.mubr.f32.gmra.mrb[0].mxu0 %v876
        %v965 = vpop.f32.mrb[0].mxu0
        %v966 = vadd.f32 %v422, %v965
        %v967 = vpop.f32.mrb[0].mxu0
        %968 = vmatprep.mubr.f32.mxu0 0.0
        %969 = vmatmul.mubr.f32.gmra.mrb[0].mxu0 %v879
        %v970 = vpop.f32.mrb[0].mxu0
        %v971 = vadd.f32 %v423, %v970
        %v972 = vpop.f32.mrb[0].mxu0
        %973 = vmatprep.mubr.f32.mxu0 0.0
        %974 = vmatmul.mubr.f32.gmra.mrb[0].mxu0 %v882
        %v975 = vpop.f32.mrb[0].mxu0
        %v976 = vadd.f32 %v424, %v975
        %v977 = vpop.f32.mrb[0].mxu0
        %978 = vmatprep.mubr.f32.mxu0 0.0
        %979 = vmatmul.mubr.f32.gmra.mrb[0].mxu0 %v885
        %v980 = vpop.f32.mrb[0].mxu0
        %v981 = vadd.f32 %v425, %v980
        %v982 = vpop.f32.mrb[0].mxu0
        %983 = vmatprep.mubr.f32.mxu0 0.0
        %984 = vmatmul.mubr.f32.gmra.mrb[0].mxu0 %v888
        %v985 = vpop.f32.mrb[0].mxu0
        %v986 = vadd.f32 %v426, %v985
        %v987 = vpop.f32.mrb[0].mxu0
        %988 = vmatprep.mubr.f32.mxu0 0.0
        %989 = vmatmul.mubr.f32.gmra.mrb[0].mxu0 %v891
        %v990 = vpop.f32.mrb[0].mxu0
        %v991 = vadd.f32 %v427, %v990
        %v992 = vpop.f32.mrb[0].mxu0
        %993 = vmatprep.mubr.f32.mxu0 0.0
        %994 = vmatmul.mubr.f32.gmra.mrb[0].mxu0 %v894
        %v995 = vpop.f32.mrb[0].mxu0
        %v996 = vadd.f32 %v428, %v995
        %v997 = vpop.f32.mrb[0].mxu0
        %998 = vmatprep.mubr.f32.mxu0 0.0
        %999 = vmatmul.mubr.f32.gmra.mrb[0].mxu0 %v897
        %v1000 = vpop.f32.mrb[0].mxu0
        %v1001 = vadd.f32 %v429, %v1000
        %v1002 = vpop.f32.mrb[0].mxu0
        %1003 = vdwg.mxu0
        %v1004 = vmul.f32 %v966, 0.2
        %v1005 = vmul.f32 %v971, 0.2
        %v1006 = vmul.f32 %v976, 0.2
        %v1007 = vmul.f32 %v981, 0.2
        %v1008 = vmul.f32 %v986, 0.2
        %v1009 = vmul.f32 %v991, 0.2
        %v1010 = vmul.f32 %v996, 0.2
        %v1011 = vmul.f32 %v1001, 0.2
        %v1012 = vmax.f32 %v966, %v1004
        %v1013 = vmax.f32 %v971, %v1005
        %v1014 = vmax.f32 %v976, %v1006
        %v1015 = vmax.f32 %v981, %v1007
        %v1016 = vmax.f32 %v986, %v1008
        %v1017 = vmax.f32 %v991, %v1009
        %v1018 = vmax.f32 %v996, %v1010
        %v1019 = vmax.f32 %v1001, %v1011
        %v1020 = vmax.f32 %v819, %v1012
        %v1021 = vmax.f32 %v820, %v1013
        %v1022 = vmax.f32 %v821, %v1014
        %v1023 = vmax.f32 %v822, %v1015
        %v1024 = vmax.f32 %v823, %v1016
        %v1025 = vmax.f32 %v824, %v1017
        %v1026 = vmax.f32 %v825, %v1018
        %v1027 = vmax.f32 %v826, %v1019
        %1028 = vset.pattern.permute.xlu0 3
        %1029 = vperm.xlu0 %1028, %v388
        %v1030 = vpop.permute.xlu0 %1029
        %1031 = vset.pattern.permute.xlu0 3
        %1032 = vperm.xlu0 %1031, %v389
        %v1033 = vpop.permute.xlu0 %1032
        %1034 = vset.pattern.permute.xlu0 3
        %1035 = vperm.xlu0 %1034, %v390
        %v1036 = vpop.permute.xlu0 %1035
        %1037 = vset.pattern.permute.xlu0 3
        %1038 = vperm.xlu0 %1037, %v391
        %v1039 = vpop.permute.xlu0 %1038
        %1040 = vset.pattern.permute.xlu0 3
        %1041 = vperm.xlu0 %1040, %v392
        %v1042 = vpop.permute.xlu0 %1041
        %1043 = vset.pattern.permute.xlu0 3
        %1044 = vperm.xlu0 %1043, %v393
        %v1045 = vpop.permute.xlu0 %1044
        %1046 = vset.pattern.permute.xlu0 3
        %1047 = vperm.xlu0 %1046, %v394
        %v1048 = vpop.permute.xlu0 %1047
        %1049 = vset.pattern.permute.xlu0 3
        %1050 = vperm.xlu0 %1049, %v395
        %v1051 = vpop.permute.xlu0 %1050
        %vm1052 = vcmp.eq.s32.totalorder %v431, %v1030
        %vm1053 = vcmp.eq.s32.totalorder %v431, %v1033
        %vm1054 = vcmp.eq.s32.totalorder %v431, %v1036
        %vm1055 = vcmp.eq.s32.totalorder %v431, %v1039
        %vm1056 = vcmp.eq.s32.totalorder %v431, %v1042
        %vm1057 = vcmp.eq.s32.totalorder %v431, %v1045
        %vm1058 = vcmp.eq.s32.totalorder %v431, %v1048
        %vm1059 = vcmp.eq.s32.totalorder %v431, %v1051
        %v1060 = vsel %vm1052, 1, 0
        %v1061 = vsel %vm1053, 1, 0
        %v1062 = vsel %vm1054, 1, 0
        %v1063 = vsel %vm1055, 1, 0
        %v1064 = vsel %vm1056, 1, 0
        %v1065 = vsel %vm1057, 1, 0
        %v1066 = vsel %vm1058, 1, 0
        %v1067 = vsel %vm1059, 1, 0
        %v1068 = vcvt.s32.f32 %v1060
        %v1069 = vcvt.s32.f32 %v1061
        %v1070 = vcvt.s32.f32 %v1062
        %v1071 = vcvt.s32.f32 %v1063
        %v1072 = vcvt.s32.f32 %v1064
        %v1073 = vcvt.s32.f32 %v1065
        %v1074 = vcvt.s32.f32 %v1066
        %v1075 = vcvt.s32.f32 %v1067
        %v1077 = vsel %vm480, %v1068, 0
        %v1080 = vsel %vm480, %v1069, 0
        %v1083 = vsel %vm480, %v1070, 0
        %v1086 = vsel %vm480, %v1071, 0
        %v1089 = vsel %vm480, %v1072, 0
        %v1092 = vsel %vm480, %v1073, 0
        %v1095 = vsel %vm480, %v1074, 0
        %v1098 = vsel %vm480, %v1075, 0
        %1100 = vmatprep.subr.mxu0 0.0
        %1101 = vmatpush1.msra.mxu0 %v402
        %1102 = vmatprep.subr.mxu0 0.0
        %1103 = vmatpush1.msra.mxu0 %v403
        %1104 = vmatprep.subr.mxu0 0.0
        %1105 = vmatpush1.msra.mxu0 %v404
        %1106 = vmatprep.subr.mxu0 0.0
        %1107 = vmatpush1.msra.mxu0 %v405
        %1108 = vmatprep.subr.mxu0 0.0
        %1109 = vmatpush1.msra.mxu0 %v406
        %1110 = vmatprep.subr.mxu0 0.0
        %1111 = vmatpush1.msra.mxu0 %v407
        %1112 = vmatprep.subr.mxu0 0.0
        %1113 = vmatpush1.msra.mxu0 %v408
        %1114 = vmatprep.subr.mxu0 0.0
        %1115 = vmatpush1.msra.mxu0 %v409
        %1116 = vmatprep.subr.mxu0 0.0
        %1117 = vmatpush1.msra.mxu0 0.0
        %1118 = vmatprep.subr.mxu0 0.0
        %1119 = vmatpush1.msra.mxu0 0.0
        %1120 = vmatprep.subr.mxu0 0.0
        %1121 = vmatpush1.msra.mxu0 0.0
        %1122 = vmatprep.subr.mxu0 0.0
        %1123 = vmatpush1.msra.mxu0 0.0
        %1124 = vmatprep.subr.mxu0 0.0
        %1125 = vmatpush1.msra.mxu0 0.0
        %1126 = vmatprep.subr.mxu0 0.0
        %1127 = vmatpush1.msra.mxu0 0.0
        %1128 = vmatprep.subr.mxu0 0.0
        %1129 = vmatpush1.msra.mxu0 0.0
        %1130 = vmatprep.subr.mxu0 0.0
        %1131 = vmatpush1.msra.mxu0 0.0
        %1132 = vmatprep.subr.mxu0 0.0
        %1133 = vmatpush1.msra.mxu0 0.0
        %1134 = vmatprep.subr.mxu0 0.0
        %1135 = vmatpush1.msra.mxu0 0.0
        %1136 = vmatprep.subr.mxu0 0.0
        %1137 = vmatpush1.msra.mxu0 0.0
        %1138 = vmatprep.subr.mxu0 0.0
        %1139 = vmatpush1.msra.mxu0 0.0
        %1140 = vmatprep.subr.mxu0 0.0
        %1141 = vmatpush1.msra.mxu0 0.0
        %1142 = vmatprep.subr.mxu0 0.0
        %1143 = vmatpush1.msra.mxu0 0.0
        %1144 = vmatprep.subr.mxu0 0.0
        %1145 = vmatpush1.msra.mxu0 0.0
        %1146 = vmatprep.subr.mxu0 0.0
        %1147 = vmatpush1.msra.mxu0 0.0
        %1148 = vmatprep.subr.mxu0 0.0
        %1149 = vmatpush1.msra.mxu0 0.0
        %1150 = vmatprep.subr.mxu0 0.0
        %1151 = vmatpush1.msra.mxu0 0.0
        %1152 = vmatprep.subr.mxu0 0.0
        %1153 = vmatpush1.msra.mxu0 0.0
        %1154 = vmatprep.subr.mxu0 0.0
        %1155 = vmatpush1.msra.mxu0 0.0
        %1156 = vmatprep.subr.mxu0 0.0
        %1157 = vmatpush1.msra.mxu0 0.0
        %1158 = vmatprep.subr.mxu0 0.0
        %1159 = vmatpush1.msra.mxu0 0.0
        %1160 = vmatprep.subr.mxu0 0.0
        %1161 = vmatpush1.msra.mxu0 0.0
        %1162 = vmatprep.subr.mxu0 0.0
        %1163 = vmatpush1.msra.mxu0 0.0
        %1164 = vmatprep.mubr.f32.mxu0 0.0
        %1165 = vmatmul.mubr.f32.gmra.mrb[0].mxu0 %v1077
        %v1166 = vpop.f32.mrb[0].mxu0
        %v1167 = vadd.f32 %v422, %v1166
        %v1168 = vpop.f32.mrb[0].mxu0
        %1169 = vmatprep.mubr.f32.mxu0 0.0
        %1170 = vmatmul.mubr.f32.gmra.mrb[0].mxu0 %v1080
        %v1171 = vpop.f32.mrb[0].mxu0
        %v1172 = vadd.f32 %v423, %v1171
        %v1173 = vpop.f32.mrb[0].mxu0
        %1174 = vmatprep.mubr.f32.mxu0 0.0
        %1175 = vmatmul.mubr.f32.gmra.mrb[0].mxu0 %v1083
        %v1176 = vpop.f32.mrb[0].mxu0
        %v1177 = vadd.f32 %v424, %v1176
        %v1178 = vpop.f32.mrb[0].mxu0
        %1179 = vmatprep.mubr.f32.mxu0 0.0
        %1180 = vmatmul.mubr.f32.gmra.mrb[0].mxu0 %v1086
        %v1181 = vpop.f32.mrb[0].mxu0
        %v1182 = vadd.f32 %v425, %v1181
        %v1183 = vpop.f32.mrb[0].mxu0
        %1184 = vmatprep.mubr.f32.mxu0 0.0
        %1185 = vmatmul.mubr.f32.gmra.mrb[0].mxu0 %v1089
        %v1186 = vpop.f32.mrb[0].mxu0
        %v1187 = vadd.f32 %v426, %v1186
        %v1188 = vpop.f32.mrb[0].mxu0
        %1189 = vmatprep.mubr.f32.mxu0 0.0
        %1190 = vmatmul.mubr.f32.gmra.mrb[0].mxu0 %v1092
        %v1191 = vpop.f32.mrb[0].mxu0
        %v1192 = vadd.f32 %v427, %v1191
        %v1193 = vpop.f32.mrb[0].mxu0
        %1194 = vmatprep.mubr.f32.mxu0 0.0
        %1195 = vmatmul.mubr.f32.gmra.mrb[0].mxu0 %v1095
        %v1196 = vpop.f32.mrb[0].mxu0
        %v1197 = vadd.f32 %v428, %v1196
        %v1198 = vpop.f32.mrb[0].mxu0
        %1199 = vmatprep.mubr.f32.mxu0 0.0
        %1200 = vmatmul.mubr.f32.gmra.mrb[0].mxu0 %v1098
        %v1201 = vpop.f32.mrb[0].mxu0
        %v1202 = vadd.f32 %v429, %v1201
        %v1203 = vpop.f32.mrb[0].mxu0
        %1204 = vdwg.mxu0
        %v1205 = vmul.f32 %v1167, 0.2
        %v1206 = vmul.f32 %v1172, 0.2
        %v1207 = vmul.f32 %v1177, 0.2
        %v1208 = vmul.f32 %v1182, 0.2
        %v1209 = vmul.f32 %v1187, 0.2
        %v1210 = vmul.f32 %v1192, 0.2
        %v1211 = vmul.f32 %v1197, 0.2
        %v1212 = vmul.f32 %v1202, 0.2
        %v1213 = vmax.f32 %v1167, %v1205
        %v1214 = vmax.f32 %v1172, %v1206
        %v1215 = vmax.f32 %v1177, %v1207
        %v1216 = vmax.f32 %v1182, %v1208
        %v1217 = vmax.f32 %v1187, %v1209
        %v1218 = vmax.f32 %v1192, %v1210
        %v1219 = vmax.f32 %v1197, %v1211
        %v1220 = vmax.f32 %v1202, %v1212
        %v1221 = vmax.f32 %v1020, %v1213
        %v1222 = vmax.f32 %v1021, %v1214
        %v1223 = vmax.f32 %v1022, %v1215
        %v1224 = vmax.f32 %v1023, %v1216
        %v1225 = vmax.f32 %v1024, %v1217
        %v1226 = vmax.f32 %v1025, %v1218
        %v1227 = vmax.f32 %v1026, %v1219
        %v1228 = vmax.f32 %v1027, %v1220
        %1229 = vset.pattern.permute.xlu0 4
        %1230 = vperm.xlu0 %1229, %v388
        %v1231 = vpop.permute.xlu0 %1230
        %1232 = vset.pattern.permute.xlu0 4
        %1233 = vperm.xlu0 %1232, %v389
        %v1234 = vpop.permute.xlu0 %1233
        %1235 = vset.pattern.permute.xlu0 4
        %1236 = vperm.xlu0 %1235, %v390
        %v1237 = vpop.permute.xlu0 %1236
        %1238 = vset.pattern.permute.xlu0 4
        %1239 = vperm.xlu0 %1238, %v391
        %v1240 = vpop.permute.xlu0 %1239
        %1241 = vset.pattern.permute.xlu0 4
        %1242 = vperm.xlu0 %1241, %v392
        %v1243 = vpop.permute.xlu0 %1242
        %1244 = vset.pattern.permute.xlu0 4
        %1245 = vperm.xlu0 %1244, %v393
        %v1246 = vpop.permute.xlu0 %1245
        %1247 = vset.pattern.permute.xlu0 4
        %1248 = vperm.xlu0 %1247, %v394
        %v1249 = vpop.permute.xlu0 %1248
        %1250 = vset.pattern.permute.xlu0 4
        %1251 = vperm.xlu0 %1250, %v395
        %v1252 = vpop.permute.xlu0 %1251
        %vm1253 = vcmp.eq.s32.totalorder %v431, %v1231
        %vm1254 = vcmp.eq.s32.totalorder %v431, %v1234
        %vm1255 = vcmp.eq.s32.totalorder %v431, %v1237
        %vm1256 = vcmp.eq.s32.totalorder %v431, %v1240
        %vm1257 = vcmp.eq.s32.totalorder %v431, %v1243
        %vm1258 = vcmp.eq.s32.totalorder %v431, %v1246
        %vm1259 = vcmp.eq.s32.totalorder %v431, %v1249
        %vm1260 = vcmp.eq.s32.totalorder %v431, %v1252
        %v1261 = vsel %vm1253, 1, 0
        %v1262 = vsel %vm1254, 1, 0
        %v1263 = vsel %vm1255, 1, 0
        %v1264 = vsel %vm1256, 1, 0
        %v1265 = vsel %vm1257, 1, 0
        %v1266 = vsel %vm1258, 1, 0
        %v1267 = vsel %vm1259, 1, 0
        %v1268 = vsel %vm1260, 1, 0
        %v1269 = vcvt.s32.f32 %v1261
        %v1270 = vcvt.s32.f32 %v1262
        %v1271 = vcvt.s32.f32 %v1263
        %v1272 = vcvt.s32.f32 %v1264
        %v1273 = vcvt.s32.f32 %v1265
        %v1274 = vcvt.s32.f32 %v1266
        %v1275 = vcvt.s32.f32 %v1267
        %v1276 = vcvt.s32.f32 %v1268
        %v1278 = vsel %vm480, %v1269, 0
        %v1281 = vsel %vm480, %v1270, 0
        %v1284 = vsel %vm480, %v1271, 0
        %v1287 = vsel %vm480, %v1272, 0
        %v1290 = vsel %vm480, %v1273, 0
        %v1293 = vsel %vm480, %v1274, 0
        %v1296 = vsel %vm480, %v1275, 0
        %v1299 = vsel %vm480, %v1276, 0
        %1301 = vmatprep.subr.mxu0 0.0
        %1302 = vmatpush1.msra.mxu0 %v402
        %1303 = vmatprep.subr.mxu0 0.0
        %1304 = vmatpush1.msra.mxu0 %v403
        %1305 = vmatprep.subr.mxu0 0.0
        %1306 = vmatpush1.msra.mxu0 %v404
        %1307 = vmatprep.subr.mxu0 0.0
        %1308 = vmatpush1.msra.mxu0 %v405
        %1309 = vmatprep.subr.mxu0 0.0
        %1310 = vmatpush1.msra.mxu0 %v406
        %1311 = vmatprep.subr.mxu0 0.0
        %1312 = vmatpush1.msra.mxu0 %v407
        %1313 = vmatprep.subr.mxu0 0.0
        %1314 = vmatpush1.msra.mxu0 %v408
        %1315 = vmatprep.subr.mxu0 0.0
        %1316 = vmatpush1.msra.mxu0 %v409
        %1317 = vmatprep.subr.mxu0 0.0
        %1318 = vmatpush1.msra.mxu0 0.0
        %1319 = vmatprep.subr.mxu0 0.0
        %1320 = vmatpush1.msra.mxu0 0.0
        %1321 = vmatprep.subr.mxu0 0.0
        %1322 = vmatpush1.msra.mxu0 0.0
        %1323 = vmatprep.subr.mxu0 0.0
        %1324 = vmatpush1.msra.mxu0 0.0
        %1325 = vmatprep.subr.mxu0 0.0
        %1326 = vmatpush1.msra.mxu0 0.0
        %1327 = vmatprep.subr.mxu0 0.0
        %1328 = vmatpush1.msra.mxu0 0.0
        %1329 = vmatprep.subr.mxu0 0.0
        %1330 = vmatpush1.msra.mxu0 0.0
        %1331 = vmatprep.subr.mxu0 0.0
        %1332 = vmatpush1.msra.mxu0 0.0
        %1333 = vmatprep.subr.mxu0 0.0
        %1334 = vmatpush1.msra.mxu0 0.0
        %1335 = vmatprep.subr.mxu0 0.0
        %1336 = vmatpush1.msra.mxu0 0.0
        %1337 = vmatprep.subr.mxu0 0.0
        %1338 = vmatpush1.msra.mxu0 0.0
        %1339 = vmatprep.subr.mxu0 0.0
        %1340 = vmatpush1.msra.mxu0 0.0
        %1341 = vmatprep.subr.mxu0 0.0
        %1342 = vmatpush1.msra.mxu0 0.0
        %1343 = vmatprep.subr.mxu0 0.0
        %1344 = vmatpush1.msra.mxu0 0.0
        %1345 = vmatprep.subr.mxu0 0.0
        %1346 = vmatpush1.msra.mxu0 0.0
        %1347 = vmatprep.subr.mxu0 0.0
        %1348 = vmatpush1.msra.mxu0 0.0
        %1349 = vmatprep.subr.mxu0 0.0
        %1350 = vmatpush1.msra.mxu0 0.0
        %1351 = vmatprep.subr.mxu0 0.0
        %1352 = vmatpush1.msra.mxu0 0.0
        %1353 = vmatprep.subr.mxu0 0.0
        %1354 = vmatpush1.msra.mxu0 0.0
        %1355 = vmatprep.subr.mxu0 0.0
        %1356 = vmatpush1.msra.mxu0 0.0
        %1357 = vmatprep.subr.mxu0 0.0
        %1358 = vmatpush1.msra.mxu0 0.0
        %1359 = vmatprep.subr.mxu0 0.0
        %1360 = vmatpush1.msra.mxu0 0.0
        %1361 = vmatprep.subr.mxu0 0.0
        %1362 = vmatpush1.msra.mxu0 0.0
        %1363 = vmatprep.subr.mxu0 0.0
        %1364 = vmatpush1.msra.mxu0 0.0
        %1365 = vmatprep.mubr.f32.mxu0 0.0
        %1366 = vmatmul.mubr.f32.gmra.mrb[0].mxu0 %v1278
        %v1367 = vpop.f32.mrb[0].mxu0
        %v1368 = vadd.f32 %v422, %v1367
        %v1369 = vpop.f32.mrb[0].mxu0
        %1370 = vmatprep.mubr.f32.mxu0 0.0
        %1371 = vmatmul.mubr.f32.gmra.mrb[0].mxu0 %v1281
        %v1372 = vpop.f32.mrb[0].mxu0
        %v1373 = vadd.f32 %v423, %v1372
        %v1374 = vpop.f32.mrb[0].mxu0
        %1375 = vmatprep.mubr.f32.mxu0 0.0
        %1376 = vmatmul.mubr.f32.gmra.mrb[0].mxu0 %v1284
        %v1377 = vpop.f32.mrb[0].mxu0
        %v1378 = vadd.f32 %v424, %v1377
        %v1379 = vpop.f32.mrb[0].mxu0
        %1380 = vmatprep.mubr.f32.mxu0 0.0
        %1381 = vmatmul.mubr.f32.gmra.mrb[0].mxu0 %v1287
        %v1382 = vpop.f32.mrb[0].mxu0
        %v1383 = vadd.f32 %v425, %v1382
        %v1384 = vpop.f32.mrb[0].mxu0
        %1385 = vmatprep.mubr.f32.mxu0 0.0
        %1386 = vmatmul.mubr.f32.gmra.mrb[0].mxu0 %v1290
        %v1387 = vpop.f32.mrb[0].mxu0
        %v1388 = vadd.f32 %v426, %v1387
        %v1389 = vpop.f32.mrb[0].mxu0
        %1390 = vmatprep.mubr.f32.mxu0 0.0
        %1391 = vmatmul.mubr.f32.gmra.mrb[0].mxu0 %v1293
        %v1392 = vpop.f32.mrb[0].mxu0
        %v1393 = vadd.f32 %v427, %v1392
        %v1394 = vpop.f32.mrb[0].mxu0
        %1395 = vmatprep.mubr.f32.mxu0 0.0
        %1396 = vmatmul.mubr.f32.gmra.mrb[0].mxu0 %v1296
        %v1397 = vpop.f32.mrb[0].mxu0
        %v1398 = vadd.f32 %v428, %v1397
        %v1399 = vpop.f32.mrb[0].mxu0
        %1400 = vmatprep.mubr.f32.mxu0 0.0
        %1401 = vmatmul.mubr.f32.gmra.mrb[0].mxu0 %v1299
        %v1402 = vpop.f32.mrb[0].mxu0
        %v1403 = vadd.f32 %v429, %v1402
        %v1404 = vpop.f32.mrb[0].mxu0
        %1405 = vdwg.mxu0
        %v1406 = vmul.f32 %v1368, 0.2
        %v1407 = vmul.f32 %v1373, 0.2
        %v1408 = vmul.f32 %v1378, 0.2
        %v1409 = vmul.f32 %v1383, 0.2
        %v1410 = vmul.f32 %v1388, 0.2
        %v1411 = vmul.f32 %v1393, 0.2
        %v1412 = vmul.f32 %v1398, 0.2
        %v1413 = vmul.f32 %v1403, 0.2
        %v1414 = vmax.f32 %v1368, %v1406
        %v1415 = vmax.f32 %v1373, %v1407
        %v1416 = vmax.f32 %v1378, %v1408
        %v1417 = vmax.f32 %v1383, %v1409
        %v1418 = vmax.f32 %v1388, %v1410
        %v1419 = vmax.f32 %v1393, %v1411
        %v1420 = vmax.f32 %v1398, %v1412
        %v1421 = vmax.f32 %v1403, %v1413
        %v1422 = vmax.f32 %v1221, %v1414
        %v1423 = vmax.f32 %v1222, %v1415
        %v1424 = vmax.f32 %v1223, %v1416
        %v1425 = vmax.f32 %v1224, %v1417
        %v1426 = vmax.f32 %v1225, %v1418
        %v1427 = vmax.f32 %v1226, %v1419
        %v1428 = vmax.f32 %v1227, %v1420
        %v1429 = vmax.f32 %v1228, %v1421
        %1430 = vset.pattern.permute.xlu0 5
        %1431 = vperm.xlu0 %1430, %v388
        %v1432 = vpop.permute.xlu0 %1431
        %1433 = vset.pattern.permute.xlu0 5
        %1434 = vperm.xlu0 %1433, %v389
        %v1435 = vpop.permute.xlu0 %1434
        %1436 = vset.pattern.permute.xlu0 5
        %1437 = vperm.xlu0 %1436, %v390
        %v1438 = vpop.permute.xlu0 %1437
        %1439 = vset.pattern.permute.xlu0 5
        %1440 = vperm.xlu0 %1439, %v391
        %v1441 = vpop.permute.xlu0 %1440
        %1442 = vset.pattern.permute.xlu0 5
        %1443 = vperm.xlu0 %1442, %v392
        %v1444 = vpop.permute.xlu0 %1443
        %1445 = vset.pattern.permute.xlu0 5
        %1446 = vperm.xlu0 %1445, %v393
        %v1447 = vpop.permute.xlu0 %1446
        %1448 = vset.pattern.permute.xlu0 5
        %1449 = vperm.xlu0 %1448, %v394
        %v1450 = vpop.permute.xlu0 %1449
        %1451 = vset.pattern.permute.xlu0 5
        %1452 = vperm.xlu0 %1451, %v395
        %v1453 = vpop.permute.xlu0 %1452
        %vm1454 = vcmp.eq.s32.totalorder %v431, %v1432
        %vm1455 = vcmp.eq.s32.totalorder %v431, %v1435
        %vm1456 = vcmp.eq.s32.totalorder %v431, %v1438
        %vm1457 = vcmp.eq.s32.totalorder %v431, %v1441
        %vm1458 = vcmp.eq.s32.totalorder %v431, %v1444
        %vm1459 = vcmp.eq.s32.totalorder %v431, %v1447
        %vm1460 = vcmp.eq.s32.totalorder %v431, %v1450
        %vm1461 = vcmp.eq.s32.totalorder %v431, %v1453
        %v1462 = vsel %vm1454, 1, 0
        %v1463 = vsel %vm1455, 1, 0
        %v1464 = vsel %vm1456, 1, 0
        %v1465 = vsel %vm1457, 1, 0
        %v1466 = vsel %vm1458, 1, 0
        %v1467 = vsel %vm1459, 1, 0
        %v1468 = vsel %vm1460, 1, 0
        %v1469 = vsel %vm1461, 1, 0
        %v1470 = vcvt.s32.f32 %v1462
        %v1471 = vcvt.s32.f32 %v1463
        %v1472 = vcvt.s32.f32 %v1464
        %v1473 = vcvt.s32.f32 %v1465
        %v1474 = vcvt.s32.f32 %v1466
        %v1475 = vcvt.s32.f32 %v1467
        %v1476 = vcvt.s32.f32 %v1468
        %v1477 = vcvt.s32.f32 %v1469
        %v1479 = vsel %vm480, %v1470, 0
        %v1482 = vsel %vm480, %v1471, 0
        %v1485 = vsel %vm480, %v1472, 0
        %v1488 = vsel %vm480, %v1473, 0
        %v1491 = vsel %vm480, %v1474, 0
        %v1494 = vsel %vm480, %v1475, 0
        %v1497 = vsel %vm480, %v1476, 0
        %v1500 = vsel %vm480, %v1477, 0
        %1502 = vmatprep.subr.mxu0 0.0
        %1503 = vmatpush1.msra.mxu0 %v402
        %1504 = vmatprep.subr.mxu0 0.0
        %1505 = vmatpush1.msra.mxu0 %v403
        %1506 = vmatprep.subr.mxu0 0.0
        %1507 = vmatpush1.msra.mxu0 %v404
        %1508 = vmatprep.subr.mxu0 0.0
        %1509 = vmatpush1.msra.mxu0 %v405
        %1510 = vmatprep.subr.mxu0 0.0
        %1511 = vmatpush1.msra.mxu0 %v406
        %1512 = vmatprep.subr.mxu0 0.0
        %1513 = vmatpush1.msra.mxu0 %v407
        %1514 = vmatprep.subr.mxu0 0.0
        %1515 = vmatpush1.msra.mxu0 %v408
        %1516 = vmatprep.subr.mxu0 0.0
        %1517 = vmatpush1.msra.mxu0 %v409
        %1518 = vmatprep.subr.mxu0 0.0
        %1519 = vmatpush1.msra.mxu0 0.0
        %1520 = vmatprep.subr.mxu0 0.0
        %1521 = vmatpush1.msra.mxu0 0.0
        %1522 = vmatprep.subr.mxu0 0.0
        %1523 = vmatpush1.msra.mxu0 0.0
        %1524 = vmatprep.subr.mxu0 0.0
        %1525 = vmatpush1.msra.mxu0 0.0
        %1526 = vmatprep.subr.mxu0 0.0
        %1527 = vmatpush1.msra.mxu0 0.0
        %1528 = vmatprep.subr.mxu0 0.0
        %1529 = vmatpush1.msra.mxu0 0.0
        %1530 = vmatprep.subr.mxu0 0.0
        %1531 = vmatpush1.msra.mxu0 0.0
        %1532 = vmatprep.subr.mxu0 0.0
        %1533 = vmatpush1.msra.mxu0 0.0
        %1534 = vmatprep.subr.mxu0 0.0
        %1535 = vmatpush1.msra.mxu0 0.0
        %1536 = vmatprep.subr.mxu0 0.0
        %1537 = vmatpush1.msra.mxu0 0.0
        %1538 = vmatprep.subr.mxu0 0.0
        %1539 = vmatpush1.msra.mxu0 0.0
        %1540 = vmatprep.subr.mxu0 0.0
        %1541 = vmatpush1.msra.mxu0 0.0
        %1542 = vmatprep.subr.mxu0 0.0
        %1543 = vmatpush1.msra.mxu0 0.0
        %1544 = vmatprep.subr.mxu0 0.0
        %1545 = vmatpush1.msra.mxu0 0.0
        %1546 = vmatprep.subr.mxu0 0.0
        %1547 = vmatpush1.msra.mxu0 0.0
        %1548 = vmatprep.subr.mxu0 0.0
        %1549 = vmatpush1.msra.mxu0 0.0
        %1550 = vmatprep.subr.mxu0 0.0
        %1551 = vmatpush1.msra.mxu0 0.0
        %1552 = vmatprep.subr.mxu0 0.0
        %1553 = vmatpush1.msra.mxu0 0.0
        %1554 = vmatprep.subr.mxu0 0.0
        %1555 = vmatpush1.msra.mxu0 0.0
        %1556 = vmatprep.subr.mxu0 0.0
        %1557 = vmatpush1.msra.mxu0 0.0
        %1558 = vmatprep.subr.mxu0 0.0
        %1559 = vmatpush1.msra.mxu0 0.0
        %1560 = vmatprep.subr.mxu0 0.0
        %1561 = vmatpush1.msra.mxu0 0.0
        %1562 = vmatprep.subr.mxu0 0.0
        %1563 = vmatpush1.msra.mxu0 0.0
        %1564 = vmatprep.subr.mxu0 0.0
        %1565 = vmatpush1.msra.mxu0 0.0
        %1566 = vmatprep.mubr.f32.mxu0 0.0
        %1567 = vmatmul.mubr.f32.gmra.mrb[0].mxu0 %v1479
        %v1568 = vpop.f32.mrb[0].mxu0
        %v1569 = vadd.f32 %v422, %v1568
        %v1570 = vpop.f32.mrb[0].mxu0
        %1571 = vmatprep.mubr.f32.mxu0 0.0
        %1572 = vmatmul.mubr.f32.gmra.mrb[0].mxu0 %v1482
        %v1573 = vpop.f32.mrb[0].mxu0
        %v1574 = vadd.f32 %v423, %v1573
        %v1575 = vpop.f32.mrb[0].mxu0
        %1576 = vmatprep.mubr.f32.mxu0 0.0
        %1577 = vmatmul.mubr.f32.gmra.mrb[0].mxu0 %v1485
        %v1578 = vpop.f32.mrb[0].mxu0
        %v1579 = vadd.f32 %v424, %v1578
        %v1580 = vpop.f32.mrb[0].mxu0
        %1581 = vmatprep.mubr.f32.mxu0 0.0
        %1582 = vmatmul.mubr.f32.gmra.mrb[0].mxu0 %v1488
        %v1583 = vpop.f32.mrb[0].mxu0
        %v1584 = vadd.f32 %v425, %v1583
        %v1585 = vpop.f32.mrb[0].mxu0
        %1586 = vmatprep.mubr.f32.mxu0 0.0
        %1587 = vmatmul.mubr.f32.gmra.mrb[0].mxu0 %v1491
        %v1588 = vpop.f32.mrb[0].mxu0
        %v1589 = vadd.f32 %v426, %v1588
        %v1590 = vpop.f32.mrb[0].mxu0
        %1591 = vmatprep.mubr.f32.mxu0 0.0
        %1592 = vmatmul.mubr.f32.gmra.mrb[0].mxu0 %v1494
        %v1593 = vpop.f32.mrb[0].mxu0
        %v1594 = vadd.f32 %v427, %v1593
        %v1595 = vpop.f32.mrb[0].mxu0
        %1596 = vmatprep.mubr.f32.mxu0 0.0
        %1597 = vmatmul.mubr.f32.gmra.mrb[0].mxu0 %v1497
        %v1598 = vpop.f32.mrb[0].mxu0
        %v1599 = vadd.f32 %v428, %v1598
        %v1600 = vpop.f32.mrb[0].mxu0
        %1601 = vmatprep.mubr.f32.mxu0 0.0
        %1602 = vmatmul.mubr.f32.gmra.mrb[0].mxu0 %v1500
        %v1603 = vpop.f32.mrb[0].mxu0
        %v1604 = vadd.f32 %v429, %v1603
        %v1605 = vpop.f32.mrb[0].mxu0
        %1606 = vdwg.mxu0
        %v1607 = vmul.f32 %v1569, 0.2
        %v1608 = vmul.f32 %v1574, 0.2
        %v1609 = vmul.f32 %v1579, 0.2
        %v1610 = vmul.f32 %v1584, 0.2
        %v1611 = vmul.f32 %v1589, 0.2
        %v1612 = vmul.f32 %v1594, 0.2
        %v1613 = vmul.f32 %v1599, 0.2
        %v1614 = vmul.f32 %v1604, 0.2
        %v1615 = vmax.f32 %v1569, %v1607
        %v1616 = vmax.f32 %v1574, %v1608
        %v1617 = vmax.f32 %v1579, %v1609
        %v1618 = vmax.f32 %v1584, %v1610
        %v1619 = vmax.f32 %v1589, %v1611
        %v1620 = vmax.f32 %v1594, %v1612
        %v1621 = vmax.f32 %v1599, %v1613
        %v1622 = vmax.f32 %v1604, %v1614
        %v1623 = vmax.f32 %v1422, %v1615
        %v1624 = vmax.f32 %v1423, %v1616
        %v1625 = vmax.f32 %v1424, %v1617
        %v1626 = vmax.f32 %v1425, %v1618
        %v1627 = vmax.f32 %v1426, %v1619
        %v1628 = vmax.f32 %v1427, %v1620
        %v1629 = vmax.f32 %v1428, %v1621
        %v1630 = vmax.f32 %v1429, %v1622
        %1631 = vset.pattern.permute.xlu0 6
        %1632 = vperm.xlu0 %1631, %v388
        %v1633 = vpop.permute.xlu0 %1632
        %1634 = vset.pattern.permute.xlu0 6
        %1635 = vperm.xlu0 %1634, %v389
        %v1636 = vpop.permute.xlu0 %1635
        %1637 = vset.pattern.permute.xlu0 6
        %1638 = vperm.xlu0 %1637, %v390
        %v1639 = vpop.permute.xlu0 %1638
        %1640 = vset.pattern.permute.xlu0 6
        %1641 = vperm.xlu0 %1640, %v391
        %v1642 = vpop.permute.xlu0 %1641
        %1643 = vset.pattern.permute.xlu0 6
        %1644 = vperm.xlu0 %1643, %v392
        %v1645 = vpop.permute.xlu0 %1644
        %1646 = vset.pattern.permute.xlu0 6
        %1647 = vperm.xlu0 %1646, %v393
        %v1648 = vpop.permute.xlu0 %1647
        %1649 = vset.pattern.permute.xlu0 6
        %1650 = vperm.xlu0 %1649, %v394
        %v1651 = vpop.permute.xlu0 %1650
        %1652 = vset.pattern.permute.xlu0 6
        %1653 = vperm.xlu0 %1652, %v395
        %v1654 = vpop.permute.xlu0 %1653
        %vm1655 = vcmp.eq.s32.totalorder %v431, %v1633
        %vm1656 = vcmp.eq.s32.totalorder %v431, %v1636
        %vm1657 = vcmp.eq.s32.totalorder %v431, %v1639
        %vm1658 = vcmp.eq.s32.totalorder %v431, %v1642
        %vm1659 = vcmp.eq.s32.totalorder %v431, %v1645
        %vm1660 = vcmp.eq.s32.totalorder %v431, %v1648
        %vm1661 = vcmp.eq.s32.totalorder %v431, %v1651
        %vm1662 = vcmp.eq.s32.totalorder %v431, %v1654
        %v1663 = vsel %vm1655, 1, 0
        %v1664 = vsel %vm1656, 1, 0
        %v1665 = vsel %vm1657, 1, 0
        %v1666 = vsel %vm1658, 1, 0
        %v1667 = vsel %vm1659, 1, 0
        %v1668 = vsel %vm1660, 1, 0
        %v1669 = vsel %vm1661, 1, 0
        %v1670 = vsel %vm1662, 1, 0
        %v1671 = vcvt.s32.f32 %v1663
        %v1672 = vcvt.s32.f32 %v1664
        %v1673 = vcvt.s32.f32 %v1665
        %v1674 = vcvt.s32.f32 %v1666
        %v1675 = vcvt.s32.f32 %v1667
        %v1676 = vcvt.s32.f32 %v1668
        %v1677 = vcvt.s32.f32 %v1669
        %v1678 = vcvt.s32.f32 %v1670
        %v1680 = vsel %vm480, %v1671, 0
        %v1683 = vsel %vm480, %v1672, 0
        %v1686 = vsel %vm480, %v1673, 0
        %v1689 = vsel %vm480, %v1674, 0
        %v1692 = vsel %vm480, %v1675, 0
        %v1695 = vsel %vm480, %v1676, 0
        %v1698 = vsel %vm480, %v1677, 0
        %v1701 = vsel %vm480, %v1678, 0
        %1703 = vmatprep.subr.mxu0 0.0
        %1704 = vmatpush1.msra.mxu0 %v402
        %1705 = vmatprep.subr.mxu0 0.0
        %1706 = vmatpush1.msra.mxu0 %v403
        %1707 = vmatprep.subr.mxu0 0.0
        %1708 = vmatpush1.msra.mxu0 %v404
        %1709 = vmatprep.subr.mxu0 0.0
        %1710 = vmatpush1.msra.mxu0 %v405
        %1711 = vmatprep.subr.mxu0 0.0
        %1712 = vmatpush1.msra.mxu0 %v406
        %1713 = vmatprep.subr.mxu0 0.0
        %1714 = vmatpush1.msra.mxu0 %v407
        %1715 = vmatprep.subr.mxu0 0.0
        %1716 = vmatpush1.msra.mxu0 %v408
        %1717 = vmatprep.subr.mxu0 0.0
        %1718 = vmatpush1.msra.mxu0 %v409
        %1719 = vmatprep.subr.mxu0 0.0
        %1720 = vmatpush1.msra.mxu0 0.0
        %1721 = vmatprep.subr.mxu0 0.0
        %1722 = vmatpush1.msra.mxu0 0.0
        %1723 = vmatprep.subr.mxu0 0.0
        %1724 = vmatpush1.msra.mxu0 0.0
        %1725 = vmatprep.subr.mxu0 0.0
        %1726 = vmatpush1.msra.mxu0 0.0
        %1727 = vmatprep.subr.mxu0 0.0
        %1728 = vmatpush1.msra.mxu0 0.0
        %1729 = vmatprep.subr.mxu0 0.0
        %1730 = vmatpush1.msra.mxu0 0.0
        %1731 = vmatprep.subr.mxu0 0.0
        %1732 = vmatpush1.msra.mxu0 0.0
        %1733 = vmatprep.subr.mxu0 0.0
        %1734 = vmatpush1.msra.mxu0 0.0
        %1735 = vmatprep.subr.mxu0 0.0
        %1736 = vmatpush1.msra.mxu0 0.0
        %1737 = vmatprep.subr.mxu0 0.0
        %1738 = vmatpush1.msra.mxu0 0.0
        %1739 = vmatprep.subr.mxu0 0.0
        %1740 = vmatpush1.msra.mxu0 0.0
        %1741 = vmatprep.subr.mxu0 0.0
        %1742 = vmatpush1.msra.mxu0 0.0
        %1743 = vmatprep.subr.mxu0 0.0
        %1744 = vmatpush1.msra.mxu0 0.0
        %1745 = vmatprep.subr.mxu0 0.0
        %1746 = vmatpush1.msra.mxu0 0.0
        %1747 = vmatprep.subr.mxu0 0.0
        %1748 = vmatpush1.msra.mxu0 0.0
        %1749 = vmatprep.subr.mxu0 0.0
        %1750 = vmatpush1.msra.mxu0 0.0
        %1751 = vmatprep.subr.mxu0 0.0
        %1752 = vmatpush1.msra.mxu0 0.0
        %1753 = vmatprep.subr.mxu0 0.0
        %1754 = vmatpush1.msra.mxu0 0.0
        %1755 = vmatprep.subr.mxu0 0.0
        %1756 = vmatpush1.msra.mxu0 0.0
        %1757 = vmatprep.subr.mxu0 0.0
        %1758 = vmatpush1.msra.mxu0 0.0
        %1759 = vmatprep.subr.mxu0 0.0
        %1760 = vmatpush1.msra.mxu0 0.0
        %1761 = vmatprep.subr.mxu0 0.0
        %1762 = vmatpush1.msra.mxu0 0.0
        %1763 = vmatprep.subr.mxu0 0.0
        %1764 = vmatpush1.msra.mxu0 0.0
        %1765 = vmatprep.subr.mxu0 0.0
        %1766 = vmatpush1.msra.mxu0 0.0
        %1767 = vmatprep.mubr.f32.mxu0 0.0
        %1768 = vmatmul.mubr.f32.gmra.mrb[0].mxu0 %v1680
        %v1769 = vpop.f32.mrb[0].mxu0
        %v1770 = vadd.f32 %v422, %v1769
        %v1771 = vpop.f32.mrb[0].mxu0
        %1772 = vmatprep.mubr.f32.mxu0 0.0
        %1773 = vmatmul.mubr.f32.gmra.mrb[0].mxu0 %v1683
        %v1774 = vpop.f32.mrb[0].mxu0
        %v1775 = vadd.f32 %v423, %v1774
        %v1776 = vpop.f32.mrb[0].mxu0
        %1777 = vmatprep.mubr.f32.mxu0 0.0
        %1778 = vmatmul.mubr.f32.gmra.mrb[0].mxu0 %v1686
        %v1779 = vpop.f32.mrb[0].mxu0
        %v1780 = vadd.f32 %v424, %v1779
        %v1781 = vpop.f32.mrb[0].mxu0
        %1782 = vmatprep.mubr.f32.mxu0 0.0
        %1783 = vmatmul.mubr.f32.gmra.mrb[0].mxu0 %v1689
        %v1784 = vpop.f32.mrb[0].mxu0
        %v1785 = vadd.f32 %v425, %v1784
        %v1786 = vpop.f32.mrb[0].mxu0
        %1787 = vmatprep.mubr.f32.mxu0 0.0
        %1788 = vmatmul.mubr.f32.gmra.mrb[0].mxu0 %v1692
        %v1789 = vpop.f32.mrb[0].mxu0
        %v1790 = vadd.f32 %v426, %v1789
        %v1791 = vpop.f32.mrb[0].mxu0
        %1792 = vmatprep.mubr.f32.mxu0 0.0
        %1793 = vmatmul.mubr.f32.gmra.mrb[0].mxu0 %v1695
        %v1794 = vpop.f32.mrb[0].mxu0
        %v1795 = vadd.f32 %v427, %v1794
        %v1796 = vpop.f32.mrb[0].mxu0
        %1797 = vmatprep.mubr.f32.mxu0 0.0
        %1798 = vmatmul.mubr.f32.gmra.mrb[0].mxu0 %v1698
        %v1799 = vpop.f32.mrb[0].mxu0
        %v1800 = vadd.f32 %v428, %v1799
        %v1801 = vpop.f32.mrb[0].mxu0
        %1802 = vmatprep.mubr.f32.mxu0 0.0
        %1803 = vmatmul.mubr.f32.gmra.mrb[0].mxu0 %v1701
        %v1804 = vpop.f32.mrb[0].mxu0
        %v1805 = vadd.f32 %v429, %v1804
        %v1806 = vpop.f32.mrb[0].mxu0
        %1807 = vdwg.mxu0
        %v1808 = vmul.f32 %v1770, 0.2
        %v1809 = vmul.f32 %v1775, 0.2
        %v1810 = vmul.f32 %v1780, 0.2
        %v1811 = vmul.f32 %v1785, 0.2
        %v1812 = vmul.f32 %v1790, 0.2
        %v1813 = vmul.f32 %v1795, 0.2
        %v1814 = vmul.f32 %v1800, 0.2
        %v1815 = vmul.f32 %v1805, 0.2
        %v1816 = vmax.f32 %v1770, %v1808
        %v1817 = vmax.f32 %v1775, %v1809
        %v1818 = vmax.f32 %v1780, %v1810
        %v1819 = vmax.f32 %v1785, %v1811
        %v1820 = vmax.f32 %v1790, %v1812
        %v1821 = vmax.f32 %v1795, %v1813
        %v1822 = vmax.f32 %v1800, %v1814
        %v1823 = vmax.f32 %v1805, %v1815
        %v1824 = vmax.f32 %v1623, %v1816
        %v1825 = vmax.f32 %v1624, %v1817
        %v1826 = vmax.f32 %v1625, %v1818
        %v1827 = vmax.f32 %v1626, %v1819
        %v1828 = vmax.f32 %v1627, %v1820
        %v1829 = vmax.f32 %v1628, %v1821
        %v1830 = vmax.f32 %v1629, %v1822
        %v1831 = vmax.f32 %v1630, %v1823
        %1832 = vset.pattern.permute.xlu0 7
        %1833 = vperm.xlu0 %1832, %v388
        %v1834 = vpop.permute.xlu0 %1833
        %1835 = vset.pattern.permute.xlu0 7
        %1836 = vperm.xlu0 %1835, %v389
        %v1837 = vpop.permute.xlu0 %1836
        %1838 = vset.pattern.permute.xlu0 7
        %1839 = vperm.xlu0 %1838, %v390
        %v1840 = vpop.permute.xlu0 %1839
        %1841 = vset.pattern.permute.xlu0 7
        %1842 = vperm.xlu0 %1841, %v391
        %v1843 = vpop.permute.xlu0 %1842
        %1844 = vset.pattern.permute.xlu0 7
        %1845 = vperm.xlu0 %1844, %v392
        %v1846 = vpop.permute.xlu0 %1845
        %1847 = vset.pattern.permute.xlu0 7
        %1848 = vperm.xlu0 %1847, %v393
        %v1849 = vpop.permute.xlu0 %1848
        %1850 = vset.pattern.permute.xlu0 7
        %1851 = vperm.xlu0 %1850, %v394
        %v1852 = vpop.permute.xlu0 %1851
        %1853 = vset.pattern.permute.xlu0 7
        %1854 = vperm.xlu0 %1853, %v395
        %v1855 = vpop.permute.xlu0 %1854
        %vm1856 = vcmp.eq.s32.totalorder %v431, %v1834
        %vm1857 = vcmp.eq.s32.totalorder %v431, %v1837
        %vm1858 = vcmp.eq.s32.totalorder %v431, %v1840
        %vm1859 = vcmp.eq.s32.totalorder %v431, %v1843
        %vm1860 = vcmp.eq.s32.totalorder %v431, %v1846
        %vm1861 = vcmp.eq.s32.totalorder %v431, %v1849
        %vm1862 = vcmp.eq.s32.totalorder %v431, %v1852
        %vm1863 = vcmp.eq.s32.totalorder %v431, %v1855
        %v1864 = vsel %vm1856, 1, 0
        %v1865 = vsel %vm1857, 1, 0
        %v1866 = vsel %vm1858, 1, 0
        %v1867 = vsel %vm1859, 1, 0
        %v1868 = vsel %vm1860, 1, 0
        %v1869 = vsel %vm1861, 1, 0
        %v1870 = vsel %vm1862, 1, 0
        %v1871 = vsel %vm1863, 1, 0
        %v1872 = vcvt.s32.f32 %v1864
        %v1873 = vcvt.s32.f32 %v1865
        %v1874 = vcvt.s32.f32 %v1866
        %v1875 = vcvt.s32.f32 %v1867
        %v1876 = vcvt.s32.f32 %v1868
        %v1877 = vcvt.s32.f32 %v1869
        %v1878 = vcvt.s32.f32 %v1870
        %v1879 = vcvt.s32.f32 %v1871
        %v1881 = vsel %vm480, %v1872, 0
        %v1884 = vsel %vm480, %v1873, 0
        %v1887 = vsel %vm480, %v1874, 0
        %v1890 = vsel %vm480, %v1875, 0
        %v1893 = vsel %vm480, %v1876, 0
        %v1896 = vsel %vm480, %v1877, 0
        %v1899 = vsel %vm480, %v1878, 0
        %v1902 = vsel %vm480, %v1879, 0
        %1904 = vmatprep.subr.mxu0 0.0
        %1905 = vmatpush1.msra.mxu0 %v402
        %1906 = vmatprep.subr.mxu0 0.0
        %1907 = vmatpush1.msra.mxu0 %v403
        %1908 = vmatprep.subr.mxu0 0.0
        %1909 = vmatpush1.msra.mxu0 %v404
        %1910 = vmatprep.subr.mxu0 0.0
        %1911 = vmatpush1.msra.mxu0 %v405
        %1912 = vmatprep.subr.mxu0 0.0
        %1913 = vmatpush1.msra.mxu0 %v406
        %1914 = vmatprep.subr.mxu0 0.0
        %1915 = vmatpush1.msra.mxu0 %v407
        %1916 = vmatprep.subr.mxu0 0.0
        %1917 = vmatpush1.msra.mxu0 %v408
        %1918 = vmatprep.subr.mxu0 0.0
        %1919 = vmatpush1.msra.mxu0 %v409
        %1920 = vmatprep.subr.mxu0 0.0
        %1921 = vmatpush1.msra.mxu0 0.0
        %1922 = vmatprep.subr.mxu0 0.0
        %1923 = vmatpush1.msra.mxu0 0.0
        %1924 = vmatprep.subr.mxu0 0.0
        %1925 = vmatpush1.msra.mxu0 0.0
        %1926 = vmatprep.subr.mxu0 0.0
        %1927 = vmatpush1.msra.mxu0 0.0
        %1928 = vmatprep.subr.mxu0 0.0
        %1929 = vmatpush1.msra.mxu0 0.0
        %1930 = vmatprep.subr.mxu0 0.0
        %1931 = vmatpush1.msra.mxu0 0.0
        %1932 = vmatprep.subr.mxu0 0.0
        %1933 = vmatpush1.msra.mxu0 0.0
        %1934 = vmatprep.subr.mxu0 0.0
        %1935 = vmatpush1.msra.mxu0 0.0
        %1936 = vmatprep.subr.mxu0 0.0
        %1937 = vmatpush1.msra.mxu0 0.0
        %1938 = vmatprep.subr.mxu0 0.0
        %1939 = vmatpush1.msra.mxu0 0.0
        %1940 = vmatprep.subr.mxu0 0.0
        %1941 = vmatpush1.msra.mxu0 0.0
        %1942 = vmatprep.subr.mxu0 0.0
        %1943 = vmatpush1.msra.mxu0 0.0
        %1944 = vmatprep.subr.mxu0 0.0
        %1945 = vmatpush1.msra.mxu0 0.0
        %1946 = vmatprep.subr.mxu0 0.0
        %1947 = vmatpush1.msra.mxu0 0.0
        %1948 = vmatprep.subr.mxu0 0.0
        %1949 = vmatpush1.msra.mxu0 0.0
        %1950 = vmatprep.subr.mxu0 0.0
        %1951 = vmatpush1.msra.mxu0 0.0
        %1952 = vmatprep.subr.mxu0 0.0
        %1953 = vmatpush1.msra.mxu0 0.0
        %1954 = vmatprep.subr.mxu0 0.0
        %1955 = vmatpush1.msra.mxu0 0.0
        %1956 = vmatprep.subr.mxu0 0.0
        %1957 = vmatpush1.msra.mxu0 0.0
        %1958 = vmatprep.subr.mxu0 0.0
        %1959 = vmatpush1.msra.mxu0 0.0
        %1960 = vmatprep.subr.mxu0 0.0
        %1961 = vmatpush1.msra.mxu0 0.0
        %1962 = vmatprep.subr.mxu0 0.0
        %1963 = vmatpush1.msra.mxu0 0.0
        %1964 = vmatprep.subr.mxu0 0.0
        %1965 = vmatpush1.msra.mxu0 0.0
        %1966 = vmatprep.subr.mxu0 0.0
        %1967 = vmatpush1.msra.mxu0 0.0
        %1968 = vmatprep.mubr.f32.mxu0 0.0
        %1969 = vmatmul.mubr.f32.gmra.mrb[0].mxu0 %v1881
        %v1970 = vpop.f32.mrb[0].mxu0
        %v1971 = vadd.f32 %v422, %v1970
        %v1972 = vpop.f32.mrb[0].mxu0
        %1973 = vmatprep.mubr.f32.mxu0 0.0
        %1974 = vmatmul.mubr.f32.gmra.mrb[0].mxu0 %v1884
        %v1975 = vpop.f32.mrb[0].mxu0
        %v1976 = vadd.f32 %v423, %v1975
        %v1977 = vpop.f32.mrb[0].mxu0
        %1978 = vmatprep.mubr.f32.mxu0 0.0
        %1979 = vmatmul.mubr.f32.gmra.mrb[0].mxu0 %v1887
        %v1980 = vpop.f32.mrb[0].mxu0
        %v1981 = vadd.f32 %v424, %v1980
        %v1982 = vpop.f32.mrb[0].mxu0
        %1983 = vmatprep.mubr.f32.mxu0 0.0
        %1984 = vmatmul.mubr.f32.gmra.mrb[0].mxu0 %v1890
        %v1985 = vpop.f32.mrb[0].mxu0
        %v1986 = vadd.f32 %v425, %v1985
        %v1987 = vpop.f32.mrb[0].mxu0
        %1988 = vmatprep.mubr.f32.mxu0 0.0
        %1989 = vmatmul.mubr.f32.gmra.mrb[0].mxu0 %v1893
        %v1990 = vpop.f32.mrb[0].mxu0
        %v1991 = vadd.f32 %v426, %v1990
        %v1992 = vpop.f32.mrb[0].mxu0
        %1993 = vmatprep.mubr.f32.mxu0 0.0
        %1994 = vmatmul.mubr.f32.gmra.mrb[0].mxu0 %v1896
        %v1995 = vpop.f32.mrb[0].mxu0
        %v1996 = vadd.f32 %v427, %v1995
        %v1997 = vpop.f32.mrb[0].mxu0
        %1998 = vmatprep.mubr.f32.mxu0 0.0
        %1999 = vmatmul.mubr.f32.gmra.mrb[0].mxu0 %v1899
        %v2000 = vpop.f32.mrb[0].mxu0
        %v2001 = vadd.f32 %v428, %v2000
        %v2002 = vpop.f32.mrb[0].mxu0
        %2003 = vmatprep.mubr.f32.mxu0 0.0
        %2004 = vmatmul.mubr.f32.gmra.mrb[0].mxu0 %v1902
        %v2005 = vpop.f32.mrb[0].mxu0
        %v2006 = vadd.f32 %v429, %v2005
        %v2007 = vpop.f32.mrb[0].mxu0
        %2008 = vdwg.mxu0
        %v2009 = vmul.f32 %v1971, 0.2
        %v2010 = vmul.f32 %v1976, 0.2
        %v2011 = vmul.f32 %v1981, 0.2
        %v2012 = vmul.f32 %v1986, 0.2
        %v2013 = vmul.f32 %v1991, 0.2
        %v2014 = vmul.f32 %v1996, 0.2
        %v2015 = vmul.f32 %v2001, 0.2
        %v2016 = vmul.f32 %v2006, 0.2
        %v2017 = vmax.f32 %v1971, %v2009
        %v2018 = vmax.f32 %v1976, %v2010
        %v2019 = vmax.f32 %v1981, %v2011
        %v2020 = vmax.f32 %v1986, %v2012
        %v2021 = vmax.f32 %v1991, %v2013
        %v2022 = vmax.f32 %v1996, %v2014
        %v2023 = vmax.f32 %v2001, %v2015
        %v2024 = vmax.f32 %v2006, %v2016
        %v2025 = vmax.f32 %v1824, %v2017
        %v2026 = vmax.f32 %v1825, %v2018
        %v2027 = vmax.f32 %v1826, %v2019
        %v2028 = vmax.f32 %v1827, %v2020
        %v2029 = vmax.f32 %v1828, %v2021
        %v2030 = vmax.f32 %v1829, %v2022
        %v2031 = vmax.f32 %v1830, %v2023
        %v2032 = vmax.f32 %v1831, %v2024
        %v2033 = vxor.u32 %v2025, 2147483648
        %v2034 = vxor.u32 %v2026, 2147483648
        %v2035 = vxor.u32 %v2027, 2147483648
        %v2036 = vxor.u32 %v2028, 2147483648
        %v2037 = vxor.u32 %v2029, 2147483648
        %v2038 = vxor.u32 %v2030, 2147483648
        %v2039 = vxor.u32 %v2031, 2147483648
        %v2040 = vxor.u32 %v2032, 2147483648
        %v2041 = vmul.f32 %v2033, 1.442695
        %v2042 = vpow.pop %v2041
        %v2043 = vmul.f32 %v2034, 1.442695
        %v2044 = vpow.pop %v2043
        %v2045 = vmul.f32 %v2035, 1.442695
        %v2046 = vpow.pop %v2045
        %v2047 = vmul.f32 %v2036, 1.442695
        %v2048 = vpow.pop %v2047
        %v2049 = vmul.f32 %v2037, 1.442695
        %v2050 = vpow.pop %v2049
        %v2051 = vmul.f32 %v2038, 1.442695
        %v2052 = vpow.pop %v2051
        %v2053 = vmul.f32 %v2039, 1.442695
        %v2054 = vpow.pop %v2053
        %v2055 = vmul.f32 %v2040, 1.442695
        %v2056 = vpow.pop %v2055
        %v2057 = vadd.f32 %v2042, 1.0
        %v2058 = vadd.f32 %v2044, 1.0
        %v2059 = vadd.f32 %v2046, 1.0
        %v2060 = vadd.f32 %v2048, 1.0
        %v2061 = vadd.f32 %v2050, 1.0
        %v2062 = vadd.f32 %v2052, 1.0
        %v2063 = vadd.f32 %v2054, 1.0
        %v2064 = vadd.f32 %v2056, 1.0
        %v2065 = vrcp.pop %v2057
        %v2066 = vmul.f32 1.0, %v2065
        %v2067 = vrcp.pop %v2058
        %v2068 = vmul.f32 1.0, %v2067
        %v2069 = vrcp.pop %v2059
        %v2070 = vmul.f32 1.0, %v2069
        %v2071 = vrcp.pop %v2060
        %v2072 = vmul.f32 1.0, %v2071
        %v2073 = vrcp.pop %v2061
        %v2074 = vmul.f32 1.0, %v2073
        %v2075 = vrcp.pop %v2062
        %v2076 = vmul.f32 1.0, %v2075
        %v2077 = vrcp.pop %v2063
        %v2078 = vmul.f32 1.0, %v2077
        %v2079 = vrcp.pop %v2064
        %v2080 = vmul.f32 1.0, %v2079
        %v2081 = vld [vmem:[#allocation10] sm:$0xff]
        %v2082 = vld [vmem:[#allocation10 + $0x8] sm:$0xff]
        %v2083 = vld [vmem:[#allocation10 + $0x10] sm:$0xff]
        %v2084 = vld [vmem:[#allocation10 + $0x18] sm:$0xff]
        %vm2085 = vcmask 261120
        %v2087 = vsel %vm2085, %v2066, 0
        %v2090 = vsel %vm2085, %v2068, 0
        %v2093 = vsel %vm2085, %v2070, 0
        %v2096 = vsel %vm2085, %v2072, 0
        %v2099 = vsel %vm2085, %v2074, 0
        %v2102 = vsel %vm2085, %v2076, 0
        %v2105 = vsel %vm2085, %v2078, 0
        %v2108 = vsel %vm2085, %v2080, 0
        %2110 = vmatprep.subr.mxu0 0.0
        %2111 = vmatpush1.msra.mxu0 %v2081
        %2112 = vmatprep.subr.mxu0 0.0
        %2113 = vmatpush1.msra.mxu0 %v2082
        %2114 = vmatprep.subr.mxu0 0.0
        %2115 = vmatpush1.msra.mxu0 %v2083
        %2116 = vmatprep.subr.mxu0 0.0
        %2117 = vmatpush1.msra.mxu0 %v2084
        %2118 = vmatprep.subr.mxu0 0.0
        %2119 = vmatpush1.msra.mxu0 0.0
        %2120 = vmatprep.subr.mxu0 0.0
        %2121 = vmatpush1.msra.mxu0 0.0
        %2122 = vmatprep.subr.mxu0 0.0
        %2123 = vmatpush1.msra.mxu0 0.0
        %2124 = vmatprep.subr.mxu0 0.0
        %2125 = vmatpush1.msra.mxu0 0.0
        %2126 = vmatprep.subr.mxu0 0.0
        %2127 = vmatpush1.msra.mxu0 0.0
        %2128 = vmatprep.subr.mxu0 0.0
        %2129 = vmatpush1.msra.mxu0 0.0
        %2130 = vmatprep.subr.mxu0 0.0
        %2131 = vmatpush1.msra.mxu0 0.0
        %2132 = vmatprep.subr.mxu0 0.0
        %2133 = vmatpush1.msra.mxu0 0.0
        %2134 = vmatprep.subr.mxu0 0.0
        %2135 = vmatpush1.msra.mxu0 0.0
        %2136 = vmatprep.subr.mxu0 0.0
        %2137 = vmatpush1.msra.mxu0 0.0
        %2138 = vmatprep.subr.mxu0 0.0
        %2139 = vmatpush1.msra.mxu0 0.0
        %2140 = vmatprep.subr.mxu0 0.0
        %2141 = vmatpush1.msra.mxu0 0.0
        %2142 = vmatprep.subr.mxu0 0.0
        %2143 = vmatpush1.msra.mxu0 0.0
        %2144 = vmatprep.subr.mxu0 0.0
        %2145 = vmatpush1.msra.mxu0 0.0
        %2146 = vmatprep.subr.mxu0 0.0
        %2147 = vmatpush1.msra.mxu0 0.0
        %2148 = vmatprep.subr.mxu0 0.0
        %2149 = vmatpush1.msra.mxu0 0.0
        %2150 = vmatprep.subr.mxu0 0.0
        %2151 = vmatpush1.msra.mxu0 0.0
        %2152 = vmatprep.subr.mxu0 0.0
        %2153 = vmatpush1.msra.mxu0 0.0
        %2154 = vmatprep.subr.mxu0 0.0
        %2155 = vmatpush1.msra.mxu0 0.0
        %2156 = vmatprep.subr.mxu0 0.0
        %2157 = vmatpush1.msra.mxu0 0.0
        %2158 = vmatprep.subr.mxu0 0.0
        %2159 = vmatpush1.msra.mxu0 0.0
        %2160 = vmatprep.subr.mxu0 0.0
        %2161 = vmatpush1.msra.mxu0 0.0
        %2162 = vmatprep.subr.mxu0 0.0
        %2163 = vmatpush1.msra.mxu0 0.0
        %2164 = vmatprep.subr.mxu0 0.0
        %2165 = vmatpush1.msra.mxu0 0.0
        %2166 = vmatprep.subr.mxu0 0.0
        %2167 = vmatpush1.msra.mxu0 0.0
        %2168 = vmatprep.subr.mxu0 0.0
        %2169 = vmatpush1.msra.mxu0 0.0
        %2170 = vmatprep.subr.mxu0 0.0
        %2171 = vmatpush1.msra.mxu0 0.0
        %2172 = vmatprep.subr.mxu0 0.0
        %2173 = vmatpush1.msra.mxu0 0.0
        %2174 = vmatprep.mubr.f32.mxu0 0.0
        %2175 = vmatmul.mubr.f32.gmra.mrb[0].mxu0 %v2087
        %v2176 = vpop.f32.mrb[0].mxu0
        %v2177 = vadd.f32 0.0, %v2176
        %v2178 = vpop.f32.mrb[0].mxu0
        %2179 = vmatprep.mubr.f32.mxu0 0.0
        %2180 = vmatmul.mubr.f32.gmra.mrb[0].mxu0 %v2090
        %v2181 = vpop.f32.mrb[0].mxu0
        %v2182 = vadd.f32 0.0, %v2181
        %v2183 = vpop.f32.mrb[0].mxu0
        %2184 = vmatprep.mubr.f32.mxu0 0.0
        %2185 = vmatmul.mubr.f32.gmra.mrb[0].mxu0 %v2093
        %v2186 = vpop.f32.mrb[0].mxu0
        %v2187 = vadd.f32 0.0, %v2186
        %v2188 = vpop.f32.mrb[0].mxu0
        %2189 = vmatprep.mubr.f32.mxu0 0.0
        %2190 = vmatmul.mubr.f32.gmra.mrb[0].mxu0 %v2096
        %v2191 = vpop.f32.mrb[0].mxu0
        %v2192 = vadd.f32 0.0, %v2191
        %v2193 = vpop.f32.mrb[0].mxu0
        %2194 = vmatprep.mubr.f32.mxu0 0.0
        %2195 = vmatmul.mubr.f32.gmra.mrb[0].mxu0 %v2099
        %v2196 = vpop.f32.mrb[0].mxu0
        %v2197 = vadd.f32 0.0, %v2196
        %v2198 = vpop.f32.mrb[0].mxu0
        %2199 = vmatprep.mubr.f32.mxu0 0.0
        %2200 = vmatmul.mubr.f32.gmra.mrb[0].mxu0 %v2102
        %v2201 = vpop.f32.mrb[0].mxu0
        %v2202 = vadd.f32 0.0, %v2201
        %v2203 = vpop.f32.mrb[0].mxu0
        %2204 = vmatprep.mubr.f32.mxu0 0.0
        %2205 = vmatmul.mubr.f32.gmra.mrb[0].mxu0 %v2105
        %v2206 = vpop.f32.mrb[0].mxu0
        %v2207 = vadd.f32 0.0, %v2206
        %v2208 = vpop.f32.mrb[0].mxu0
        %2209 = vmatprep.mubr.f32.mxu0 0.0
        %2210 = vmatmul.mubr.f32.gmra.mrb[0].mxu0 %v2108
        %v2211 = vpop.f32.mrb[0].mxu0
        %v2212 = vadd.f32 0.0, %v2211
        %v2213 = vpop.f32.mrb[0].mxu0
        %2214 = vdwg.mxu0
        %2215 = vst.msk [vmem:[%s368] sm:$0xff] %vm2085, %v2177
        %2216 = vst.msk [vmem:[%s368 + $0x8] sm:$0xff] %vm2085, %v2182
        %2217 = vst.msk [vmem:[%s368 + $0x10] sm:$0xff] %vm2085, %v2187
        %2218 = vst.msk [vmem:[%s368 + $0x18] sm:$0xff] %vm2085, %v2192
        %2219 = vst.msk [vmem:[%s368 + $0x20] sm:$0xff] %vm2085, %v2197
        %2220 = vst.msk [vmem:[%s368 + $0x28] sm:$0xff] %vm2085, %v2202
        %2221 = vst.msk [vmem:[%s368 + $0x30] sm:$0xff] %vm2085, %v2207
        %2222 = vst.msk [vmem:[%s368 + $0x38] sm:$0xff] %vm2085, %v2212
        %s2223 = sand.u32 %s172, 1
        %s2224 = scalar_lea.sflag [#allocation4], %s2223
        %s2225 = sand.u32 %s172, 1
        %s2226 = smul.addr %s2225, 64
        %s2227 = scalar_lea.vmem [#allocation11], %s2226
        // Predicated region
        $region61: #{index_select_forward.12} parent=39 // pred_check
          %p2228 = pneg %p182
        $region62: #{index_select_forward.12} parent=39 // pred_check_branch
          %2230 = sbr.rel (%p2228) target = $region64
        $region63: #{index_select_forward.12} parent=39 // pred_region
          %s2231 = smul.u32 8, %s31
          %s2233 = ssub.s32 1024, 1024
          %2234 = vsyncadd %s2224, %s2233
          %s2235 = smul.addr %s30, 8
          %s2236 = sadd.s32 %s2231, %s2235
          %s2237 = smul.addr %s2236, 128
          %s2238 = scalar_lea.hbm %s5, %s2237
          %s2239 = sshll.u32 %s2227, 4
          %s2240 = int_to_ptr.vmem [resolvable:$true] %s2239
          %2245 = dma.vmem_to_hbm [thread:$0]  %s2240, 1024, %s2238, %s2224, 128, 128, 8
        $region64: #{index_select_forward.12} parent=39 // pred_fallthru
          _
      $region40: #{index_select_forward.12} parent=5 // pred_fallthru
        _
      %p2246 = scmp.le.s32.totalorder 2, %s21
      // Predicated region
      $region65: #{index_select_forward.12} parent=5 // pred_check
        %p2247 = pneg %p2246
      $region66: #{index_select_forward.12} parent=5 // pred_check_branch
        %2249 = sbr.rel (%p2247) target = $region68
      $region67: #{index_select_forward.12} parent=5 // pred_region
        %s2250 = ssub.s32 %s21, 2
        // Predicated region
        $region69: #{index_select_forward.12} parent=67 // pred_check
          %p2251 = pneg %p188
        $region70: #{index_select_forward.12} parent=67 // pred_check_branch
          %2253 = sbr.rel (%p2251) target = $region72
        $region71: #{index_select_forward.12} parent=67 // pred_region
          %s2254 = sand.u32 %s173, 1
          %s2255 = scalar_lea.sflag [#allocation4], %s2254
          %s2256 = sand.u32 %s173, 1
          %s2257 = smul.addr %s2256, 64
          %s2258 = scalar_lea.vmem [#allocation11], %s2257
          %2259 = dma.done %s2255, 1024
        $region72: #{index_select_forward.12} parent=67 // pred_fallthru
          _
      $region68: #{index_select_forward.12} parent=5 // pred_fallthru
        _
    $region6: #{index_select_forward.12} parent=1 // loop_footer
      %s25 = sadd.s32 1, %s21
    $region7: #{index_select_forward.12} parent=1 // loop_footer_branch
      %20 = sbr.rel target = $region3
    $region8: #{index_select_forward.12} parent=1 // loop_exit
      _
    %2260 = vsyncpa [#allocation3], 1
    %s2261 = scalar_lea.sflag [#allocation3], 1
    %2262 = vsyncpa %s2261, 1
    %2263 = vsyncpa [#allocation6], 1
    %s2264 = scalar_lea.sflag [#allocation6], 1
    %2265 = vsyncpa %s2264, 1
    %2266 = vsyncpa [#allocation9], 1
    %2267 = vsyncpa [#allocation4], 1
    %s2268 = scalar_lea.sflag [#allocation4], 1
    %2269 = vsyncpa %s2268, 1

// kernel: index_select_forward.13
$region0: #{index_select_forward.13}
  #allocation0 [shape = 'u32[]', space=smem, size = 0x4, offset = 0x4, fixed_abs, tag = 'smem constant byte address 0x4 - core index']
  #allocation1 [shape = 'u32[144,128]{1,0:T(1,128)}', space=vmem, size = 0x12000, scoped, tag = 'internal scratch']
  #allocation2 [shape = 'f32[1]{0:T(128)S(6)}', space=smem, size = 0x200, scoped, tag = 'scoped memory for index_select_forward.13']
  %s0 = inlined_call_operand.hbm [shape: f32[2,2,64,32], index: 0, kind: input, shape index: {}]
  %s1 = inlined_call_operand.hbm [shape: f32[2,64,32], index: 1, kind: input, shape index: {}]
  %s2 = inlined_call_operand.<no memory space> [shape: f32[1], index: 2, kind: input, shape index: {}]
  %s3 = inlined_call_operand.hbm [shape: f32[2,2,64], index: 3, kind: output, shape index: {}]
  %s4 = sld [smem:[#allocation0]]
  $region53: #{index_select_forward.13} parent=0
    _
  %s6 = ssub.s32 1, %s4
  %s7 = scalar_select 0, %s6, %s4
  %8 = sst [smem:[#allocation2]] %s2
  $region1: #{index_select_forward.13} parent=0
    #allocation3 [shape = 'u8[131072]{0}', space=vmem, size = 0x20000, scoped, tag = 'input window, operand 0']
    #allocation4 [shape = 's32[2]{0}', space=sflag, size = 0x8, scoped, tag = 'scoped memory for index_select_forward.13']
    #allocation5 [shape = 's32[2]{0}', space=sflag, size = 0x8, scoped, tag = 'scoped memory for index_select_forward.13']
    #allocation6 [shape = 'u8[65536]{0}', space=vmem, size = 0x10000, scoped, tag = 'input window, operand 1, single buffered']
    #allocation7 [shape = 's32[1]{0}', space=sflag, size = 0x4, scoped, tag = 'scoped memory for index_select_forward.13']
    #allocation8 [shape = 'u8[2048]{0}', space=vmem, size = 0x800, scoped, tag = 'output window, operand 0']
    %9 = vsyncpa [#allocation4], 0
    %s10 = scalar_lea.sflag [#allocation4], 1
    %11 = vsyncpa %s10, 0
    %12 = vsyncpa [#allocation7], 0
    %13 = vsyncpa [#allocation5], 0
    %s14 = scalar_lea.sflag [#allocation5], 1
    %15 = vsyncpa %s14, 0
    loop: start=0, step=1, limit=4
    $region2: #{index_select_forward.13} parent=1 // loop_pre_header
      _
    $region3: #{index_select_forward.13} parent=1 // loop_header
      %s17 = sphi 0, %s21
      %p18 = scmp.ge.s32.totalorder %s17, 4
      %s24 = sphi 0, %s36
      %s25 = sphi 0, %s32
      %s26 = sphi 0, %s24
      %s27 = sphi 0, %s25
      %s28 = sphi 0, %s26
      %s29 = sphi 0, %s27
      %s41 = sphi 0, %s43
      %s44 = sphi 0, %s41
      %s45 = sphi 0, %s44
      %s61 = sphi 0, %s45
      %s67 = sphi 0, %s69
      %s70 = sphi 0, %s67
      %s71 = sphi 0, %s70
      %s87 = sphi 0, %s71
      %s91 = sphi 0, %s91
      %s93 = sphi 0, %s91
      %s94 = sphi 0, %s93
      %s108 = sphi 0, %s94
      %s116 = sphi 0, %s118
      %s119 = sphi 0, %s116
      %s120 = sphi 0, %s119
      %s136 = sphi 0, %s120
    $region4: #{index_select_forward.13} parent=1 // loop_header_branch
      %20 = sbr.rel (%p18) target = $region8
    $region5: #{index_select_forward.13} parent=1 // loop_body
      %s22 = ssub.s32 %s17, 1
      %s23 = ssub.s32 %s17, 2
      %s30 = sadd.s32 1, %s25
      %p31 = scmp.ge.s32.totalorder %s30, 2
      %s32 = scalar_select %p31, 0, %s30
      %s33 = sadd.s32 1, %s24
      %s34 = scalar_select %p31, %s33, %s24
      %p35 = scmp.ge.s32.totalorder %s34, 1
      %s36 = scalar_select %p35, 0, %s34
      %s37 = ssub.s32 %s25, %s32
      %s38 = ssub.s32 %s24, %s36
      %s39 = sor.u32 %s37, %s38
      %p40 = scmp.eq.s32.totalorder %s39, 0
      %s42 = sadd.s32 %s41, 1
      %s43 = scalar_select %p40, %s41, %s42
      %p46 = pneg %p40
      %p47 = scmp.eq.s32.totalorder %s17, 1
      %p48 = por %p46, %p47
      %p49 = scmp.ne.s32.totalorder %s41, %s44
      %p50 = scmp.eq.s32.totalorder %s17, 0
      %p51 = por %p49, %p50
      %p52 = scmp.ne.s32.totalorder %s41, %s44
      %p53 = scmp.eq.s32.totalorder %s22, 1
      %p54 = por %p52, %p53
      %p55 = scmp.ne.s32.totalorder %s44, %s45
      %p56 = scmp.eq.s32.totalorder %s22, 0
      %p57 = por %p55, %p56
      %p58 = scmp.ne.s32.totalorder %s44, %s45
      %p59 = scmp.eq.s32.totalorder %s23, 1
      %p60 = por %p58, %p59
      %p62 = scmp.ne.s32.totalorder %s45, %s61
      %p63 = scmp.eq.s32.totalorder %s23, 0
      %p64 = por %p62, %p63
      %s65 = ssub.s32 %s24, %s36
      %p66 = scmp.eq.s32.totalorder %s65, 0
      %s68 = sadd.s32 %s67, 1
      %s69 = scalar_select %p66, %s67, %s68
      %p72 = pneg %p66
      %p73 = scmp.eq.s32.totalorder %s17, 1
      %p74 = por %p72, %p73
      %p75 = scmp.ne.s32.totalorder %s67, %s70
      %p76 = scmp.eq.s32.totalorder %s17, 0
      %p77 = por %p75, %p76
      %p78 = scmp.ne.s32.totalorder %s67, %s70
      %p79 = scmp.eq.s32.totalorder %s22, 1
      %p80 = por %p78, %p79
      %p81 = scmp.ne.s32.totalorder %s70, %s71
      %p82 = scmp.eq.s32.totalorder %s22, 0
      %p83 = por %p81, %p82
      %p84 = scmp.ne.s32.totalorder %s70, %s71
      %p85 = scmp.eq.s32.totalorder %s23, 1
      %p86 = por %p84, %p85
      %p88 = scmp.ne.s32.totalorder %s71, %s87
      %p89 = scmp.eq.s32.totalorder %s23, 0
      %p90 = por %p88, %p89
      %s92 = sadd.s32 %s91, 1
      %p95 = scmp.eq.s32.totalorder %s17, 1
      %p96 = scmp.ne.s32.totalorder %s91, %s93
      %p97 = scmp.eq.s32.totalorder %s17, 0
      %p98 = por %p96, %p97
      %p99 = scmp.ne.s32.totalorder %s91, %s93
      %p100 = scmp.eq.s32.totalorder %s22, 1
      %p101 = por %p99, %p100
      %p102 = scmp.ne.s32.totalorder %s93, %s94
      %p103 = scmp.eq.s32.totalorder %s22, 0
      %p104 = por %p102, %p103
      %p105 = scmp.ne.s32.totalorder %s93, %s94
      %p106 = scmp.eq.s32.totalorder %s23, 1
      %p107 = por %p105, %p106
      %p109 = scmp.ne.s32.totalorder %s94, %s108
      %p110 = scmp.eq.s32.totalorder %s23, 0
      %p111 = por %p109, %p110
      %s112 = ssub.s32 %s25, %s32
      %s113 = ssub.s32 %s24, %s36
      %s114 = sor.u32 %s112, %s113
      %p115 = scmp.eq.s32.totalorder %s114, 0
      %s117 = sadd.s32 %s116, 1
      %s118 = scalar_select %p115, %s116, %s117
      %p121 = pneg %p115
      %p122 = scmp.eq.s32.totalorder %s17, 1
      %p123 = por %p121, %p122
      %p124 = scmp.ne.s32.totalorder %s116, %s119
      %p125 = scmp.eq.s32.totalorder %s17, 0
      %p126 = por %p124, %p125
      %p127 = scmp.ne.s32.totalorder %s116, %s119
      %p128 = scmp.eq.s32.totalorder %s22, 1
      %p129 = por %p127, %p128
      %p130 = scmp.ne.s32.totalorder %s119, %s120
      %p131 = scmp.eq.s32.totalorder %s22, 0
      %p132 = por %p130, %p131
      %p133 = scmp.ne.s32.totalorder %s119, %s120
      %p134 = scmp.eq.s32.totalorder %s23, 1
      %p135 = por %p133, %p134
      %p137 = scmp.ne.s32.totalorder %s120, %s136
      %p138 = scmp.eq.s32.totalorder %s23, 0
      %p139 = por %p137, %p138
      %p140 = scmp.le.s32.totalorder 1, %s17
      %p141 = scmp.lt.s32.totalorder %s17, 3
      %p142 = pnand %p140, %p141
      %p143 = pneg %p142
      // Predicated region
      $region9: #{index_select_forward.13} parent=5 // pred_check
        _
      $region10: #{index_select_forward.13} parent=5 // pred_check_branch
        %145 = sbr.rel (%p142) target = $region12
      $region11: #{index_select_forward.13} parent=5 // pred_region
        %s146 = ssub.s32 %s17, 1
        // Predicated region
        $region13: #{index_select_forward.13} parent=11 // pred_check
          %p147 = pneg %p83
        $region14: #{index_select_forward.13} parent=11 // pred_check_branch
          %149 = sbr.rel (%p147) target = $region16
        $region15: #{index_select_forward.13} parent=11 // pred_region
          %s150 = smul.u32 8, %s26
          %s152 = ssub.s32 2048, 2048
          %153 = vsyncadd [#allocation7], %s152
          %s154 = smul.addr %s150, 128
          %s155 = scalar_lea.hbm %s1, %s154
          %s156 = sshll.u32 [#allocation6], 4
          %s157 = int_to_ptr.vmem [resolvable:$true] %s156
          %162 = dma.hbm_to_vmem [thread:$0]  %s155, 2048, %s157, [#allocation7], 128, 128, 8
        $region16: #{index_select_forward.13} parent=11 // pred_fallthru
          _
        // Predicated region
        $region17: #{index_select_forward.13} parent=11 // pred_check
          %p163 = pneg %p104
        $region18: #{index_select_forward.13} parent=11 // pred_check_branch
          %165 = sbr.rel (%p163) target = $region20
        $region19: #{index_select_forward.13} parent=11 // pred_region
          _
        $region20: #{index_select_forward.13} parent=11 // pred_fallthru
          _
      $region12: #{index_select_forward.13} parent=5 // pred_fallthru
        _
      %p166 = scmp.lt.s32.totalorder %s17, 2
      // Predicated region
      $region21: #{index_select_forward.13} parent=5 // pred_check
        %p167 = pneg %p166
      $region22: #{index_select_forward.13} parent=5 // pred_check_branch
        %169 = sbr.rel (%p167) target = $region24
      $region23: #{index_select_forward.13} parent=5 // pred_region
        // Predicated region
        $region25: #{index_select_forward.13} parent=23 // pred_check
          %p170 = pneg %p51
        $region26: #{index_select_forward.13} parent=23 // pred_check_branch
          %172 = sbr.rel (%p170) target = $region28
        $region27: #{index_select_forward.13} parent=23 // pred_region
          %s173 = sand.u32 %s41, 1
          %s174 = scalar_lea.sflag [#allocation4], %s173
          %s175 = sand.u32 %s41, 1
          %s176 = smul.addr %s175, 128
          %s177 = scalar_lea.vmem [#allocation3], %s176
          %s178 = smul.u32 8, %s24
          %s180 = ssub.s32 2048, 2048
          %181 = vsyncadd %s174, %s180
          %s182 = smul.addr %s25, 16
          %s183 = sadd.s32 %s178, %s182
          %s184 = smul.addr %s183, 128
          %s185 = scalar_lea.hbm %s0, %s184
          %s186 = sshll.u32 %s177, 4
          %s187 = int_to_ptr.vmem [resolvable:$true] %s186
          %192 = dma.hbm_to_vmem [thread:$0]  %s185, 2048, %s187, %s174, 128, 128, 8
        $region28: #{index_select_forward.13} parent=23 // pred_fallthru
          _
      $region24: #{index_select_forward.13} parent=5 // pred_fallthru
        _
      %p193 = scmp.le.s32.totalorder 1, %s17
      %p194 = scmp.lt.s32.totalorder %s17, 3
      %p195 = pnand %p193, %p194
      %p196 = pneg %p195
      // Predicated region
      $region29: #{index_select_forward.13} parent=5 // pred_check
        _
      $region30: #{index_select_forward.13} parent=5 // pred_check_branch
        %198 = sbr.rel (%p195) target = $region32
      $region31: #{index_select_forward.13} parent=5 // pred_region
        %s199 = ssub.s32 %s17, 1
        %s200 = sand.u32 %s44, 1
        %s201 = scalar_lea.sflag [#allocation4], %s200
        %s202 = sand.u32 %s44, 1
        %s203 = smul.addr %s202, 128
        %s204 = scalar_lea.vmem [#allocation3], %s203
        // Predicated region
        $region33: #{index_select_forward.13} parent=31 // pred_check
          %p205 = pneg %p57
        $region34: #{index_select_forward.13} parent=31 // pred_check_branch
          %207 = sbr.rel (%p205) target = $region36
        $region35: #{index_select_forward.13} parent=31 // pred_region
          %208 = dma.done %s201, 2048
        $region36: #{index_select_forward.13} parent=31 // pred_fallthru
          _
        // Predicated region
        $region37: #{index_select_forward.13} parent=31 // pred_check
          %p209 = pneg %p83
        $region38: #{index_select_forward.13} parent=31 // pred_check_branch
          %211 = sbr.rel (%p209) target = $region40
        $region39: #{index_select_forward.13} parent=31 // pred_region
          %212 = dma.done [#allocation7], 2048
        $region40: #{index_select_forward.13} parent=31 // pred_fallthru
          _
        %s213 = sand.u32 %s44, 1
        %s214 = scalar_lea.sflag [#allocation4], %s213
        %s215 = sand.u32 %s44, 1
        %s216 = smul.addr %s215, 128
        %s217 = scalar_lea.vmem [#allocation3], %s216
        %p218 = pneg %p57
        %p219 = pneg %p54
        %p220 = pneg %p83
        %p221 = pneg %p80
        %p222 = pneg %p104
        %p223 = pneg %p101
        %p224 = pneg %p132
        %p225 = pneg %p129
        %s226 = sand.u32 %s119, 1
        %s227 = scalar_lea.sflag [#allocation5], %s226
        %s228 = sand.u32 %s119, 1
        %s229 = smul.addr %s228, 2
        %s230 = scalar_lea.vmem [#allocation8], %s229
        %s231 = smul.u32 8, %s26
        %s232 = smul.u32 8, %s26
        %v233 = vld [vmem:[%s204] sm:$0xff]
        %v234 = vld [vmem:[%s204 + $0x8] sm:$0xff]
        %v235 = vld [vmem:[%s204 + $0x10] sm:$0xff]
        %v236 = vld [vmem:[%s204 + $0x18] sm:$0xff]
        %v237 = vld [vmem:[%s204 + $0x20] sm:$0xff]
        %v238 = vld [vmem:[%s204 + $0x28] sm:$0xff]
        %v239 = vld [vmem:[%s204 + $0x30] sm:$0xff]
        %v240 = vld [vmem:[%s204 + $0x38] sm:$0xff]
        %v241 = vld [vmem:[%s204 + $0x40] sm:$0xff]
        %v242 = vld [vmem:[%s204 + $0x48] sm:$0xff]
        %v243 = vld [vmem:[%s204 + $0x50] sm:$0xff]
        %v244 = vld [vmem:[%s204 + $0x58] sm:$0xff]
        %v245 = vld [vmem:[%s204 + $0x60] sm:$0xff]
        %v246 = vld [vmem:[%s204 + $0x68] sm:$0xff]
        %v247 = vld [vmem:[%s204 + $0x70] sm:$0xff]
        %v248 = vld [vmem:[%s204 + $0x78] sm:$0xff]
        %v249 = vld [vmem:[#allocation6] sm:$0xff]
        %v250 = vld [vmem:[#allocation6 + $0x8] sm:$0xff]
        %v251 = vld [vmem:[#allocation6 + $0x10] sm:$0xff]
        %v252 = vld [vmem:[#allocation6 + $0x18] sm:$0xff]
        %v253 = vld [vmem:[#allocation6 + $0x20] sm:$0xff]
        %v254 = vld [vmem:[#allocation6 + $0x28] sm:$0xff]
        %v255 = vld [vmem:[#allocation6 + $0x30] sm:$0xff]
        %v256 = vld [vmem:[#allocation6 + $0x38] sm:$0xff]
        %v257 = vld [vmem:[#allocation6 + $0x40] sm:$0xff]
        %v258 = vld [vmem:[#allocation6 + $0x48] sm:$0xff]
        %v259 = vld [vmem:[#allocation6 + $0x50] sm:$0xff]
        %v260 = vld [vmem:[#allocation6 + $0x58] sm:$0xff]
        %v261 = vld [vmem:[#allocation6 + $0x60] sm:$0xff]
        %v262 = vld [vmem:[#allocation6 + $0x68] sm:$0xff]
        %v263 = vld [vmem:[#allocation6 + $0x70] sm:$0xff]
        %v264 = vld [vmem:[#allocation6 + $0x78] sm:$0xff]
        %v265 = vmul.f32 %v233, %v249
        %v266 = vmul.f32 %v234, %v250
        %v267 = vmul.f32 %v235, %v251
        %v268 = vmul.f32 %v236, %v252
        %v269 = vmul.f32 %v237, %v253
        %v270 = vmul.f32 %v238, %v254
        %v271 = vmul.f32 %v239, %v255
        %v272 = vmul.f32 %v240, %v256
        %v273 = vmul.f32 %v241, %v257
        %v274 = vmul.f32 %v242, %v258
        %v275 = vmul.f32 %v243, %v259
        %v276 = vmul.f32 %v244, %v260
        %v277 = vmul.f32 %v245, %v261
        %v278 = vmul.f32 %v246, %v262
        %v279 = vmul.f32 %v247, %v263
        %v280 = vmul.f32 %v248, %v264
        %vm281 = vcmask 261120
        %v282 = vsel %vm281, %v265, 0.0
        %283 = vadd.xlane.f32.xlu0 %v282
        %v284 = vpop.xlane.xlu0 %283
        %v285 = vsel %vm281, %v266, 0.0
        %286 = vadd.xlane.f32.xlu0 %v285
        %v287 = vpop.xlane.xlu0 %286
        %v288 = vsel %vm281, %v267, 0.0
        %289 = vadd.xlane.f32.xlu0 %v288
        %v290 = vpop.xlane.xlu0 %289
        %v291 = vsel %vm281, %v268, 0.0
        %292 = vadd.xlane.f32.xlu0 %v291
        %v293 = vpop.xlane.xlu0 %292
        %v294 = vsel %vm281, %v269, 0.0
        %295 = vadd.xlane.f32.xlu0 %v294
        %v296 = vpop.xlane.xlu0 %295
        %v297 = vsel %vm281, %v270, 0.0
        %298 = vadd.xlane.f32.xlu0 %v297
        %v299 = vpop.xlane.xlu0 %298
        %v300 = vsel %vm281, %v271, 0.0
        %301 = vadd.xlane.f32.xlu0 %v300
        %v302 = vpop.xlane.xlu0 %301
        %v303 = vsel %vm281, %v272, 0.0
        %304 = vadd.xlane.f32.xlu0 %v303
        %v305 = vpop.xlane.xlu0 %304
        %v306 = vsel %vm281, %v273, 0.0
        %307 = vadd.xlane.f32.xlu0 %v306
        %v308 = vpop.xlane.xlu0 %307
        %v309 = vsel %vm281, %v274, 0.0
        %310 = vadd.xlane.f32.xlu0 %v309
        %v311 = vpop.xlane.xlu0 %310
        %v312 = vsel %vm281, %v275, 0.0
        %313 = vadd.xlane.f32.xlu0 %v312
        %v314 = vpop.xlane.xlu0 %313
        %v315 = vsel %vm281, %v276, 0.0
        %316 = vadd.xlane.f32.xlu0 %v315
        %v317 = vpop.xlane.xlu0 %316
        %v318 = vsel %vm281, %v277, 0.0
        %319 = vadd.xlane.f32.xlu0 %v318
        %v320 = vpop.xlane.xlu0 %319
        %v321 = vsel %vm281, %v278, 0.0
        %322 = vadd.xlane.f32.xlu0 %v321
        %v323 = vpop.xlane.xlu0 %322
        %v324 = vsel %vm281, %v279, 0.0
        %325 = vadd.xlane.f32.xlu0 %v324
        %v326 = vpop.xlane.xlu0 %325
        %v327 = vsel %vm281, %v280, 0.0
        %328 = vadd.xlane.f32.xlu0 %v327
        %v329 = vpop.xlane.xlu0 %328
        %s330 = sld [smem:[#allocation2]]
        %v331 = vstv %s330
        %v332 = vadd.f32 %v284, %v331
        %v333 = vadd.f32 %v287, %v331
        %v334 = vadd.f32 %v290, %v331
        %v335 = vadd.f32 %v293, %v331
        %v336 = vadd.f32 %v296, %v331
        %v337 = vadd.f32 %v299, %v331
        %v338 = vadd.f32 %v302, %v331
        %v339 = vadd.f32 %v305, %v331
        %v340 = vadd.f32 %v308, %v331
        %v341 = vadd.f32 %v311, %v331
        %v342 = vadd.f32 %v314, %v331
        %v343 = vadd.f32 %v317, %v331
        %v344 = vadd.f32 %v320, %v331
        %v345 = vadd.f32 %v323, %v331
        %v346 = vadd.f32 %v326, %v331
        %v347 = vadd.f32 %v329, %v331
        %v364 = vlaneseq
        %v365 = vand.u32 %v364, 127
        %v366 = vlaneseq
        %v367 = vshrl.u32 %v366, 7
        %v368 = vsub.s32 %v365, %v367
        %v369 = vrot.slane %v332, %v368
        %v370 = vadd.s32 %v365, 4294967288
        %v371 = vlaneseq
        %v372 = vshrl.u32 %v371, 7
        %v373 = vsub.s32 %v370, %v372
        %v374 = vrot.slane %v333, %v373
        %vm375 = vcmask 130112
        %v376 = vsel %vm375, %v374, %v369
        %v377 = vadd.s32 %v365, 4294967280
        %v378 = vlaneseq
        %v379 = vshrl.u32 %v378, 7
        %v380 = vsub.s32 %v377, %v379
        %v381 = vrot.slane %v334, %v380
        %vm382 = vcmask 195712
        %v383 = vsel %vm382, %v381, %v376
        %v384 = vadd.s32 %v365, 4294967272
        %v385 = vlaneseq
        %v386 = vshrl.u32 %v385, 7
        %v387 = vsub.s32 %v384, %v386
        %v388 = vrot.slane %v335, %v387
        %vm389 = vcmask 261312
        %v390 = vsel %vm389, %v388, %v383
        %v391 = vadd.s32 %v365, 4294967264
        %v392 = vlaneseq
        %v393 = vshrl.u32 %v392, 7
        %v394 = vsub.s32 %v391, %v393
        %v395 = vrot.slane %v336, %v394
        %vm396 = vcmask 326912
        %v397 = vsel %vm396, %v395, %v390
        %v398 = vadd.s32 %v365, 4294967256
        %v399 = vlaneseq
        %v400 = vshrl.u32 %v399, 7
        %v401 = vsub.s32 %v398, %v400
        %v402 = vrot.slane %v337, %v401
        %vm403 = vcmask 392512
        %v404 = vsel %vm403, %v402, %v397
        %v405 = vadd.s32 %v365, 4294967248
        %v406 = vlaneseq
        %v407 = vshrl.u32 %v406, 7
        %v408 = vsub.s32 %v405, %v407
        %v409 = vrot.slane %v338, %v408
        %vm410 = vcmask 458112
        %v411 = vsel %vm410, %v409, %v404
        %v412 = vadd.s32 %v365, 4294967240
        %v413 = vlaneseq
        %v414 = vshrl.u32 %v413, 7
        %v415 = vsub.s32 %v412, %v414
        %v416 = vrot.slane %v339, %v415
        %vm417 = vcmask 523712
        %v418 = vsel %vm417, %v416, %v411
        %v419 = vlaneseq
        %v420 = vshrl.u32 %v419, 7
        %v421 = vsub.s32 %v365, %v420
        %v422 = vrot.slane %v340, %v421
        %v423 = vlaneseq
        %v424 = vshrl.u32 %v423, 7
        %v425 = vsub.s32 %v370, %v424
        %v426 = vrot.slane %v341, %v425
        %v427 = vsel %vm375, %v426, %v422
        %v428 = vlaneseq
        %v429 = vshrl.u32 %v428, 7
        %v430 = vsub.s32 %v377, %v429
        %v431 = vrot.slane %v342, %v430
        %v432 = vsel %vm382, %v431, %v427
        %v433 = vlaneseq
        %v434 = vshrl.u32 %v433, 7
        %v435 = vsub.s32 %v384, %v434
        %v436 = vrot.slane %v343, %v435
        %v437 = vsel %vm389, %v436, %v432
        %v438 = vlaneseq
        %v439 = vshrl.u32 %v438, 7
        %v440 = vsub.s32 %v391, %v439
        %v441 = vrot.slane %v344, %v440
        %v442 = vsel %vm396, %v441, %v437
        %v443 = vlaneseq
        %v444 = vshrl.u32 %v443, 7
        %v445 = vsub.s32 %v398, %v444
        %v446 = vrot.slane %v345, %v445
        %v447 = vsel %vm403, %v446, %v442
        %v448 = vlaneseq
        %v449 = vshrl.u32 %v448, 7
        %v450 = vsub.s32 %v405, %v449
        %v451 = vrot.slane %v346, %v450
        %v452 = vsel %vm410, %v451, %v447
        %v453 = vlaneseq
        %v454 = vshrl.u32 %v453, 7
        %v455 = vsub.s32 %v412, %v454
        %v456 = vrot.slane %v347, %v455
        %v457 = vsel %vm417, %v456, %v452
        %vm458 = vcmask 1041409
        %v459 = vsel %vm458, %v457, %v418
        %vm461 = vcmask 517120
        %462 = vst.msk [vmem:[%s230] sm:$0x3] %vm461, %v459
        %s463 = sand.u32 %s119, 1
        %s464 = scalar_lea.sflag [#allocation5], %s463
        %s465 = sand.u32 %s119, 1
        %s466 = smul.addr %s465, 2
        %s467 = scalar_lea.vmem [#allocation8], %s466
        // Predicated region
        $region41: #{index_select_forward.13} parent=31 // pred_check
          %p468 = pneg %p129
        $region42: #{index_select_forward.13} parent=31 // pred_check_branch
          %470 = sbr.rel (%p468) target = $region44
        $region43: #{index_select_forward.13} parent=31 // pred_region
          %s472 = ssub.s32 32, 32
          %473 = vsyncadd %s464, %s472
          %s474 = sadd.s32 %s26, %s27
          %s475 = smul.addr %s474, 32
          %s476 = scalar_lea.hbm %s3, %s475
          %s478 = sshll.u32 %s467, 4
          %s479 = int_to_ptr.vmem [resolvable:$true] %s478
          %481 = dma.vmem_to_hbm [thread:$0]  %s479, 32, %s476, %s464
        $region44: #{index_select_forward.13} parent=31 // pred_fallthru
          _
      $region32: #{index_select_forward.13} parent=5 // pred_fallthru
        _
      %p482 = scmp.le.s32.totalorder 2, %s17
      // Predicated region
      $region45: #{index_select_forward.13} parent=5 // pred_check
        %p483 = pneg %p482
      $region46: #{index_select_forward.13} parent=5 // pred_check_branch
        %485 = sbr.rel (%p483) target = $region48
      $region47: #{index_select_forward.13} parent=5 // pred_region
        %s486 = ssub.s32 %s17, 2
        // Predicated region
        $region49: #{index_select_forward.13} parent=47 // pred_check
          %p487 = pneg %p135
        $region50: #{index_select_forward.13} parent=47 // pred_check_branch
          %489 = sbr.rel (%p487) target = $region52
        $region51: #{index_select_forward.13} parent=47 // pred_region
          %s490 = sand.u32 %s120, 1
          %s491 = scalar_lea.sflag [#allocation5], %s490
          %s492 = sand.u32 %s120, 1
          %s493 = smul.addr %s492, 2
          %s494 = scalar_lea.vmem [#allocation8], %s493
          %495 = dma.done %s491, 32
        $region52: #{index_select_forward.13} parent=47 // pred_fallthru
          _
      $region48: #{index_select_forward.13} parent=5 // pred_fallthru
        _
    $region6: #{index_select_forward.13} parent=1 // loop_footer
      %s21 = sadd.s32 1, %s17
    $region7: #{index_select_forward.13} parent=1 // loop_footer_branch
      %16 = sbr.rel target = $region3
    $region8: #{index_select_forward.13} parent=1 // loop_exit
      _
    %496 = vsyncpa [#allocation4], 1
    %s497 = scalar_lea.sflag [#allocation4], 1
    %498 = vsyncpa %s497, 1
    %499 = vsyncpa [#allocation7], 1
    %500 = vsyncpa [#allocation5], 1
    %s501 = scalar_lea.sflag [#allocation5], 1
    %502 = vsyncpa %s501, 1

</llo_original>
